<compile_context>
chip_gen: v6e
topology: v6e:2x2x1
jax: 0.10.0
libtpu: 0.0.40
codegen_flags: <defaults>
</compile_context>

<pallas_src>
import functools

import numpy as np
import jax
import jax.numpy as jnp
from jax import lax
from jax.experimental import pallas as pl
from jax.experimental.pallas import tpu as pltpu


# --------------------------------------------------------------------------
# Pallas kernel: fused sigmoid(mask) modulation + deformable-conv contraction
# --------------------------------------------------------------------------
def _dcn_contract_kernel(c1, kk, cols_ref, mlog_ref, w_ref, b_ref, o_ref):
    """One row-tile of the modulated deformable convolution.

    cols_ref : (tm, kk*c1)   bf16  sampled values, column order (tap, channel)
    mlog_ref : (tm, kk)      f32   mask logits, one per tap (NOT pre-broadcast)
    w_ref    : (kk, c1, Cp)  bf16  weight, one (c1, Cout_padded) slab per tap
    b_ref    : (1, Cp)       f32
    o_ref    : (tm, Cp)      f32

    y[r, o] = sum_t sigmoid(mlog[r,t]) * sum_c cols[r, t*c1+c] * w[t, c, o] + b[o]
    """
    m = jax.nn.sigmoid(mlog_ref[...].astype(jnp.float32))           # (tm, kk) f32
    acc = jnp.zeros(o_ref.shape, jnp.float32)
    for t in range(kk):                                             # static unroll (kk = 9)
        xt = cols_ref[:, pl.ds(t * c1, c1)]                         # (tm, c1) bf16
        yt = jnp.dot(xt, w_ref[t], preferred_element_type=jnp.float32)
        acc = acc + m[:, t:t + 1] * yt                              # lane-broadcast mask
    o_ref[...] = (acc + b_ref[...]).astype(o_ref.dtype)


def _dcn_contract(cols, mlog, w, b, *, c1, kk, tm=512):
    """cols:(M, kk*c1) bf16, mlog:(M, kk) f32, w:(kk, c1, Cp) bf16, b:(1, Cp) f32."""
    M, K = cols.shape
    Cp = w.shape[-1]
    tm = min(tm, M)                       # tm is a multiple of 8, or equals M exactly
    grid = (pl.cdiv(M, tm),)              # ragged tail: OOB reads are garbage rows whose
                                          # outputs are dropped -> no pad copies needed
    kernel = functools.partial(_dcn_contract_kernel, c1, kk)
    return pl.pallas_call(
        kernel,
        out_shape=jax.ShapeDtypeStruct((M, Cp), jnp.float32),
        grid=grid,
        in_specs=[
            pl.BlockSpec((tm, K), lambda i: (i, 0)),
            pl.BlockSpec((tm, kk), lambda i: (i, 0)),
            pl.BlockSpec((kk, c1, Cp), lambda i: (0, 0, 0)),
            pl.BlockSpec((1, Cp), lambda i: (0, 0)),
        ],
        out_specs=pl.BlockSpec((tm, Cp), lambda i: (i, 0)),
        compiler_params=pltpu.CompilerParams(
            # "parallel" lets the row-tile loop shard across the 2 TCs on v7x.
            dimension_semantics=("parallel",),
            # Above the 16 MiB (v5e) / 32 MiB (v6e, v7x) scoped defaults, below
            # v7x's 64 MiB physical VMEM.  tm=512 with production K=1152 (bf16)
            # double-buffered needs only a few MiB.
            vmem_limit_bytes=48 * 1024 * 1024,
        ),
    )(cols, mlog, w, b)


# --------------------------------------------------------------------------
# Plain-JAX glue: bilinear deformable gather (no efficient Pallas gather on TPU)
# --------------------------------------------------------------------------
def _bilinear_sample_nhwc(x_nhwc, ys, xs):
    """x_nhwc:(N,H,W,C); ys,xs:(N,Ho,Wo,KK) float coords -> (N,Ho,Wo,KK,C).

    Out-of-bounds corners contribute zero, matching torchvision deform_conv2d's
    bilinear_interpolate (a fully out-of-range point gets all corners zeroed).
    """
    N, H, W, C = x_nhwc.shape
    y0 = jnp.floor(ys)
    x0 = jnp.floor(xs)
    y1 = y0 + 1.0
    x1 = x0 + 1.0
    ly = ys - y0
    lx = xs - x0
    hy = 1.0 - ly
    hx = 1.0 - lx
    xf = x_nhwc.reshape(N, H * W, C)
    S = ys.shape[1] * ys.shape[2] * ys.shape[3]

    def corner(yc, xc, wgt):
        valid = (yc >= 0) & (yc <= H - 1) & (xc >= 0) & (xc <= W - 1)
        yi = jnp.clip(yc, 0, H - 1).astype(jnp.int32)
        xi = jnp.clip(xc, 0, W - 1).astype(jnp.int32)
        flat = (yi * W + xi).reshape(N, S, 1)
        v = jnp.take_along_axis(xf, jnp.broadcast_to(flat, (N, S, C)), axis=1)
        v = v.reshape(N, *ys.shape[1:], C)                          # (N,Ho,Wo,KK,C)
        wv = (wgt * valid.astype(x_nhwc.dtype))[..., None]          # (N,Ho,Wo,KK,1)
        return v * wv

    return (corner(y0, x0, hy * hx) + corner(y0, x1, hy * lx)
            + corner(y1, x0, ly * hx) + corner(y1, x1, ly * lx))


# --------------------------------------------------------------------------
# DCNv2 forward
# --------------------------------------------------------------------------
def dcnv2_forward(x, offset_feat, params, *, k, s, p, g=1, tm=512):
    """Equivalent of DCNv2.forward(x, offset) from fapn.py (NCHW in / NCHW out).

    x:           (N, c1, H, W)   feature fed to the deformable conv
    offset_feat: (N, c2, H, W)   feature fed to the offset_mask conv
    returns:     (N, c2, Ho, Wo)
    """
    # TODO(synk): only g == 1 (single weight/offset group) is implemented.
    assert g == 1, "only g=1 supported in this synthetic kernel"
    N, c1, H, W = x.shape
    c2 = params["dcn_w"].shape[0]
    kk = k * k

    # ---- offset_mask conv: plain conv -> NHWC result via lax.conv (no im2col).
    om = lax.conv_general_dilated(
        offset_feat, params["offset_mask_w"], (s, s), [(p, p), (p, p)],
        dimension_numbers=("NCHW", "OIHW", "NHWC"),
    ) + params["offset_mask_b"]                                     # (N, Ho, Wo, 3*kk)
    Ho, Wo = om.shape[1], om.shape[2]
    M = N * Ho * Wo

    # torchvision deform_conv2d reads the concatenated [o1, o2] offsets as
    # interleaved (dy, dx) pairs per kernel tap; mask channel t modulates tap t.
    off = om[..., : 2 * kk]
    dy = off[..., 0::2]                                             # (N, Ho, Wo, kk)
    dx = off[..., 1::2]
    mlog = om[..., 2 * kk:].reshape(M, kk)                          # mask logits (M, kk)

    # ---- deformable sampling coordinates, built directly in NHWC order.
    iy = (jnp.arange(kk) // k).astype(jnp.float32)                  # kernel row per tap
    ix = (jnp.arange(kk) % k).astype(jnp.float32)                   # kernel col per tap
    hs = (jnp.arange(Ho) * s - p).astype(jnp.float32)
    ws = (jnp.arange(Wo) * s - p).astype(jnp.float32)
    ys = hs[None, :, None, None] + iy[None, None, None, :] + dy     # (N, Ho, Wo, kk)
    xs = ws[None, None, :, None] + ix[None, None, None, :] + dx

    # ---- gather straight into (N, Ho, Wo, kk, c1): `cols` is a pure reshape.
    x_nhwc = jnp.transpose(x, (0, 2, 3, 1))                         # (N, H, W, c1)
    sampled = _bilinear_sample_nhwc(x_nhwc, ys, xs)                 # (N,Ho,Wo,kk,c1) f32
    cols = sampled.astype(jnp.bfloat16).reshape(M, kk * c1)         # bf16 MXU stream

    # ---- weight/bias in (tap, cin, cout) order; cout zero-padded to a 128
    # multiple so the kernel's output stores are lane-dense.
    cp = ((c2 + 127) // 128) * 128
    w = jnp.transpose(params["dcn_w"], (2, 3, 1, 0)).reshape(kk, c1 // g, c2)
    w = jnp.pad(w, ((0, 0), (0, 0), (0, cp - c2))).astype(jnp.bfloat16)
    b = jnp.pad(params["dcn_b"], (0, cp - c2)).reshape(1, cp).astype(jnp.float32)

    y = _dcn_contract(cols, mlog, w, b, c1=c1, kk=kk, tm=tm)        # (M, cp) f32
    y = y[:, :c2].reshape(N, Ho, Wo, c2)
    return jnp.transpose(y, (0, 3, 1, 2))                           # back to NCHW


# --------------------------------------------------------------------------
if __name__ == "__main__":
    key = jax.random.PRNGKey(0)
    N, c1, c2, H, W = 2, 4, 4, 16, 16
    k, s, p, g = 3, 1, 1, 1

    kx, ko, kw, kb = jax.random.split(key, 4)
    x = jax.random.normal(kx, (N, c1, H, W), jnp.float32)
    offset_feat = jax.random.normal(ko, (N, c2, H, W), jnp.float32)

    params = {
        # DeformConv2d(c1, c2, k, s, p) weight / bias
        "dcn_w": jax.random.normal(kw, (c2, c1 // g, k, k), jnp.float32) * 0.1,
        "dcn_b": jax.random.normal(kb, (c2,), jnp.float32) * 0.1,
        # _init_offset(): the offset_mask conv weight & bias are zero-initialized
        "offset_mask_w": jnp.zeros((g * 3 * k * k, c2, k, k), jnp.float32),
        "offset_mask_b": jnp.zeros((g * 3 * k * k,), jnp.float32),
    }

    fwd = jax.jit(functools.partial(dcnv2_forward, k=k, s=s, p=p, g=g))
    y = jax.block_until_ready(fwd(x, offset_feat, params))

    # With zero-initialized offset_mask (per _init_offset), offsets == 0 and
    # mask == sigmoid(0) == 0.5, so DCNv2 degenerates to 0.5 * conv2d(x, W) + b.
    ref = 0.5 * lax.conv_general_dilated(
        x, params["dcn_w"], (s, s), [(p, p), (p, p)],
        dimension_numbers=("NCHW", "OIHW", "NCHW"),
    ) + params["dcn_b"][None, :, None, None]

    assert y.shape == (N, c2, H, W), y.shape
    err = float(np.abs(np.asarray(y) - np.asarray(ref)).max())
    # bf16 MXU operands (f32 accumulation) -> looser tolerance than pure-f32 rev 1.
    assert err < 2e-2, f"max abs err {err}"
    print("KERNEL_OK")
</pallas_src>

<mosaic_0001>
module attributes {stable_mosaic.version = 11 : i64} {
  func.func @_dcn_contract_kernel(%arg0: i32, %arg1: memref<512x36xbf16, #tpu.memory_space<vmem>>, %arg2: memref<512x9xf32, #tpu.memory_space<vmem>>, %arg3: memref<9x4x128xbf16, #tpu.memory_space<vmem>>, %arg4: memref<1x128xf32, #tpu.memory_space<vmem>>, %arg5: memref<512x128xf32, #tpu.memory_space<vmem>>) attributes {dimension_semantics = [#tpu.dimension_semantics<parallel>], iteration_bounds = array<i64: 1>, scalar_prefetch = 0 : i64, scratch_operands = 0 : i64, tpu.core_type = #tpu.core_type<tc>, window_params = [{transform_indices = @transform_0, window_bounds = array<i64: 512, 36>}, {transform_indices = @transform_1, window_bounds = array<i64: 512, 9>}, {pipeline_mode = #tpu.pipeline_mode<synchronous>, transform_indices = @transform_2, window_bounds = array<i64: 9, 4, 128>}, {pipeline_mode = #tpu.pipeline_mode<synchronous>, transform_indices = @transform_3, window_bounds = array<i64: 1, 128>}, {transform_indices = @transform_4, window_bounds = array<i64: 512, 128>}]} {
    %c0 = arith.constant 0 : index
    %c0_0 = arith.constant 0 : index
    %0 = vector.load %arg2[%c0, %c0_0] : memref<512x9xf32, #tpu.memory_space<vmem>>, vector<512x9xf32>
    %1 = arith.negf %0 : vector<512x9xf32>
    %2 = math.exp %1 : vector<512x9xf32>
    %cst = arith.constant 1.000000e+00 : f32
    %3 = vector.broadcast %cst : f32 to vector<512x9xf32>
    %4 = arith.addf %3, %2 : vector<512x9xf32>
    %5 = arith.divf %3, %4 : vector<512x9xf32>
    %cst_1 = arith.constant 0.000000e+00 : f32
    %6 = vector.broadcast %cst_1 : f32 to vector<512x128xf32>
    %c0_2 = arith.constant 0 : index
    %c0_3 = arith.constant 0 : index
    %7 = vector.load %arg1[%c0_2, %c0_3] : memref<512x36xbf16, #tpu.memory_space<vmem>>, vector<512x4xbf16>
    %c0_4 = arith.constant 0 : index
    %c0_5 = arith.constant 0 : index
    %c0_6 = arith.constant 0 : index
    %8 = vector.load %arg3[%c0_4, %c0_5, %c0_6] : memref<9x4x128xbf16, #tpu.memory_space<vmem>>, vector<1x4x128xbf16>
    %9 = vector.shape_cast %8 : vector<1x4x128xbf16> to vector<4x128xbf16>
    %cst_7 = arith.constant dense<0.000000e+00> : vector<512x128xf32>
    %10 = tpu.matmul %7, %9, %cst_7 {dimension_numbers = #tpu.dot_dimension_numbers<[1], [0], [0], [1], [0, 0, 1, 1], [], []>} : vector<512x4xbf16>, vector<4x128xbf16>, vector<512x128xf32> -> vector<512x128xf32>
    %11 = vector.extract_strided_slice %5 {offsets = [0, 0], sizes = [512, 1], strides = [1, 1]} : vector<512x9xf32> to vector<512x1xf32>
    %12 = vector.broadcast %11 : vector<512x1xf32> to vector<512x128xf32>
    %13 = arith.mulf %12, %10 : vector<512x128xf32>
    %14 = arith.addf %6, %13 : vector<512x128xf32>
    %c0_8 = arith.constant 0 : index
    %c4 = arith.constant 4 : index
    %15 = vector.load %arg1[%c0_8, %c4] : memref<512x36xbf16, #tpu.memory_space<vmem>>, vector<512x4xbf16>
    %c1 = arith.constant 1 : index
    %c0_9 = arith.constant 0 : index
    %c0_10 = arith.constant 0 : index
    %16 = vector.load %arg3[%c1, %c0_9, %c0_10] : memref<9x4x128xbf16, #tpu.memory_space<vmem>>, vector<1x4x128xbf16>
    %17 = vector.shape_cast %16 : vector<1x4x128xbf16> to vector<4x128xbf16>
    %cst_11 = arith.constant dense<0.000000e+00> : vector<512x128xf32>
    %18 = tpu.matmul %15, %17, %cst_11 {dimension_numbers = #tpu.dot_dimension_numbers<[1], [0], [0], [1], [0, 0, 1, 1], [], []>} : vector<512x4xbf16>, vector<4x128xbf16>, vector<512x128xf32> -> vector<512x128xf32>
    %19 = vector.extract_strided_slice %5 {offsets = [0, 1], sizes = [512, 1], strides = [1, 1]} : vector<512x9xf32> to vector<512x1xf32>
    %20 = vector.broadcast %19 : vector<512x1xf32> to vector<512x128xf32>
    %21 = arith.mulf %20, %18 : vector<512x128xf32>
    %22 = arith.addf %14, %21 : vector<512x128xf32>
    %c0_12 = arith.constant 0 : index
    %c8 = arith.constant 8 : index
    %23 = vector.load %arg1[%c0_12, %c8] : memref<512x36xbf16, #tpu.memory_space<vmem>>, vector<512x4xbf16>
    %c2 = arith.constant 2 : index
    %c0_13 = arith.constant 0 : index
    %c0_14 = arith.constant 0 : index
    %24 = vector.load %arg3[%c2, %c0_13, %c0_14] : memref<9x4x128xbf16, #tpu.memory_space<vmem>>, vector<1x4x128xbf16>
    %25 = vector.shape_cast %24 : vector<1x4x128xbf16> to vector<4x128xbf16>
    %cst_15 = arith.constant dense<0.000000e+00> : vector<512x128xf32>
    %26 = tpu.matmul %23, %25, %cst_15 {dimension_numbers = #tpu.dot_dimension_numbers<[1], [0], [0], [1], [0, 0, 1, 1], [], []>} : vector<512x4xbf16>, vector<4x128xbf16>, vector<512x128xf32> -> vector<512x128xf32>
    %27 = vector.extract_strided_slice %5 {offsets = [0, 2], sizes = [512, 1], strides = [1, 1]} : vector<512x9xf32> to vector<512x1xf32>
    %28 = vector.broadcast %27 : vector<512x1xf32> to vector<512x128xf32>
    %29 = arith.mulf %28, %26 : vector<512x128xf32>
    %30 = arith.addf %22, %29 : vector<512x128xf32>
    %c0_16 = arith.constant 0 : index
    %c12 = arith.constant 12 : index
    %31 = vector.load %arg1[%c0_16, %c12] : memref<512x36xbf16, #tpu.memory_space<vmem>>, vector<512x4xbf16>
    %c3 = arith.constant 3 : index
    %c0_17 = arith.constant 0 : index
    %c0_18 = arith.constant 0 : index
    %32 = vector.load %arg3[%c3, %c0_17, %c0_18] : memref<9x4x128xbf16, #tpu.memory_space<vmem>>, vector<1x4x128xbf16>
    %33 = vector.shape_cast %32 : vector<1x4x128xbf16> to vector<4x128xbf16>
    %cst_19 = arith.constant dense<0.000000e+00> : vector<512x128xf32>
    %34 = tpu.matmul %31, %33, %cst_19 {dimension_numbers = #tpu.dot_dimension_numbers<[1], [0], [0], [1], [0, 0, 1, 1], [], []>} : vector<512x4xbf16>, vector<4x128xbf16>, vector<512x128xf32> -> vector<512x128xf32>
    %35 = vector.extract_strided_slice %5 {offsets = [0, 3], sizes = [512, 1], strides = [1, 1]} : vector<512x9xf32> to vector<512x1xf32>
    %36 = vector.broadcast %35 : vector<512x1xf32> to vector<512x128xf32>
    %37 = arith.mulf %36, %34 : vector<512x128xf32>
    %38 = arith.addf %30, %37 : vector<512x128xf32>
    %c0_20 = arith.constant 0 : index
    %c16 = arith.constant 16 : index
    %39 = vector.load %arg1[%c0_20, %c16] : memref<512x36xbf16, #tpu.memory_space<vmem>>, vector<512x4xbf16>
    %c4_21 = arith.constant 4 : index
    %c0_22 = arith.constant 0 : index
    %c0_23 = arith.constant 0 : index
    %40 = vector.load %arg3[%c4_21, %c0_22, %c0_23] : memref<9x4x128xbf16, #tpu.memory_space<vmem>>, vector<1x4x128xbf16>
    %41 = vector.shape_cast %40 : vector<1x4x128xbf16> to vector<4x128xbf16>
    %cst_24 = arith.constant dense<0.000000e+00> : vector<512x128xf32>
    %42 = tpu.matmul %39, %41, %cst_24 {dimension_numbers = #tpu.dot_dimension_numbers<[1], [0], [0], [1], [0, 0, 1, 1], [], []>} : vector<512x4xbf16>, vector<4x128xbf16>, vector<512x128xf32> -> vector<512x128xf32>
    %43 = vector.extract_strided_slice %5 {offsets = [0, 4], sizes = [512, 1], strides = [1, 1]} : vector<512x9xf32> to vector<512x1xf32>
    %44 = vector.broadcast %43 : vector<512x1xf32> to vector<512x128xf32>
    %45 = arith.mulf %44, %42 : vector<512x128xf32>
    %46 = arith.addf %38, %45 : vector<512x128xf32>
    %c0_25 = arith.constant 0 : index
    %c20 = arith.constant 20 : index
    %47 = vector.load %arg1[%c0_25, %c20] : memref<512x36xbf16, #tpu.memory_space<vmem>>, vector<512x4xbf16>
    %c5 = arith.constant 5 : index
    %c0_26 = arith.constant 0 : index
    %c0_27 = arith.constant 0 : index
    %48 = vector.load %arg3[%c5, %c0_26, %c0_27] : memref<9x4x128xbf16, #tpu.memory_space<vmem>>, vector<1x4x128xbf16>
    %49 = vector.shape_cast %48 : vector<1x4x128xbf16> to vector<4x128xbf16>
    %cst_28 = arith.constant dense<0.000000e+00> : vector<512x128xf32>
    %50 = tpu.matmul %47, %49, %cst_28 {dimension_numbers = #tpu.dot_dimension_numbers<[1], [0], [0], [1], [0, 0, 1, 1], [], []>} : vector<512x4xbf16>, vector<4x128xbf16>, vector<512x128xf32> -> vector<512x128xf32>
    %51 = vector.extract_strided_slice %5 {offsets = [0, 5], sizes = [512, 1], strides = [1, 1]} : vector<512x9xf32> to vector<512x1xf32>
    %52 = vector.broadcast %51 : vector<512x1xf32> to vector<512x128xf32>
    %53 = arith.mulf %52, %50 : vector<512x128xf32>
    %54 = arith.addf %46, %53 : vector<512x128xf32>
    %c0_29 = arith.constant 0 : index
    %c24 = arith.constant 24 : index
    %55 = vector.load %arg1[%c0_29, %c24] : memref<512x36xbf16, #tpu.memory_space<vmem>>, vector<512x4xbf16>
    %c6 = arith.constant 6 : index
    %c0_30 = arith.constant 0 : index
    %c0_31 = arith.constant 0 : index
    %56 = vector.load %arg3[%c6, %c0_30, %c0_31] : memref<9x4x128xbf16, #tpu.memory_space<vmem>>, vector<1x4x128xbf16>
    %57 = vector.shape_cast %56 : vector<1x4x128xbf16> to vector<4x128xbf16>
    %cst_32 = arith.constant dense<0.000000e+00> : vector<512x128xf32>
    %58 = tpu.matmul %55, %57, %cst_32 {dimension_numbers = #tpu.dot_dimension_numbers<[1], [0], [0], [1], [0, 0, 1, 1], [], []>} : vector<512x4xbf16>, vector<4x128xbf16>, vector<512x128xf32> -> vector<512x128xf32>
    %59 = vector.extract_strided_slice %5 {offsets = [0, 6], sizes = [512, 1], strides = [1, 1]} : vector<512x9xf32> to vector<512x1xf32>
    %60 = vector.broadcast %59 : vector<512x1xf32> to vector<512x128xf32>
    %61 = arith.mulf %60, %58 : vector<512x128xf32>
    %62 = arith.addf %54, %61 : vector<512x128xf32>
    %c0_33 = arith.constant 0 : index
    %c28 = arith.constant 28 : index
    %63 = vector.load %arg1[%c0_33, %c28] : memref<512x36xbf16, #tpu.memory_space<vmem>>, vector<512x4xbf16>
    %c7 = arith.constant 7 : index
    %c0_34 = arith.constant 0 : index
    %c0_35 = arith.constant 0 : index
    %64 = vector.load %arg3[%c7, %c0_34, %c0_35] : memref<9x4x128xbf16, #tpu.memory_space<vmem>>, vector<1x4x128xbf16>
    %65 = vector.shape_cast %64 : vector<1x4x128xbf16> to vector<4x128xbf16>
    %cst_36 = arith.constant dense<0.000000e+00> : vector<512x128xf32>
    %66 = tpu.matmul %63, %65, %cst_36 {dimension_numbers = #tpu.dot_dimension_numbers<[1], [0], [0], [1], [0, 0, 1, 1], [], []>} : vector<512x4xbf16>, vector<4x128xbf16>, vector<512x128xf32> -> vector<512x128xf32>
    %67 = vector.extract_strided_slice %5 {offsets = [0, 7], sizes = [512, 1], strides = [1, 1]} : vector<512x9xf32> to vector<512x1xf32>
    %68 = vector.broadcast %67 : vector<512x1xf32> to vector<512x128xf32>
    %69 = arith.mulf %68, %66 : vector<512x128xf32>
    %70 = arith.addf %62, %69 : vector<512x128xf32>
    %c0_37 = arith.constant 0 : index
    %c32 = arith.constant 32 : index
    %71 = vector.load %arg1[%c0_37, %c32] : memref<512x36xbf16, #tpu.memory_space<vmem>>, vector<512x4xbf16>
    %c8_38 = arith.constant 8 : index
    %c0_39 = arith.constant 0 : index
    %c0_40 = arith.constant 0 : index
    %72 = vector.load %arg3[%c8_38, %c0_39, %c0_40] : memref<9x4x128xbf16, #tpu.memory_space<vmem>>, vector<1x4x128xbf16>
    %73 = vector.shape_cast %72 : vector<1x4x128xbf16> to vector<4x128xbf16>
    %cst_41 = arith.constant dense<0.000000e+00> : vector<512x128xf32>
    %74 = tpu.matmul %71, %73, %cst_41 {dimension_numbers = #tpu.dot_dimension_numbers<[1], [0], [0], [1], [0, 0, 1, 1], [], []>} : vector<512x4xbf16>, vector<4x128xbf16>, vector<512x128xf32> -> vector<512x128xf32>
    %75 = vector.extract_strided_slice %5 {offsets = [0, 8], sizes = [512, 1], strides = [1, 1]} : vector<512x9xf32> to vector<512x1xf32>
    %76 = vector.broadcast %75 : vector<512x1xf32> to vector<512x128xf32>
    %77 = arith.mulf %76, %74 : vector<512x128xf32>
    %78 = arith.addf %70, %77 : vector<512x128xf32>
    %c0_42 = arith.constant 0 : index
    %c0_43 = arith.constant 0 : index
    %79 = vector.load %arg4[%c0_42, %c0_43] : memref<1x128xf32, #tpu.memory_space<vmem>>, vector<1x128xf32>
    %80 = vector.broadcast %79 : vector<1x128xf32> to vector<512x128xf32>
    %81 = arith.addf %78, %80 : vector<512x128xf32>
    %c0_44 = arith.constant 0 : index
    %c0_45 = arith.constant 0 : index
    %82 = vector.load %arg5[%c0_44, %c0_45] : memref<512x128xf32, #tpu.memory_space<vmem>>, vector<512x128xf32>
    tpu.vector_store %arg5[%c0_44, %c0_45], %81 {strides = array<i32>} : memref<512x128xf32, #tpu.memory_space<vmem>>, vector<512x128xf32>,
    return
  }
  func.func @transform_0(%arg0: i32) -> (i32, i32) {
    %c0_i32 = arith.constant 0 : i32
    %c0_i32_0 = arith.constant 0 : i32
    return %arg0, %c0_i32 : i32, i32
  }
  func.func @transform_1(%arg0: i32) -> (i32, i32) {
    %c0_i32 = arith.constant 0 : i32
    %c0_i32_0 = arith.constant 0 : i32
    return %arg0, %c0_i32 : i32, i32
  }
  func.func @transform_2(%arg0: i32) -> (i32, i32, i32) {
    %c0_i32 = arith.constant 0 : i32
    %c0_i32_0 = arith.constant 0 : i32
    %c0_i32_1 = arith.constant 0 : i32
    %c0_i32_2 = arith.constant 0 : i32
    return %c0_i32, %c0_i32_0, %c0_i32_1 : i32, i32, i32
  }
  func.func @transform_3(%arg0: i32) -> (i32, i32) {
    %c0_i32 = arith.constant 0 : i32
    %c0_i32_0 = arith.constant 0 : i32
    %c0_i32_1 = arith.constant 0 : i32
    return %c0_i32, %c0_i32_0 : i32, i32
  }
  func.func @transform_4(%arg0: i32) -> (i32, i32) {
    %c0_i32 = arith.constant 0 : i32
    %c0_i32_0 = arith.constant 0 : i32
    return %arg0, %c0_i32 : i32, i32
  }
}

</mosaic_0001>

<llo_original>
// kernel: dcnv2_forward.1
$region0: #{dcnv2_forward.1}
  #allocation0 [shape = 'u32[]', space=smem, size = 0x4, offset = 0x4, fixed_abs, tag = 'smem constant byte address 0x4 - core index']
  #allocation1 [shape = 'u32[144,128]{1,0:T(1,128)}', space=vmem, size = 0x12000, scoped, tag = 'internal scratch']
  %s0 = inlined_call_operand.vmem [shape: bf16[512,36], index: 0, kind: input, shape index: {}]
  %s1 = inlined_call_operand.vmem [shape: f32[512,9], index: 1, kind: input, shape index: {}]
  %s2 = inlined_call_operand.vmem [shape: bf16[9,4,128], index: 2, kind: input, shape index: {}]
  %s3 = inlined_call_operand.vmem [shape: f32[1,128], index: 3, kind: input, shape index: {}]
  %s4 = inlined_call_operand.vmem [shape: f32[512,128], index: 4, kind: output, shape index: {}]
  %s5 = sld [smem:[#allocation0]]
  $region26: #{dcnv2_forward.1} parent=0
    _
  %s7 = ssub.s32 1, %s5
  %s8 = scalar_select 0, %s7, %s5
  // Predicated region
  $region2: #{dcnv2_forward.1} parent=0 // pred_check
    _
  $region3: #{dcnv2_forward.1} parent=0 // pred_check_branch
    %10 = sbr.rel (0) target = $region5
  $region4: #{dcnv2_forward.1} parent=0 // pred_region
    _
  $region5: #{dcnv2_forward.1} parent=0 // pred_fallthru
    _
  // Predicated region
  $region6: #{dcnv2_forward.1} parent=0 // pred_check
    _
  $region7: #{dcnv2_forward.1} parent=0 // pred_check_branch
    %12 = sbr.rel (0) target = $region9
  $region8: #{dcnv2_forward.1} parent=0 // pred_region
    _
  $region9: #{dcnv2_forward.1} parent=0 // pred_fallthru
    _
  // Predicated region
  $region10: #{dcnv2_forward.1} parent=0 // pred_check
    _
  $region11: #{dcnv2_forward.1} parent=0 // pred_check_branch
    %14 = sbr.rel (0) target = $region13
  $region12: #{dcnv2_forward.1} parent=0 // pred_region
    _
  $region13: #{dcnv2_forward.1} parent=0 // pred_fallthru
    _
  // Predicated region
  $region14: #{dcnv2_forward.1} parent=0 // pred_check
    _
  $region15: #{dcnv2_forward.1} parent=0 // pred_check_branch
    %16 = sbr.rel (0) target = $region17
  $region16: #{dcnv2_forward.1} parent=0 // pred_region
    _
  $region17: #{dcnv2_forward.1} parent=0 // pred_fallthru
    _
  %v18 = vld [vmem:[%s1] sm:$0xff]
  %v19 = vld [vmem:[%s1 + $0x8] sm:$0xff]
  %v20 = vld [vmem:[%s1 + $0x10] sm:$0xff]
  %v21 = vld [vmem:[%s1 + $0x18] sm:$0xff]
  %v22 = vld [vmem:[%s1 + $0x20] sm:$0xff]
  %v23 = vld [vmem:[%s1 + $0x28] sm:$0xff]
  %v24 = vld [vmem:[%s1 + $0x30] sm:$0xff]
  %v25 = vld [vmem:[%s1 + $0x38] sm:$0xff]
  %v26 = vld [vmem:[%s1 + $0x40] sm:$0xff]
  %v27 = vld [vmem:[%s1 + $0x48] sm:$0xff]
  %v28 = vld [vmem:[%s1 + $0x50] sm:$0xff]
  %v29 = vld [vmem:[%s1 + $0x58] sm:$0xff]
  %v30 = vld [vmem:[%s1 + $0x60] sm:$0xff]
  %v31 = vld [vmem:[%s1 + $0x68] sm:$0xff]
  %v32 = vld [vmem:[%s1 + $0x70] sm:$0xff]
  %v33 = vld [vmem:[%s1 + $0x78] sm:$0xff]
  %v34 = vld [vmem:[%s1 + $0x80] sm:$0xff]
  %v35 = vld [vmem:[%s1 + $0x88] sm:$0xff]
  %v36 = vld [vmem:[%s1 + $0x90] sm:$0xff]
  %v37 = vld [vmem:[%s1 + $0x98] sm:$0xff]
  %v38 = vld [vmem:[%s1 + $0xa0] sm:$0xff]
  %v39 = vld [vmem:[%s1 + $0xa8] sm:$0xff]
  %v40 = vld [vmem:[%s1 + $0xb0] sm:$0xff]
  %v41 = vld [vmem:[%s1 + $0xb8] sm:$0xff]
  %v42 = vld [vmem:[%s1 + $0xc0] sm:$0xff]
  %v43 = vld [vmem:[%s1 + $0xc8] sm:$0xff]
  %v44 = vld [vmem:[%s1 + $0xd0] sm:$0xff]
  %v45 = vld [vmem:[%s1 + $0xd8] sm:$0xff]
  %v46 = vld [vmem:[%s1 + $0xe0] sm:$0xff]
  %v47 = vld [vmem:[%s1 + $0xe8] sm:$0xff]
  %v48 = vld [vmem:[%s1 + $0xf0] sm:$0xff]
  %v49 = vld [vmem:[%s1 + $0xf8] sm:$0xff]
  %v50 = vld [vmem:[%s1 + $0x100] sm:$0xff]
  %v51 = vld [vmem:[%s1 + $0x108] sm:$0xff]
  %v52 = vld [vmem:[%s1 + $0x110] sm:$0xff]
  %v53 = vld [vmem:[%s1 + $0x118] sm:$0xff]
  %v54 = vld [vmem:[%s1 + $0x120] sm:$0xff]
  %v55 = vld [vmem:[%s1 + $0x128] sm:$0xff]
  %v56 = vld [vmem:[%s1 + $0x130] sm:$0xff]
  %v57 = vld [vmem:[%s1 + $0x138] sm:$0xff]
  %v58 = vld [vmem:[%s1 + $0x140] sm:$0xff]
  %v59 = vld [vmem:[%s1 + $0x148] sm:$0xff]
  %v60 = vld [vmem:[%s1 + $0x150] sm:$0xff]
  %v61 = vld [vmem:[%s1 + $0x158] sm:$0xff]
  %v62 = vld [vmem:[%s1 + $0x160] sm:$0xff]
  %v63 = vld [vmem:[%s1 + $0x168] sm:$0xff]
  %v64 = vld [vmem:[%s1 + $0x170] sm:$0xff]
  %v65 = vld [vmem:[%s1 + $0x178] sm:$0xff]
  %v66 = vld [vmem:[%s1 + $0x180] sm:$0xff]
  %v67 = vld [vmem:[%s1 + $0x188] sm:$0xff]
  %v68 = vld [vmem:[%s1 + $0x190] sm:$0xff]
  %v69 = vld [vmem:[%s1 + $0x198] sm:$0xff]
  %v70 = vld [vmem:[%s1 + $0x1a0] sm:$0xff]
  %v71 = vld [vmem:[%s1 + $0x1a8] sm:$0xff]
  %v72 = vld [vmem:[%s1 + $0x1b0] sm:$0xff]
  %v73 = vld [vmem:[%s1 + $0x1b8] sm:$0xff]
  %v74 = vld [vmem:[%s1 + $0x1c0] sm:$0xff]
  %v75 = vld [vmem:[%s1 + $0x1c8] sm:$0xff]
  %v76 = vld [vmem:[%s1 + $0x1d0] sm:$0xff]
  %v77 = vld [vmem:[%s1 + $0x1d8] sm:$0xff]
  %v78 = vld [vmem:[%s1 + $0x1e0] sm:$0xff]
  %v79 = vld [vmem:[%s1 + $0x1e8] sm:$0xff]
  %v80 = vld [vmem:[%s1 + $0x1f0] sm:$0xff]
  %v81 = vld [vmem:[%s1 + $0x1f8] sm:$0xff]
  %v82 = vxor.u32 %v18, 2147483648
  %v83 = vxor.u32 %v19, 2147483648
  %v84 = vxor.u32 %v20, 2147483648
  %v85 = vxor.u32 %v21, 2147483648
  %v86 = vxor.u32 %v22, 2147483648
  %v87 = vxor.u32 %v23, 2147483648
  %v88 = vxor.u32 %v24, 2147483648
  %v89 = vxor.u32 %v25, 2147483648
  %v90 = vxor.u32 %v26, 2147483648
  %v91 = vxor.u32 %v27, 2147483648
  %v92 = vxor.u32 %v28, 2147483648
  %v93 = vxor.u32 %v29, 2147483648
  %v94 = vxor.u32 %v30, 2147483648
  %v95 = vxor.u32 %v31, 2147483648
  %v96 = vxor.u32 %v32, 2147483648
  %v97 = vxor.u32 %v33, 2147483648
  %v98 = vxor.u32 %v34, 2147483648
  %v99 = vxor.u32 %v35, 2147483648
  %v100 = vxor.u32 %v36, 2147483648
  %v101 = vxor.u32 %v37, 2147483648
  %v102 = vxor.u32 %v38, 2147483648
  %v103 = vxor.u32 %v39, 2147483648
  %v104 = vxor.u32 %v40, 2147483648
  %v105 = vxor.u32 %v41, 2147483648
  %v106 = vxor.u32 %v42, 2147483648
  %v107 = vxor.u32 %v43, 2147483648
  %v108 = vxor.u32 %v44, 2147483648
  %v109 = vxor.u32 %v45, 2147483648
  %v110 = vxor.u32 %v46, 2147483648
  %v111 = vxor.u32 %v47, 2147483648
  %v112 = vxor.u32 %v48, 2147483648
  %v113 = vxor.u32 %v49, 2147483648
  %v114 = vxor.u32 %v50, 2147483648
  %v115 = vxor.u32 %v51, 2147483648
  %v116 = vxor.u32 %v52, 2147483648
  %v117 = vxor.u32 %v53, 2147483648
  %v118 = vxor.u32 %v54, 2147483648
  %v119 = vxor.u32 %v55, 2147483648
  %v120 = vxor.u32 %v56, 2147483648
  %v121 = vxor.u32 %v57, 2147483648
  %v122 = vxor.u32 %v58, 2147483648
  %v123 = vxor.u32 %v59, 2147483648
  %v124 = vxor.u32 %v60, 2147483648
  %v125 = vxor.u32 %v61, 2147483648
  %v126 = vxor.u32 %v62, 2147483648
  %v127 = vxor.u32 %v63, 2147483648
  %v128 = vxor.u32 %v64, 2147483648
  %v129 = vxor.u32 %v65, 2147483648
  %v130 = vxor.u32 %v66, 2147483648
  %v131 = vxor.u32 %v67, 2147483648
  %v132 = vxor.u32 %v68, 2147483648
  %v133 = vxor.u32 %v69, 2147483648
  %v134 = vxor.u32 %v70, 2147483648
  %v135 = vxor.u32 %v71, 2147483648
  %v136 = vxor.u32 %v72, 2147483648
  %v137 = vxor.u32 %v73, 2147483648
  %v138 = vxor.u32 %v74, 2147483648
  %v139 = vxor.u32 %v75, 2147483648
  %v140 = vxor.u32 %v76, 2147483648
  %v141 = vxor.u32 %v77, 2147483648
  %v142 = vxor.u32 %v78, 2147483648
  %v143 = vxor.u32 %v79, 2147483648
  %v144 = vxor.u32 %v80, 2147483648
  %v145 = vxor.u32 %v81, 2147483648
  %v146 = vmul.f32 %v82, 1.442695
  %v147 = vpow.pop %v146
  %v148 = vmul.f32 %v83, 1.442695
  %v149 = vpow.pop %v148
  %v150 = vmul.f32 %v84, 1.442695
  %v151 = vpow.pop %v150
  %v152 = vmul.f32 %v85, 1.442695
  %v153 = vpow.pop %v152
  %v154 = vmul.f32 %v86, 1.442695
  %v155 = vpow.pop %v154
  %v156 = vmul.f32 %v87, 1.442695
  %v157 = vpow.pop %v156
  %v158 = vmul.f32 %v88, 1.442695
  %v159 = vpow.pop %v158
  %v160 = vmul.f32 %v89, 1.442695
  %v161 = vpow.pop %v160
  %v162 = vmul.f32 %v90, 1.442695
  %v163 = vpow.pop %v162
  %v164 = vmul.f32 %v91, 1.442695
  %v165 = vpow.pop %v164
  %v166 = vmul.f32 %v92, 1.442695
  %v167 = vpow.pop %v166
  %v168 = vmul.f32 %v93, 1.442695
  %v169 = vpow.pop %v168
  %v170 = vmul.f32 %v94, 1.442695
  %v171 = vpow.pop %v170
  %v172 = vmul.f32 %v95, 1.442695
  %v173 = vpow.pop %v172
  %v174 = vmul.f32 %v96, 1.442695
  %v175 = vpow.pop %v174
  %v176 = vmul.f32 %v97, 1.442695
  %v177 = vpow.pop %v176
  %v178 = vmul.f32 %v98, 1.442695
  %v179 = vpow.pop %v178
  %v180 = vmul.f32 %v99, 1.442695
  %v181 = vpow.pop %v180
  %v182 = vmul.f32 %v100, 1.442695
  %v183 = vpow.pop %v182
  %v184 = vmul.f32 %v101, 1.442695
  %v185 = vpow.pop %v184
  %v186 = vmul.f32 %v102, 1.442695
  %v187 = vpow.pop %v186
  %v188 = vmul.f32 %v103, 1.442695
  %v189 = vpow.pop %v188
  %v190 = vmul.f32 %v104, 1.442695
  %v191 = vpow.pop %v190
  %v192 = vmul.f32 %v105, 1.442695
  %v193 = vpow.pop %v192
  %v194 = vmul.f32 %v106, 1.442695
  %v195 = vpow.pop %v194
  %v196 = vmul.f32 %v107, 1.442695
  %v197 = vpow.pop %v196
  %v198 = vmul.f32 %v108, 1.442695
  %v199 = vpow.pop %v198
  %v200 = vmul.f32 %v109, 1.442695
  %v201 = vpow.pop %v200
  %v202 = vmul.f32 %v110, 1.442695
  %v203 = vpow.pop %v202
  %v204 = vmul.f32 %v111, 1.442695
  %v205 = vpow.pop %v204
  %v206 = vmul.f32 %v112, 1.442695
  %v207 = vpow.pop %v206
  %v208 = vmul.f32 %v113, 1.442695
  %v209 = vpow.pop %v208
  %v210 = vmul.f32 %v114, 1.442695
  %v211 = vpow.pop %v210
  %v212 = vmul.f32 %v115, 1.442695
  %v213 = vpow.pop %v212
  %v214 = vmul.f32 %v116, 1.442695
  %v215 = vpow.pop %v214
  %v216 = vmul.f32 %v117, 1.442695
  %v217 = vpow.pop %v216
  %v218 = vmul.f32 %v118, 1.442695
  %v219 = vpow.pop %v218
  %v220 = vmul.f32 %v119, 1.442695
  %v221 = vpow.pop %v220
  %v222 = vmul.f32 %v120, 1.442695
  %v223 = vpow.pop %v222
  %v224 = vmul.f32 %v121, 1.442695
  %v225 = vpow.pop %v224
  %v226 = vmul.f32 %v122, 1.442695
  %v227 = vpow.pop %v226
  %v228 = vmul.f32 %v123, 1.442695
  %v229 = vpow.pop %v228
  %v230 = vmul.f32 %v124, 1.442695
  %v231 = vpow.pop %v230
  %v232 = vmul.f32 %v125, 1.442695
  %v233 = vpow.pop %v232
  %v234 = vmul.f32 %v126, 1.442695
  %v235 = vpow.pop %v234
  %v236 = vmul.f32 %v127, 1.442695
  %v237 = vpow.pop %v236
  %v238 = vmul.f32 %v128, 1.442695
  %v239 = vpow.pop %v238
  %v240 = vmul.f32 %v129, 1.442695
  %v241 = vpow.pop %v240
  %v242 = vmul.f32 %v130, 1.442695
  %v243 = vpow.pop %v242
  %v244 = vmul.f32 %v131, 1.442695
  %v245 = vpow.pop %v244
  %v246 = vmul.f32 %v132, 1.442695
  %v247 = vpow.pop %v246
  %v248 = vmul.f32 %v133, 1.442695
  %v249 = vpow.pop %v248
  %v250 = vmul.f32 %v134, 1.442695
  %v251 = vpow.pop %v250
  %v252 = vmul.f32 %v135, 1.442695
  %v253 = vpow.pop %v252
  %v254 = vmul.f32 %v136, 1.442695
  %v255 = vpow.pop %v254
  %v256 = vmul.f32 %v137, 1.442695
  %v257 = vpow.pop %v256
  %v258 = vmul.f32 %v138, 1.442695
  %v259 = vpow.pop %v258
  %v260 = vmul.f32 %v139, 1.442695
  %v261 = vpow.pop %v260
  %v262 = vmul.f32 %v140, 1.442695
  %v263 = vpow.pop %v262
  %v264 = vmul.f32 %v141, 1.442695
  %v265 = vpow.pop %v264
  %v266 = vmul.f32 %v142, 1.442695
  %v267 = vpow.pop %v266
  %v268 = vmul.f32 %v143, 1.442695
  %v269 = vpow.pop %v268
  %v270 = vmul.f32 %v144, 1.442695
  %v271 = vpow.pop %v270
  %v272 = vmul.f32 %v145, 1.442695
  %v273 = vpow.pop %v272
  %v274 = vadd.f32 %v147, 1.0
  %v275 = vadd.f32 %v149, 1.0
  %v276 = vadd.f32 %v151, 1.0
  %v277 = vadd.f32 %v153, 1.0
  %v278 = vadd.f32 %v155, 1.0
  %v279 = vadd.f32 %v157, 1.0
  %v280 = vadd.f32 %v159, 1.0
  %v281 = vadd.f32 %v161, 1.0
  %v282 = vadd.f32 %v163, 1.0
  %v283 = vadd.f32 %v165, 1.0
  %v284 = vadd.f32 %v167, 1.0
  %v285 = vadd.f32 %v169, 1.0
  %v286 = vadd.f32 %v171, 1.0
  %v287 = vadd.f32 %v173, 1.0
  %v288 = vadd.f32 %v175, 1.0
  %v289 = vadd.f32 %v177, 1.0
  %v290 = vadd.f32 %v179, 1.0
  %v291 = vadd.f32 %v181, 1.0
  %v292 = vadd.f32 %v183, 1.0
  %v293 = vadd.f32 %v185, 1.0
  %v294 = vadd.f32 %v187, 1.0
  %v295 = vadd.f32 %v189, 1.0
  %v296 = vadd.f32 %v191, 1.0
  %v297 = vadd.f32 %v193, 1.0
  %v298 = vadd.f32 %v195, 1.0
  %v299 = vadd.f32 %v197, 1.0
  %v300 = vadd.f32 %v199, 1.0
  %v301 = vadd.f32 %v201, 1.0
  %v302 = vadd.f32 %v203, 1.0
  %v303 = vadd.f32 %v205, 1.0
  %v304 = vadd.f32 %v207, 1.0
  %v305 = vadd.f32 %v209, 1.0
  %v306 = vadd.f32 %v211, 1.0
  %v307 = vadd.f32 %v213, 1.0
  %v308 = vadd.f32 %v215, 1.0
  %v309 = vadd.f32 %v217, 1.0
  %v310 = vadd.f32 %v219, 1.0
  %v311 = vadd.f32 %v221, 1.0
  %v312 = vadd.f32 %v223, 1.0
  %v313 = vadd.f32 %v225, 1.0
  %v314 = vadd.f32 %v227, 1.0
  %v315 = vadd.f32 %v229, 1.0
  %v316 = vadd.f32 %v231, 1.0
  %v317 = vadd.f32 %v233, 1.0
  %v318 = vadd.f32 %v235, 1.0
  %v319 = vadd.f32 %v237, 1.0
  %v320 = vadd.f32 %v239, 1.0
  %v321 = vadd.f32 %v241, 1.0
  %v322 = vadd.f32 %v243, 1.0
  %v323 = vadd.f32 %v245, 1.0
  %v324 = vadd.f32 %v247, 1.0
  %v325 = vadd.f32 %v249, 1.0
  %v326 = vadd.f32 %v251, 1.0
  %v327 = vadd.f32 %v253, 1.0
  %v328 = vadd.f32 %v255, 1.0
  %v329 = vadd.f32 %v257, 1.0
  %v330 = vadd.f32 %v259, 1.0
  %v331 = vadd.f32 %v261, 1.0
  %v332 = vadd.f32 %v263, 1.0
  %v333 = vadd.f32 %v265, 1.0
  %v334 = vadd.f32 %v267, 1.0
  %v335 = vadd.f32 %v269, 1.0
  %v336 = vadd.f32 %v271, 1.0
  %v337 = vadd.f32 %v273, 1.0
  %v338 = vrcp.pop %v274
  %v339 = vmul.f32 1.0, %v338
  %v340 = vrcp.pop %v275
  %v341 = vmul.f32 1.0, %v340
  %v342 = vrcp.pop %v276
  %v343 = vmul.f32 1.0, %v342
  %v344 = vrcp.pop %v277
  %v345 = vmul.f32 1.0, %v344
  %v346 = vrcp.pop %v278
  %v347 = vmul.f32 1.0, %v346
  %v348 = vrcp.pop %v279
  %v349 = vmul.f32 1.0, %v348
  %v350 = vrcp.pop %v280
  %v351 = vmul.f32 1.0, %v350
  %v352 = vrcp.pop %v281
  %v353 = vmul.f32 1.0, %v352
  %v354 = vrcp.pop %v282
  %v355 = vmul.f32 1.0, %v354
  %v356 = vrcp.pop %v283
  %v357 = vmul.f32 1.0, %v356
  %v358 = vrcp.pop %v284
  %v359 = vmul.f32 1.0, %v358
  %v360 = vrcp.pop %v285
  %v361 = vmul.f32 1.0, %v360
  %v362 = vrcp.pop %v286
  %v363 = vmul.f32 1.0, %v362
  %v364 = vrcp.pop %v287
  %v365 = vmul.f32 1.0, %v364
  %v366 = vrcp.pop %v288
  %v367 = vmul.f32 1.0, %v366
  %v368 = vrcp.pop %v289
  %v369 = vmul.f32 1.0, %v368
  %v370 = vrcp.pop %v290
  %v371 = vmul.f32 1.0, %v370
  %v372 = vrcp.pop %v291
  %v373 = vmul.f32 1.0, %v372
  %v374 = vrcp.pop %v292
  %v375 = vmul.f32 1.0, %v374
  %v376 = vrcp.pop %v293
  %v377 = vmul.f32 1.0, %v376
  %v378 = vrcp.pop %v294
  %v379 = vmul.f32 1.0, %v378
  %v380 = vrcp.pop %v295
  %v381 = vmul.f32 1.0, %v380
  %v382 = vrcp.pop %v296
  %v383 = vmul.f32 1.0, %v382
  %v384 = vrcp.pop %v297
  %v385 = vmul.f32 1.0, %v384
  %v386 = vrcp.pop %v298
  %v387 = vmul.f32 1.0, %v386
  %v388 = vrcp.pop %v299
  %v389 = vmul.f32 1.0, %v388
  %v390 = vrcp.pop %v300
  %v391 = vmul.f32 1.0, %v390
  %v392 = vrcp.pop %v301
  %v393 = vmul.f32 1.0, %v392
  %v394 = vrcp.pop %v302
  %v395 = vmul.f32 1.0, %v394
  %v396 = vrcp.pop %v303
  %v397 = vmul.f32 1.0, %v396
  %v398 = vrcp.pop %v304
  %v399 = vmul.f32 1.0, %v398
  %v400 = vrcp.pop %v305
  %v401 = vmul.f32 1.0, %v400
  %v402 = vrcp.pop %v306
  %v403 = vmul.f32 1.0, %v402
  %v404 = vrcp.pop %v307
  %v405 = vmul.f32 1.0, %v404
  %v406 = vrcp.pop %v308
  %v407 = vmul.f32 1.0, %v406
  %v408 = vrcp.pop %v309
  %v409 = vmul.f32 1.0, %v408
  %v410 = vrcp.pop %v310
  %v411 = vmul.f32 1.0, %v410
  %v412 = vrcp.pop %v311
  %v413 = vmul.f32 1.0, %v412
  %v414 = vrcp.pop %v312
  %v415 = vmul.f32 1.0, %v414
  %v416 = vrcp.pop %v313
  %v417 = vmul.f32 1.0, %v416
  %v418 = vrcp.pop %v314
  %v419 = vmul.f32 1.0, %v418
  %v420 = vrcp.pop %v315
  %v421 = vmul.f32 1.0, %v420
  %v422 = vrcp.pop %v316
  %v423 = vmul.f32 1.0, %v422
  %v424 = vrcp.pop %v317
  %v425 = vmul.f32 1.0, %v424
  %v426 = vrcp.pop %v318
  %v427 = vmul.f32 1.0, %v426
  %v428 = vrcp.pop %v319
  %v429 = vmul.f32 1.0, %v428
  %v430 = vrcp.pop %v320
  %v431 = vmul.f32 1.0, %v430
  %v432 = vrcp.pop %v321
  %v433 = vmul.f32 1.0, %v432
  %v434 = vrcp.pop %v322
  %v435 = vmul.f32 1.0, %v434
  %v436 = vrcp.pop %v323
  %v437 = vmul.f32 1.0, %v436
  %v438 = vrcp.pop %v324
  %v439 = vmul.f32 1.0, %v438
  %v440 = vrcp.pop %v325
  %v441 = vmul.f32 1.0, %v440
  %v442 = vrcp.pop %v326
  %v443 = vmul.f32 1.0, %v442
  %v444 = vrcp.pop %v327
  %v445 = vmul.f32 1.0, %v444
  %v446 = vrcp.pop %v328
  %v447 = vmul.f32 1.0, %v446
  %v448 = vrcp.pop %v329
  %v449 = vmul.f32 1.0, %v448
  %v450 = vrcp.pop %v330
  %v451 = vmul.f32 1.0, %v450
  %v452 = vrcp.pop %v331
  %v453 = vmul.f32 1.0, %v452
  %v454 = vrcp.pop %v332
  %v455 = vmul.f32 1.0, %v454
  %v456 = vrcp.pop %v333
  %v457 = vmul.f32 1.0, %v456
  %v458 = vrcp.pop %v334
  %v459 = vmul.f32 1.0, %v458
  %v460 = vrcp.pop %v335
  %v461 = vmul.f32 1.0, %v460
  %v462 = vrcp.pop %v336
  %v463 = vmul.f32 1.0, %v462
  %v464 = vrcp.pop %v337
  %v465 = vmul.f32 1.0, %v464
  %v466 = vld [vmem:[%s0] sm:$0xf]
  %v467 = vld [vmem:[%s0 + $0x4] sm:$0xf]
  %v468 = vld [vmem:[%s0 + $0x8] sm:$0xf]
  %v469 = vld [vmem:[%s0 + $0xc] sm:$0xf]
  %v470 = vld [vmem:[%s0 + $0x10] sm:$0xf]
  %v471 = vld [vmem:[%s0 + $0x14] sm:$0xf]
  %v472 = vld [vmem:[%s0 + $0x18] sm:$0xf]
  %v473 = vld [vmem:[%s0 + $0x1c] sm:$0xf]
  %v474 = vld [vmem:[%s0 + $0x20] sm:$0xf]
  %v475 = vld [vmem:[%s0 + $0x24] sm:$0xf]
  %v476 = vld [vmem:[%s0 + $0x28] sm:$0xf]
  %v477 = vld [vmem:[%s0 + $0x2c] sm:$0xf]
  %v478 = vld [vmem:[%s0 + $0x30] sm:$0xf]
  %v479 = vld [vmem:[%s0 + $0x34] sm:$0xf]
  %v480 = vld [vmem:[%s0 + $0x38] sm:$0xf]
  %v481 = vld [vmem:[%s0 + $0x3c] sm:$0xf]
  %v482 = vld [vmem:[%s0 + $0x40] sm:$0xf]
  %v483 = vld [vmem:[%s0 + $0x44] sm:$0xf]
  %v484 = vld [vmem:[%s0 + $0x48] sm:$0xf]
  %v485 = vld [vmem:[%s0 + $0x4c] sm:$0xf]
  %v486 = vld [vmem:[%s0 + $0x50] sm:$0xf]
  %v487 = vld [vmem:[%s0 + $0x54] sm:$0xf]
  %v488 = vld [vmem:[%s0 + $0x58] sm:$0xf]
  %v489 = vld [vmem:[%s0 + $0x5c] sm:$0xf]
  %v490 = vld [vmem:[%s0 + $0x60] sm:$0xf]
  %v491 = vld [vmem:[%s0 + $0x64] sm:$0xf]
  %v492 = vld [vmem:[%s0 + $0x68] sm:$0xf]
  %v493 = vld [vmem:[%s0 + $0x6c] sm:$0xf]
  %v494 = vld [vmem:[%s0 + $0x70] sm:$0xf]
  %v495 = vld [vmem:[%s0 + $0x74] sm:$0xf]
  %v496 = vld [vmem:[%s0 + $0x78] sm:$0xf]
  %v497 = vld [vmem:[%s0 + $0x7c] sm:$0xf]
  %v498 = vld [vmem:[%s0 + $0x80] sm:$0xf]
  %v499 = vld [vmem:[%s0 + $0x84] sm:$0xf]
  %v500 = vld [vmem:[%s0 + $0x88] sm:$0xf]
  %v501 = vld [vmem:[%s0 + $0x8c] sm:$0xf]
  %v502 = vld [vmem:[%s0 + $0x90] sm:$0xf]
  %v503 = vld [vmem:[%s0 + $0x94] sm:$0xf]
  %v504 = vld [vmem:[%s0 + $0x98] sm:$0xf]
  %v505 = vld [vmem:[%s0 + $0x9c] sm:$0xf]
  %v506 = vld [vmem:[%s0 + $0xa0] sm:$0xf]
  %v507 = vld [vmem:[%s0 + $0xa4] sm:$0xf]
  %v508 = vld [vmem:[%s0 + $0xa8] sm:$0xf]
  %v509 = vld [vmem:[%s0 + $0xac] sm:$0xf]
  %v510 = vld [vmem:[%s0 + $0xb0] sm:$0xf]
  %v511 = vld [vmem:[%s0 + $0xb4] sm:$0xf]
  %v512 = vld [vmem:[%s0 + $0xb8] sm:$0xf]
  %v513 = vld [vmem:[%s0 + $0xbc] sm:$0xf]
  %v514 = vld [vmem:[%s0 + $0xc0] sm:$0xf]
  %v515 = vld [vmem:[%s0 + $0xc4] sm:$0xf]
  %v516 = vld [vmem:[%s0 + $0xc8] sm:$0xf]
  %v517 = vld [vmem:[%s0 + $0xcc] sm:$0xf]
  %v518 = vld [vmem:[%s0 + $0xd0] sm:$0xf]
  %v519 = vld [vmem:[%s0 + $0xd4] sm:$0xf]
  %v520 = vld [vmem:[%s0 + $0xd8] sm:$0xf]
  %v521 = vld [vmem:[%s0 + $0xdc] sm:$0xf]
  %v522 = vld [vmem:[%s0 + $0xe0] sm:$0xf]
  %v523 = vld [vmem:[%s0 + $0xe4] sm:$0xf]
  %v524 = vld [vmem:[%s0 + $0xe8] sm:$0xf]
  %v525 = vld [vmem:[%s0 + $0xec] sm:$0xf]
  %v526 = vld [vmem:[%s0 + $0xf0] sm:$0xf]
  %v527 = vld [vmem:[%s0 + $0xf4] sm:$0xf]
  %v528 = vld [vmem:[%s0 + $0xf8] sm:$0xf]
  %v529 = vld [vmem:[%s0 + $0xfc] sm:$0xf]
  %v530 = vld [vmem:[%s2] sm:$0x3]
  %v595 = vunpack.c.l.b16 %v466
  %v596 = vunpack.c.l.b16 %v467
  %v597 = vunpack.c.l.b16 %v468
  %v598 = vunpack.c.l.b16 %v469
  %v599 = vunpack.c.l.b16 %v470
  %v600 = vunpack.c.l.b16 %v471
  %v601 = vunpack.c.l.b16 %v472
  %v602 = vunpack.c.l.b16 %v473
  %v603 = vunpack.c.l.b16 %v474
  %v604 = vunpack.c.l.b16 %v475
  %v605 = vunpack.c.l.b16 %v476
  %v606 = vunpack.c.l.b16 %v477
  %v607 = vunpack.c.l.b16 %v478
  %v608 = vunpack.c.l.b16 %v479
  %v609 = vunpack.c.l.b16 %v480
  %v610 = vunpack.c.l.b16 %v481
  %v611 = vunpack.c.l.b16 %v482
  %v612 = vunpack.c.l.b16 %v483
  %v613 = vunpack.c.l.b16 %v484
  %v614 = vunpack.c.l.b16 %v485
  %v615 = vunpack.c.l.b16 %v486
  %v616 = vunpack.c.l.b16 %v487
  %v617 = vunpack.c.l.b16 %v488
  %v618 = vunpack.c.l.b16 %v489
  %v619 = vunpack.c.l.b16 %v490
  %v620 = vunpack.c.l.b16 %v491
  %v621 = vunpack.c.l.b16 %v492
  %v622 = vunpack.c.l.b16 %v493
  %v623 = vunpack.c.l.b16 %v494
  %v624 = vunpack.c.l.b16 %v495
  %v625 = vunpack.c.l.b16 %v496
  %v626 = vunpack.c.l.b16 %v497
  %v627 = vunpack.c.l.b16 %v498
  %v628 = vunpack.c.l.b16 %v499
  %v629 = vunpack.c.l.b16 %v500
  %v630 = vunpack.c.l.b16 %v501
  %v631 = vunpack.c.l.b16 %v502
  %v632 = vunpack.c.l.b16 %v503
  %v633 = vunpack.c.l.b16 %v504
  %v634 = vunpack.c.l.b16 %v505
  %v635 = vunpack.c.l.b16 %v506
  %v636 = vunpack.c.l.b16 %v507
  %v637 = vunpack.c.l.b16 %v508
  %v638 = vunpack.c.l.b16 %v509
  %v639 = vunpack.c.l.b16 %v510
  %v640 = vunpack.c.l.b16 %v511
  %v641 = vunpack.c.l.b16 %v512
  %v642 = vunpack.c.l.b16 %v513
  %v643 = vunpack.c.l.b16 %v514
  %v644 = vunpack.c.l.b16 %v515
  %v645 = vunpack.c.l.b16 %v516
  %v646 = vunpack.c.l.b16 %v517
  %v647 = vunpack.c.l.b16 %v518
  %v648 = vunpack.c.l.b16 %v519
  %v649 = vunpack.c.l.b16 %v520
  %v650 = vunpack.c.l.b16 %v521
  %v651 = vunpack.c.l.b16 %v522
  %v652 = vunpack.c.l.b16 %v523
  %v653 = vunpack.c.l.b16 %v524
  %v654 = vunpack.c.l.b16 %v525
  %v655 = vunpack.c.l.b16 %v526
  %v656 = vunpack.c.l.b16 %v527
  %v657 = vunpack.c.l.b16 %v528
  %v658 = vunpack.c.l.b16 %v529
  %v659 = vpack.c.b16 %v596, %v595
  %v660 = vpack.c.b16 %v598, %v597
  %v661 = vpack.c.b16 %v600, %v599
  %v662 = vpack.c.b16 %v602, %v601
  %v663 = vpack.c.b16 %v604, %v603
  %v664 = vpack.c.b16 %v606, %v605
  %v665 = vpack.c.b16 %v608, %v607
  %v666 = vpack.c.b16 %v610, %v609
  %v667 = vpack.c.b16 %v612, %v611
  %v668 = vpack.c.b16 %v614, %v613
  %v669 = vpack.c.b16 %v616, %v615
  %v670 = vpack.c.b16 %v618, %v617
  %v671 = vpack.c.b16 %v620, %v619
  %v672 = vpack.c.b16 %v622, %v621
  %v673 = vpack.c.b16 %v624, %v623
  %v674 = vpack.c.b16 %v626, %v625
  %v675 = vpack.c.b16 %v628, %v627
  %v676 = vpack.c.b16 %v630, %v629
  %v677 = vpack.c.b16 %v632, %v631
  %v678 = vpack.c.b16 %v634, %v633
  %v679 = vpack.c.b16 %v636, %v635
  %v680 = vpack.c.b16 %v638, %v637
  %v681 = vpack.c.b16 %v640, %v639
  %v682 = vpack.c.b16 %v642, %v641
  %v683 = vpack.c.b16 %v644, %v643
  %v684 = vpack.c.b16 %v646, %v645
  %v685 = vpack.c.b16 %v648, %v647
  %v686 = vpack.c.b16 %v650, %v649
  %v687 = vpack.c.b16 %v652, %v651
  %v688 = vpack.c.b16 %v654, %v653
  %v689 = vpack.c.b16 %v656, %v655
  %v690 = vpack.c.b16 %v658, %v657
  %vm691 = vcmask 31744
  %v693 = vsel %vm691, %v659, 0
  %v696 = vsel %vm691, %v660, 0
  %v699 = vsel %vm691, %v661, 0
  %v702 = vsel %vm691, %v662, 0
  %v705 = vsel %vm691, %v663, 0
  %v708 = vsel %vm691, %v664, 0
  %v711 = vsel %vm691, %v665, 0
  %v714 = vsel %vm691, %v666, 0
  %v717 = vsel %vm691, %v667, 0
  %v720 = vsel %vm691, %v668, 0
  %v723 = vsel %vm691, %v669, 0
  %v726 = vsel %vm691, %v670, 0
  %v729 = vsel %vm691, %v671, 0
  %v732 = vsel %vm691, %v672, 0
  %v735 = vsel %vm691, %v673, 0
  %v738 = vsel %vm691, %v674, 0
  %v741 = vsel %vm691, %v675, 0
  %v744 = vsel %vm691, %v676, 0
  %v747 = vsel %vm691, %v677, 0
  %v750 = vsel %vm691, %v678, 0
  %v753 = vsel %vm691, %v679, 0
  %v756 = vsel %vm691, %v680, 0
  %v759 = vsel %vm691, %v681, 0
  %v762 = vsel %vm691, %v682, 0
  %v765 = vsel %vm691, %v683, 0
  %v768 = vsel %vm691, %v684, 0
  %v771 = vsel %vm691, %v685, 0
  %v774 = vsel %vm691, %v686, 0
  %v777 = vsel %vm691, %v687, 0
  %v780 = vsel %vm691, %v688, 0
  %v783 = vsel %vm691, %v689, 0
  %v786 = vsel %vm691, %v690, 0
  %vm788 = vcmask 1041408
  %v790 = vsel %vm788, %v530, 0
  %792 = vmatprep.subr.bf16.mxu0 0
  %793 = vmatpush1.bf16.msra.mxu0 0
  %794 = vmatprep.subr.bf16.mxu0 0
  %795 = vmatpush1.bf16.msra.mxu0 0
  %796 = vmatprep.subr.bf16.mxu0 0
  %797 = vmatpush1.bf16.msra.mxu0 0
  %798 = vmatprep.subr.bf16.mxu0 0
  %799 = vmatpush1.bf16.msra.mxu0 0
  %800 = vmatprep.subr.bf16.mxu0 0
  %801 = vmatpush1.bf16.msra.mxu0 0
  %802 = vmatprep.subr.bf16.mxu0 0
  %803 = vmatpush1.bf16.msra.mxu0 0
  %804 = vmatprep.subr.bf16.mxu0 0
  %805 = vmatpush1.bf16.msra.mxu0 0
  %806 = vmatprep.subr.bf16.mxu0 0
  %807 = vmatpush1.bf16.msra.mxu0 %v790
  %808 = vmatprep.subr.bf16.mxu0 0
  %809 = vmatpush2.bf16.msra.mxu0 0
  %810 = vmatprep.subr.bf16.mxu0 0
  %811 = vmatpush2.bf16.msra.mxu0 0
  %812 = vmatprep.subr.bf16.mxu0 0
  %813 = vmatpush2.bf16.msra.mxu0 0
  %814 = vmatprep.subr.bf16.mxu0 0
  %815 = vmatpush2.bf16.msra.mxu0 0
  %816 = vmatprep.subr.bf16.mxu0 0
  %817 = vmatpush2.bf16.msra.mxu0 0
  %818 = vmatprep.subr.bf16.mxu0 0
  %819 = vmatpush2.bf16.msra.mxu0 0
  %820 = vmatprep.subr.bf16.mxu0 0
  %821 = vmatpush2.bf16.msra.mxu0 0
  %822 = vmatprep.subr.bf16.mxu0 0
  %823 = vmatpush2.bf16.msra.mxu0 0
  %824 = vmatprep.mubr.bf16.mxu0 0
  %825 = vmatmul.mubr.bf16.gmra.mxu0 %v693
  %v826 = vpop.f32.mrf.mxu0
  %v827 = vadd.f32 0.0, %v826
  %v828 = vpop.f32.mrf.mxu0
  %v829 = vpop.f32.mrf.mxu0
  %v830 = vadd.f32 0.0, %v829
  %v831 = vpop.f32.mrf.mxu0
  %832 = vmatprep.mubr.bf16.mxu0 0
  %833 = vmatmul.mubr.bf16.gmra.mxu0 %v696
  %v834 = vpop.f32.mrf.mxu0
  %v835 = vadd.f32 0.0, %v834
  %v836 = vpop.f32.mrf.mxu0
  %v837 = vpop.f32.mrf.mxu0
  %v838 = vadd.f32 0.0, %v837
  %v839 = vpop.f32.mrf.mxu0
  %840 = vmatprep.mubr.bf16.mxu0 0
  %841 = vmatmul.mubr.bf16.gmra.mxu0 %v699
  %v842 = vpop.f32.mrf.mxu0
  %v843 = vadd.f32 0.0, %v842
  %v844 = vpop.f32.mrf.mxu0
  %v845 = vpop.f32.mrf.mxu0
  %v846 = vadd.f32 0.0, %v845
  %v847 = vpop.f32.mrf.mxu0
  %848 = vmatprep.mubr.bf16.mxu0 0
  %849 = vmatmul.mubr.bf16.gmra.mxu0 %v702
  %v850 = vpop.f32.mrf.mxu0
  %v851 = vadd.f32 0.0, %v850
  %v852 = vpop.f32.mrf.mxu0
  %v853 = vpop.f32.mrf.mxu0
  %v854 = vadd.f32 0.0, %v853
  %v855 = vpop.f32.mrf.mxu0
  %856 = vmatprep.mubr.bf16.mxu0 0
  %857 = vmatmul.mubr.bf16.gmra.mxu0 %v705
  %v858 = vpop.f32.mrf.mxu0
  %v859 = vadd.f32 0.0, %v858
  %v860 = vpop.f32.mrf.mxu0
  %v861 = vpop.f32.mrf.mxu0
  %v862 = vadd.f32 0.0, %v861
  %v863 = vpop.f32.mrf.mxu0
  %864 = vmatprep.mubr.bf16.mxu0 0
  %865 = vmatmul.mubr.bf16.gmra.mxu0 %v708
  %v866 = vpop.f32.mrf.mxu0
  %v867 = vadd.f32 0.0, %v866
  %v868 = vpop.f32.mrf.mxu0
  %v869 = vpop.f32.mrf.mxu0
  %v870 = vadd.f32 0.0, %v869
  %v871 = vpop.f32.mrf.mxu0
  %872 = vmatprep.mubr.bf16.mxu0 0
  %873 = vmatmul.mubr.bf16.gmra.mxu0 %v711
  %v874 = vpop.f32.mrf.mxu0
  %v875 = vadd.f32 0.0, %v874
  %v876 = vpop.f32.mrf.mxu0
  %v877 = vpop.f32.mrf.mxu0
  %v878 = vadd.f32 0.0, %v877
  %v879 = vpop.f32.mrf.mxu0
  %880 = vmatprep.mubr.bf16.mxu0 0
  %881 = vmatmul.mubr.bf16.gmra.mxu0 %v714
  %v882 = vpop.f32.mrf.mxu0
  %v883 = vadd.f32 0.0, %v882
  %v884 = vpop.f32.mrf.mxu0
  %v885 = vpop.f32.mrf.mxu0
  %v886 = vadd.f32 0.0, %v885
  %v887 = vpop.f32.mrf.mxu0
  %888 = vmatprep.mubr.bf16.mxu0 0
  %889 = vmatmul.mubr.bf16.gmra.mxu0 %v717
  %v890 = vpop.f32.mrf.mxu0
  %v891 = vadd.f32 0.0, %v890
  %v892 = vpop.f32.mrf.mxu0
  %v893 = vpop.f32.mrf.mxu0
  %v894 = vadd.f32 0.0, %v893
  %v895 = vpop.f32.mrf.mxu0
  %896 = vmatprep.mubr.bf16.mxu0 0
  %897 = vmatmul.mubr.bf16.gmra.mxu0 %v720
  %v898 = vpop.f32.mrf.mxu0
  %v899 = vadd.f32 0.0, %v898
  %v900 = vpop.f32.mrf.mxu0
  %v901 = vpop.f32.mrf.mxu0
  %v902 = vadd.f32 0.0, %v901
  %v903 = vpop.f32.mrf.mxu0
  %904 = vmatprep.mubr.bf16.mxu0 0
  %905 = vmatmul.mubr.bf16.gmra.mxu0 %v723
  %v906 = vpop.f32.mrf.mxu0
  %v907 = vadd.f32 0.0, %v906
  %v908 = vpop.f32.mrf.mxu0
  %v909 = vpop.f32.mrf.mxu0
  %v910 = vadd.f32 0.0, %v909
  %v911 = vpop.f32.mrf.mxu0
  %912 = vmatprep.mubr.bf16.mxu0 0
  %913 = vmatmul.mubr.bf16.gmra.mxu0 %v726
  %v914 = vpop.f32.mrf.mxu0
  %v915 = vadd.f32 0.0, %v914
  %v916 = vpop.f32.mrf.mxu0
  %v917 = vpop.f32.mrf.mxu0
  %v918 = vadd.f32 0.0, %v917
  %v919 = vpop.f32.mrf.mxu0
  %920 = vmatprep.mubr.bf16.mxu0 0
  %921 = vmatmul.mubr.bf16.gmra.mxu0 %v729
  %v922 = vpop.f32.mrf.mxu0
  %v923 = vadd.f32 0.0, %v922
  %v924 = vpop.f32.mrf.mxu0
  %v925 = vpop.f32.mrf.mxu0
  %v926 = vadd.f32 0.0, %v925
  %v927 = vpop.f32.mrf.mxu0
  %928 = vmatprep.mubr.bf16.mxu0 0
  %929 = vmatmul.mubr.bf16.gmra.mxu0 %v732
  %v930 = vpop.f32.mrf.mxu0
  %v931 = vadd.f32 0.0, %v930
  %v932 = vpop.f32.mrf.mxu0
  %v933 = vpop.f32.mrf.mxu0
  %v934 = vadd.f32 0.0, %v933
  %v935 = vpop.f32.mrf.mxu0
  %936 = vmatprep.mubr.bf16.mxu0 0
  %937 = vmatmul.mubr.bf16.gmra.mxu0 %v735
  %v938 = vpop.f32.mrf.mxu0
  %v939 = vadd.f32 0.0, %v938
  %v940 = vpop.f32.mrf.mxu0
  %v941 = vpop.f32.mrf.mxu0
  %v942 = vadd.f32 0.0, %v941
  %v943 = vpop.f32.mrf.mxu0
  %944 = vmatprep.mubr.bf16.mxu0 0
  %945 = vmatmul.mubr.bf16.gmra.mxu0 %v738
  %v946 = vpop.f32.mrf.mxu0
  %v947 = vadd.f32 0.0, %v946
  %v948 = vpop.f32.mrf.mxu0
  %v949 = vpop.f32.mrf.mxu0
  %v950 = vadd.f32 0.0, %v949
  %v951 = vpop.f32.mrf.mxu0
  %952 = vmatprep.mubr.bf16.mxu0 0
  %953 = vmatmul.mubr.bf16.gmra.mxu0 %v741
  %v954 = vpop.f32.mrf.mxu0
  %v955 = vadd.f32 0.0, %v954
  %v956 = vpop.f32.mrf.mxu0
  %v957 = vpop.f32.mrf.mxu0
  %v958 = vadd.f32 0.0, %v957
  %v959 = vpop.f32.mrf.mxu0
  %960 = vmatprep.mubr.bf16.mxu0 0
  %961 = vmatmul.mubr.bf16.gmra.mxu0 %v744
  %v962 = vpop.f32.mrf.mxu0
  %v963 = vadd.f32 0.0, %v962
  %v964 = vpop.f32.mrf.mxu0
  %v965 = vpop.f32.mrf.mxu0
  %v966 = vadd.f32 0.0, %v965
  %v967 = vpop.f32.mrf.mxu0
  %968 = vmatprep.mubr.bf16.mxu0 0
  %969 = vmatmul.mubr.bf16.gmra.mxu0 %v747
  %v970 = vpop.f32.mrf.mxu0
  %v971 = vadd.f32 0.0, %v970
  %v972 = vpop.f32.mrf.mxu0
  %v973 = vpop.f32.mrf.mxu0
  %v974 = vadd.f32 0.0, %v973
  %v975 = vpop.f32.mrf.mxu0
  %976 = vmatprep.mubr.bf16.mxu0 0
  %977 = vmatmul.mubr.bf16.gmra.mxu0 %v750
  %v978 = vpop.f32.mrf.mxu0
  %v979 = vadd.f32 0.0, %v978
  %v980 = vpop.f32.mrf.mxu0
  %v981 = vpop.f32.mrf.mxu0
  %v982 = vadd.f32 0.0, %v981
  %v983 = vpop.f32.mrf.mxu0
  %984 = vmatprep.mubr.bf16.mxu0 0
  %985 = vmatmul.mubr.bf16.gmra.mxu0 %v753
  %v986 = vpop.f32.mrf.mxu0
  %v987 = vadd.f32 0.0, %v986
  %v988 = vpop.f32.mrf.mxu0
  %v989 = vpop.f32.mrf.mxu0
  %v990 = vadd.f32 0.0, %v989
  %v991 = vpop.f32.mrf.mxu0
  %992 = vmatprep.mubr.bf16.mxu0 0
  %993 = vmatmul.mubr.bf16.gmra.mxu0 %v756
  %v994 = vpop.f32.mrf.mxu0
  %v995 = vadd.f32 0.0, %v994
  %v996 = vpop.f32.mrf.mxu0
  %v997 = vpop.f32.mrf.mxu0
  %v998 = vadd.f32 0.0, %v997
  %v999 = vpop.f32.mrf.mxu0
  %1000 = vmatprep.mubr.bf16.mxu0 0
  %1001 = vmatmul.mubr.bf16.gmra.mxu0 %v759
  %v1002 = vpop.f32.mrf.mxu0
  %v1003 = vadd.f32 0.0, %v1002
  %v1004 = vpop.f32.mrf.mxu0
  %v1005 = vpop.f32.mrf.mxu0
  %v1006 = vadd.f32 0.0, %v1005
  %v1007 = vpop.f32.mrf.mxu0
  %1008 = vmatprep.mubr.bf16.mxu0 0
  %1009 = vmatmul.mubr.bf16.gmra.mxu0 %v762
  %v1010 = vpop.f32.mrf.mxu0
  %v1011 = vadd.f32 0.0, %v1010
  %v1012 = vpop.f32.mrf.mxu0
  %v1013 = vpop.f32.mrf.mxu0
  %v1014 = vadd.f32 0.0, %v1013
  %v1015 = vpop.f32.mrf.mxu0
  %1016 = vmatprep.mubr.bf16.mxu0 0
  %1017 = vmatmul.mubr.bf16.gmra.mxu0 %v765
  %v1018 = vpop.f32.mrf.mxu0
  %v1019 = vadd.f32 0.0, %v1018
  %v1020 = vpop.f32.mrf.mxu0
  %v1021 = vpop.f32.mrf.mxu0
  %v1022 = vadd.f32 0.0, %v1021
  %v1023 = vpop.f32.mrf.mxu0
  %1024 = vmatprep.mubr.bf16.mxu0 0
  %1025 = vmatmul.mubr.bf16.gmra.mxu0 %v768
  %v1026 = vpop.f32.mrf.mxu0
  %v1027 = vadd.f32 0.0, %v1026
  %v1028 = vpop.f32.mrf.mxu0
  %v1029 = vpop.f32.mrf.mxu0
  %v1030 = vadd.f32 0.0, %v1029
  %v1031 = vpop.f32.mrf.mxu0
  %1032 = vmatprep.mubr.bf16.mxu0 0
  %1033 = vmatmul.mubr.bf16.gmra.mxu0 %v771
  %v1034 = vpop.f32.mrf.mxu0
  %v1035 = vadd.f32 0.0, %v1034
  %v1036 = vpop.f32.mrf.mxu0
  %v1037 = vpop.f32.mrf.mxu0
  %v1038 = vadd.f32 0.0, %v1037
  %v1039 = vpop.f32.mrf.mxu0
  %1040 = vmatprep.mubr.bf16.mxu0 0
  %1041 = vmatmul.mubr.bf16.gmra.mxu0 %v774
  %v1042 = vpop.f32.mrf.mxu0
  %v1043 = vadd.f32 0.0, %v1042
  %v1044 = vpop.f32.mrf.mxu0
  %v1045 = vpop.f32.mrf.mxu0
  %v1046 = vadd.f32 0.0, %v1045
  %v1047 = vpop.f32.mrf.mxu0
  %1048 = vmatprep.mubr.bf16.mxu0 0
  %1049 = vmatmul.mubr.bf16.gmra.mxu0 %v777
  %v1050 = vpop.f32.mrf.mxu0
  %v1051 = vadd.f32 0.0, %v1050
  %v1052 = vpop.f32.mrf.mxu0
  %v1053 = vpop.f32.mrf.mxu0
  %v1054 = vadd.f32 0.0, %v1053
  %v1055 = vpop.f32.mrf.mxu0
  %1056 = vmatprep.mubr.bf16.mxu0 0
  %1057 = vmatmul.mubr.bf16.gmra.mxu0 %v780
  %v1058 = vpop.f32.mrf.mxu0
  %v1059 = vadd.f32 0.0, %v1058
  %v1060 = vpop.f32.mrf.mxu0
  %v1061 = vpop.f32.mrf.mxu0
  %v1062 = vadd.f32 0.0, %v1061
  %v1063 = vpop.f32.mrf.mxu0
  %1064 = vmatprep.mubr.bf16.mxu0 0
  %1065 = vmatmul.mubr.bf16.gmra.mxu0 %v783
  %v1066 = vpop.f32.mrf.mxu0
  %v1067 = vadd.f32 0.0, %v1066
  %v1068 = vpop.f32.mrf.mxu0
  %v1069 = vpop.f32.mrf.mxu0
  %v1070 = vadd.f32 0.0, %v1069
  %v1071 = vpop.f32.mrf.mxu0
  %1072 = vmatprep.mubr.bf16.mxu0 0
  %1073 = vmatmul.mubr.bf16.gmra.mxu0 %v786
  %v1074 = vpop.f32.mrf.mxu0
  %v1075 = vadd.f32 0.0, %v1074
  %v1076 = vpop.f32.mrf.mxu0
  %v1077 = vpop.f32.mrf.mxu0
  %v1078 = vadd.f32 0.0, %v1077
  %v1079 = vpop.f32.mrf.mxu0
  %1080 = vdwg.mxu0
  %1082 = vset.pattern.permute.xlu0 0
  %1083 = vperm.xlu0 %1082, %v339
  %v1084 = vpop.permute.xlu0 %1083
  %1087 = vset.pattern.permute.xlu0 0
  %1088 = vperm.xlu0 %1087, %v341
  %v1089 = vpop.permute.xlu0 %1088
  %1092 = vset.pattern.permute.xlu0 0
  %1093 = vperm.xlu0 %1092, %v343
  %v1094 = vpop.permute.xlu0 %1093
  %1097 = vset.pattern.permute.xlu0 0
  %1098 = vperm.xlu0 %1097, %v345
  %v1099 = vpop.permute.xlu0 %1098
  %1102 = vset.pattern.permute.xlu0 0
  %1103 = vperm.xlu0 %1102, %v347
  %v1104 = vpop.permute.xlu0 %1103
  %1107 = vset.pattern.permute.xlu0 0
  %1108 = vperm.xlu0 %1107, %v349
  %v1109 = vpop.permute.xlu0 %1108
  %1112 = vset.pattern.permute.xlu0 0
  %1113 = vperm.xlu0 %1112, %v351
  %v1114 = vpop.permute.xlu0 %1113
  %1117 = vset.pattern.permute.xlu0 0
  %1118 = vperm.xlu0 %1117, %v353
  %v1119 = vpop.permute.xlu0 %1118
  %1122 = vset.pattern.permute.xlu0 0
  %1123 = vperm.xlu0 %1122, %v355
  %v1124 = vpop.permute.xlu0 %1123
  %1127 = vset.pattern.permute.xlu0 0
  %1128 = vperm.xlu0 %1127, %v357
  %v1129 = vpop.permute.xlu0 %1128
  %1132 = vset.pattern.permute.xlu0 0
  %1133 = vperm.xlu0 %1132, %v359
  %v1134 = vpop.permute.xlu0 %1133
  %1137 = vset.pattern.permute.xlu0 0
  %1138 = vperm.xlu0 %1137, %v361
  %v1139 = vpop.permute.xlu0 %1138
  %1142 = vset.pattern.permute.xlu0 0
  %1143 = vperm.xlu0 %1142, %v363
  %v1144 = vpop.permute.xlu0 %1143
  %1147 = vset.pattern.permute.xlu0 0
  %1148 = vperm.xlu0 %1147, %v365
  %v1149 = vpop.permute.xlu0 %1148
  %1152 = vset.pattern.permute.xlu0 0
  %1153 = vperm.xlu0 %1152, %v367
  %v1154 = vpop.permute.xlu0 %1153
  %1157 = vset.pattern.permute.xlu0 0
  %1158 = vperm.xlu0 %1157, %v369
  %v1159 = vpop.permute.xlu0 %1158
  %1162 = vset.pattern.permute.xlu0 0
  %1163 = vperm.xlu0 %1162, %v371
  %v1164 = vpop.permute.xlu0 %1163
  %1167 = vset.pattern.permute.xlu0 0
  %1168 = vperm.xlu0 %1167, %v373
  %v1169 = vpop.permute.xlu0 %1168
  %1172 = vset.pattern.permute.xlu0 0
  %1173 = vperm.xlu0 %1172, %v375
  %v1174 = vpop.permute.xlu0 %1173
  %1177 = vset.pattern.permute.xlu0 0
  %1178 = vperm.xlu0 %1177, %v377
  %v1179 = vpop.permute.xlu0 %1178
  %1182 = vset.pattern.permute.xlu0 0
  %1183 = vperm.xlu0 %1182, %v379
  %v1184 = vpop.permute.xlu0 %1183
  %1187 = vset.pattern.permute.xlu0 0
  %1188 = vperm.xlu0 %1187, %v381
  %v1189 = vpop.permute.xlu0 %1188
  %1192 = vset.pattern.permute.xlu0 0
  %1193 = vperm.xlu0 %1192, %v383
  %v1194 = vpop.permute.xlu0 %1193
  %1197 = vset.pattern.permute.xlu0 0
  %1198 = vperm.xlu0 %1197, %v385
  %v1199 = vpop.permute.xlu0 %1198
  %1202 = vset.pattern.permute.xlu0 0
  %1203 = vperm.xlu0 %1202, %v387
  %v1204 = vpop.permute.xlu0 %1203
  %1207 = vset.pattern.permute.xlu0 0
  %1208 = vperm.xlu0 %1207, %v389
  %v1209 = vpop.permute.xlu0 %1208
  %1212 = vset.pattern.permute.xlu0 0
  %1213 = vperm.xlu0 %1212, %v391
  %v1214 = vpop.permute.xlu0 %1213
  %1217 = vset.pattern.permute.xlu0 0
  %1218 = vperm.xlu0 %1217, %v393
  %v1219 = vpop.permute.xlu0 %1218
  %1222 = vset.pattern.permute.xlu0 0
  %1223 = vperm.xlu0 %1222, %v395
  %v1224 = vpop.permute.xlu0 %1223
  %1227 = vset.pattern.permute.xlu0 0
  %1228 = vperm.xlu0 %1227, %v397
  %v1229 = vpop.permute.xlu0 %1228
  %1232 = vset.pattern.permute.xlu0 0
  %1233 = vperm.xlu0 %1232, %v399
  %v1234 = vpop.permute.xlu0 %1233
  %1237 = vset.pattern.permute.xlu0 0
  %1238 = vperm.xlu0 %1237, %v401
  %v1239 = vpop.permute.xlu0 %1238
  %1242 = vset.pattern.permute.xlu0 0
  %1243 = vperm.xlu0 %1242, %v403
  %v1244 = vpop.permute.xlu0 %1243
  %1247 = vset.pattern.permute.xlu0 0
  %1248 = vperm.xlu0 %1247, %v405
  %v1249 = vpop.permute.xlu0 %1248
  %1252 = vset.pattern.permute.xlu0 0
  %1253 = vperm.xlu0 %1252, %v407
  %v1254 = vpop.permute.xlu0 %1253
  %1257 = vset.pattern.permute.xlu0 0
  %1258 = vperm.xlu0 %1257, %v409
  %v1259 = vpop.permute.xlu0 %1258
  %1262 = vset.pattern.permute.xlu0 0
  %1263 = vperm.xlu0 %1262, %v411
  %v1264 = vpop.permute.xlu0 %1263
  %1267 = vset.pattern.permute.xlu0 0
  %1268 = vperm.xlu0 %1267, %v413
  %v1269 = vpop.permute.xlu0 %1268
  %1272 = vset.pattern.permute.xlu0 0
  %1273 = vperm.xlu0 %1272, %v415
  %v1274 = vpop.permute.xlu0 %1273
  %1277 = vset.pattern.permute.xlu0 0
  %1278 = vperm.xlu0 %1277, %v417
  %v1279 = vpop.permute.xlu0 %1278
  %1282 = vset.pattern.permute.xlu0 0
  %1283 = vperm.xlu0 %1282, %v419
  %v1284 = vpop.permute.xlu0 %1283
  %1287 = vset.pattern.permute.xlu0 0
  %1288 = vperm.xlu0 %1287, %v421
  %v1289 = vpop.permute.xlu0 %1288
  %1292 = vset.pattern.permute.xlu0 0
  %1293 = vperm.xlu0 %1292, %v423
  %v1294 = vpop.permute.xlu0 %1293
  %1297 = vset.pattern.permute.xlu0 0
  %1298 = vperm.xlu0 %1297, %v425
  %v1299 = vpop.permute.xlu0 %1298
  %1302 = vset.pattern.permute.xlu0 0
  %1303 = vperm.xlu0 %1302, %v427
  %v1304 = vpop.permute.xlu0 %1303
  %1307 = vset.pattern.permute.xlu0 0
  %1308 = vperm.xlu0 %1307, %v429
  %v1309 = vpop.permute.xlu0 %1308
  %1312 = vset.pattern.permute.xlu0 0
  %1313 = vperm.xlu0 %1312, %v431
  %v1314 = vpop.permute.xlu0 %1313
  %1317 = vset.pattern.permute.xlu0 0
  %1318 = vperm.xlu0 %1317, %v433
  %v1319 = vpop.permute.xlu0 %1318
  %1322 = vset.pattern.permute.xlu0 0
  %1323 = vperm.xlu0 %1322, %v435
  %v1324 = vpop.permute.xlu0 %1323
  %1327 = vset.pattern.permute.xlu0 0
  %1328 = vperm.xlu0 %1327, %v437
  %v1329 = vpop.permute.xlu0 %1328
  %1332 = vset.pattern.permute.xlu0 0
  %1333 = vperm.xlu0 %1332, %v439
  %v1334 = vpop.permute.xlu0 %1333
  %1337 = vset.pattern.permute.xlu0 0
  %1338 = vperm.xlu0 %1337, %v441
  %v1339 = vpop.permute.xlu0 %1338
  %1342 = vset.pattern.permute.xlu0 0
  %1343 = vperm.xlu0 %1342, %v443
  %v1344 = vpop.permute.xlu0 %1343
  %1347 = vset.pattern.permute.xlu0 0
  %1348 = vperm.xlu0 %1347, %v445
  %v1349 = vpop.permute.xlu0 %1348
  %1352 = vset.pattern.permute.xlu0 0
  %1353 = vperm.xlu0 %1352, %v447
  %v1354 = vpop.permute.xlu0 %1353
  %1357 = vset.pattern.permute.xlu0 0
  %1358 = vperm.xlu0 %1357, %v449
  %v1359 = vpop.permute.xlu0 %1358
  %1362 = vset.pattern.permute.xlu0 0
  %1363 = vperm.xlu0 %1362, %v451
  %v1364 = vpop.permute.xlu0 %1363
  %1367 = vset.pattern.permute.xlu0 0
  %1368 = vperm.xlu0 %1367, %v453
  %v1369 = vpop.permute.xlu0 %1368
  %1372 = vset.pattern.permute.xlu0 0
  %1373 = vperm.xlu0 %1372, %v455
  %v1374 = vpop.permute.xlu0 %1373
  %1377 = vset.pattern.permute.xlu0 0
  %1378 = vperm.xlu0 %1377, %v457
  %v1379 = vpop.permute.xlu0 %1378
  %1382 = vset.pattern.permute.xlu0 0
  %1383 = vperm.xlu0 %1382, %v459
  %v1384 = vpop.permute.xlu0 %1383
  %1387 = vset.pattern.permute.xlu0 0
  %1388 = vperm.xlu0 %1387, %v461
  %v1389 = vpop.permute.xlu0 %1388
  %1392 = vset.pattern.permute.xlu0 0
  %1393 = vperm.xlu0 %1392, %v463
  %v1394 = vpop.permute.xlu0 %1393
  %1397 = vset.pattern.permute.xlu0 0
  %1398 = vperm.xlu0 %1397, %v465
  %v1399 = vpop.permute.xlu0 %1398
  %v1401 = vmul.f32 %v1084, %v827
  %v1402 = vmul.f32 %v1089, %v830
  %v1403 = vmul.f32 %v1094, %v835
  %v1404 = vmul.f32 %v1099, %v838
  %v1405 = vmul.f32 %v1104, %v843
  %v1406 = vmul.f32 %v1109, %v846
  %v1407 = vmul.f32 %v1114, %v851
  %v1408 = vmul.f32 %v1119, %v854
  %v1409 = vmul.f32 %v1124, %v859
  %v1410 = vmul.f32 %v1129, %v862
  %v1411 = vmul.f32 %v1134, %v867
  %v1412 = vmul.f32 %v1139, %v870
  %v1413 = vmul.f32 %v1144, %v875
  %v1414 = vmul.f32 %v1149, %v878
  %v1415 = vmul.f32 %v1154, %v883
  %v1416 = vmul.f32 %v1159, %v886
  %v1417 = vmul.f32 %v1164, %v891
  %v1418 = vmul.f32 %v1169, %v894
  %v1419 = vmul.f32 %v1174, %v899
  %v1420 = vmul.f32 %v1179, %v902
  %v1421 = vmul.f32 %v1184, %v907
  %v1422 = vmul.f32 %v1189, %v910
  %v1423 = vmul.f32 %v1194, %v915
  %v1424 = vmul.f32 %v1199, %v918
  %v1425 = vmul.f32 %v1204, %v923
  %v1426 = vmul.f32 %v1209, %v926
  %v1427 = vmul.f32 %v1214, %v931
  %v1428 = vmul.f32 %v1219, %v934
  %v1429 = vmul.f32 %v1224, %v939
  %v1430 = vmul.f32 %v1229, %v942
  %v1431 = vmul.f32 %v1234, %v947
  %v1432 = vmul.f32 %v1239, %v950
  %v1433 = vmul.f32 %v1244, %v955
  %v1434 = vmul.f32 %v1249, %v958
  %v1435 = vmul.f32 %v1254, %v963
  %v1436 = vmul.f32 %v1259, %v966
  %v1437 = vmul.f32 %v1264, %v971
  %v1438 = vmul.f32 %v1269, %v974
  %v1439 = vmul.f32 %v1274, %v979
  %v1440 = vmul.f32 %v1279, %v982
  %v1441 = vmul.f32 %v1284, %v987
  %v1442 = vmul.f32 %v1289, %v990
  %v1443 = vmul.f32 %v1294, %v995
  %v1444 = vmul.f32 %v1299, %v998
  %v1445 = vmul.f32 %v1304, %v1003
  %v1446 = vmul.f32 %v1309, %v1006
  %v1447 = vmul.f32 %v1314, %v1011
  %v1448 = vmul.f32 %v1319, %v1014
  %v1449 = vmul.f32 %v1324, %v1019
  %v1450 = vmul.f32 %v1329, %v1022
  %v1451 = vmul.f32 %v1334, %v1027
  %v1452 = vmul.f32 %v1339, %v1030
  %v1453 = vmul.f32 %v1344, %v1035
  %v1454 = vmul.f32 %v1349, %v1038
  %v1455 = vmul.f32 %v1354, %v1043
  %v1456 = vmul.f32 %v1359, %v1046
  %v1457 = vmul.f32 %v1364, %v1051
  %v1458 = vmul.f32 %v1369, %v1054
  %v1459 = vmul.f32 %v1374, %v1059
  %v1460 = vmul.f32 %v1379, %v1062
  %v1461 = vmul.f32 %v1384, %v1067
  %v1462 = vmul.f32 %v1389, %v1070
  %v1463 = vmul.f32 %v1394, %v1075
  %v1464 = vmul.f32 %v1399, %v1078
  %v1465 = vadd.f32 %v1401, 0.0
  %v1466 = vadd.f32 %v1402, 0.0
  %v1467 = vadd.f32 %v1403, 0.0
  %v1468 = vadd.f32 %v1404, 0.0
  %v1469 = vadd.f32 %v1405, 0.0
  %v1470 = vadd.f32 %v1406, 0.0
  %v1471 = vadd.f32 %v1407, 0.0
  %v1472 = vadd.f32 %v1408, 0.0
  %v1473 = vadd.f32 %v1409, 0.0
  %v1474 = vadd.f32 %v1410, 0.0
  %v1475 = vadd.f32 %v1411, 0.0
  %v1476 = vadd.f32 %v1412, 0.0
  %v1477 = vadd.f32 %v1413, 0.0
  %v1478 = vadd.f32 %v1414, 0.0
  %v1479 = vadd.f32 %v1415, 0.0
  %v1480 = vadd.f32 %v1416, 0.0
  %v1481 = vadd.f32 %v1417, 0.0
  %v1482 = vadd.f32 %v1418, 0.0
  %v1483 = vadd.f32 %v1419, 0.0
  %v1484 = vadd.f32 %v1420, 0.0
  %v1485 = vadd.f32 %v1421, 0.0
  %v1486 = vadd.f32 %v1422, 0.0
  %v1487 = vadd.f32 %v1423, 0.0
  %v1488 = vadd.f32 %v1424, 0.0
  %v1489 = vadd.f32 %v1425, 0.0
  %v1490 = vadd.f32 %v1426, 0.0
  %v1491 = vadd.f32 %v1427, 0.0
  %v1492 = vadd.f32 %v1428, 0.0
  %v1493 = vadd.f32 %v1429, 0.0
  %v1494 = vadd.f32 %v1430, 0.0
  %v1495 = vadd.f32 %v1431, 0.0
  %v1496 = vadd.f32 %v1432, 0.0
  %v1497 = vadd.f32 %v1433, 0.0
  %v1498 = vadd.f32 %v1434, 0.0
  %v1499 = vadd.f32 %v1435, 0.0
  %v1500 = vadd.f32 %v1436, 0.0
  %v1501 = vadd.f32 %v1437, 0.0
  %v1502 = vadd.f32 %v1438, 0.0
  %v1503 = vadd.f32 %v1439, 0.0
  %v1504 = vadd.f32 %v1440, 0.0
  %v1505 = vadd.f32 %v1441, 0.0
  %v1506 = vadd.f32 %v1442, 0.0
  %v1507 = vadd.f32 %v1443, 0.0
  %v1508 = vadd.f32 %v1444, 0.0
  %v1509 = vadd.f32 %v1445, 0.0
  %v1510 = vadd.f32 %v1446, 0.0
  %v1511 = vadd.f32 %v1447, 0.0
  %v1512 = vadd.f32 %v1448, 0.0
  %v1513 = vadd.f32 %v1449, 0.0
  %v1514 = vadd.f32 %v1450, 0.0
  %v1515 = vadd.f32 %v1451, 0.0
  %v1516 = vadd.f32 %v1452, 0.0
  %v1517 = vadd.f32 %v1453, 0.0
  %v1518 = vadd.f32 %v1454, 0.0
  %v1519 = vadd.f32 %v1455, 0.0
  %v1520 = vadd.f32 %v1456, 0.0
  %v1521 = vadd.f32 %v1457, 0.0
  %v1522 = vadd.f32 %v1458, 0.0
  %v1523 = vadd.f32 %v1459, 0.0
  %v1524 = vadd.f32 %v1460, 0.0
  %v1525 = vadd.f32 %v1461, 0.0
  %v1526 = vadd.f32 %v1462, 0.0
  %v1527 = vadd.f32 %v1463, 0.0
  %v1528 = vadd.f32 %v1464, 0.0
  %s1529 = scalar_lea.vmem %s2, 2
  %v1530 = vld [vmem:[%s1529] sm:$0x3]
  %1531 = vrot.lane.b32.xlu0 %v659, 124
  %v1532 = vpop.permute.xlu0 %1531
  %1533 = vrot.lane.b32.xlu0 %v660, 124
  %v1534 = vpop.permute.xlu0 %1533
  %1535 = vrot.lane.b32.xlu0 %v661, 124
  %v1536 = vpop.permute.xlu0 %1535
  %1537 = vrot.lane.b32.xlu0 %v662, 124
  %v1538 = vpop.permute.xlu0 %1537
  %1539 = vrot.lane.b32.xlu0 %v663, 124
  %v1540 = vpop.permute.xlu0 %1539
  %1541 = vrot.lane.b32.xlu0 %v664, 124
  %v1542 = vpop.permute.xlu0 %1541
  %1543 = vrot.lane.b32.xlu0 %v665, 124
  %v1544 = vpop.permute.xlu0 %1543
  %1545 = vrot.lane.b32.xlu0 %v666, 124
  %v1546 = vpop.permute.xlu0 %1545
  %1547 = vrot.lane.b32.xlu0 %v667, 124
  %v1548 = vpop.permute.xlu0 %1547
  %1549 = vrot.lane.b32.xlu0 %v668, 124
  %v1550 = vpop.permute.xlu0 %1549
  %1551 = vrot.lane.b32.xlu0 %v669, 124
  %v1552 = vpop.permute.xlu0 %1551
  %1553 = vrot.lane.b32.xlu0 %v670, 124
  %v1554 = vpop.permute.xlu0 %1553
  %1555 = vrot.lane.b32.xlu0 %v671, 124
  %v1556 = vpop.permute.xlu0 %1555
  %1557 = vrot.lane.b32.xlu0 %v672, 124
  %v1558 = vpop.permute.xlu0 %1557
  %1559 = vrot.lane.b32.xlu0 %v673, 124
  %v1560 = vpop.permute.xlu0 %1559
  %1561 = vrot.lane.b32.xlu0 %v674, 124
  %v1562 = vpop.permute.xlu0 %1561
  %1563 = vrot.lane.b32.xlu0 %v675, 124
  %v1564 = vpop.permute.xlu0 %1563
  %1565 = vrot.lane.b32.xlu0 %v676, 124
  %v1566 = vpop.permute.xlu0 %1565
  %1567 = vrot.lane.b32.xlu0 %v677, 124
  %v1568 = vpop.permute.xlu0 %1567
  %1569 = vrot.lane.b32.xlu0 %v678, 124
  %v1570 = vpop.permute.xlu0 %1569
  %1571 = vrot.lane.b32.xlu0 %v679, 124
  %v1572 = vpop.permute.xlu0 %1571
  %1573 = vrot.lane.b32.xlu0 %v680, 124
  %v1574 = vpop.permute.xlu0 %1573
  %1575 = vrot.lane.b32.xlu0 %v681, 124
  %v1576 = vpop.permute.xlu0 %1575
  %1577 = vrot.lane.b32.xlu0 %v682, 124
  %v1578 = vpop.permute.xlu0 %1577
  %1579 = vrot.lane.b32.xlu0 %v683, 124
  %v1580 = vpop.permute.xlu0 %1579
  %1581 = vrot.lane.b32.xlu0 %v684, 124
  %v1582 = vpop.permute.xlu0 %1581
  %1583 = vrot.lane.b32.xlu0 %v685, 124
  %v1584 = vpop.permute.xlu0 %1583
  %1585 = vrot.lane.b32.xlu0 %v686, 124
  %v1586 = vpop.permute.xlu0 %1585
  %1587 = vrot.lane.b32.xlu0 %v687, 124
  %v1588 = vpop.permute.xlu0 %1587
  %1589 = vrot.lane.b32.xlu0 %v688, 124
  %v1590 = vpop.permute.xlu0 %1589
  %1591 = vrot.lane.b32.xlu0 %v689, 124
  %v1592 = vpop.permute.xlu0 %1591
  %1593 = vrot.lane.b32.xlu0 %v690, 124
  %v1594 = vpop.permute.xlu0 %1593
  %v1596 = vsel %vm691, %v1532, 0
  %v1599 = vsel %vm691, %v1534, 0
  %v1602 = vsel %vm691, %v1536, 0
  %v1605 = vsel %vm691, %v1538, 0
  %v1608 = vsel %vm691, %v1540, 0
  %v1611 = vsel %vm691, %v1542, 0
  %v1614 = vsel %vm691, %v1544, 0
  %v1617 = vsel %vm691, %v1546, 0
  %v1620 = vsel %vm691, %v1548, 0
  %v1623 = vsel %vm691, %v1550, 0
  %v1626 = vsel %vm691, %v1552, 0
  %v1629 = vsel %vm691, %v1554, 0
  %v1632 = vsel %vm691, %v1556, 0
  %v1635 = vsel %vm691, %v1558, 0
  %v1638 = vsel %vm691, %v1560, 0
  %v1641 = vsel %vm691, %v1562, 0
  %v1644 = vsel %vm691, %v1564, 0
  %v1647 = vsel %vm691, %v1566, 0
  %v1650 = vsel %vm691, %v1568, 0
  %v1653 = vsel %vm691, %v1570, 0
  %v1656 = vsel %vm691, %v1572, 0
  %v1659 = vsel %vm691, %v1574, 0
  %v1662 = vsel %vm691, %v1576, 0
  %v1665 = vsel %vm691, %v1578, 0
  %v1668 = vsel %vm691, %v1580, 0
  %v1671 = vsel %vm691, %v1582, 0
  %v1674 = vsel %vm691, %v1584, 0
  %v1677 = vsel %vm691, %v1586, 0
  %v1680 = vsel %vm691, %v1588, 0
  %v1683 = vsel %vm691, %v1590, 0
  %v1686 = vsel %vm691, %v1592, 0
  %v1689 = vsel %vm691, %v1594, 0
  %v1692 = vsel %vm788, %v1530, 0
  %1694 = vmatprep.subr.bf16.mxu0 0
  %1695 = vmatpush1.bf16.msra.mxu0 0
  %1696 = vmatprep.subr.bf16.mxu0 0
  %1697 = vmatpush1.bf16.msra.mxu0 0
  %1698 = vmatprep.subr.bf16.mxu0 0
  %1699 = vmatpush1.bf16.msra.mxu0 0
  %1700 = vmatprep.subr.bf16.mxu0 0
  %1701 = vmatpush1.bf16.msra.mxu0 0
  %1702 = vmatprep.subr.bf16.mxu0 0
  %1703 = vmatpush1.bf16.msra.mxu0 0
  %1704 = vmatprep.subr.bf16.mxu0 0
  %1705 = vmatpush1.bf16.msra.mxu0 0
  %1706 = vmatprep.subr.bf16.mxu0 0
  %1707 = vmatpush1.bf16.msra.mxu0 0
  %1708 = vmatprep.subr.bf16.mxu0 0
  %1709 = vmatpush1.bf16.msra.mxu0 %v1692
  %1710 = vmatprep.subr.bf16.mxu0 0
  %1711 = vmatpush2.bf16.msra.mxu0 0
  %1712 = vmatprep.subr.bf16.mxu0 0
  %1713 = vmatpush2.bf16.msra.mxu0 0
  %1714 = vmatprep.subr.bf16.mxu0 0
  %1715 = vmatpush2.bf16.msra.mxu0 0
  %1716 = vmatprep.subr.bf16.mxu0 0
  %1717 = vmatpush2.bf16.msra.mxu0 0
  %1718 = vmatprep.subr.bf16.mxu0 0
  %1719 = vmatpush2.bf16.msra.mxu0 0
  %1720 = vmatprep.subr.bf16.mxu0 0
  %1721 = vmatpush2.bf16.msra.mxu0 0
  %1722 = vmatprep.subr.bf16.mxu0 0
  %1723 = vmatpush2.bf16.msra.mxu0 0
  %1724 = vmatprep.subr.bf16.mxu0 0
  %1725 = vmatpush2.bf16.msra.mxu0 0
  %1726 = vmatprep.mubr.bf16.mxu0 0
  %1727 = vmatmul.mubr.bf16.gmra.mxu0 %v1596
  %v1728 = vpop.f32.mrf.mxu0
  %v1729 = vadd.f32 0.0, %v1728
  %v1730 = vpop.f32.mrf.mxu0
  %v1731 = vpop.f32.mrf.mxu0
  %v1732 = vadd.f32 0.0, %v1731
  %v1733 = vpop.f32.mrf.mxu0
  %1734 = vmatprep.mubr.bf16.mxu0 0
  %1735 = vmatmul.mubr.bf16.gmra.mxu0 %v1599
  %v1736 = vpop.f32.mrf.mxu0
  %v1737 = vadd.f32 0.0, %v1736
  %v1738 = vpop.f32.mrf.mxu0
  %v1739 = vpop.f32.mrf.mxu0
  %v1740 = vadd.f32 0.0, %v1739
  %v1741 = vpop.f32.mrf.mxu0
  %1742 = vmatprep.mubr.bf16.mxu0 0
  %1743 = vmatmul.mubr.bf16.gmra.mxu0 %v1602
  %v1744 = vpop.f32.mrf.mxu0
  %v1745 = vadd.f32 0.0, %v1744
  %v1746 = vpop.f32.mrf.mxu0
  %v1747 = vpop.f32.mrf.mxu0
  %v1748 = vadd.f32 0.0, %v1747
  %v1749 = vpop.f32.mrf.mxu0
  %1750 = vmatprep.mubr.bf16.mxu0 0
  %1751 = vmatmul.mubr.bf16.gmra.mxu0 %v1605
  %v1752 = vpop.f32.mrf.mxu0
  %v1753 = vadd.f32 0.0, %v1752
  %v1754 = vpop.f32.mrf.mxu0
  %v1755 = vpop.f32.mrf.mxu0
  %v1756 = vadd.f32 0.0, %v1755
  %v1757 = vpop.f32.mrf.mxu0
  %1758 = vmatprep.mubr.bf16.mxu0 0
  %1759 = vmatmul.mubr.bf16.gmra.mxu0 %v1608
  %v1760 = vpop.f32.mrf.mxu0
  %v1761 = vadd.f32 0.0, %v1760
  %v1762 = vpop.f32.mrf.mxu0
  %v1763 = vpop.f32.mrf.mxu0
  %v1764 = vadd.f32 0.0, %v1763
  %v1765 = vpop.f32.mrf.mxu0
  %1766 = vmatprep.mubr.bf16.mxu0 0
  %1767 = vmatmul.mubr.bf16.gmra.mxu0 %v1611
  %v1768 = vpop.f32.mrf.mxu0
  %v1769 = vadd.f32 0.0, %v1768
  %v1770 = vpop.f32.mrf.mxu0
  %v1771 = vpop.f32.mrf.mxu0
  %v1772 = vadd.f32 0.0, %v1771
  %v1773 = vpop.f32.mrf.mxu0
  %1774 = vmatprep.mubr.bf16.mxu0 0
  %1775 = vmatmul.mubr.bf16.gmra.mxu0 %v1614
  %v1776 = vpop.f32.mrf.mxu0
  %v1777 = vadd.f32 0.0, %v1776
  %v1778 = vpop.f32.mrf.mxu0
  %v1779 = vpop.f32.mrf.mxu0
  %v1780 = vadd.f32 0.0, %v1779
  %v1781 = vpop.f32.mrf.mxu0
  %1782 = vmatprep.mubr.bf16.mxu0 0
  %1783 = vmatmul.mubr.bf16.gmra.mxu0 %v1617
  %v1784 = vpop.f32.mrf.mxu0
  %v1785 = vadd.f32 0.0, %v1784
  %v1786 = vpop.f32.mrf.mxu0
  %v1787 = vpop.f32.mrf.mxu0
  %v1788 = vadd.f32 0.0, %v1787
  %v1789 = vpop.f32.mrf.mxu0
  %1790 = vmatprep.mubr.bf16.mxu0 0
  %1791 = vmatmul.mubr.bf16.gmra.mxu0 %v1620
  %v1792 = vpop.f32.mrf.mxu0
  %v1793 = vadd.f32 0.0, %v1792
  %v1794 = vpop.f32.mrf.mxu0
  %v1795 = vpop.f32.mrf.mxu0
  %v1796 = vadd.f32 0.0, %v1795
  %v1797 = vpop.f32.mrf.mxu0
  %1798 = vmatprep.mubr.bf16.mxu0 0
  %1799 = vmatmul.mubr.bf16.gmra.mxu0 %v1623
  %v1800 = vpop.f32.mrf.mxu0
  %v1801 = vadd.f32 0.0, %v1800
  %v1802 = vpop.f32.mrf.mxu0
  %v1803 = vpop.f32.mrf.mxu0
  %v1804 = vadd.f32 0.0, %v1803
  %v1805 = vpop.f32.mrf.mxu0
  %1806 = vmatprep.mubr.bf16.mxu0 0
  %1807 = vmatmul.mubr.bf16.gmra.mxu0 %v1626
  %v1808 = vpop.f32.mrf.mxu0
  %v1809 = vadd.f32 0.0, %v1808
  %v1810 = vpop.f32.mrf.mxu0
  %v1811 = vpop.f32.mrf.mxu0
  %v1812 = vadd.f32 0.0, %v1811
  %v1813 = vpop.f32.mrf.mxu0
  %1814 = vmatprep.mubr.bf16.mxu0 0
  %1815 = vmatmul.mubr.bf16.gmra.mxu0 %v1629
  %v1816 = vpop.f32.mrf.mxu0
  %v1817 = vadd.f32 0.0, %v1816
  %v1818 = vpop.f32.mrf.mxu0
  %v1819 = vpop.f32.mrf.mxu0
  %v1820 = vadd.f32 0.0, %v1819
  %v1821 = vpop.f32.mrf.mxu0
  %1822 = vmatprep.mubr.bf16.mxu0 0
  %1823 = vmatmul.mubr.bf16.gmra.mxu0 %v1632
  %v1824 = vpop.f32.mrf.mxu0
  %v1825 = vadd.f32 0.0, %v1824
  %v1826 = vpop.f32.mrf.mxu0
  %v1827 = vpop.f32.mrf.mxu0
  %v1828 = vadd.f32 0.0, %v1827
  %v1829 = vpop.f32.mrf.mxu0
  %1830 = vmatprep.mubr.bf16.mxu0 0
  %1831 = vmatmul.mubr.bf16.gmra.mxu0 %v1635
  %v1832 = vpop.f32.mrf.mxu0
  %v1833 = vadd.f32 0.0, %v1832
  %v1834 = vpop.f32.mrf.mxu0
  %v1835 = vpop.f32.mrf.mxu0
  %v1836 = vadd.f32 0.0, %v1835
  %v1837 = vpop.f32.mrf.mxu0
  %1838 = vmatprep.mubr.bf16.mxu0 0
  %1839 = vmatmul.mubr.bf16.gmra.mxu0 %v1638
  %v1840 = vpop.f32.mrf.mxu0
  %v1841 = vadd.f32 0.0, %v1840
  %v1842 = vpop.f32.mrf.mxu0
  %v1843 = vpop.f32.mrf.mxu0
  %v1844 = vadd.f32 0.0, %v1843
  %v1845 = vpop.f32.mrf.mxu0
  %1846 = vmatprep.mubr.bf16.mxu0 0
  %1847 = vmatmul.mubr.bf16.gmra.mxu0 %v1641
  %v1848 = vpop.f32.mrf.mxu0
  %v1849 = vadd.f32 0.0, %v1848
  %v1850 = vpop.f32.mrf.mxu0
  %v1851 = vpop.f32.mrf.mxu0
  %v1852 = vadd.f32 0.0, %v1851
  %v1853 = vpop.f32.mrf.mxu0
  %1854 = vmatprep.mubr.bf16.mxu0 0
  %1855 = vmatmul.mubr.bf16.gmra.mxu0 %v1644
  %v1856 = vpop.f32.mrf.mxu0
  %v1857 = vadd.f32 0.0, %v1856
  %v1858 = vpop.f32.mrf.mxu0
  %v1859 = vpop.f32.mrf.mxu0
  %v1860 = vadd.f32 0.0, %v1859
  %v1861 = vpop.f32.mrf.mxu0
  %1862 = vmatprep.mubr.bf16.mxu0 0
  %1863 = vmatmul.mubr.bf16.gmra.mxu0 %v1647
  %v1864 = vpop.f32.mrf.mxu0
  %v1865 = vadd.f32 0.0, %v1864
  %v1866 = vpop.f32.mrf.mxu0
  %v1867 = vpop.f32.mrf.mxu0
  %v1868 = vadd.f32 0.0, %v1867
  %v1869 = vpop.f32.mrf.mxu0
  %1870 = vmatprep.mubr.bf16.mxu0 0
  %1871 = vmatmul.mubr.bf16.gmra.mxu0 %v1650
  %v1872 = vpop.f32.mrf.mxu0
  %v1873 = vadd.f32 0.0, %v1872
  %v1874 = vpop.f32.mrf.mxu0
  %v1875 = vpop.f32.mrf.mxu0
  %v1876 = vadd.f32 0.0, %v1875
  %v1877 = vpop.f32.mrf.mxu0
  %1878 = vmatprep.mubr.bf16.mxu0 0
  %1879 = vmatmul.mubr.bf16.gmra.mxu0 %v1653
  %v1880 = vpop.f32.mrf.mxu0
  %v1881 = vadd.f32 0.0, %v1880
  %v1882 = vpop.f32.mrf.mxu0
  %v1883 = vpop.f32.mrf.mxu0
  %v1884 = vadd.f32 0.0, %v1883
  %v1885 = vpop.f32.mrf.mxu0
  %1886 = vmatprep.mubr.bf16.mxu0 0
  %1887 = vmatmul.mubr.bf16.gmra.mxu0 %v1656
  %v1888 = vpop.f32.mrf.mxu0
  %v1889 = vadd.f32 0.0, %v1888
  %v1890 = vpop.f32.mrf.mxu0
  %v1891 = vpop.f32.mrf.mxu0
  %v1892 = vadd.f32 0.0, %v1891
  %v1893 = vpop.f32.mrf.mxu0
  %1894 = vmatprep.mubr.bf16.mxu0 0
  %1895 = vmatmul.mubr.bf16.gmra.mxu0 %v1659
  %v1896 = vpop.f32.mrf.mxu0
  %v1897 = vadd.f32 0.0, %v1896
  %v1898 = vpop.f32.mrf.mxu0
  %v1899 = vpop.f32.mrf.mxu0
  %v1900 = vadd.f32 0.0, %v1899
  %v1901 = vpop.f32.mrf.mxu0
  %1902 = vmatprep.mubr.bf16.mxu0 0
  %1903 = vmatmul.mubr.bf16.gmra.mxu0 %v1662
  %v1904 = vpop.f32.mrf.mxu0
  %v1905 = vadd.f32 0.0, %v1904
  %v1906 = vpop.f32.mrf.mxu0
  %v1907 = vpop.f32.mrf.mxu0
  %v1908 = vadd.f32 0.0, %v1907
  %v1909 = vpop.f32.mrf.mxu0
  %1910 = vmatprep.mubr.bf16.mxu0 0
  %1911 = vmatmul.mubr.bf16.gmra.mxu0 %v1665
  %v1912 = vpop.f32.mrf.mxu0
  %v1913 = vadd.f32 0.0, %v1912
  %v1914 = vpop.f32.mrf.mxu0
  %v1915 = vpop.f32.mrf.mxu0
  %v1916 = vadd.f32 0.0, %v1915
  %v1917 = vpop.f32.mrf.mxu0
  %1918 = vmatprep.mubr.bf16.mxu0 0
  %1919 = vmatmul.mubr.bf16.gmra.mxu0 %v1668
  %v1920 = vpop.f32.mrf.mxu0
  %v1921 = vadd.f32 0.0, %v1920
  %v1922 = vpop.f32.mrf.mxu0
  %v1923 = vpop.f32.mrf.mxu0
  %v1924 = vadd.f32 0.0, %v1923
  %v1925 = vpop.f32.mrf.mxu0
  %1926 = vmatprep.mubr.bf16.mxu0 0
  %1927 = vmatmul.mubr.bf16.gmra.mxu0 %v1671
  %v1928 = vpop.f32.mrf.mxu0
  %v1929 = vadd.f32 0.0, %v1928
  %v1930 = vpop.f32.mrf.mxu0
  %v1931 = vpop.f32.mrf.mxu0
  %v1932 = vadd.f32 0.0, %v1931
  %v1933 = vpop.f32.mrf.mxu0
  %1934 = vmatprep.mubr.bf16.mxu0 0
  %1935 = vmatmul.mubr.bf16.gmra.mxu0 %v1674
  %v1936 = vpop.f32.mrf.mxu0
  %v1937 = vadd.f32 0.0, %v1936
  %v1938 = vpop.f32.mrf.mxu0
  %v1939 = vpop.f32.mrf.mxu0
  %v1940 = vadd.f32 0.0, %v1939
  %v1941 = vpop.f32.mrf.mxu0
  %1942 = vmatprep.mubr.bf16.mxu0 0
  %1943 = vmatmul.mubr.bf16.gmra.mxu0 %v1677
  %v1944 = vpop.f32.mrf.mxu0
  %v1945 = vadd.f32 0.0, %v1944
  %v1946 = vpop.f32.mrf.mxu0
  %v1947 = vpop.f32.mrf.mxu0
  %v1948 = vadd.f32 0.0, %v1947
  %v1949 = vpop.f32.mrf.mxu0
  %1950 = vmatprep.mubr.bf16.mxu0 0
  %1951 = vmatmul.mubr.bf16.gmra.mxu0 %v1680
  %v1952 = vpop.f32.mrf.mxu0
  %v1953 = vadd.f32 0.0, %v1952
  %v1954 = vpop.f32.mrf.mxu0
  %v1955 = vpop.f32.mrf.mxu0
  %v1956 = vadd.f32 0.0, %v1955
  %v1957 = vpop.f32.mrf.mxu0
  %1958 = vmatprep.mubr.bf16.mxu0 0
  %1959 = vmatmul.mubr.bf16.gmra.mxu0 %v1683
  %v1960 = vpop.f32.mrf.mxu0
  %v1961 = vadd.f32 0.0, %v1960
  %v1962 = vpop.f32.mrf.mxu0
  %v1963 = vpop.f32.mrf.mxu0
  %v1964 = vadd.f32 0.0, %v1963
  %v1965 = vpop.f32.mrf.mxu0
  %1966 = vmatprep.mubr.bf16.mxu0 0
  %1967 = vmatmul.mubr.bf16.gmra.mxu0 %v1686
  %v1968 = vpop.f32.mrf.mxu0
  %v1969 = vadd.f32 0.0, %v1968
  %v1970 = vpop.f32.mrf.mxu0
  %v1971 = vpop.f32.mrf.mxu0
  %v1972 = vadd.f32 0.0, %v1971
  %v1973 = vpop.f32.mrf.mxu0
  %1974 = vmatprep.mubr.bf16.mxu0 0
  %1975 = vmatmul.mubr.bf16.gmra.mxu0 %v1689
  %v1976 = vpop.f32.mrf.mxu0
  %v1977 = vadd.f32 0.0, %v1976
  %v1978 = vpop.f32.mrf.mxu0
  %v1979 = vpop.f32.mrf.mxu0
  %v1980 = vadd.f32 0.0, %v1979
  %v1981 = vpop.f32.mrf.mxu0
  %1982 = vdwg.mxu0
  %1983 = vset.pattern.permute.xlu0 1
  %1984 = vperm.xlu0 %1983, %v339
  %v1985 = vpop.permute.xlu0 %1984
  %1987 = vset.pattern.permute.xlu0 1
  %1988 = vperm.xlu0 %1987, %v341
  %v1989 = vpop.permute.xlu0 %1988
  %1991 = vset.pattern.permute.xlu0 1
  %1992 = vperm.xlu0 %1991, %v343
  %v1993 = vpop.permute.xlu0 %1992
  %1995 = vset.pattern.permute.xlu0 1
  %1996 = vperm.xlu0 %1995, %v345
  %v1997 = vpop.permute.xlu0 %1996
  %1999 = vset.pattern.permute.xlu0 1
  %2000 = vperm.xlu0 %1999, %v347
  %v2001 = vpop.permute.xlu0 %2000
  %2003 = vset.pattern.permute.xlu0 1
  %2004 = vperm.xlu0 %2003, %v349
  %v2005 = vpop.permute.xlu0 %2004
  %2007 = vset.pattern.permute.xlu0 1
  %2008 = vperm.xlu0 %2007, %v351
  %v2009 = vpop.permute.xlu0 %2008
  %2011 = vset.pattern.permute.xlu0 1
  %2012 = vperm.xlu0 %2011, %v353
  %v2013 = vpop.permute.xlu0 %2012
  %2015 = vset.pattern.permute.xlu0 1
  %2016 = vperm.xlu0 %2015, %v355
  %v2017 = vpop.permute.xlu0 %2016
  %2019 = vset.pattern.permute.xlu0 1
  %2020 = vperm.xlu0 %2019, %v357
  %v2021 = vpop.permute.xlu0 %2020
  %2023 = vset.pattern.permute.xlu0 1
  %2024 = vperm.xlu0 %2023, %v359
  %v2025 = vpop.permute.xlu0 %2024
  %2027 = vset.pattern.permute.xlu0 1
  %2028 = vperm.xlu0 %2027, %v361
  %v2029 = vpop.permute.xlu0 %2028
  %2031 = vset.pattern.permute.xlu0 1
  %2032 = vperm.xlu0 %2031, %v363
  %v2033 = vpop.permute.xlu0 %2032
  %2035 = vset.pattern.permute.xlu0 1
  %2036 = vperm.xlu0 %2035, %v365
  %v2037 = vpop.permute.xlu0 %2036
  %2039 = vset.pattern.permute.xlu0 1
  %2040 = vperm.xlu0 %2039, %v367
  %v2041 = vpop.permute.xlu0 %2040
  %2043 = vset.pattern.permute.xlu0 1
  %2044 = vperm.xlu0 %2043, %v369
  %v2045 = vpop.permute.xlu0 %2044
  %2047 = vset.pattern.permute.xlu0 1
  %2048 = vperm.xlu0 %2047, %v371
  %v2049 = vpop.permute.xlu0 %2048
  %2051 = vset.pattern.permute.xlu0 1
  %2052 = vperm.xlu0 %2051, %v373
  %v2053 = vpop.permute.xlu0 %2052
  %2055 = vset.pattern.permute.xlu0 1
  %2056 = vperm.xlu0 %2055, %v375
  %v2057 = vpop.permute.xlu0 %2056
  %2059 = vset.pattern.permute.xlu0 1
  %2060 = vperm.xlu0 %2059, %v377
  %v2061 = vpop.permute.xlu0 %2060
  %2063 = vset.pattern.permute.xlu0 1
  %2064 = vperm.xlu0 %2063, %v379
  %v2065 = vpop.permute.xlu0 %2064
  %2067 = vset.pattern.permute.xlu0 1
  %2068 = vperm.xlu0 %2067, %v381
  %v2069 = vpop.permute.xlu0 %2068
  %2071 = vset.pattern.permute.xlu0 1
  %2072 = vperm.xlu0 %2071, %v383
  %v2073 = vpop.permute.xlu0 %2072
  %2075 = vset.pattern.permute.xlu0 1
  %2076 = vperm.xlu0 %2075, %v385
  %v2077 = vpop.permute.xlu0 %2076
  %2079 = vset.pattern.permute.xlu0 1
  %2080 = vperm.xlu0 %2079, %v387
  %v2081 = vpop.permute.xlu0 %2080
  %2083 = vset.pattern.permute.xlu0 1
  %2084 = vperm.xlu0 %2083, %v389
  %v2085 = vpop.permute.xlu0 %2084
  %2087 = vset.pattern.permute.xlu0 1
  %2088 = vperm.xlu0 %2087, %v391
  %v2089 = vpop.permute.xlu0 %2088
  %2091 = vset.pattern.permute.xlu0 1
  %2092 = vperm.xlu0 %2091, %v393
  %v2093 = vpop.permute.xlu0 %2092
  %2095 = vset.pattern.permute.xlu0 1
  %2096 = vperm.xlu0 %2095, %v395
  %v2097 = vpop.permute.xlu0 %2096
  %2099 = vset.pattern.permute.xlu0 1
  %2100 = vperm.xlu0 %2099, %v397
  %v2101 = vpop.permute.xlu0 %2100
  %2103 = vset.pattern.permute.xlu0 1
  %2104 = vperm.xlu0 %2103, %v399
  %v2105 = vpop.permute.xlu0 %2104
  %2107 = vset.pattern.permute.xlu0 1
  %2108 = vperm.xlu0 %2107, %v401
  %v2109 = vpop.permute.xlu0 %2108
  %2111 = vset.pattern.permute.xlu0 1
  %2112 = vperm.xlu0 %2111, %v403
  %v2113 = vpop.permute.xlu0 %2112
  %2115 = vset.pattern.permute.xlu0 1
  %2116 = vperm.xlu0 %2115, %v405
  %v2117 = vpop.permute.xlu0 %2116
  %2119 = vset.pattern.permute.xlu0 1
  %2120 = vperm.xlu0 %2119, %v407
  %v2121 = vpop.permute.xlu0 %2120
  %2123 = vset.pattern.permute.xlu0 1
  %2124 = vperm.xlu0 %2123, %v409
  %v2125 = vpop.permute.xlu0 %2124
  %2127 = vset.pattern.permute.xlu0 1
  %2128 = vperm.xlu0 %2127, %v411
  %v2129 = vpop.permute.xlu0 %2128
  %2131 = vset.pattern.permute.xlu0 1
  %2132 = vperm.xlu0 %2131, %v413
  %v2133 = vpop.permute.xlu0 %2132
  %2135 = vset.pattern.permute.xlu0 1
  %2136 = vperm.xlu0 %2135, %v415
  %v2137 = vpop.permute.xlu0 %2136
  %2139 = vset.pattern.permute.xlu0 1
  %2140 = vperm.xlu0 %2139, %v417
  %v2141 = vpop.permute.xlu0 %2140
  %2143 = vset.pattern.permute.xlu0 1
  %2144 = vperm.xlu0 %2143, %v419
  %v2145 = vpop.permute.xlu0 %2144
  %2147 = vset.pattern.permute.xlu0 1
  %2148 = vperm.xlu0 %2147, %v421
  %v2149 = vpop.permute.xlu0 %2148
  %2151 = vset.pattern.permute.xlu0 1
  %2152 = vperm.xlu0 %2151, %v423
  %v2153 = vpop.permute.xlu0 %2152
  %2155 = vset.pattern.permute.xlu0 1
  %2156 = vperm.xlu0 %2155, %v425
  %v2157 = vpop.permute.xlu0 %2156
  %2159 = vset.pattern.permute.xlu0 1
  %2160 = vperm.xlu0 %2159, %v427
  %v2161 = vpop.permute.xlu0 %2160
  %2163 = vset.pattern.permute.xlu0 1
  %2164 = vperm.xlu0 %2163, %v429
  %v2165 = vpop.permute.xlu0 %2164
  %2167 = vset.pattern.permute.xlu0 1
  %2168 = vperm.xlu0 %2167, %v431
  %v2169 = vpop.permute.xlu0 %2168
  %2171 = vset.pattern.permute.xlu0 1
  %2172 = vperm.xlu0 %2171, %v433
  %v2173 = vpop.permute.xlu0 %2172
  %2175 = vset.pattern.permute.xlu0 1
  %2176 = vperm.xlu0 %2175, %v435
  %v2177 = vpop.permute.xlu0 %2176
  %2179 = vset.pattern.permute.xlu0 1
  %2180 = vperm.xlu0 %2179, %v437
  %v2181 = vpop.permute.xlu0 %2180
  %2183 = vset.pattern.permute.xlu0 1
  %2184 = vperm.xlu0 %2183, %v439
  %v2185 = vpop.permute.xlu0 %2184
  %2187 = vset.pattern.permute.xlu0 1
  %2188 = vperm.xlu0 %2187, %v441
  %v2189 = vpop.permute.xlu0 %2188
  %2191 = vset.pattern.permute.xlu0 1
  %2192 = vperm.xlu0 %2191, %v443
  %v2193 = vpop.permute.xlu0 %2192
  %2195 = vset.pattern.permute.xlu0 1
  %2196 = vperm.xlu0 %2195, %v445
  %v2197 = vpop.permute.xlu0 %2196
  %2199 = vset.pattern.permute.xlu0 1
  %2200 = vperm.xlu0 %2199, %v447
  %v2201 = vpop.permute.xlu0 %2200
  %2203 = vset.pattern.permute.xlu0 1
  %2204 = vperm.xlu0 %2203, %v449
  %v2205 = vpop.permute.xlu0 %2204
  %2207 = vset.pattern.permute.xlu0 1
  %2208 = vperm.xlu0 %2207, %v451
  %v2209 = vpop.permute.xlu0 %2208
  %2211 = vset.pattern.permute.xlu0 1
  %2212 = vperm.xlu0 %2211, %v453
  %v2213 = vpop.permute.xlu0 %2212
  %2215 = vset.pattern.permute.xlu0 1
  %2216 = vperm.xlu0 %2215, %v455
  %v2217 = vpop.permute.xlu0 %2216
  %2219 = vset.pattern.permute.xlu0 1
  %2220 = vperm.xlu0 %2219, %v457
  %v2221 = vpop.permute.xlu0 %2220
  %2223 = vset.pattern.permute.xlu0 1
  %2224 = vperm.xlu0 %2223, %v459
  %v2225 = vpop.permute.xlu0 %2224
  %2227 = vset.pattern.permute.xlu0 1
  %2228 = vperm.xlu0 %2227, %v461
  %v2229 = vpop.permute.xlu0 %2228
  %2231 = vset.pattern.permute.xlu0 1
  %2232 = vperm.xlu0 %2231, %v463
  %v2233 = vpop.permute.xlu0 %2232
  %2235 = vset.pattern.permute.xlu0 1
  %2236 = vperm.xlu0 %2235, %v465
  %v2237 = vpop.permute.xlu0 %2236
  %v2239 = vmul.f32 %v1985, %v1729
  %v2240 = vmul.f32 %v1989, %v1732
  %v2241 = vmul.f32 %v1993, %v1737
  %v2242 = vmul.f32 %v1997, %v1740
  %v2243 = vmul.f32 %v2001, %v1745
  %v2244 = vmul.f32 %v2005, %v1748
  %v2245 = vmul.f32 %v2009, %v1753
  %v2246 = vmul.f32 %v2013, %v1756
  %v2247 = vmul.f32 %v2017, %v1761
  %v2248 = vmul.f32 %v2021, %v1764
  %v2249 = vmul.f32 %v2025, %v1769
  %v2250 = vmul.f32 %v2029, %v1772
  %v2251 = vmul.f32 %v2033, %v1777
  %v2252 = vmul.f32 %v2037, %v1780
  %v2253 = vmul.f32 %v2041, %v1785
  %v2254 = vmul.f32 %v2045, %v1788
  %v2255 = vmul.f32 %v2049, %v1793
  %v2256 = vmul.f32 %v2053, %v1796
  %v2257 = vmul.f32 %v2057, %v1801
  %v2258 = vmul.f32 %v2061, %v1804
  %v2259 = vmul.f32 %v2065, %v1809
  %v2260 = vmul.f32 %v2069, %v1812
  %v2261 = vmul.f32 %v2073, %v1817
  %v2262 = vmul.f32 %v2077, %v1820
  %v2263 = vmul.f32 %v2081, %v1825
  %v2264 = vmul.f32 %v2085, %v1828
  %v2265 = vmul.f32 %v2089, %v1833
  %v2266 = vmul.f32 %v2093, %v1836
  %v2267 = vmul.f32 %v2097, %v1841
  %v2268 = vmul.f32 %v2101, %v1844
  %v2269 = vmul.f32 %v2105, %v1849
  %v2270 = vmul.f32 %v2109, %v1852
  %v2271 = vmul.f32 %v2113, %v1857
  %v2272 = vmul.f32 %v2117, %v1860
  %v2273 = vmul.f32 %v2121, %v1865
  %v2274 = vmul.f32 %v2125, %v1868
  %v2275 = vmul.f32 %v2129, %v1873
  %v2276 = vmul.f32 %v2133, %v1876
  %v2277 = vmul.f32 %v2137, %v1881
  %v2278 = vmul.f32 %v2141, %v1884
  %v2279 = vmul.f32 %v2145, %v1889
  %v2280 = vmul.f32 %v2149, %v1892
  %v2281 = vmul.f32 %v2153, %v1897
  %v2282 = vmul.f32 %v2157, %v1900
  %v2283 = vmul.f32 %v2161, %v1905
  %v2284 = vmul.f32 %v2165, %v1908
  %v2285 = vmul.f32 %v2169, %v1913
  %v2286 = vmul.f32 %v2173, %v1916
  %v2287 = vmul.f32 %v2177, %v1921
  %v2288 = vmul.f32 %v2181, %v1924
  %v2289 = vmul.f32 %v2185, %v1929
  %v2290 = vmul.f32 %v2189, %v1932
  %v2291 = vmul.f32 %v2193, %v1937
  %v2292 = vmul.f32 %v2197, %v1940
  %v2293 = vmul.f32 %v2201, %v1945
  %v2294 = vmul.f32 %v2205, %v1948
  %v2295 = vmul.f32 %v2209, %v1953
  %v2296 = vmul.f32 %v2213, %v1956
  %v2297 = vmul.f32 %v2217, %v1961
  %v2298 = vmul.f32 %v2221, %v1964
  %v2299 = vmul.f32 %v2225, %v1969
  %v2300 = vmul.f32 %v2229, %v1972
  %v2301 = vmul.f32 %v2233, %v1977
  %v2302 = vmul.f32 %v2237, %v1980
  %v2303 = vadd.f32 %v1465, %v2239
  %v2304 = vadd.f32 %v1466, %v2240
  %v2305 = vadd.f32 %v1467, %v2241
  %v2306 = vadd.f32 %v1468, %v2242
  %v2307 = vadd.f32 %v1469, %v2243
  %v2308 = vadd.f32 %v1470, %v2244
  %v2309 = vadd.f32 %v1471, %v2245
  %v2310 = vadd.f32 %v1472, %v2246
  %v2311 = vadd.f32 %v1473, %v2247
  %v2312 = vadd.f32 %v1474, %v2248
  %v2313 = vadd.f32 %v1475, %v2249
  %v2314 = vadd.f32 %v1476, %v2250
  %v2315 = vadd.f32 %v1477, %v2251
  %v2316 = vadd.f32 %v1478, %v2252
  %v2317 = vadd.f32 %v1479, %v2253
  %v2318 = vadd.f32 %v1480, %v2254
  %v2319 = vadd.f32 %v1481, %v2255
  %v2320 = vadd.f32 %v1482, %v2256
  %v2321 = vadd.f32 %v1483, %v2257
  %v2322 = vadd.f32 %v1484, %v2258
  %v2323 = vadd.f32 %v1485, %v2259
  %v2324 = vadd.f32 %v1486, %v2260
  %v2325 = vadd.f32 %v1487, %v2261
  %v2326 = vadd.f32 %v1488, %v2262
  %v2327 = vadd.f32 %v1489, %v2263
  %v2328 = vadd.f32 %v1490, %v2264
  %v2329 = vadd.f32 %v1491, %v2265
  %v2330 = vadd.f32 %v1492, %v2266
  %v2331 = vadd.f32 %v1493, %v2267
  %v2332 = vadd.f32 %v1494, %v2268
  %v2333 = vadd.f32 %v1495, %v2269
  %v2334 = vadd.f32 %v1496, %v2270
  %v2335 = vadd.f32 %v1497, %v2271
  %v2336 = vadd.f32 %v1498, %v2272
  %v2337 = vadd.f32 %v1499, %v2273
  %v2338 = vadd.f32 %v1500, %v2274
  %v2339 = vadd.f32 %v1501, %v2275
  %v2340 = vadd.f32 %v1502, %v2276
  %v2341 = vadd.f32 %v1503, %v2277
  %v2342 = vadd.f32 %v1504, %v2278
  %v2343 = vadd.f32 %v1505, %v2279
  %v2344 = vadd.f32 %v1506, %v2280
  %v2345 = vadd.f32 %v1507, %v2281
  %v2346 = vadd.f32 %v1508, %v2282
  %v2347 = vadd.f32 %v1509, %v2283
  %v2348 = vadd.f32 %v1510, %v2284
  %v2349 = vadd.f32 %v1511, %v2285
  %v2350 = vadd.f32 %v1512, %v2286
  %v2351 = vadd.f32 %v1513, %v2287
  %v2352 = vadd.f32 %v1514, %v2288
  %v2353 = vadd.f32 %v1515, %v2289
  %v2354 = vadd.f32 %v1516, %v2290
  %v2355 = vadd.f32 %v1517, %v2291
  %v2356 = vadd.f32 %v1518, %v2292
  %v2357 = vadd.f32 %v1519, %v2293
  %v2358 = vadd.f32 %v1520, %v2294
  %v2359 = vadd.f32 %v1521, %v2295
  %v2360 = vadd.f32 %v1522, %v2296
  %v2361 = vadd.f32 %v1523, %v2297
  %v2362 = vadd.f32 %v1524, %v2298
  %v2363 = vadd.f32 %v1525, %v2299
  %v2364 = vadd.f32 %v1526, %v2300
  %v2365 = vadd.f32 %v1527, %v2301
  %v2366 = vadd.f32 %v1528, %v2302
  %s2367 = scalar_lea.vmem %s2, 4
  %v2368 = vld [vmem:[%s2367] sm:$0x3]
  %2369 = vrot.lane.b32.xlu0 %v659, 120
  %v2370 = vpop.permute.xlu0 %2369
  %2371 = vrot.lane.b32.xlu0 %v660, 120
  %v2372 = vpop.permute.xlu0 %2371
  %2373 = vrot.lane.b32.xlu0 %v661, 120
  %v2374 = vpop.permute.xlu0 %2373
  %2375 = vrot.lane.b32.xlu0 %v662, 120
  %v2376 = vpop.permute.xlu0 %2375
  %2377 = vrot.lane.b32.xlu0 %v663, 120
  %v2378 = vpop.permute.xlu0 %2377
  %2379 = vrot.lane.b32.xlu0 %v664, 120
  %v2380 = vpop.permute.xlu0 %2379
  %2381 = vrot.lane.b32.xlu0 %v665, 120
  %v2382 = vpop.permute.xlu0 %2381
  %2383 = vrot.lane.b32.xlu0 %v666, 120
  %v2384 = vpop.permute.xlu0 %2383
  %2385 = vrot.lane.b32.xlu0 %v667, 120
  %v2386 = vpop.permute.xlu0 %2385
  %2387 = vrot.lane.b32.xlu0 %v668, 120
  %v2388 = vpop.permute.xlu0 %2387
  %2389 = vrot.lane.b32.xlu0 %v669, 120
  %v2390 = vpop.permute.xlu0 %2389
  %2391 = vrot.lane.b32.xlu0 %v670, 120
  %v2392 = vpop.permute.xlu0 %2391
  %2393 = vrot.lane.b32.xlu0 %v671, 120
  %v2394 = vpop.permute.xlu0 %2393
  %2395 = vrot.lane.b32.xlu0 %v672, 120
  %v2396 = vpop.permute.xlu0 %2395
  %2397 = vrot.lane.b32.xlu0 %v673, 120
  %v2398 = vpop.permute.xlu0 %2397
  %2399 = vrot.lane.b32.xlu0 %v674, 120
  %v2400 = vpop.permute.xlu0 %2399
  %2401 = vrot.lane.b32.xlu0 %v675, 120
  %v2402 = vpop.permute.xlu0 %2401
  %2403 = vrot.lane.b32.xlu0 %v676, 120
  %v2404 = vpop.permute.xlu0 %2403
  %2405 = vrot.lane.b32.xlu0 %v677, 120
  %v2406 = vpop.permute.xlu0 %2405
  %2407 = vrot.lane.b32.xlu0 %v678, 120
  %v2408 = vpop.permute.xlu0 %2407
  %2409 = vrot.lane.b32.xlu0 %v679, 120
  %v2410 = vpop.permute.xlu0 %2409
  %2411 = vrot.lane.b32.xlu0 %v680, 120
  %v2412 = vpop.permute.xlu0 %2411
  %2413 = vrot.lane.b32.xlu0 %v681, 120
  %v2414 = vpop.permute.xlu0 %2413
  %2415 = vrot.lane.b32.xlu0 %v682, 120
  %v2416 = vpop.permute.xlu0 %2415
  %2417 = vrot.lane.b32.xlu0 %v683, 120
  %v2418 = vpop.permute.xlu0 %2417
  %2419 = vrot.lane.b32.xlu0 %v684, 120
  %v2420 = vpop.permute.xlu0 %2419
  %2421 = vrot.lane.b32.xlu0 %v685, 120
  %v2422 = vpop.permute.xlu0 %2421
  %2423 = vrot.lane.b32.xlu0 %v686, 120
  %v2424 = vpop.permute.xlu0 %2423
  %2425 = vrot.lane.b32.xlu0 %v687, 120
  %v2426 = vpop.permute.xlu0 %2425
  %2427 = vrot.lane.b32.xlu0 %v688, 120
  %v2428 = vpop.permute.xlu0 %2427
  %2429 = vrot.lane.b32.xlu0 %v689, 120
  %v2430 = vpop.permute.xlu0 %2429
  %2431 = vrot.lane.b32.xlu0 %v690, 120
  %v2432 = vpop.permute.xlu0 %2431
  %v2434 = vsel %vm691, %v2370, 0
  %v2437 = vsel %vm691, %v2372, 0
  %v2440 = vsel %vm691, %v2374, 0
  %v2443 = vsel %vm691, %v2376, 0
  %v2446 = vsel %vm691, %v2378, 0
  %v2449 = vsel %vm691, %v2380, 0
  %v2452 = vsel %vm691, %v2382, 0
  %v2455 = vsel %vm691, %v2384, 0
  %v2458 = vsel %vm691, %v2386, 0
  %v2461 = vsel %vm691, %v2388, 0
  %v2464 = vsel %vm691, %v2390, 0
  %v2467 = vsel %vm691, %v2392, 0
  %v2470 = vsel %vm691, %v2394, 0
  %v2473 = vsel %vm691, %v2396, 0
  %v2476 = vsel %vm691, %v2398, 0
  %v2479 = vsel %vm691, %v2400, 0
  %v2482 = vsel %vm691, %v2402, 0
  %v2485 = vsel %vm691, %v2404, 0
  %v2488 = vsel %vm691, %v2406, 0
  %v2491 = vsel %vm691, %v2408, 0
  %v2494 = vsel %vm691, %v2410, 0
  %v2497 = vsel %vm691, %v2412, 0
  %v2500 = vsel %vm691, %v2414, 0
  %v2503 = vsel %vm691, %v2416, 0
  %v2506 = vsel %vm691, %v2418, 0
  %v2509 = vsel %vm691, %v2420, 0
  %v2512 = vsel %vm691, %v2422, 0
  %v2515 = vsel %vm691, %v2424, 0
  %v2518 = vsel %vm691, %v2426, 0
  %v2521 = vsel %vm691, %v2428, 0
  %v2524 = vsel %vm691, %v2430, 0
  %v2527 = vsel %vm691, %v2432, 0
  %v2530 = vsel %vm788, %v2368, 0
  %2532 = vmatprep.subr.bf16.mxu0 0
  %2533 = vmatpush1.bf16.msra.mxu0 0
  %2534 = vmatprep.subr.bf16.mxu0 0
  %2535 = vmatpush1.bf16.msra.mxu0 0
  %2536 = vmatprep.subr.bf16.mxu0 0
  %2537 = vmatpush1.bf16.msra.mxu0 0
  %2538 = vmatprep.subr.bf16.mxu0 0
  %2539 = vmatpush1.bf16.msra.mxu0 0
  %2540 = vmatprep.subr.bf16.mxu0 0
  %2541 = vmatpush1.bf16.msra.mxu0 0
  %2542 = vmatprep.subr.bf16.mxu0 0
  %2543 = vmatpush1.bf16.msra.mxu0 0
  %2544 = vmatprep.subr.bf16.mxu0 0
  %2545 = vmatpush1.bf16.msra.mxu0 0
  %2546 = vmatprep.subr.bf16.mxu0 0
  %2547 = vmatpush1.bf16.msra.mxu0 %v2530
  %2548 = vmatprep.subr.bf16.mxu0 0
  %2549 = vmatpush2.bf16.msra.mxu0 0
  %2550 = vmatprep.subr.bf16.mxu0 0
  %2551 = vmatpush2.bf16.msra.mxu0 0
  %2552 = vmatprep.subr.bf16.mxu0 0
  %2553 = vmatpush2.bf16.msra.mxu0 0
  %2554 = vmatprep.subr.bf16.mxu0 0
  %2555 = vmatpush2.bf16.msra.mxu0 0
  %2556 = vmatprep.subr.bf16.mxu0 0
  %2557 = vmatpush2.bf16.msra.mxu0 0
  %2558 = vmatprep.subr.bf16.mxu0 0
  %2559 = vmatpush2.bf16.msra.mxu0 0
  %2560 = vmatprep.subr.bf16.mxu0 0
  %2561 = vmatpush2.bf16.msra.mxu0 0
  %2562 = vmatprep.subr.bf16.mxu0 0
  %2563 = vmatpush2.bf16.msra.mxu0 0
  %2564 = vmatprep.mubr.bf16.mxu0 0
  %2565 = vmatmul.mubr.bf16.gmra.mxu0 %v2434
  %v2566 = vpop.f32.mrf.mxu0
  %v2567 = vadd.f32 0.0, %v2566
  %v2568 = vpop.f32.mrf.mxu0
  %v2569 = vpop.f32.mrf.mxu0
  %v2570 = vadd.f32 0.0, %v2569
  %v2571 = vpop.f32.mrf.mxu0
  %2572 = vmatprep.mubr.bf16.mxu0 0
  %2573 = vmatmul.mubr.bf16.gmra.mxu0 %v2437
  %v2574 = vpop.f32.mrf.mxu0
  %v2575 = vadd.f32 0.0, %v2574
  %v2576 = vpop.f32.mrf.mxu0
  %v2577 = vpop.f32.mrf.mxu0
  %v2578 = vadd.f32 0.0, %v2577
  %v2579 = vpop.f32.mrf.mxu0
  %2580 = vmatprep.mubr.bf16.mxu0 0
  %2581 = vmatmul.mubr.bf16.gmra.mxu0 %v2440
  %v2582 = vpop.f32.mrf.mxu0
  %v2583 = vadd.f32 0.0, %v2582
  %v2584 = vpop.f32.mrf.mxu0
  %v2585 = vpop.f32.mrf.mxu0
  %v2586 = vadd.f32 0.0, %v2585
  %v2587 = vpop.f32.mrf.mxu0
  %2588 = vmatprep.mubr.bf16.mxu0 0
  %2589 = vmatmul.mubr.bf16.gmra.mxu0 %v2443
  %v2590 = vpop.f32.mrf.mxu0
  %v2591 = vadd.f32 0.0, %v2590
  %v2592 = vpop.f32.mrf.mxu0
  %v2593 = vpop.f32.mrf.mxu0
  %v2594 = vadd.f32 0.0, %v2593
  %v2595 = vpop.f32.mrf.mxu0
  %2596 = vmatprep.mubr.bf16.mxu0 0
  %2597 = vmatmul.mubr.bf16.gmra.mxu0 %v2446
  %v2598 = vpop.f32.mrf.mxu0
  %v2599 = vadd.f32 0.0, %v2598
  %v2600 = vpop.f32.mrf.mxu0
  %v2601 = vpop.f32.mrf.mxu0
  %v2602 = vadd.f32 0.0, %v2601
  %v2603 = vpop.f32.mrf.mxu0
  %2604 = vmatprep.mubr.bf16.mxu0 0
  %2605 = vmatmul.mubr.bf16.gmra.mxu0 %v2449
  %v2606 = vpop.f32.mrf.mxu0
  %v2607 = vadd.f32 0.0, %v2606
  %v2608 = vpop.f32.mrf.mxu0
  %v2609 = vpop.f32.mrf.mxu0
  %v2610 = vadd.f32 0.0, %v2609
  %v2611 = vpop.f32.mrf.mxu0
  %2612 = vmatprep.mubr.bf16.mxu0 0
  %2613 = vmatmul.mubr.bf16.gmra.mxu0 %v2452
  %v2614 = vpop.f32.mrf.mxu0
  %v2615 = vadd.f32 0.0, %v2614
  %v2616 = vpop.f32.mrf.mxu0
  %v2617 = vpop.f32.mrf.mxu0
  %v2618 = vadd.f32 0.0, %v2617
  %v2619 = vpop.f32.mrf.mxu0
  %2620 = vmatprep.mubr.bf16.mxu0 0
  %2621 = vmatmul.mubr.bf16.gmra.mxu0 %v2455
  %v2622 = vpop.f32.mrf.mxu0
  %v2623 = vadd.f32 0.0, %v2622
  %v2624 = vpop.f32.mrf.mxu0
  %v2625 = vpop.f32.mrf.mxu0
  %v2626 = vadd.f32 0.0, %v2625
  %v2627 = vpop.f32.mrf.mxu0
  %2628 = vmatprep.mubr.bf16.mxu0 0
  %2629 = vmatmul.mubr.bf16.gmra.mxu0 %v2458
  %v2630 = vpop.f32.mrf.mxu0
  %v2631 = vadd.f32 0.0, %v2630
  %v2632 = vpop.f32.mrf.mxu0
  %v2633 = vpop.f32.mrf.mxu0
  %v2634 = vadd.f32 0.0, %v2633
  %v2635 = vpop.f32.mrf.mxu0
  %2636 = vmatprep.mubr.bf16.mxu0 0
  %2637 = vmatmul.mubr.bf16.gmra.mxu0 %v2461
  %v2638 = vpop.f32.mrf.mxu0
  %v2639 = vadd.f32 0.0, %v2638
  %v2640 = vpop.f32.mrf.mxu0
  %v2641 = vpop.f32.mrf.mxu0
  %v2642 = vadd.f32 0.0, %v2641
  %v2643 = vpop.f32.mrf.mxu0
  %2644 = vmatprep.mubr.bf16.mxu0 0
  %2645 = vmatmul.mubr.bf16.gmra.mxu0 %v2464
  %v2646 = vpop.f32.mrf.mxu0
  %v2647 = vadd.f32 0.0, %v2646
  %v2648 = vpop.f32.mrf.mxu0
  %v2649 = vpop.f32.mrf.mxu0
  %v2650 = vadd.f32 0.0, %v2649
  %v2651 = vpop.f32.mrf.mxu0
  %2652 = vmatprep.mubr.bf16.mxu0 0
  %2653 = vmatmul.mubr.bf16.gmra.mxu0 %v2467
  %v2654 = vpop.f32.mrf.mxu0
  %v2655 = vadd.f32 0.0, %v2654
  %v2656 = vpop.f32.mrf.mxu0
  %v2657 = vpop.f32.mrf.mxu0
  %v2658 = vadd.f32 0.0, %v2657
  %v2659 = vpop.f32.mrf.mxu0
  %2660 = vmatprep.mubr.bf16.mxu0 0
  %2661 = vmatmul.mubr.bf16.gmra.mxu0 %v2470
  %v2662 = vpop.f32.mrf.mxu0
  %v2663 = vadd.f32 0.0, %v2662
  %v2664 = vpop.f32.mrf.mxu0
  %v2665 = vpop.f32.mrf.mxu0
  %v2666 = vadd.f32 0.0, %v2665
  %v2667 = vpop.f32.mrf.mxu0
  %2668 = vmatprep.mubr.bf16.mxu0 0
  %2669 = vmatmul.mubr.bf16.gmra.mxu0 %v2473
  %v2670 = vpop.f32.mrf.mxu0
  %v2671 = vadd.f32 0.0, %v2670
  %v2672 = vpop.f32.mrf.mxu0
  %v2673 = vpop.f32.mrf.mxu0
  %v2674 = vadd.f32 0.0, %v2673
  %v2675 = vpop.f32.mrf.mxu0
  %2676 = vmatprep.mubr.bf16.mxu0 0
  %2677 = vmatmul.mubr.bf16.gmra.mxu0 %v2476
  %v2678 = vpop.f32.mrf.mxu0
  %v2679 = vadd.f32 0.0, %v2678
  %v2680 = vpop.f32.mrf.mxu0
  %v2681 = vpop.f32.mrf.mxu0
  %v2682 = vadd.f32 0.0, %v2681
  %v2683 = vpop.f32.mrf.mxu0
  %2684 = vmatprep.mubr.bf16.mxu0 0
  %2685 = vmatmul.mubr.bf16.gmra.mxu0 %v2479
  %v2686 = vpop.f32.mrf.mxu0
  %v2687 = vadd.f32 0.0, %v2686
  %v2688 = vpop.f32.mrf.mxu0
  %v2689 = vpop.f32.mrf.mxu0
  %v2690 = vadd.f32 0.0, %v2689
  %v2691 = vpop.f32.mrf.mxu0
  %2692 = vmatprep.mubr.bf16.mxu0 0
  %2693 = vmatmul.mubr.bf16.gmra.mxu0 %v2482
  %v2694 = vpop.f32.mrf.mxu0
  %v2695 = vadd.f32 0.0, %v2694
  %v2696 = vpop.f32.mrf.mxu0
  %v2697 = vpop.f32.mrf.mxu0
  %v2698 = vadd.f32 0.0, %v2697
  %v2699 = vpop.f32.mrf.mxu0
  %2700 = vmatprep.mubr.bf16.mxu0 0
  %2701 = vmatmul.mubr.bf16.gmra.mxu0 %v2485
  %v2702 = vpop.f32.mrf.mxu0
  %v2703 = vadd.f32 0.0, %v2702
  %v2704 = vpop.f32.mrf.mxu0
  %v2705 = vpop.f32.mrf.mxu0
  %v2706 = vadd.f32 0.0, %v2705
  %v2707 = vpop.f32.mrf.mxu0
  %2708 = vmatprep.mubr.bf16.mxu0 0
  %2709 = vmatmul.mubr.bf16.gmra.mxu0 %v2488
  %v2710 = vpop.f32.mrf.mxu0
  %v2711 = vadd.f32 0.0, %v2710
  %v2712 = vpop.f32.mrf.mxu0
  %v2713 = vpop.f32.mrf.mxu0
  %v2714 = vadd.f32 0.0, %v2713
  %v2715 = vpop.f32.mrf.mxu0
  %2716 = vmatprep.mubr.bf16.mxu0 0
  %2717 = vmatmul.mubr.bf16.gmra.mxu0 %v2491
  %v2718 = vpop.f32.mrf.mxu0
  %v2719 = vadd.f32 0.0, %v2718
  %v2720 = vpop.f32.mrf.mxu0
  %v2721 = vpop.f32.mrf.mxu0
  %v2722 = vadd.f32 0.0, %v2721
  %v2723 = vpop.f32.mrf.mxu0
  %2724 = vmatprep.mubr.bf16.mxu0 0
  %2725 = vmatmul.mubr.bf16.gmra.mxu0 %v2494
  %v2726 = vpop.f32.mrf.mxu0
  %v2727 = vadd.f32 0.0, %v2726
  %v2728 = vpop.f32.mrf.mxu0
  %v2729 = vpop.f32.mrf.mxu0
  %v2730 = vadd.f32 0.0, %v2729
  %v2731 = vpop.f32.mrf.mxu0
  %2732 = vmatprep.mubr.bf16.mxu0 0
  %2733 = vmatmul.mubr.bf16.gmra.mxu0 %v2497
  %v2734 = vpop.f32.mrf.mxu0
  %v2735 = vadd.f32 0.0, %v2734
  %v2736 = vpop.f32.mrf.mxu0
  %v2737 = vpop.f32.mrf.mxu0
  %v2738 = vadd.f32 0.0, %v2737
  %v2739 = vpop.f32.mrf.mxu0
  %2740 = vmatprep.mubr.bf16.mxu0 0
  %2741 = vmatmul.mubr.bf16.gmra.mxu0 %v2500
  %v2742 = vpop.f32.mrf.mxu0
  %v2743 = vadd.f32 0.0, %v2742
  %v2744 = vpop.f32.mrf.mxu0
  %v2745 = vpop.f32.mrf.mxu0
  %v2746 = vadd.f32 0.0, %v2745
  %v2747 = vpop.f32.mrf.mxu0
  %2748 = vmatprep.mubr.bf16.mxu0 0
  %2749 = vmatmul.mubr.bf16.gmra.mxu0 %v2503
  %v2750 = vpop.f32.mrf.mxu0
  %v2751 = vadd.f32 0.0, %v2750
  %v2752 = vpop.f32.mrf.mxu0
  %v2753 = vpop.f32.mrf.mxu0
  %v2754 = vadd.f32 0.0, %v2753
  %v2755 = vpop.f32.mrf.mxu0
  %2756 = vmatprep.mubr.bf16.mxu0 0
  %2757 = vmatmul.mubr.bf16.gmra.mxu0 %v2506
  %v2758 = vpop.f32.mrf.mxu0
  %v2759 = vadd.f32 0.0, %v2758
  %v2760 = vpop.f32.mrf.mxu0
  %v2761 = vpop.f32.mrf.mxu0
  %v2762 = vadd.f32 0.0, %v2761
  %v2763 = vpop.f32.mrf.mxu0
  %2764 = vmatprep.mubr.bf16.mxu0 0
  %2765 = vmatmul.mubr.bf16.gmra.mxu0 %v2509
  %v2766 = vpop.f32.mrf.mxu0
  %v2767 = vadd.f32 0.0, %v2766
  %v2768 = vpop.f32.mrf.mxu0
  %v2769 = vpop.f32.mrf.mxu0
  %v2770 = vadd.f32 0.0, %v2769
  %v2771 = vpop.f32.mrf.mxu0
  %2772 = vmatprep.mubr.bf16.mxu0 0
  %2773 = vmatmul.mubr.bf16.gmra.mxu0 %v2512
  %v2774 = vpop.f32.mrf.mxu0
  %v2775 = vadd.f32 0.0, %v2774
  %v2776 = vpop.f32.mrf.mxu0
  %v2777 = vpop.f32.mrf.mxu0
  %v2778 = vadd.f32 0.0, %v2777
  %v2779 = vpop.f32.mrf.mxu0
  %2780 = vmatprep.mubr.bf16.mxu0 0
  %2781 = vmatmul.mubr.bf16.gmra.mxu0 %v2515
  %v2782 = vpop.f32.mrf.mxu0
  %v2783 = vadd.f32 0.0, %v2782
  %v2784 = vpop.f32.mrf.mxu0
  %v2785 = vpop.f32.mrf.mxu0
  %v2786 = vadd.f32 0.0, %v2785
  %v2787 = vpop.f32.mrf.mxu0
  %2788 = vmatprep.mubr.bf16.mxu0 0
  %2789 = vmatmul.mubr.bf16.gmra.mxu0 %v2518
  %v2790 = vpop.f32.mrf.mxu0
  %v2791 = vadd.f32 0.0, %v2790
  %v2792 = vpop.f32.mrf.mxu0
  %v2793 = vpop.f32.mrf.mxu0
  %v2794 = vadd.f32 0.0, %v2793
  %v2795 = vpop.f32.mrf.mxu0
  %2796 = vmatprep.mubr.bf16.mxu0 0
  %2797 = vmatmul.mubr.bf16.gmra.mxu0 %v2521
  %v2798 = vpop.f32.mrf.mxu0
  %v2799 = vadd.f32 0.0, %v2798
  %v2800 = vpop.f32.mrf.mxu0
  %v2801 = vpop.f32.mrf.mxu0
  %v2802 = vadd.f32 0.0, %v2801
  %v2803 = vpop.f32.mrf.mxu0
  %2804 = vmatprep.mubr.bf16.mxu0 0
  %2805 = vmatmul.mubr.bf16.gmra.mxu0 %v2524
  %v2806 = vpop.f32.mrf.mxu0
  %v2807 = vadd.f32 0.0, %v2806
  %v2808 = vpop.f32.mrf.mxu0
  %v2809 = vpop.f32.mrf.mxu0
  %v2810 = vadd.f32 0.0, %v2809
  %v2811 = vpop.f32.mrf.mxu0
  %2812 = vmatprep.mubr.bf16.mxu0 0
  %2813 = vmatmul.mubr.bf16.gmra.mxu0 %v2527
  %v2814 = vpop.f32.mrf.mxu0
  %v2815 = vadd.f32 0.0, %v2814
  %v2816 = vpop.f32.mrf.mxu0
  %v2817 = vpop.f32.mrf.mxu0
  %v2818 = vadd.f32 0.0, %v2817
  %v2819 = vpop.f32.mrf.mxu0
  %2820 = vdwg.mxu0
  %2821 = vset.pattern.permute.xlu0 2
  %2822 = vperm.xlu0 %2821, %v339
  %v2823 = vpop.permute.xlu0 %2822
  %2825 = vset.pattern.permute.xlu0 2
  %2826 = vperm.xlu0 %2825, %v341
  %v2827 = vpop.permute.xlu0 %2826
  %2829 = vset.pattern.permute.xlu0 2
  %2830 = vperm.xlu0 %2829, %v343
  %v2831 = vpop.permute.xlu0 %2830
  %2833 = vset.pattern.permute.xlu0 2
  %2834 = vperm.xlu0 %2833, %v345
  %v2835 = vpop.permute.xlu0 %2834
  %2837 = vset.pattern.permute.xlu0 2
  %2838 = vperm.xlu0 %2837, %v347
  %v2839 = vpop.permute.xlu0 %2838
  %2841 = vset.pattern.permute.xlu0 2
  %2842 = vperm.xlu0 %2841, %v349
  %v2843 = vpop.permute.xlu0 %2842
  %2845 = vset.pattern.permute.xlu0 2
  %2846 = vperm.xlu0 %2845, %v351
  %v2847 = vpop.permute.xlu0 %2846
  %2849 = vset.pattern.permute.xlu0 2
  %2850 = vperm.xlu0 %2849, %v353
  %v2851 = vpop.permute.xlu0 %2850
  %2853 = vset.pattern.permute.xlu0 2
  %2854 = vperm.xlu0 %2853, %v355
  %v2855 = vpop.permute.xlu0 %2854
  %2857 = vset.pattern.permute.xlu0 2
  %2858 = vperm.xlu0 %2857, %v357
  %v2859 = vpop.permute.xlu0 %2858
  %2861 = vset.pattern.permute.xlu0 2
  %2862 = vperm.xlu0 %2861, %v359
  %v2863 = vpop.permute.xlu0 %2862
  %2865 = vset.pattern.permute.xlu0 2
  %2866 = vperm.xlu0 %2865, %v361
  %v2867 = vpop.permute.xlu0 %2866
  %2869 = vset.pattern.permute.xlu0 2
  %2870 = vperm.xlu0 %2869, %v363
  %v2871 = vpop.permute.xlu0 %2870
  %2873 = vset.pattern.permute.xlu0 2
  %2874 = vperm.xlu0 %2873, %v365
  %v2875 = vpop.permute.xlu0 %2874
  %2877 = vset.pattern.permute.xlu0 2
  %2878 = vperm.xlu0 %2877, %v367
  %v2879 = vpop.permute.xlu0 %2878
  %2881 = vset.pattern.permute.xlu0 2
  %2882 = vperm.xlu0 %2881, %v369
  %v2883 = vpop.permute.xlu0 %2882
  %2885 = vset.pattern.permute.xlu0 2
  %2886 = vperm.xlu0 %2885, %v371
  %v2887 = vpop.permute.xlu0 %2886
  %2889 = vset.pattern.permute.xlu0 2
  %2890 = vperm.xlu0 %2889, %v373
  %v2891 = vpop.permute.xlu0 %2890
  %2893 = vset.pattern.permute.xlu0 2
  %2894 = vperm.xlu0 %2893, %v375
  %v2895 = vpop.permute.xlu0 %2894
  %2897 = vset.pattern.permute.xlu0 2
  %2898 = vperm.xlu0 %2897, %v377
  %v2899 = vpop.permute.xlu0 %2898
  %2901 = vset.pattern.permute.xlu0 2
  %2902 = vperm.xlu0 %2901, %v379
  %v2903 = vpop.permute.xlu0 %2902
  %2905 = vset.pattern.permute.xlu0 2
  %2906 = vperm.xlu0 %2905, %v381
  %v2907 = vpop.permute.xlu0 %2906
  %2909 = vset.pattern.permute.xlu0 2
  %2910 = vperm.xlu0 %2909, %v383
  %v2911 = vpop.permute.xlu0 %2910
  %2913 = vset.pattern.permute.xlu0 2
  %2914 = vperm.xlu0 %2913, %v385
  %v2915 = vpop.permute.xlu0 %2914
  %2917 = vset.pattern.permute.xlu0 2
  %2918 = vperm.xlu0 %2917, %v387
  %v2919 = vpop.permute.xlu0 %2918
  %2921 = vset.pattern.permute.xlu0 2
  %2922 = vperm.xlu0 %2921, %v389
  %v2923 = vpop.permute.xlu0 %2922
  %2925 = vset.pattern.permute.xlu0 2
  %2926 = vperm.xlu0 %2925, %v391
  %v2927 = vpop.permute.xlu0 %2926
  %2929 = vset.pattern.permute.xlu0 2
  %2930 = vperm.xlu0 %2929, %v393
  %v2931 = vpop.permute.xlu0 %2930
  %2933 = vset.pattern.permute.xlu0 2
  %2934 = vperm.xlu0 %2933, %v395
  %v2935 = vpop.permute.xlu0 %2934
  %2937 = vset.pattern.permute.xlu0 2
  %2938 = vperm.xlu0 %2937, %v397
  %v2939 = vpop.permute.xlu0 %2938
  %2941 = vset.pattern.permute.xlu0 2
  %2942 = vperm.xlu0 %2941, %v399
  %v2943 = vpop.permute.xlu0 %2942
  %2945 = vset.pattern.permute.xlu0 2
  %2946 = vperm.xlu0 %2945, %v401
  %v2947 = vpop.permute.xlu0 %2946
  %2949 = vset.pattern.permute.xlu0 2
  %2950 = vperm.xlu0 %2949, %v403
  %v2951 = vpop.permute.xlu0 %2950
  %2953 = vset.pattern.permute.xlu0 2
  %2954 = vperm.xlu0 %2953, %v405
  %v2955 = vpop.permute.xlu0 %2954
  %2957 = vset.pattern.permute.xlu0 2
  %2958 = vperm.xlu0 %2957, %v407
  %v2959 = vpop.permute.xlu0 %2958
  %2961 = vset.pattern.permute.xlu0 2
  %2962 = vperm.xlu0 %2961, %v409
  %v2963 = vpop.permute.xlu0 %2962
  %2965 = vset.pattern.permute.xlu0 2
  %2966 = vperm.xlu0 %2965, %v411
  %v2967 = vpop.permute.xlu0 %2966
  %2969 = vset.pattern.permute.xlu0 2
  %2970 = vperm.xlu0 %2969, %v413
  %v2971 = vpop.permute.xlu0 %2970
  %2973 = vset.pattern.permute.xlu0 2
  %2974 = vperm.xlu0 %2973, %v415
  %v2975 = vpop.permute.xlu0 %2974
  %2977 = vset.pattern.permute.xlu0 2
  %2978 = vperm.xlu0 %2977, %v417
  %v2979 = vpop.permute.xlu0 %2978
  %2981 = vset.pattern.permute.xlu0 2
  %2982 = vperm.xlu0 %2981, %v419
  %v2983 = vpop.permute.xlu0 %2982
  %2985 = vset.pattern.permute.xlu0 2
  %2986 = vperm.xlu0 %2985, %v421
  %v2987 = vpop.permute.xlu0 %2986
  %2989 = vset.pattern.permute.xlu0 2
  %2990 = vperm.xlu0 %2989, %v423
  %v2991 = vpop.permute.xlu0 %2990
  %2993 = vset.pattern.permute.xlu0 2
  %2994 = vperm.xlu0 %2993, %v425
  %v2995 = vpop.permute.xlu0 %2994
  %2997 = vset.pattern.permute.xlu0 2
  %2998 = vperm.xlu0 %2997, %v427
  %v2999 = vpop.permute.xlu0 %2998
  %3001 = vset.pattern.permute.xlu0 2
  %3002 = vperm.xlu0 %3001, %v429
  %v3003 = vpop.permute.xlu0 %3002
  %3005 = vset.pattern.permute.xlu0 2
  %3006 = vperm.xlu0 %3005, %v431
  %v3007 = vpop.permute.xlu0 %3006
  %3009 = vset.pattern.permute.xlu0 2
  %3010 = vperm.xlu0 %3009, %v433
  %v3011 = vpop.permute.xlu0 %3010
  %3013 = vset.pattern.permute.xlu0 2
  %3014 = vperm.xlu0 %3013, %v435
  %v3015 = vpop.permute.xlu0 %3014
  %3017 = vset.pattern.permute.xlu0 2
  %3018 = vperm.xlu0 %3017, %v437
  %v3019 = vpop.permute.xlu0 %3018
  %3021 = vset.pattern.permute.xlu0 2
  %3022 = vperm.xlu0 %3021, %v439
  %v3023 = vpop.permute.xlu0 %3022
  %3025 = vset.pattern.permute.xlu0 2
  %3026 = vperm.xlu0 %3025, %v441
  %v3027 = vpop.permute.xlu0 %3026
  %3029 = vset.pattern.permute.xlu0 2
  %3030 = vperm.xlu0 %3029, %v443
  %v3031 = vpop.permute.xlu0 %3030
  %3033 = vset.pattern.permute.xlu0 2
  %3034 = vperm.xlu0 %3033, %v445
  %v3035 = vpop.permute.xlu0 %3034
  %3037 = vset.pattern.permute.xlu0 2
  %3038 = vperm.xlu0 %3037, %v447
  %v3039 = vpop.permute.xlu0 %3038
  %3041 = vset.pattern.permute.xlu0 2
  %3042 = vperm.xlu0 %3041, %v449
  %v3043 = vpop.permute.xlu0 %3042
  %3045 = vset.pattern.permute.xlu0 2
  %3046 = vperm.xlu0 %3045, %v451
  %v3047 = vpop.permute.xlu0 %3046
  %3049 = vset.pattern.permute.xlu0 2
  %3050 = vperm.xlu0 %3049, %v453
  %v3051 = vpop.permute.xlu0 %3050
  %3053 = vset.pattern.permute.xlu0 2
  %3054 = vperm.xlu0 %3053, %v455
  %v3055 = vpop.permute.xlu0 %3054
  %3057 = vset.pattern.permute.xlu0 2
  %3058 = vperm.xlu0 %3057, %v457
  %v3059 = vpop.permute.xlu0 %3058
  %3061 = vset.pattern.permute.xlu0 2
  %3062 = vperm.xlu0 %3061, %v459
  %v3063 = vpop.permute.xlu0 %3062
  %3065 = vset.pattern.permute.xlu0 2
  %3066 = vperm.xlu0 %3065, %v461
  %v3067 = vpop.permute.xlu0 %3066
  %3069 = vset.pattern.permute.xlu0 2
  %3070 = vperm.xlu0 %3069, %v463
  %v3071 = vpop.permute.xlu0 %3070
  %3073 = vset.pattern.permute.xlu0 2
  %3074 = vperm.xlu0 %3073, %v465
  %v3075 = vpop.permute.xlu0 %3074
  %v3077 = vmul.f32 %v2823, %v2567
  %v3078 = vmul.f32 %v2827, %v2570
  %v3079 = vmul.f32 %v2831, %v2575
  %v3080 = vmul.f32 %v2835, %v2578
  %v3081 = vmul.f32 %v2839, %v2583
  %v3082 = vmul.f32 %v2843, %v2586
  %v3083 = vmul.f32 %v2847, %v2591
  %v3084 = vmul.f32 %v2851, %v2594
  %v3085 = vmul.f32 %v2855, %v2599
  %v3086 = vmul.f32 %v2859, %v2602
  %v3087 = vmul.f32 %v2863, %v2607
  %v3088 = vmul.f32 %v2867, %v2610
  %v3089 = vmul.f32 %v2871, %v2615
  %v3090 = vmul.f32 %v2875, %v2618
  %v3091 = vmul.f32 %v2879, %v2623
  %v3092 = vmul.f32 %v2883, %v2626
  %v3093 = vmul.f32 %v2887, %v2631
  %v3094 = vmul.f32 %v2891, %v2634
  %v3095 = vmul.f32 %v2895, %v2639
  %v3096 = vmul.f32 %v2899, %v2642
  %v3097 = vmul.f32 %v2903, %v2647
  %v3098 = vmul.f32 %v2907, %v2650
  %v3099 = vmul.f32 %v2911, %v2655
  %v3100 = vmul.f32 %v2915, %v2658
  %v3101 = vmul.f32 %v2919, %v2663
  %v3102 = vmul.f32 %v2923, %v2666
  %v3103 = vmul.f32 %v2927, %v2671
  %v3104 = vmul.f32 %v2931, %v2674
  %v3105 = vmul.f32 %v2935, %v2679
  %v3106 = vmul.f32 %v2939, %v2682
  %v3107 = vmul.f32 %v2943, %v2687
  %v3108 = vmul.f32 %v2947, %v2690
  %v3109 = vmul.f32 %v2951, %v2695
  %v3110 = vmul.f32 %v2955, %v2698
  %v3111 = vmul.f32 %v2959, %v2703
  %v3112 = vmul.f32 %v2963, %v2706
  %v3113 = vmul.f32 %v2967, %v2711
  %v3114 = vmul.f32 %v2971, %v2714
  %v3115 = vmul.f32 %v2975, %v2719
  %v3116 = vmul.f32 %v2979, %v2722
  %v3117 = vmul.f32 %v2983, %v2727
  %v3118 = vmul.f32 %v2987, %v2730
  %v3119 = vmul.f32 %v2991, %v2735
  %v3120 = vmul.f32 %v2995, %v2738
  %v3121 = vmul.f32 %v2999, %v2743
  %v3122 = vmul.f32 %v3003, %v2746
  %v3123 = vmul.f32 %v3007, %v2751
  %v3124 = vmul.f32 %v3011, %v2754
  %v3125 = vmul.f32 %v3015, %v2759
  %v3126 = vmul.f32 %v3019, %v2762
  %v3127 = vmul.f32 %v3023, %v2767
  %v3128 = vmul.f32 %v3027, %v2770
  %v3129 = vmul.f32 %v3031, %v2775
  %v3130 = vmul.f32 %v3035, %v2778
  %v3131 = vmul.f32 %v3039, %v2783
  %v3132 = vmul.f32 %v3043, %v2786
  %v3133 = vmul.f32 %v3047, %v2791
  %v3134 = vmul.f32 %v3051, %v2794
  %v3135 = vmul.f32 %v3055, %v2799
  %v3136 = vmul.f32 %v3059, %v2802
  %v3137 = vmul.f32 %v3063, %v2807
  %v3138 = vmul.f32 %v3067, %v2810
  %v3139 = vmul.f32 %v3071, %v2815
  %v3140 = vmul.f32 %v3075, %v2818
  %v3141 = vadd.f32 %v2303, %v3077
  %v3142 = vadd.f32 %v2304, %v3078
  %v3143 = vadd.f32 %v2305, %v3079
  %v3144 = vadd.f32 %v2306, %v3080
  %v3145 = vadd.f32 %v2307, %v3081
  %v3146 = vadd.f32 %v2308, %v3082
  %v3147 = vadd.f32 %v2309, %v3083
  %v3148 = vadd.f32 %v2310, %v3084
  %v3149 = vadd.f32 %v2311, %v3085
  %v3150 = vadd.f32 %v2312, %v3086
  %v3151 = vadd.f32 %v2313, %v3087
  %v3152 = vadd.f32 %v2314, %v3088
  %v3153 = vadd.f32 %v2315, %v3089
  %v3154 = vadd.f32 %v2316, %v3090
  %v3155 = vadd.f32 %v2317, %v3091
  %v3156 = vadd.f32 %v2318, %v3092
  %v3157 = vadd.f32 %v2319, %v3093
  %v3158 = vadd.f32 %v2320, %v3094
  %v3159 = vadd.f32 %v2321, %v3095
  %v3160 = vadd.f32 %v2322, %v3096
  %v3161 = vadd.f32 %v2323, %v3097
  %v3162 = vadd.f32 %v2324, %v3098
  %v3163 = vadd.f32 %v2325, %v3099
  %v3164 = vadd.f32 %v2326, %v3100
  %v3165 = vadd.f32 %v2327, %v3101
  %v3166 = vadd.f32 %v2328, %v3102
  %v3167 = vadd.f32 %v2329, %v3103
  %v3168 = vadd.f32 %v2330, %v3104
  %v3169 = vadd.f32 %v2331, %v3105
  %v3170 = vadd.f32 %v2332, %v3106
  %v3171 = vadd.f32 %v2333, %v3107
  %v3172 = vadd.f32 %v2334, %v3108
  %v3173 = vadd.f32 %v2335, %v3109
  %v3174 = vadd.f32 %v2336, %v3110
  %v3175 = vadd.f32 %v2337, %v3111
  %v3176 = vadd.f32 %v2338, %v3112
  %v3177 = vadd.f32 %v2339, %v3113
  %v3178 = vadd.f32 %v2340, %v3114
  %v3179 = vadd.f32 %v2341, %v3115
  %v3180 = vadd.f32 %v2342, %v3116
  %v3181 = vadd.f32 %v2343, %v3117
  %v3182 = vadd.f32 %v2344, %v3118
  %v3183 = vadd.f32 %v2345, %v3119
  %v3184 = vadd.f32 %v2346, %v3120
  %v3185 = vadd.f32 %v2347, %v3121
  %v3186 = vadd.f32 %v2348, %v3122
  %v3187 = vadd.f32 %v2349, %v3123
  %v3188 = vadd.f32 %v2350, %v3124
  %v3189 = vadd.f32 %v2351, %v3125
  %v3190 = vadd.f32 %v2352, %v3126
  %v3191 = vadd.f32 %v2353, %v3127
  %v3192 = vadd.f32 %v2354, %v3128
  %v3193 = vadd.f32 %v2355, %v3129
  %v3194 = vadd.f32 %v2356, %v3130
  %v3195 = vadd.f32 %v2357, %v3131
  %v3196 = vadd.f32 %v2358, %v3132
  %v3197 = vadd.f32 %v2359, %v3133
  %v3198 = vadd.f32 %v2360, %v3134
  %v3199 = vadd.f32 %v2361, %v3135
  %v3200 = vadd.f32 %v2362, %v3136
  %v3201 = vadd.f32 %v2363, %v3137
  %v3202 = vadd.f32 %v2364, %v3138
  %v3203 = vadd.f32 %v2365, %v3139
  %v3204 = vadd.f32 %v2366, %v3140
  %s3205 = scalar_lea.vmem %s2, 6
  %v3206 = vld [vmem:[%s3205] sm:$0x3]
  %3207 = vrot.lane.b32.xlu0 %v659, 116
  %v3208 = vpop.permute.xlu0 %3207
  %3209 = vrot.lane.b32.xlu0 %v660, 116
  %v3210 = vpop.permute.xlu0 %3209
  %3211 = vrot.lane.b32.xlu0 %v661, 116
  %v3212 = vpop.permute.xlu0 %3211
  %3213 = vrot.lane.b32.xlu0 %v662, 116
  %v3214 = vpop.permute.xlu0 %3213
  %3215 = vrot.lane.b32.xlu0 %v663, 116
  %v3216 = vpop.permute.xlu0 %3215
  %3217 = vrot.lane.b32.xlu0 %v664, 116
  %v3218 = vpop.permute.xlu0 %3217
  %3219 = vrot.lane.b32.xlu0 %v665, 116
  %v3220 = vpop.permute.xlu0 %3219
  %3221 = vrot.lane.b32.xlu0 %v666, 116
  %v3222 = vpop.permute.xlu0 %3221
  %3223 = vrot.lane.b32.xlu0 %v667, 116
  %v3224 = vpop.permute.xlu0 %3223
  %3225 = vrot.lane.b32.xlu0 %v668, 116
  %v3226 = vpop.permute.xlu0 %3225
  %3227 = vrot.lane.b32.xlu0 %v669, 116
  %v3228 = vpop.permute.xlu0 %3227
  %3229 = vrot.lane.b32.xlu0 %v670, 116
  %v3230 = vpop.permute.xlu0 %3229
  %3231 = vrot.lane.b32.xlu0 %v671, 116
  %v3232 = vpop.permute.xlu0 %3231
  %3233 = vrot.lane.b32.xlu0 %v672, 116
  %v3234 = vpop.permute.xlu0 %3233
  %3235 = vrot.lane.b32.xlu0 %v673, 116
  %v3236 = vpop.permute.xlu0 %3235
  %3237 = vrot.lane.b32.xlu0 %v674, 116
  %v3238 = vpop.permute.xlu0 %3237
  %3239 = vrot.lane.b32.xlu0 %v675, 116
  %v3240 = vpop.permute.xlu0 %3239
  %3241 = vrot.lane.b32.xlu0 %v676, 116
  %v3242 = vpop.permute.xlu0 %3241
  %3243 = vrot.lane.b32.xlu0 %v677, 116
  %v3244 = vpop.permute.xlu0 %3243
  %3245 = vrot.lane.b32.xlu0 %v678, 116
  %v3246 = vpop.permute.xlu0 %3245
  %3247 = vrot.lane.b32.xlu0 %v679, 116
  %v3248 = vpop.permute.xlu0 %3247
  %3249 = vrot.lane.b32.xlu0 %v680, 116
  %v3250 = vpop.permute.xlu0 %3249
  %3251 = vrot.lane.b32.xlu0 %v681, 116
  %v3252 = vpop.permute.xlu0 %3251
  %3253 = vrot.lane.b32.xlu0 %v682, 116
  %v3254 = vpop.permute.xlu0 %3253
  %3255 = vrot.lane.b32.xlu0 %v683, 116
  %v3256 = vpop.permute.xlu0 %3255
  %3257 = vrot.lane.b32.xlu0 %v684, 116
  %v3258 = vpop.permute.xlu0 %3257
  %3259 = vrot.lane.b32.xlu0 %v685, 116
  %v3260 = vpop.permute.xlu0 %3259
  %3261 = vrot.lane.b32.xlu0 %v686, 116
  %v3262 = vpop.permute.xlu0 %3261
  %3263 = vrot.lane.b32.xlu0 %v687, 116
  %v3264 = vpop.permute.xlu0 %3263
  %3265 = vrot.lane.b32.xlu0 %v688, 116
  %v3266 = vpop.permute.xlu0 %3265
  %3267 = vrot.lane.b32.xlu0 %v689, 116
  %v3268 = vpop.permute.xlu0 %3267
  %3269 = vrot.lane.b32.xlu0 %v690, 116
  %v3270 = vpop.permute.xlu0 %3269
  %v3272 = vsel %vm691, %v3208, 0
  %v3275 = vsel %vm691, %v3210, 0
  %v3278 = vsel %vm691, %v3212, 0
  %v3281 = vsel %vm691, %v3214, 0
  %v3284 = vsel %vm691, %v3216, 0
  %v3287 = vsel %vm691, %v3218, 0
  %v3290 = vsel %vm691, %v3220, 0
  %v3293 = vsel %vm691, %v3222, 0
  %v3296 = vsel %vm691, %v3224, 0
  %v3299 = vsel %vm691, %v3226, 0
  %v3302 = vsel %vm691, %v3228, 0
  %v3305 = vsel %vm691, %v3230, 0
  %v3308 = vsel %vm691, %v3232, 0
  %v3311 = vsel %vm691, %v3234, 0
  %v3314 = vsel %vm691, %v3236, 0
  %v3317 = vsel %vm691, %v3238, 0
  %v3320 = vsel %vm691, %v3240, 0
  %v3323 = vsel %vm691, %v3242, 0
  %v3326 = vsel %vm691, %v3244, 0
  %v3329 = vsel %vm691, %v3246, 0
  %v3332 = vsel %vm691, %v3248, 0
  %v3335 = vsel %vm691, %v3250, 0
  %v3338 = vsel %vm691, %v3252, 0
  %v3341 = vsel %vm691, %v3254, 0
  %v3344 = vsel %vm691, %v3256, 0
  %v3347 = vsel %vm691, %v3258, 0
  %v3350 = vsel %vm691, %v3260, 0
  %v3353 = vsel %vm691, %v3262, 0
  %v3356 = vsel %vm691, %v3264, 0
  %v3359 = vsel %vm691, %v3266, 0
  %v3362 = vsel %vm691, %v3268, 0
  %v3365 = vsel %vm691, %v3270, 0
  %v3368 = vsel %vm788, %v3206, 0
  %3370 = vmatprep.subr.bf16.mxu0 0
  %3371 = vmatpush1.bf16.msra.mxu0 0
  %3372 = vmatprep.subr.bf16.mxu0 0
  %3373 = vmatpush1.bf16.msra.mxu0 0
  %3374 = vmatprep.subr.bf16.mxu0 0
  %3375 = vmatpush1.bf16.msra.mxu0 0
  %3376 = vmatprep.subr.bf16.mxu0 0
  %3377 = vmatpush1.bf16.msra.mxu0 0
  %3378 = vmatprep.subr.bf16.mxu0 0
  %3379 = vmatpush1.bf16.msra.mxu0 0
  %3380 = vmatprep.subr.bf16.mxu0 0
  %3381 = vmatpush1.bf16.msra.mxu0 0
  %3382 = vmatprep.subr.bf16.mxu0 0
  %3383 = vmatpush1.bf16.msra.mxu0 0
  %3384 = vmatprep.subr.bf16.mxu0 0
  %3385 = vmatpush1.bf16.msra.mxu0 %v3368
  %3386 = vmatprep.subr.bf16.mxu0 0
  %3387 = vmatpush2.bf16.msra.mxu0 0
  %3388 = vmatprep.subr.bf16.mxu0 0
  %3389 = vmatpush2.bf16.msra.mxu0 0
  %3390 = vmatprep.subr.bf16.mxu0 0
  %3391 = vmatpush2.bf16.msra.mxu0 0
  %3392 = vmatprep.subr.bf16.mxu0 0
  %3393 = vmatpush2.bf16.msra.mxu0 0
  %3394 = vmatprep.subr.bf16.mxu0 0
  %3395 = vmatpush2.bf16.msra.mxu0 0
  %3396 = vmatprep.subr.bf16.mxu0 0
  %3397 = vmatpush2.bf16.msra.mxu0 0
  %3398 = vmatprep.subr.bf16.mxu0 0
  %3399 = vmatpush2.bf16.msra.mxu0 0
  %3400 = vmatprep.subr.bf16.mxu0 0
  %3401 = vmatpush2.bf16.msra.mxu0 0
  %3402 = vmatprep.mubr.bf16.mxu0 0
  %3403 = vmatmul.mubr.bf16.gmra.mxu0 %v3272
  %v3404 = vpop.f32.mrf.mxu0
  %v3405 = vadd.f32 0.0, %v3404
  %v3406 = vpop.f32.mrf.mxu0
  %v3407 = vpop.f32.mrf.mxu0
  %v3408 = vadd.f32 0.0, %v3407
  %v3409 = vpop.f32.mrf.mxu0
  %3410 = vmatprep.mubr.bf16.mxu0 0
  %3411 = vmatmul.mubr.bf16.gmra.mxu0 %v3275
  %v3412 = vpop.f32.mrf.mxu0
  %v3413 = vadd.f32 0.0, %v3412
  %v3414 = vpop.f32.mrf.mxu0
  %v3415 = vpop.f32.mrf.mxu0
  %v3416 = vadd.f32 0.0, %v3415
  %v3417 = vpop.f32.mrf.mxu0
  %3418 = vmatprep.mubr.bf16.mxu0 0
  %3419 = vmatmul.mubr.bf16.gmra.mxu0 %v3278
  %v3420 = vpop.f32.mrf.mxu0
  %v3421 = vadd.f32 0.0, %v3420
  %v3422 = vpop.f32.mrf.mxu0
  %v3423 = vpop.f32.mrf.mxu0
  %v3424 = vadd.f32 0.0, %v3423
  %v3425 = vpop.f32.mrf.mxu0
  %3426 = vmatprep.mubr.bf16.mxu0 0
  %3427 = vmatmul.mubr.bf16.gmra.mxu0 %v3281
  %v3428 = vpop.f32.mrf.mxu0
  %v3429 = vadd.f32 0.0, %v3428
  %v3430 = vpop.f32.mrf.mxu0
  %v3431 = vpop.f32.mrf.mxu0
  %v3432 = vadd.f32 0.0, %v3431
  %v3433 = vpop.f32.mrf.mxu0
  %3434 = vmatprep.mubr.bf16.mxu0 0
  %3435 = vmatmul.mubr.bf16.gmra.mxu0 %v3284
  %v3436 = vpop.f32.mrf.mxu0
  %v3437 = vadd.f32 0.0, %v3436
  %v3438 = vpop.f32.mrf.mxu0
  %v3439 = vpop.f32.mrf.mxu0
  %v3440 = vadd.f32 0.0, %v3439
  %v3441 = vpop.f32.mrf.mxu0
  %3442 = vmatprep.mubr.bf16.mxu0 0
  %3443 = vmatmul.mubr.bf16.gmra.mxu0 %v3287
  %v3444 = vpop.f32.mrf.mxu0
  %v3445 = vadd.f32 0.0, %v3444
  %v3446 = vpop.f32.mrf.mxu0
  %v3447 = vpop.f32.mrf.mxu0
  %v3448 = vadd.f32 0.0, %v3447
  %v3449 = vpop.f32.mrf.mxu0
  %3450 = vmatprep.mubr.bf16.mxu0 0
  %3451 = vmatmul.mubr.bf16.gmra.mxu0 %v3290
  %v3452 = vpop.f32.mrf.mxu0
  %v3453 = vadd.f32 0.0, %v3452
  %v3454 = vpop.f32.mrf.mxu0
  %v3455 = vpop.f32.mrf.mxu0
  %v3456 = vadd.f32 0.0, %v3455
  %v3457 = vpop.f32.mrf.mxu0
  %3458 = vmatprep.mubr.bf16.mxu0 0
  %3459 = vmatmul.mubr.bf16.gmra.mxu0 %v3293
  %v3460 = vpop.f32.mrf.mxu0
  %v3461 = vadd.f32 0.0, %v3460
  %v3462 = vpop.f32.mrf.mxu0
  %v3463 = vpop.f32.mrf.mxu0
  %v3464 = vadd.f32 0.0, %v3463
  %v3465 = vpop.f32.mrf.mxu0
  %3466 = vmatprep.mubr.bf16.mxu0 0
  %3467 = vmatmul.mubr.bf16.gmra.mxu0 %v3296
  %v3468 = vpop.f32.mrf.mxu0
  %v3469 = vadd.f32 0.0, %v3468
  %v3470 = vpop.f32.mrf.mxu0
  %v3471 = vpop.f32.mrf.mxu0
  %v3472 = vadd.f32 0.0, %v3471
  %v3473 = vpop.f32.mrf.mxu0
  %3474 = vmatprep.mubr.bf16.mxu0 0
  %3475 = vmatmul.mubr.bf16.gmra.mxu0 %v3299
  %v3476 = vpop.f32.mrf.mxu0
  %v3477 = vadd.f32 0.0, %v3476
  %v3478 = vpop.f32.mrf.mxu0
  %v3479 = vpop.f32.mrf.mxu0
  %v3480 = vadd.f32 0.0, %v3479
  %v3481 = vpop.f32.mrf.mxu0
  %3482 = vmatprep.mubr.bf16.mxu0 0
  %3483 = vmatmul.mubr.bf16.gmra.mxu0 %v3302
  %v3484 = vpop.f32.mrf.mxu0
  %v3485 = vadd.f32 0.0, %v3484
  %v3486 = vpop.f32.mrf.mxu0
  %v3487 = vpop.f32.mrf.mxu0
  %v3488 = vadd.f32 0.0, %v3487
  %v3489 = vpop.f32.mrf.mxu0
  %3490 = vmatprep.mubr.bf16.mxu0 0
  %3491 = vmatmul.mubr.bf16.gmra.mxu0 %v3305
  %v3492 = vpop.f32.mrf.mxu0
  %v3493 = vadd.f32 0.0, %v3492
  %v3494 = vpop.f32.mrf.mxu0
  %v3495 = vpop.f32.mrf.mxu0
  %v3496 = vadd.f32 0.0, %v3495
  %v3497 = vpop.f32.mrf.mxu0
  %3498 = vmatprep.mubr.bf16.mxu0 0
  %3499 = vmatmul.mubr.bf16.gmra.mxu0 %v3308
  %v3500 = vpop.f32.mrf.mxu0
  %v3501 = vadd.f32 0.0, %v3500
  %v3502 = vpop.f32.mrf.mxu0
  %v3503 = vpop.f32.mrf.mxu0
  %v3504 = vadd.f32 0.0, %v3503
  %v3505 = vpop.f32.mrf.mxu0
  %3506 = vmatprep.mubr.bf16.mxu0 0
  %3507 = vmatmul.mubr.bf16.gmra.mxu0 %v3311
  %v3508 = vpop.f32.mrf.mxu0
  %v3509 = vadd.f32 0.0, %v3508
  %v3510 = vpop.f32.mrf.mxu0
  %v3511 = vpop.f32.mrf.mxu0
  %v3512 = vadd.f32 0.0, %v3511
  %v3513 = vpop.f32.mrf.mxu0
  %3514 = vmatprep.mubr.bf16.mxu0 0
  %3515 = vmatmul.mubr.bf16.gmra.mxu0 %v3314
  %v3516 = vpop.f32.mrf.mxu0
  %v3517 = vadd.f32 0.0, %v3516
  %v3518 = vpop.f32.mrf.mxu0
  %v3519 = vpop.f32.mrf.mxu0
  %v3520 = vadd.f32 0.0, %v3519
  %v3521 = vpop.f32.mrf.mxu0
  %3522 = vmatprep.mubr.bf16.mxu0 0
  %3523 = vmatmul.mubr.bf16.gmra.mxu0 %v3317
  %v3524 = vpop.f32.mrf.mxu0
  %v3525 = vadd.f32 0.0, %v3524
  %v3526 = vpop.f32.mrf.mxu0
  %v3527 = vpop.f32.mrf.mxu0
  %v3528 = vadd.f32 0.0, %v3527
  %v3529 = vpop.f32.mrf.mxu0
  %3530 = vmatprep.mubr.bf16.mxu0 0
  %3531 = vmatmul.mubr.bf16.gmra.mxu0 %v3320
  %v3532 = vpop.f32.mrf.mxu0
  %v3533 = vadd.f32 0.0, %v3532
  %v3534 = vpop.f32.mrf.mxu0
  %v3535 = vpop.f32.mrf.mxu0
  %v3536 = vadd.f32 0.0, %v3535
  %v3537 = vpop.f32.mrf.mxu0
  %3538 = vmatprep.mubr.bf16.mxu0 0
  %3539 = vmatmul.mubr.bf16.gmra.mxu0 %v3323
  %v3540 = vpop.f32.mrf.mxu0
  %v3541 = vadd.f32 0.0, %v3540
  %v3542 = vpop.f32.mrf.mxu0
  %v3543 = vpop.f32.mrf.mxu0
  %v3544 = vadd.f32 0.0, %v3543
  %v3545 = vpop.f32.mrf.mxu0
  %3546 = vmatprep.mubr.bf16.mxu0 0
  %3547 = vmatmul.mubr.bf16.gmra.mxu0 %v3326
  %v3548 = vpop.f32.mrf.mxu0
  %v3549 = vadd.f32 0.0, %v3548
  %v3550 = vpop.f32.mrf.mxu0
  %v3551 = vpop.f32.mrf.mxu0
  %v3552 = vadd.f32 0.0, %v3551
  %v3553 = vpop.f32.mrf.mxu0
  %3554 = vmatprep.mubr.bf16.mxu0 0
  %3555 = vmatmul.mubr.bf16.gmra.mxu0 %v3329
  %v3556 = vpop.f32.mrf.mxu0
  %v3557 = vadd.f32 0.0, %v3556
  %v3558 = vpop.f32.mrf.mxu0
  %v3559 = vpop.f32.mrf.mxu0
  %v3560 = vadd.f32 0.0, %v3559
  %v3561 = vpop.f32.mrf.mxu0
  %3562 = vmatprep.mubr.bf16.mxu0 0
  %3563 = vmatmul.mubr.bf16.gmra.mxu0 %v3332
  %v3564 = vpop.f32.mrf.mxu0
  %v3565 = vadd.f32 0.0, %v3564
  %v3566 = vpop.f32.mrf.mxu0
  %v3567 = vpop.f32.mrf.mxu0
  %v3568 = vadd.f32 0.0, %v3567
  %v3569 = vpop.f32.mrf.mxu0
  %3570 = vmatprep.mubr.bf16.mxu0 0
  %3571 = vmatmul.mubr.bf16.gmra.mxu0 %v3335
  %v3572 = vpop.f32.mrf.mxu0
  %v3573 = vadd.f32 0.0, %v3572
  %v3574 = vpop.f32.mrf.mxu0
  %v3575 = vpop.f32.mrf.mxu0
  %v3576 = vadd.f32 0.0, %v3575
  %v3577 = vpop.f32.mrf.mxu0
  %3578 = vmatprep.mubr.bf16.mxu0 0
  %3579 = vmatmul.mubr.bf16.gmra.mxu0 %v3338
  %v3580 = vpop.f32.mrf.mxu0
  %v3581 = vadd.f32 0.0, %v3580
  %v3582 = vpop.f32.mrf.mxu0
  %v3583 = vpop.f32.mrf.mxu0
  %v3584 = vadd.f32 0.0, %v3583
  %v3585 = vpop.f32.mrf.mxu0
  %3586 = vmatprep.mubr.bf16.mxu0 0
  %3587 = vmatmul.mubr.bf16.gmra.mxu0 %v3341
  %v3588 = vpop.f32.mrf.mxu0
  %v3589 = vadd.f32 0.0, %v3588
  %v3590 = vpop.f32.mrf.mxu0
  %v3591 = vpop.f32.mrf.mxu0
  %v3592 = vadd.f32 0.0, %v3591
  %v3593 = vpop.f32.mrf.mxu0
  %3594 = vmatprep.mubr.bf16.mxu0 0
  %3595 = vmatmul.mubr.bf16.gmra.mxu0 %v3344
  %v3596 = vpop.f32.mrf.mxu0
  %v3597 = vadd.f32 0.0, %v3596
  %v3598 = vpop.f32.mrf.mxu0
  %v3599 = vpop.f32.mrf.mxu0
  %v3600 = vadd.f32 0.0, %v3599
  %v3601 = vpop.f32.mrf.mxu0
  %3602 = vmatprep.mubr.bf16.mxu0 0
  %3603 = vmatmul.mubr.bf16.gmra.mxu0 %v3347
  %v3604 = vpop.f32.mrf.mxu0
  %v3605 = vadd.f32 0.0, %v3604
  %v3606 = vpop.f32.mrf.mxu0
  %v3607 = vpop.f32.mrf.mxu0
  %v3608 = vadd.f32 0.0, %v3607
  %v3609 = vpop.f32.mrf.mxu0
  %3610 = vmatprep.mubr.bf16.mxu0 0
  %3611 = vmatmul.mubr.bf16.gmra.mxu0 %v3350
  %v3612 = vpop.f32.mrf.mxu0
  %v3613 = vadd.f32 0.0, %v3612
  %v3614 = vpop.f32.mrf.mxu0
  %v3615 = vpop.f32.mrf.mxu0
  %v3616 = vadd.f32 0.0, %v3615
  %v3617 = vpop.f32.mrf.mxu0
  %3618 = vmatprep.mubr.bf16.mxu0 0
  %3619 = vmatmul.mubr.bf16.gmra.mxu0 %v3353
  %v3620 = vpop.f32.mrf.mxu0
  %v3621 = vadd.f32 0.0, %v3620
  %v3622 = vpop.f32.mrf.mxu0
  %v3623 = vpop.f32.mrf.mxu0
  %v3624 = vadd.f32 0.0, %v3623
  %v3625 = vpop.f32.mrf.mxu0
  %3626 = vmatprep.mubr.bf16.mxu0 0
  %3627 = vmatmul.mubr.bf16.gmra.mxu0 %v3356
  %v3628 = vpop.f32.mrf.mxu0
  %v3629 = vadd.f32 0.0, %v3628
  %v3630 = vpop.f32.mrf.mxu0
  %v3631 = vpop.f32.mrf.mxu0
  %v3632 = vadd.f32 0.0, %v3631
  %v3633 = vpop.f32.mrf.mxu0
  %3634 = vmatprep.mubr.bf16.mxu0 0
  %3635 = vmatmul.mubr.bf16.gmra.mxu0 %v3359
  %v3636 = vpop.f32.mrf.mxu0
  %v3637 = vadd.f32 0.0, %v3636
  %v3638 = vpop.f32.mrf.mxu0
  %v3639 = vpop.f32.mrf.mxu0
  %v3640 = vadd.f32 0.0, %v3639
  %v3641 = vpop.f32.mrf.mxu0
  %3642 = vmatprep.mubr.bf16.mxu0 0
  %3643 = vmatmul.mubr.bf16.gmra.mxu0 %v3362
  %v3644 = vpop.f32.mrf.mxu0
  %v3645 = vadd.f32 0.0, %v3644
  %v3646 = vpop.f32.mrf.mxu0
  %v3647 = vpop.f32.mrf.mxu0
  %v3648 = vadd.f32 0.0, %v3647
  %v3649 = vpop.f32.mrf.mxu0
  %3650 = vmatprep.mubr.bf16.mxu0 0
  %3651 = vmatmul.mubr.bf16.gmra.mxu0 %v3365
  %v3652 = vpop.f32.mrf.mxu0
  %v3653 = vadd.f32 0.0, %v3652
  %v3654 = vpop.f32.mrf.mxu0
  %v3655 = vpop.f32.mrf.mxu0
  %v3656 = vadd.f32 0.0, %v3655
  %v3657 = vpop.f32.mrf.mxu0
  %3658 = vdwg.mxu0
  %3659 = vset.pattern.permute.xlu0 3
  %3660 = vperm.xlu0 %3659, %v339
  %v3661 = vpop.permute.xlu0 %3660
  %3663 = vset.pattern.permute.xlu0 3
  %3664 = vperm.xlu0 %3663, %v341
  %v3665 = vpop.permute.xlu0 %3664
  %3667 = vset.pattern.permute.xlu0 3
  %3668 = vperm.xlu0 %3667, %v343
  %v3669 = vpop.permute.xlu0 %3668
  %3671 = vset.pattern.permute.xlu0 3
  %3672 = vperm.xlu0 %3671, %v345
  %v3673 = vpop.permute.xlu0 %3672
  %3675 = vset.pattern.permute.xlu0 3
  %3676 = vperm.xlu0 %3675, %v347
  %v3677 = vpop.permute.xlu0 %3676
  %3679 = vset.pattern.permute.xlu0 3
  %3680 = vperm.xlu0 %3679, %v349
  %v3681 = vpop.permute.xlu0 %3680
  %3683 = vset.pattern.permute.xlu0 3
  %3684 = vperm.xlu0 %3683, %v351
  %v3685 = vpop.permute.xlu0 %3684
  %3687 = vset.pattern.permute.xlu0 3
  %3688 = vperm.xlu0 %3687, %v353
  %v3689 = vpop.permute.xlu0 %3688
  %3691 = vset.pattern.permute.xlu0 3
  %3692 = vperm.xlu0 %3691, %v355
  %v3693 = vpop.permute.xlu0 %3692
  %3695 = vset.pattern.permute.xlu0 3
  %3696 = vperm.xlu0 %3695, %v357
  %v3697 = vpop.permute.xlu0 %3696
  %3699 = vset.pattern.permute.xlu0 3
  %3700 = vperm.xlu0 %3699, %v359
  %v3701 = vpop.permute.xlu0 %3700
  %3703 = vset.pattern.permute.xlu0 3
  %3704 = vperm.xlu0 %3703, %v361
  %v3705 = vpop.permute.xlu0 %3704
  %3707 = vset.pattern.permute.xlu0 3
  %3708 = vperm.xlu0 %3707, %v363
  %v3709 = vpop.permute.xlu0 %3708
  %3711 = vset.pattern.permute.xlu0 3
  %3712 = vperm.xlu0 %3711, %v365
  %v3713 = vpop.permute.xlu0 %3712
  %3715 = vset.pattern.permute.xlu0 3
  %3716 = vperm.xlu0 %3715, %v367
  %v3717 = vpop.permute.xlu0 %3716
  %3719 = vset.pattern.permute.xlu0 3
  %3720 = vperm.xlu0 %3719, %v369
  %v3721 = vpop.permute.xlu0 %3720
  %3723 = vset.pattern.permute.xlu0 3
  %3724 = vperm.xlu0 %3723, %v371
  %v3725 = vpop.permute.xlu0 %3724
  %3727 = vset.pattern.permute.xlu0 3
  %3728 = vperm.xlu0 %3727, %v373
  %v3729 = vpop.permute.xlu0 %3728
  %3731 = vset.pattern.permute.xlu0 3
  %3732 = vperm.xlu0 %3731, %v375
  %v3733 = vpop.permute.xlu0 %3732
  %3735 = vset.pattern.permute.xlu0 3
  %3736 = vperm.xlu0 %3735, %v377
  %v3737 = vpop.permute.xlu0 %3736
  %3739 = vset.pattern.permute.xlu0 3
  %3740 = vperm.xlu0 %3739, %v379
  %v3741 = vpop.permute.xlu0 %3740
  %3743 = vset.pattern.permute.xlu0 3
  %3744 = vperm.xlu0 %3743, %v381
  %v3745 = vpop.permute.xlu0 %3744
  %3747 = vset.pattern.permute.xlu0 3
  %3748 = vperm.xlu0 %3747, %v383
  %v3749 = vpop.permute.xlu0 %3748
  %3751 = vset.pattern.permute.xlu0 3
  %3752 = vperm.xlu0 %3751, %v385
  %v3753 = vpop.permute.xlu0 %3752
  %3755 = vset.pattern.permute.xlu0 3
  %3756 = vperm.xlu0 %3755, %v387
  %v3757 = vpop.permute.xlu0 %3756
  %3759 = vset.pattern.permute.xlu0 3
  %3760 = vperm.xlu0 %3759, %v389
  %v3761 = vpop.permute.xlu0 %3760
  %3763 = vset.pattern.permute.xlu0 3
  %3764 = vperm.xlu0 %3763, %v391
  %v3765 = vpop.permute.xlu0 %3764
  %3767 = vset.pattern.permute.xlu0 3
  %3768 = vperm.xlu0 %3767, %v393
  %v3769 = vpop.permute.xlu0 %3768
  %3771 = vset.pattern.permute.xlu0 3
  %3772 = vperm.xlu0 %3771, %v395
  %v3773 = vpop.permute.xlu0 %3772
  %3775 = vset.pattern.permute.xlu0 3
  %3776 = vperm.xlu0 %3775, %v397
  %v3777 = vpop.permute.xlu0 %3776
  %3779 = vset.pattern.permute.xlu0 3
  %3780 = vperm.xlu0 %3779, %v399
  %v3781 = vpop.permute.xlu0 %3780
  %3783 = vset.pattern.permute.xlu0 3
  %3784 = vperm.xlu0 %3783, %v401
  %v3785 = vpop.permute.xlu0 %3784
  %3787 = vset.pattern.permute.xlu0 3
  %3788 = vperm.xlu0 %3787, %v403
  %v3789 = vpop.permute.xlu0 %3788
  %3791 = vset.pattern.permute.xlu0 3
  %3792 = vperm.xlu0 %3791, %v405
  %v3793 = vpop.permute.xlu0 %3792
  %3795 = vset.pattern.permute.xlu0 3
  %3796 = vperm.xlu0 %3795, %v407
  %v3797 = vpop.permute.xlu0 %3796
  %3799 = vset.pattern.permute.xlu0 3
  %3800 = vperm.xlu0 %3799, %v409
  %v3801 = vpop.permute.xlu0 %3800
  %3803 = vset.pattern.permute.xlu0 3
  %3804 = vperm.xlu0 %3803, %v411
  %v3805 = vpop.permute.xlu0 %3804
  %3807 = vset.pattern.permute.xlu0 3
  %3808 = vperm.xlu0 %3807, %v413
  %v3809 = vpop.permute.xlu0 %3808
  %3811 = vset.pattern.permute.xlu0 3
  %3812 = vperm.xlu0 %3811, %v415
  %v3813 = vpop.permute.xlu0 %3812
  %3815 = vset.pattern.permute.xlu0 3
  %3816 = vperm.xlu0 %3815, %v417
  %v3817 = vpop.permute.xlu0 %3816
  %3819 = vset.pattern.permute.xlu0 3
  %3820 = vperm.xlu0 %3819, %v419
  %v3821 = vpop.permute.xlu0 %3820
  %3823 = vset.pattern.permute.xlu0 3
  %3824 = vperm.xlu0 %3823, %v421
  %v3825 = vpop.permute.xlu0 %3824
  %3827 = vset.pattern.permute.xlu0 3
  %3828 = vperm.xlu0 %3827, %v423
  %v3829 = vpop.permute.xlu0 %3828
  %3831 = vset.pattern.permute.xlu0 3
  %3832 = vperm.xlu0 %3831, %v425
  %v3833 = vpop.permute.xlu0 %3832
  %3835 = vset.pattern.permute.xlu0 3
  %3836 = vperm.xlu0 %3835, %v427
  %v3837 = vpop.permute.xlu0 %3836
  %3839 = vset.pattern.permute.xlu0 3
  %3840 = vperm.xlu0 %3839, %v429
  %v3841 = vpop.permute.xlu0 %3840
  %3843 = vset.pattern.permute.xlu0 3
  %3844 = vperm.xlu0 %3843, %v431
  %v3845 = vpop.permute.xlu0 %3844
  %3847 = vset.pattern.permute.xlu0 3
  %3848 = vperm.xlu0 %3847, %v433
  %v3849 = vpop.permute.xlu0 %3848
  %3851 = vset.pattern.permute.xlu0 3
  %3852 = vperm.xlu0 %3851, %v435
  %v3853 = vpop.permute.xlu0 %3852
  %3855 = vset.pattern.permute.xlu0 3
  %3856 = vperm.xlu0 %3855, %v437
  %v3857 = vpop.permute.xlu0 %3856
  %3859 = vset.pattern.permute.xlu0 3
  %3860 = vperm.xlu0 %3859, %v439
  %v3861 = vpop.permute.xlu0 %3860
  %3863 = vset.pattern.permute.xlu0 3
  %3864 = vperm.xlu0 %3863, %v441
  %v3865 = vpop.permute.xlu0 %3864
  %3867 = vset.pattern.permute.xlu0 3
  %3868 = vperm.xlu0 %3867, %v443
  %v3869 = vpop.permute.xlu0 %3868
  %3871 = vset.pattern.permute.xlu0 3
  %3872 = vperm.xlu0 %3871, %v445
  %v3873 = vpop.permute.xlu0 %3872
  %3875 = vset.pattern.permute.xlu0 3
  %3876 = vperm.xlu0 %3875, %v447
  %v3877 = vpop.permute.xlu0 %3876
  %3879 = vset.pattern.permute.xlu0 3
  %3880 = vperm.xlu0 %3879, %v449
  %v3881 = vpop.permute.xlu0 %3880
  %3883 = vset.pattern.permute.xlu0 3
  %3884 = vperm.xlu0 %3883, %v451
  %v3885 = vpop.permute.xlu0 %3884
  %3887 = vset.pattern.permute.xlu0 3
  %3888 = vperm.xlu0 %3887, %v453
  %v3889 = vpop.permute.xlu0 %3888
  %3891 = vset.pattern.permute.xlu0 3
  %3892 = vperm.xlu0 %3891, %v455
  %v3893 = vpop.permute.xlu0 %3892
  %3895 = vset.pattern.permute.xlu0 3
  %3896 = vperm.xlu0 %3895, %v457
  %v3897 = vpop.permute.xlu0 %3896
  %3899 = vset.pattern.permute.xlu0 3
  %3900 = vperm.xlu0 %3899, %v459
  %v3901 = vpop.permute.xlu0 %3900
  %3903 = vset.pattern.permute.xlu0 3
  %3904 = vperm.xlu0 %3903, %v461
  %v3905 = vpop.permute.xlu0 %3904
  %3907 = vset.pattern.permute.xlu0 3
  %3908 = vperm.xlu0 %3907, %v463
  %v3909 = vpop.permute.xlu0 %3908
  %3911 = vset.pattern.permute.xlu0 3
  %3912 = vperm.xlu0 %3911, %v465
  %v3913 = vpop.permute.xlu0 %3912
  %v3915 = vmul.f32 %v3661, %v3405
  %v3916 = vmul.f32 %v3665, %v3408
  %v3917 = vmul.f32 %v3669, %v3413
  %v3918 = vmul.f32 %v3673, %v3416
  %v3919 = vmul.f32 %v3677, %v3421
  %v3920 = vmul.f32 %v3681, %v3424
  %v3921 = vmul.f32 %v3685, %v3429
  %v3922 = vmul.f32 %v3689, %v3432
  %v3923 = vmul.f32 %v3693, %v3437
  %v3924 = vmul.f32 %v3697, %v3440
  %v3925 = vmul.f32 %v3701, %v3445
  %v3926 = vmul.f32 %v3705, %v3448
  %v3927 = vmul.f32 %v3709, %v3453
  %v3928 = vmul.f32 %v3713, %v3456
  %v3929 = vmul.f32 %v3717, %v3461
  %v3930 = vmul.f32 %v3721, %v3464
  %v3931 = vmul.f32 %v3725, %v3469
  %v3932 = vmul.f32 %v3729, %v3472
  %v3933 = vmul.f32 %v3733, %v3477
  %v3934 = vmul.f32 %v3737, %v3480
  %v3935 = vmul.f32 %v3741, %v3485
  %v3936 = vmul.f32 %v3745, %v3488
  %v3937 = vmul.f32 %v3749, %v3493
  %v3938 = vmul.f32 %v3753, %v3496
  %v3939 = vmul.f32 %v3757, %v3501
  %v3940 = vmul.f32 %v3761, %v3504
  %v3941 = vmul.f32 %v3765, %v3509
  %v3942 = vmul.f32 %v3769, %v3512
  %v3943 = vmul.f32 %v3773, %v3517
  %v3944 = vmul.f32 %v3777, %v3520
  %v3945 = vmul.f32 %v3781, %v3525
  %v3946 = vmul.f32 %v3785, %v3528
  %v3947 = vmul.f32 %v3789, %v3533
  %v3948 = vmul.f32 %v3793, %v3536
  %v3949 = vmul.f32 %v3797, %v3541
  %v3950 = vmul.f32 %v3801, %v3544
  %v3951 = vmul.f32 %v3805, %v3549
  %v3952 = vmul.f32 %v3809, %v3552
  %v3953 = vmul.f32 %v3813, %v3557
  %v3954 = vmul.f32 %v3817, %v3560
  %v3955 = vmul.f32 %v3821, %v3565
  %v3956 = vmul.f32 %v3825, %v3568
  %v3957 = vmul.f32 %v3829, %v3573
  %v3958 = vmul.f32 %v3833, %v3576
  %v3959 = vmul.f32 %v3837, %v3581
  %v3960 = vmul.f32 %v3841, %v3584
  %v3961 = vmul.f32 %v3845, %v3589
  %v3962 = vmul.f32 %v3849, %v3592
  %v3963 = vmul.f32 %v3853, %v3597
  %v3964 = vmul.f32 %v3857, %v3600
  %v3965 = vmul.f32 %v3861, %v3605
  %v3966 = vmul.f32 %v3865, %v3608
  %v3967 = vmul.f32 %v3869, %v3613
  %v3968 = vmul.f32 %v3873, %v3616
  %v3969 = vmul.f32 %v3877, %v3621
  %v3970 = vmul.f32 %v3881, %v3624
  %v3971 = vmul.f32 %v3885, %v3629
  %v3972 = vmul.f32 %v3889, %v3632
  %v3973 = vmul.f32 %v3893, %v3637
  %v3974 = vmul.f32 %v3897, %v3640
  %v3975 = vmul.f32 %v3901, %v3645
  %v3976 = vmul.f32 %v3905, %v3648
  %v3977 = vmul.f32 %v3909, %v3653
  %v3978 = vmul.f32 %v3913, %v3656
  %v3979 = vadd.f32 %v3141, %v3915
  %v3980 = vadd.f32 %v3142, %v3916
  %v3981 = vadd.f32 %v3143, %v3917
  %v3982 = vadd.f32 %v3144, %v3918
  %v3983 = vadd.f32 %v3145, %v3919
  %v3984 = vadd.f32 %v3146, %v3920
  %v3985 = vadd.f32 %v3147, %v3921
  %v3986 = vadd.f32 %v3148, %v3922
  %v3987 = vadd.f32 %v3149, %v3923
  %v3988 = vadd.f32 %v3150, %v3924
  %v3989 = vadd.f32 %v3151, %v3925
  %v3990 = vadd.f32 %v3152, %v3926
  %v3991 = vadd.f32 %v3153, %v3927
  %v3992 = vadd.f32 %v3154, %v3928
  %v3993 = vadd.f32 %v3155, %v3929
  %v3994 = vadd.f32 %v3156, %v3930
  %v3995 = vadd.f32 %v3157, %v3931
  %v3996 = vadd.f32 %v3158, %v3932
  %v3997 = vadd.f32 %v3159, %v3933
  %v3998 = vadd.f32 %v3160, %v3934
  %v3999 = vadd.f32 %v3161, %v3935
  %v4000 = vadd.f32 %v3162, %v3936
  %v4001 = vadd.f32 %v3163, %v3937
  %v4002 = vadd.f32 %v3164, %v3938
  %v4003 = vadd.f32 %v3165, %v3939
  %v4004 = vadd.f32 %v3166, %v3940
  %v4005 = vadd.f32 %v3167, %v3941
  %v4006 = vadd.f32 %v3168, %v3942
  %v4007 = vadd.f32 %v3169, %v3943
  %v4008 = vadd.f32 %v3170, %v3944
  %v4009 = vadd.f32 %v3171, %v3945
  %v4010 = vadd.f32 %v3172, %v3946
  %v4011 = vadd.f32 %v3173, %v3947
  %v4012 = vadd.f32 %v3174, %v3948
  %v4013 = vadd.f32 %v3175, %v3949
  %v4014 = vadd.f32 %v3176, %v3950
  %v4015 = vadd.f32 %v3177, %v3951
  %v4016 = vadd.f32 %v3178, %v3952
  %v4017 = vadd.f32 %v3179, %v3953
  %v4018 = vadd.f32 %v3180, %v3954
  %v4019 = vadd.f32 %v3181, %v3955
  %v4020 = vadd.f32 %v3182, %v3956
  %v4021 = vadd.f32 %v3183, %v3957
  %v4022 = vadd.f32 %v3184, %v3958
  %v4023 = vadd.f32 %v3185, %v3959
  %v4024 = vadd.f32 %v3186, %v3960
  %v4025 = vadd.f32 %v3187, %v3961
  %v4026 = vadd.f32 %v3188, %v3962
  %v4027 = vadd.f32 %v3189, %v3963
  %v4028 = vadd.f32 %v3190, %v3964
  %v4029 = vadd.f32 %v3191, %v3965
  %v4030 = vadd.f32 %v3192, %v3966
  %v4031 = vadd.f32 %v3193, %v3967
  %v4032 = vadd.f32 %v3194, %v3968
  %v4033 = vadd.f32 %v3195, %v3969
  %v4034 = vadd.f32 %v3196, %v3970
  %v4035 = vadd.f32 %v3197, %v3971
  %v4036 = vadd.f32 %v3198, %v3972
  %v4037 = vadd.f32 %v3199, %v3973
  %v4038 = vadd.f32 %v3200, %v3974
  %v4039 = vadd.f32 %v3201, %v3975
  %v4040 = vadd.f32 %v3202, %v3976
  %v4041 = vadd.f32 %v3203, %v3977
  %v4042 = vadd.f32 %v3204, %v3978
  %s4043 = scalar_lea.vmem %s2, 8
  %v4044 = vld [vmem:[%s4043] sm:$0x3]
  %4045 = vrot.lane.b32.xlu0 %v659, 112
  %v4046 = vpop.permute.xlu0 %4045
  %4047 = vrot.lane.b32.xlu0 %v660, 112
  %v4048 = vpop.permute.xlu0 %4047
  %4049 = vrot.lane.b32.xlu0 %v661, 112
  %v4050 = vpop.permute.xlu0 %4049
  %4051 = vrot.lane.b32.xlu0 %v662, 112
  %v4052 = vpop.permute.xlu0 %4051
  %4053 = vrot.lane.b32.xlu0 %v663, 112
  %v4054 = vpop.permute.xlu0 %4053
  %4055 = vrot.lane.b32.xlu0 %v664, 112
  %v4056 = vpop.permute.xlu0 %4055
  %4057 = vrot.lane.b32.xlu0 %v665, 112
  %v4058 = vpop.permute.xlu0 %4057
  %4059 = vrot.lane.b32.xlu0 %v666, 112
  %v4060 = vpop.permute.xlu0 %4059
  %4061 = vrot.lane.b32.xlu0 %v667, 112
  %v4062 = vpop.permute.xlu0 %4061
  %4063 = vrot.lane.b32.xlu0 %v668, 112
  %v4064 = vpop.permute.xlu0 %4063
  %4065 = vrot.lane.b32.xlu0 %v669, 112
  %v4066 = vpop.permute.xlu0 %4065
  %4067 = vrot.lane.b32.xlu0 %v670, 112
  %v4068 = vpop.permute.xlu0 %4067
  %4069 = vrot.lane.b32.xlu0 %v671, 112
  %v4070 = vpop.permute.xlu0 %4069
  %4071 = vrot.lane.b32.xlu0 %v672, 112
  %v4072 = vpop.permute.xlu0 %4071
  %4073 = vrot.lane.b32.xlu0 %v673, 112
  %v4074 = vpop.permute.xlu0 %4073
  %4075 = vrot.lane.b32.xlu0 %v674, 112
  %v4076 = vpop.permute.xlu0 %4075
  %4077 = vrot.lane.b32.xlu0 %v675, 112
  %v4078 = vpop.permute.xlu0 %4077
  %4079 = vrot.lane.b32.xlu0 %v676, 112
  %v4080 = vpop.permute.xlu0 %4079
  %4081 = vrot.lane.b32.xlu0 %v677, 112
  %v4082 = vpop.permute.xlu0 %4081
  %4083 = vrot.lane.b32.xlu0 %v678, 112
  %v4084 = vpop.permute.xlu0 %4083
  %4085 = vrot.lane.b32.xlu0 %v679, 112
  %v4086 = vpop.permute.xlu0 %4085
  %4087 = vrot.lane.b32.xlu0 %v680, 112
  %v4088 = vpop.permute.xlu0 %4087
  %4089 = vrot.lane.b32.xlu0 %v681, 112
  %v4090 = vpop.permute.xlu0 %4089
  %4091 = vrot.lane.b32.xlu0 %v682, 112
  %v4092 = vpop.permute.xlu0 %4091
  %4093 = vrot.lane.b32.xlu0 %v683, 112
  %v4094 = vpop.permute.xlu0 %4093
  %4095 = vrot.lane.b32.xlu0 %v684, 112
  %v4096 = vpop.permute.xlu0 %4095
  %4097 = vrot.lane.b32.xlu0 %v685, 112
  %v4098 = vpop.permute.xlu0 %4097
  %4099 = vrot.lane.b32.xlu0 %v686, 112
  %v4100 = vpop.permute.xlu0 %4099
  %4101 = vrot.lane.b32.xlu0 %v687, 112
  %v4102 = vpop.permute.xlu0 %4101
  %4103 = vrot.lane.b32.xlu0 %v688, 112
  %v4104 = vpop.permute.xlu0 %4103
  %4105 = vrot.lane.b32.xlu0 %v689, 112
  %v4106 = vpop.permute.xlu0 %4105
  %4107 = vrot.lane.b32.xlu0 %v690, 112
  %v4108 = vpop.permute.xlu0 %4107
  %v4110 = vsel %vm691, %v4046, 0
  %v4113 = vsel %vm691, %v4048, 0
  %v4116 = vsel %vm691, %v4050, 0
  %v4119 = vsel %vm691, %v4052, 0
  %v4122 = vsel %vm691, %v4054, 0
  %v4125 = vsel %vm691, %v4056, 0
  %v4128 = vsel %vm691, %v4058, 0
  %v4131 = vsel %vm691, %v4060, 0
  %v4134 = vsel %vm691, %v4062, 0
  %v4137 = vsel %vm691, %v4064, 0
  %v4140 = vsel %vm691, %v4066, 0
  %v4143 = vsel %vm691, %v4068, 0
  %v4146 = vsel %vm691, %v4070, 0
  %v4149 = vsel %vm691, %v4072, 0
  %v4152 = vsel %vm691, %v4074, 0
  %v4155 = vsel %vm691, %v4076, 0
  %v4158 = vsel %vm691, %v4078, 0
  %v4161 = vsel %vm691, %v4080, 0
  %v4164 = vsel %vm691, %v4082, 0
  %v4167 = vsel %vm691, %v4084, 0
  %v4170 = vsel %vm691, %v4086, 0
  %v4173 = vsel %vm691, %v4088, 0
  %v4176 = vsel %vm691, %v4090, 0
  %v4179 = vsel %vm691, %v4092, 0
  %v4182 = vsel %vm691, %v4094, 0
  %v4185 = vsel %vm691, %v4096, 0
  %v4188 = vsel %vm691, %v4098, 0
  %v4191 = vsel %vm691, %v4100, 0
  %v4194 = vsel %vm691, %v4102, 0
  %v4197 = vsel %vm691, %v4104, 0
  %v4200 = vsel %vm691, %v4106, 0
  %v4203 = vsel %vm691, %v4108, 0
  %v4206 = vsel %vm788, %v4044, 0
  %4208 = vmatprep.subr.bf16.mxu0 0
  %4209 = vmatpush1.bf16.msra.mxu0 0
  %4210 = vmatprep.subr.bf16.mxu0 0
  %4211 = vmatpush1.bf16.msra.mxu0 0
  %4212 = vmatprep.subr.bf16.mxu0 0
  %4213 = vmatpush1.bf16.msra.mxu0 0
  %4214 = vmatprep.subr.bf16.mxu0 0
  %4215 = vmatpush1.bf16.msra.mxu0 0
  %4216 = vmatprep.subr.bf16.mxu0 0
  %4217 = vmatpush1.bf16.msra.mxu0 0
  %4218 = vmatprep.subr.bf16.mxu0 0
  %4219 = vmatpush1.bf16.msra.mxu0 0
  %4220 = vmatprep.subr.bf16.mxu0 0
  %4221 = vmatpush1.bf16.msra.mxu0 0
  %4222 = vmatprep.subr.bf16.mxu0 0
  %4223 = vmatpush1.bf16.msra.mxu0 %v4206
  %4224 = vmatprep.subr.bf16.mxu0 0
  %4225 = vmatpush2.bf16.msra.mxu0 0
  %4226 = vmatprep.subr.bf16.mxu0 0
  %4227 = vmatpush2.bf16.msra.mxu0 0
  %4228 = vmatprep.subr.bf16.mxu0 0
  %4229 = vmatpush2.bf16.msra.mxu0 0
  %4230 = vmatprep.subr.bf16.mxu0 0
  %4231 = vmatpush2.bf16.msra.mxu0 0
  %4232 = vmatprep.subr.bf16.mxu0 0
  %4233 = vmatpush2.bf16.msra.mxu0 0
  %4234 = vmatprep.subr.bf16.mxu0 0
  %4235 = vmatpush2.bf16.msra.mxu0 0
  %4236 = vmatprep.subr.bf16.mxu0 0
  %4237 = vmatpush2.bf16.msra.mxu0 0
  %4238 = vmatprep.subr.bf16.mxu0 0
  %4239 = vmatpush2.bf16.msra.mxu0 0
  %4240 = vmatprep.mubr.bf16.mxu0 0
  %4241 = vmatmul.mubr.bf16.gmra.mxu0 %v4110
  %v4242 = vpop.f32.mrf.mxu0
  %v4243 = vadd.f32 0.0, %v4242
  %v4244 = vpop.f32.mrf.mxu0
  %v4245 = vpop.f32.mrf.mxu0
  %v4246 = vadd.f32 0.0, %v4245
  %v4247 = vpop.f32.mrf.mxu0
  %4248 = vmatprep.mubr.bf16.mxu0 0
  %4249 = vmatmul.mubr.bf16.gmra.mxu0 %v4113
  %v4250 = vpop.f32.mrf.mxu0
  %v4251 = vadd.f32 0.0, %v4250
  %v4252 = vpop.f32.mrf.mxu0
  %v4253 = vpop.f32.mrf.mxu0
  %v4254 = vadd.f32 0.0, %v4253
  %v4255 = vpop.f32.mrf.mxu0
  %4256 = vmatprep.mubr.bf16.mxu0 0
  %4257 = vmatmul.mubr.bf16.gmra.mxu0 %v4116
  %v4258 = vpop.f32.mrf.mxu0
  %v4259 = vadd.f32 0.0, %v4258
  %v4260 = vpop.f32.mrf.mxu0
  %v4261 = vpop.f32.mrf.mxu0
  %v4262 = vadd.f32 0.0, %v4261
  %v4263 = vpop.f32.mrf.mxu0
  %4264 = vmatprep.mubr.bf16.mxu0 0
  %4265 = vmatmul.mubr.bf16.gmra.mxu0 %v4119
  %v4266 = vpop.f32.mrf.mxu0
  %v4267 = vadd.f32 0.0, %v4266
  %v4268 = vpop.f32.mrf.mxu0
  %v4269 = vpop.f32.mrf.mxu0
  %v4270 = vadd.f32 0.0, %v4269
  %v4271 = vpop.f32.mrf.mxu0
  %4272 = vmatprep.mubr.bf16.mxu0 0
  %4273 = vmatmul.mubr.bf16.gmra.mxu0 %v4122
  %v4274 = vpop.f32.mrf.mxu0
  %v4275 = vadd.f32 0.0, %v4274
  %v4276 = vpop.f32.mrf.mxu0
  %v4277 = vpop.f32.mrf.mxu0
  %v4278 = vadd.f32 0.0, %v4277
  %v4279 = vpop.f32.mrf.mxu0
  %4280 = vmatprep.mubr.bf16.mxu0 0
  %4281 = vmatmul.mubr.bf16.gmra.mxu0 %v4125
  %v4282 = vpop.f32.mrf.mxu0
  %v4283 = vadd.f32 0.0, %v4282
  %v4284 = vpop.f32.mrf.mxu0
  %v4285 = vpop.f32.mrf.mxu0
  %v4286 = vadd.f32 0.0, %v4285
  %v4287 = vpop.f32.mrf.mxu0
  %4288 = vmatprep.mubr.bf16.mxu0 0
  %4289 = vmatmul.mubr.bf16.gmra.mxu0 %v4128
  %v4290 = vpop.f32.mrf.mxu0
  %v4291 = vadd.f32 0.0, %v4290
  %v4292 = vpop.f32.mrf.mxu0
  %v4293 = vpop.f32.mrf.mxu0
  %v4294 = vadd.f32 0.0, %v4293
  %v4295 = vpop.f32.mrf.mxu0
  %4296 = vmatprep.mubr.bf16.mxu0 0
  %4297 = vmatmul.mubr.bf16.gmra.mxu0 %v4131
  %v4298 = vpop.f32.mrf.mxu0
  %v4299 = vadd.f32 0.0, %v4298
  %v4300 = vpop.f32.mrf.mxu0
  %v4301 = vpop.f32.mrf.mxu0
  %v4302 = vadd.f32 0.0, %v4301
  %v4303 = vpop.f32.mrf.mxu0
  %4304 = vmatprep.mubr.bf16.mxu0 0
  %4305 = vmatmul.mubr.bf16.gmra.mxu0 %v4134
  %v4306 = vpop.f32.mrf.mxu0
  %v4307 = vadd.f32 0.0, %v4306
  %v4308 = vpop.f32.mrf.mxu0
  %v4309 = vpop.f32.mrf.mxu0
  %v4310 = vadd.f32 0.0, %v4309
  %v4311 = vpop.f32.mrf.mxu0
  %4312 = vmatprep.mubr.bf16.mxu0 0
  %4313 = vmatmul.mubr.bf16.gmra.mxu0 %v4137
  %v4314 = vpop.f32.mrf.mxu0
  %v4315 = vadd.f32 0.0, %v4314
  %v4316 = vpop.f32.mrf.mxu0
  %v4317 = vpop.f32.mrf.mxu0
  %v4318 = vadd.f32 0.0, %v4317
  %v4319 = vpop.f32.mrf.mxu0
  %4320 = vmatprep.mubr.bf16.mxu0 0
  %4321 = vmatmul.mubr.bf16.gmra.mxu0 %v4140
  %v4322 = vpop.f32.mrf.mxu0
  %v4323 = vadd.f32 0.0, %v4322
  %v4324 = vpop.f32.mrf.mxu0
  %v4325 = vpop.f32.mrf.mxu0
  %v4326 = vadd.f32 0.0, %v4325
  %v4327 = vpop.f32.mrf.mxu0
  %4328 = vmatprep.mubr.bf16.mxu0 0
  %4329 = vmatmul.mubr.bf16.gmra.mxu0 %v4143
  %v4330 = vpop.f32.mrf.mxu0
  %v4331 = vadd.f32 0.0, %v4330
  %v4332 = vpop.f32.mrf.mxu0
  %v4333 = vpop.f32.mrf.mxu0
  %v4334 = vadd.f32 0.0, %v4333
  %v4335 = vpop.f32.mrf.mxu0
  %4336 = vmatprep.mubr.bf16.mxu0 0
  %4337 = vmatmul.mubr.bf16.gmra.mxu0 %v4146
  %v4338 = vpop.f32.mrf.mxu0
  %v4339 = vadd.f32 0.0, %v4338
  %v4340 = vpop.f32.mrf.mxu0
  %v4341 = vpop.f32.mrf.mxu0
  %v4342 = vadd.f32 0.0, %v4341
  %v4343 = vpop.f32.mrf.mxu0
  %4344 = vmatprep.mubr.bf16.mxu0 0
  %4345 = vmatmul.mubr.bf16.gmra.mxu0 %v4149
  %v4346 = vpop.f32.mrf.mxu0
  %v4347 = vadd.f32 0.0, %v4346
  %v4348 = vpop.f32.mrf.mxu0
  %v4349 = vpop.f32.mrf.mxu0
  %v4350 = vadd.f32 0.0, %v4349
  %v4351 = vpop.f32.mrf.mxu0
  %4352 = vmatprep.mubr.bf16.mxu0 0
  %4353 = vmatmul.mubr.bf16.gmra.mxu0 %v4152
  %v4354 = vpop.f32.mrf.mxu0
  %v4355 = vadd.f32 0.0, %v4354
  %v4356 = vpop.f32.mrf.mxu0
  %v4357 = vpop.f32.mrf.mxu0
  %v4358 = vadd.f32 0.0, %v4357
  %v4359 = vpop.f32.mrf.mxu0
  %4360 = vmatprep.mubr.bf16.mxu0 0
  %4361 = vmatmul.mubr.bf16.gmra.mxu0 %v4155
  %v4362 = vpop.f32.mrf.mxu0
  %v4363 = vadd.f32 0.0, %v4362
  %v4364 = vpop.f32.mrf.mxu0
  %v4365 = vpop.f32.mrf.mxu0
  %v4366 = vadd.f32 0.0, %v4365
  %v4367 = vpop.f32.mrf.mxu0
  %4368 = vmatprep.mubr.bf16.mxu0 0
  %4369 = vmatmul.mubr.bf16.gmra.mxu0 %v4158
  %v4370 = vpop.f32.mrf.mxu0
  %v4371 = vadd.f32 0.0, %v4370
  %v4372 = vpop.f32.mrf.mxu0
  %v4373 = vpop.f32.mrf.mxu0
  %v4374 = vadd.f32 0.0, %v4373
  %v4375 = vpop.f32.mrf.mxu0
  %4376 = vmatprep.mubr.bf16.mxu0 0
  %4377 = vmatmul.mubr.bf16.gmra.mxu0 %v4161
  %v4378 = vpop.f32.mrf.mxu0
  %v4379 = vadd.f32 0.0, %v4378
  %v4380 = vpop.f32.mrf.mxu0
  %v4381 = vpop.f32.mrf.mxu0
  %v4382 = vadd.f32 0.0, %v4381
  %v4383 = vpop.f32.mrf.mxu0
  %4384 = vmatprep.mubr.bf16.mxu0 0
  %4385 = vmatmul.mubr.bf16.gmra.mxu0 %v4164
  %v4386 = vpop.f32.mrf.mxu0
  %v4387 = vadd.f32 0.0, %v4386
  %v4388 = vpop.f32.mrf.mxu0
  %v4389 = vpop.f32.mrf.mxu0
  %v4390 = vadd.f32 0.0, %v4389
  %v4391 = vpop.f32.mrf.mxu0
  %4392 = vmatprep.mubr.bf16.mxu0 0
  %4393 = vmatmul.mubr.bf16.gmra.mxu0 %v4167
  %v4394 = vpop.f32.mrf.mxu0
  %v4395 = vadd.f32 0.0, %v4394
  %v4396 = vpop.f32.mrf.mxu0
  %v4397 = vpop.f32.mrf.mxu0
  %v4398 = vadd.f32 0.0, %v4397
  %v4399 = vpop.f32.mrf.mxu0
  %4400 = vmatprep.mubr.bf16.mxu0 0
  %4401 = vmatmul.mubr.bf16.gmra.mxu0 %v4170
  %v4402 = vpop.f32.mrf.mxu0
  %v4403 = vadd.f32 0.0, %v4402
  %v4404 = vpop.f32.mrf.mxu0
  %v4405 = vpop.f32.mrf.mxu0
  %v4406 = vadd.f32 0.0, %v4405
  %v4407 = vpop.f32.mrf.mxu0
  %4408 = vmatprep.mubr.bf16.mxu0 0
  %4409 = vmatmul.mubr.bf16.gmra.mxu0 %v4173
  %v4410 = vpop.f32.mrf.mxu0
  %v4411 = vadd.f32 0.0, %v4410
  %v4412 = vpop.f32.mrf.mxu0
  %v4413 = vpop.f32.mrf.mxu0
  %v4414 = vadd.f32 0.0, %v4413
  %v4415 = vpop.f32.mrf.mxu0
  %4416 = vmatprep.mubr.bf16.mxu0 0
  %4417 = vmatmul.mubr.bf16.gmra.mxu0 %v4176
  %v4418 = vpop.f32.mrf.mxu0
  %v4419 = vadd.f32 0.0, %v4418
  %v4420 = vpop.f32.mrf.mxu0
  %v4421 = vpop.f32.mrf.mxu0
  %v4422 = vadd.f32 0.0, %v4421
  %v4423 = vpop.f32.mrf.mxu0
  %4424 = vmatprep.mubr.bf16.mxu0 0
  %4425 = vmatmul.mubr.bf16.gmra.mxu0 %v4179
  %v4426 = vpop.f32.mrf.mxu0
  %v4427 = vadd.f32 0.0, %v4426
  %v4428 = vpop.f32.mrf.mxu0
  %v4429 = vpop.f32.mrf.mxu0
  %v4430 = vadd.f32 0.0, %v4429
  %v4431 = vpop.f32.mrf.mxu0
  %4432 = vmatprep.mubr.bf16.mxu0 0
  %4433 = vmatmul.mubr.bf16.gmra.mxu0 %v4182
  %v4434 = vpop.f32.mrf.mxu0
  %v4435 = vadd.f32 0.0, %v4434
  %v4436 = vpop.f32.mrf.mxu0
  %v4437 = vpop.f32.mrf.mxu0
  %v4438 = vadd.f32 0.0, %v4437
  %v4439 = vpop.f32.mrf.mxu0
  %4440 = vmatprep.mubr.bf16.mxu0 0
  %4441 = vmatmul.mubr.bf16.gmra.mxu0 %v4185
  %v4442 = vpop.f32.mrf.mxu0
  %v4443 = vadd.f32 0.0, %v4442
  %v4444 = vpop.f32.mrf.mxu0
  %v4445 = vpop.f32.mrf.mxu0
  %v4446 = vadd.f32 0.0, %v4445
  %v4447 = vpop.f32.mrf.mxu0
  %4448 = vmatprep.mubr.bf16.mxu0 0
  %4449 = vmatmul.mubr.bf16.gmra.mxu0 %v4188
  %v4450 = vpop.f32.mrf.mxu0
  %v4451 = vadd.f32 0.0, %v4450
  %v4452 = vpop.f32.mrf.mxu0
  %v4453 = vpop.f32.mrf.mxu0
  %v4454 = vadd.f32 0.0, %v4453
  %v4455 = vpop.f32.mrf.mxu0
  %4456 = vmatprep.mubr.bf16.mxu0 0
  %4457 = vmatmul.mubr.bf16.gmra.mxu0 %v4191
  %v4458 = vpop.f32.mrf.mxu0
  %v4459 = vadd.f32 0.0, %v4458
  %v4460 = vpop.f32.mrf.mxu0
  %v4461 = vpop.f32.mrf.mxu0
  %v4462 = vadd.f32 0.0, %v4461
  %v4463 = vpop.f32.mrf.mxu0
  %4464 = vmatprep.mubr.bf16.mxu0 0
  %4465 = vmatmul.mubr.bf16.gmra.mxu0 %v4194
  %v4466 = vpop.f32.mrf.mxu0
  %v4467 = vadd.f32 0.0, %v4466
  %v4468 = vpop.f32.mrf.mxu0
  %v4469 = vpop.f32.mrf.mxu0
  %v4470 = vadd.f32 0.0, %v4469
  %v4471 = vpop.f32.mrf.mxu0
  %4472 = vmatprep.mubr.bf16.mxu0 0
  %4473 = vmatmul.mubr.bf16.gmra.mxu0 %v4197
  %v4474 = vpop.f32.mrf.mxu0
  %v4475 = vadd.f32 0.0, %v4474
  %v4476 = vpop.f32.mrf.mxu0
  %v4477 = vpop.f32.mrf.mxu0
  %v4478 = vadd.f32 0.0, %v4477
  %v4479 = vpop.f32.mrf.mxu0
  %4480 = vmatprep.mubr.bf16.mxu0 0
  %4481 = vmatmul.mubr.bf16.gmra.mxu0 %v4200
  %v4482 = vpop.f32.mrf.mxu0
  %v4483 = vadd.f32 0.0, %v4482
  %v4484 = vpop.f32.mrf.mxu0
  %v4485 = vpop.f32.mrf.mxu0
  %v4486 = vadd.f32 0.0, %v4485
  %v4487 = vpop.f32.mrf.mxu0
  %4488 = vmatprep.mubr.bf16.mxu0 0
  %4489 = vmatmul.mubr.bf16.gmra.mxu0 %v4203
  %v4490 = vpop.f32.mrf.mxu0
  %v4491 = vadd.f32 0.0, %v4490
  %v4492 = vpop.f32.mrf.mxu0
  %v4493 = vpop.f32.mrf.mxu0
  %v4494 = vadd.f32 0.0, %v4493
  %v4495 = vpop.f32.mrf.mxu0
  %4496 = vdwg.mxu0
  %4497 = vset.pattern.permute.xlu0 4
  %4498 = vperm.xlu0 %4497, %v339
  %v4499 = vpop.permute.xlu0 %4498
  %4501 = vset.pattern.permute.xlu0 4
  %4502 = vperm.xlu0 %4501, %v341
  %v4503 = vpop.permute.xlu0 %4502
  %4505 = vset.pattern.permute.xlu0 4
  %4506 = vperm.xlu0 %4505, %v343
  %v4507 = vpop.permute.xlu0 %4506
  %4509 = vset.pattern.permute.xlu0 4
  %4510 = vperm.xlu0 %4509, %v345
  %v4511 = vpop.permute.xlu0 %4510
  %4513 = vset.pattern.permute.xlu0 4
  %4514 = vperm.xlu0 %4513, %v347
  %v4515 = vpop.permute.xlu0 %4514
  %4517 = vset.pattern.permute.xlu0 4
  %4518 = vperm.xlu0 %4517, %v349
  %v4519 = vpop.permute.xlu0 %4518
  %4521 = vset.pattern.permute.xlu0 4
  %4522 = vperm.xlu0 %4521, %v351
  %v4523 = vpop.permute.xlu0 %4522
  %4525 = vset.pattern.permute.xlu0 4
  %4526 = vperm.xlu0 %4525, %v353
  %v4527 = vpop.permute.xlu0 %4526
  %4529 = vset.pattern.permute.xlu0 4
  %4530 = vperm.xlu0 %4529, %v355
  %v4531 = vpop.permute.xlu0 %4530
  %4533 = vset.pattern.permute.xlu0 4
  %4534 = vperm.xlu0 %4533, %v357
  %v4535 = vpop.permute.xlu0 %4534
  %4537 = vset.pattern.permute.xlu0 4
  %4538 = vperm.xlu0 %4537, %v359
  %v4539 = vpop.permute.xlu0 %4538
  %4541 = vset.pattern.permute.xlu0 4
  %4542 = vperm.xlu0 %4541, %v361
  %v4543 = vpop.permute.xlu0 %4542
  %4545 = vset.pattern.permute.xlu0 4
  %4546 = vperm.xlu0 %4545, %v363
  %v4547 = vpop.permute.xlu0 %4546
  %4549 = vset.pattern.permute.xlu0 4
  %4550 = vperm.xlu0 %4549, %v365
  %v4551 = vpop.permute.xlu0 %4550
  %4553 = vset.pattern.permute.xlu0 4
  %4554 = vperm.xlu0 %4553, %v367
  %v4555 = vpop.permute.xlu0 %4554
  %4557 = vset.pattern.permute.xlu0 4
  %4558 = vperm.xlu0 %4557, %v369
  %v4559 = vpop.permute.xlu0 %4558
  %4561 = vset.pattern.permute.xlu0 4
  %4562 = vperm.xlu0 %4561, %v371
  %v4563 = vpop.permute.xlu0 %4562
  %4565 = vset.pattern.permute.xlu0 4
  %4566 = vperm.xlu0 %4565, %v373
  %v4567 = vpop.permute.xlu0 %4566
  %4569 = vset.pattern.permute.xlu0 4
  %4570 = vperm.xlu0 %4569, %v375
  %v4571 = vpop.permute.xlu0 %4570
  %4573 = vset.pattern.permute.xlu0 4
  %4574 = vperm.xlu0 %4573, %v377
  %v4575 = vpop.permute.xlu0 %4574
  %4577 = vset.pattern.permute.xlu0 4
  %4578 = vperm.xlu0 %4577, %v379
  %v4579 = vpop.permute.xlu0 %4578
  %4581 = vset.pattern.permute.xlu0 4
  %4582 = vperm.xlu0 %4581, %v381
  %v4583 = vpop.permute.xlu0 %4582
  %4585 = vset.pattern.permute.xlu0 4
  %4586 = vperm.xlu0 %4585, %v383
  %v4587 = vpop.permute.xlu0 %4586
  %4589 = vset.pattern.permute.xlu0 4
  %4590 = vperm.xlu0 %4589, %v385
  %v4591 = vpop.permute.xlu0 %4590
  %4593 = vset.pattern.permute.xlu0 4
  %4594 = vperm.xlu0 %4593, %v387
  %v4595 = vpop.permute.xlu0 %4594
  %4597 = vset.pattern.permute.xlu0 4
  %4598 = vperm.xlu0 %4597, %v389
  %v4599 = vpop.permute.xlu0 %4598
  %4601 = vset.pattern.permute.xlu0 4
  %4602 = vperm.xlu0 %4601, %v391
  %v4603 = vpop.permute.xlu0 %4602
  %4605 = vset.pattern.permute.xlu0 4
  %4606 = vperm.xlu0 %4605, %v393
  %v4607 = vpop.permute.xlu0 %4606
  %4609 = vset.pattern.permute.xlu0 4
  %4610 = vperm.xlu0 %4609, %v395
  %v4611 = vpop.permute.xlu0 %4610
  %4613 = vset.pattern.permute.xlu0 4
  %4614 = vperm.xlu0 %4613, %v397
  %v4615 = vpop.permute.xlu0 %4614
  %4617 = vset.pattern.permute.xlu0 4
  %4618 = vperm.xlu0 %4617, %v399
  %v4619 = vpop.permute.xlu0 %4618
  %4621 = vset.pattern.permute.xlu0 4
  %4622 = vperm.xlu0 %4621, %v401
  %v4623 = vpop.permute.xlu0 %4622
  %4625 = vset.pattern.permute.xlu0 4
  %4626 = vperm.xlu0 %4625, %v403
  %v4627 = vpop.permute.xlu0 %4626
  %4629 = vset.pattern.permute.xlu0 4
  %4630 = vperm.xlu0 %4629, %v405
  %v4631 = vpop.permute.xlu0 %4630
  %4633 = vset.pattern.permute.xlu0 4
  %4634 = vperm.xlu0 %4633, %v407
  %v4635 = vpop.permute.xlu0 %4634
  %4637 = vset.pattern.permute.xlu0 4
  %4638 = vperm.xlu0 %4637, %v409
  %v4639 = vpop.permute.xlu0 %4638
  %4641 = vset.pattern.permute.xlu0 4
  %4642 = vperm.xlu0 %4641, %v411
  %v4643 = vpop.permute.xlu0 %4642
  %4645 = vset.pattern.permute.xlu0 4
  %4646 = vperm.xlu0 %4645, %v413
  %v4647 = vpop.permute.xlu0 %4646
  %4649 = vset.pattern.permute.xlu0 4
  %4650 = vperm.xlu0 %4649, %v415
  %v4651 = vpop.permute.xlu0 %4650
  %4653 = vset.pattern.permute.xlu0 4
  %4654 = vperm.xlu0 %4653, %v417
  %v4655 = vpop.permute.xlu0 %4654
  %4657 = vset.pattern.permute.xlu0 4
  %4658 = vperm.xlu0 %4657, %v419
  %v4659 = vpop.permute.xlu0 %4658
  %4661 = vset.pattern.permute.xlu0 4
  %4662 = vperm.xlu0 %4661, %v421
  %v4663 = vpop.permute.xlu0 %4662
  %4665 = vset.pattern.permute.xlu0 4
  %4666 = vperm.xlu0 %4665, %v423
  %v4667 = vpop.permute.xlu0 %4666
  %4669 = vset.pattern.permute.xlu0 4
  %4670 = vperm.xlu0 %4669, %v425
  %v4671 = vpop.permute.xlu0 %4670
  %4673 = vset.pattern.permute.xlu0 4
  %4674 = vperm.xlu0 %4673, %v427
  %v4675 = vpop.permute.xlu0 %4674
  %4677 = vset.pattern.permute.xlu0 4
  %4678 = vperm.xlu0 %4677, %v429
  %v4679 = vpop.permute.xlu0 %4678
  %4681 = vset.pattern.permute.xlu0 4
  %4682 = vperm.xlu0 %4681, %v431
  %v4683 = vpop.permute.xlu0 %4682
  %4685 = vset.pattern.permute.xlu0 4
  %4686 = vperm.xlu0 %4685, %v433
  %v4687 = vpop.permute.xlu0 %4686
  %4689 = vset.pattern.permute.xlu0 4
  %4690 = vperm.xlu0 %4689, %v435
  %v4691 = vpop.permute.xlu0 %4690
  %4693 = vset.pattern.permute.xlu0 4
  %4694 = vperm.xlu0 %4693, %v437
  %v4695 = vpop.permute.xlu0 %4694
  %4697 = vset.pattern.permute.xlu0 4
  %4698 = vperm.xlu0 %4697, %v439
  %v4699 = vpop.permute.xlu0 %4698
  %4701 = vset.pattern.permute.xlu0 4
  %4702 = vperm.xlu0 %4701, %v441
  %v4703 = vpop.permute.xlu0 %4702
  %4705 = vset.pattern.permute.xlu0 4
  %4706 = vperm.xlu0 %4705, %v443
  %v4707 = vpop.permute.xlu0 %4706
  %4709 = vset.pattern.permute.xlu0 4
  %4710 = vperm.xlu0 %4709, %v445
  %v4711 = vpop.permute.xlu0 %4710
  %4713 = vset.pattern.permute.xlu0 4
  %4714 = vperm.xlu0 %4713, %v447
  %v4715 = vpop.permute.xlu0 %4714
  %4717 = vset.pattern.permute.xlu0 4
  %4718 = vperm.xlu0 %4717, %v449
  %v4719 = vpop.permute.xlu0 %4718
  %4721 = vset.pattern.permute.xlu0 4
  %4722 = vperm.xlu0 %4721, %v451
  %v4723 = vpop.permute.xlu0 %4722
  %4725 = vset.pattern.permute.xlu0 4
  %4726 = vperm.xlu0 %4725, %v453
  %v4727 = vpop.permute.xlu0 %4726
  %4729 = vset.pattern.permute.xlu0 4
  %4730 = vperm.xlu0 %4729, %v455
  %v4731 = vpop.permute.xlu0 %4730
  %4733 = vset.pattern.permute.xlu0 4
  %4734 = vperm.xlu0 %4733, %v457
  %v4735 = vpop.permute.xlu0 %4734
  %4737 = vset.pattern.permute.xlu0 4
  %4738 = vperm.xlu0 %4737, %v459
  %v4739 = vpop.permute.xlu0 %4738
  %4741 = vset.pattern.permute.xlu0 4
  %4742 = vperm.xlu0 %4741, %v461
  %v4743 = vpop.permute.xlu0 %4742
  %4745 = vset.pattern.permute.xlu0 4
  %4746 = vperm.xlu0 %4745, %v463
  %v4747 = vpop.permute.xlu0 %4746
  %4749 = vset.pattern.permute.xlu0 4
  %4750 = vperm.xlu0 %4749, %v465
  %v4751 = vpop.permute.xlu0 %4750
  %v4753 = vmul.f32 %v4499, %v4243
  %v4754 = vmul.f32 %v4503, %v4246
  %v4755 = vmul.f32 %v4507, %v4251
  %v4756 = vmul.f32 %v4511, %v4254
  %v4757 = vmul.f32 %v4515, %v4259
  %v4758 = vmul.f32 %v4519, %v4262
  %v4759 = vmul.f32 %v4523, %v4267
  %v4760 = vmul.f32 %v4527, %v4270
  %v4761 = vmul.f32 %v4531, %v4275
  %v4762 = vmul.f32 %v4535, %v4278
  %v4763 = vmul.f32 %v4539, %v4283
  %v4764 = vmul.f32 %v4543, %v4286
  %v4765 = vmul.f32 %v4547, %v4291
  %v4766 = vmul.f32 %v4551, %v4294
  %v4767 = vmul.f32 %v4555, %v4299
  %v4768 = vmul.f32 %v4559, %v4302
  %v4769 = vmul.f32 %v4563, %v4307
  %v4770 = vmul.f32 %v4567, %v4310
  %v4771 = vmul.f32 %v4571, %v4315
  %v4772 = vmul.f32 %v4575, %v4318
  %v4773 = vmul.f32 %v4579, %v4323
  %v4774 = vmul.f32 %v4583, %v4326
  %v4775 = vmul.f32 %v4587, %v4331
  %v4776 = vmul.f32 %v4591, %v4334
  %v4777 = vmul.f32 %v4595, %v4339
  %v4778 = vmul.f32 %v4599, %v4342
  %v4779 = vmul.f32 %v4603, %v4347
  %v4780 = vmul.f32 %v4607, %v4350
  %v4781 = vmul.f32 %v4611, %v4355
  %v4782 = vmul.f32 %v4615, %v4358
  %v4783 = vmul.f32 %v4619, %v4363
  %v4784 = vmul.f32 %v4623, %v4366
  %v4785 = vmul.f32 %v4627, %v4371
  %v4786 = vmul.f32 %v4631, %v4374
  %v4787 = vmul.f32 %v4635, %v4379
  %v4788 = vmul.f32 %v4639, %v4382
  %v4789 = vmul.f32 %v4643, %v4387
  %v4790 = vmul.f32 %v4647, %v4390
  %v4791 = vmul.f32 %v4651, %v4395
  %v4792 = vmul.f32 %v4655, %v4398
  %v4793 = vmul.f32 %v4659, %v4403
  %v4794 = vmul.f32 %v4663, %v4406
  %v4795 = vmul.f32 %v4667, %v4411
  %v4796 = vmul.f32 %v4671, %v4414
  %v4797 = vmul.f32 %v4675, %v4419
  %v4798 = vmul.f32 %v4679, %v4422
  %v4799 = vmul.f32 %v4683, %v4427
  %v4800 = vmul.f32 %v4687, %v4430
  %v4801 = vmul.f32 %v4691, %v4435
  %v4802 = vmul.f32 %v4695, %v4438
  %v4803 = vmul.f32 %v4699, %v4443
  %v4804 = vmul.f32 %v4703, %v4446
  %v4805 = vmul.f32 %v4707, %v4451
  %v4806 = vmul.f32 %v4711, %v4454
  %v4807 = vmul.f32 %v4715, %v4459
  %v4808 = vmul.f32 %v4719, %v4462
  %v4809 = vmul.f32 %v4723, %v4467
  %v4810 = vmul.f32 %v4727, %v4470
  %v4811 = vmul.f32 %v4731, %v4475
  %v4812 = vmul.f32 %v4735, %v4478
  %v4813 = vmul.f32 %v4739, %v4483
  %v4814 = vmul.f32 %v4743, %v4486
  %v4815 = vmul.f32 %v4747, %v4491
  %v4816 = vmul.f32 %v4751, %v4494
  %v4817 = vadd.f32 %v3979, %v4753
  %v4818 = vadd.f32 %v3980, %v4754
  %v4819 = vadd.f32 %v3981, %v4755
  %v4820 = vadd.f32 %v3982, %v4756
  %v4821 = vadd.f32 %v3983, %v4757
  %v4822 = vadd.f32 %v3984, %v4758
  %v4823 = vadd.f32 %v3985, %v4759
  %v4824 = vadd.f32 %v3986, %v4760
  %v4825 = vadd.f32 %v3987, %v4761
  %v4826 = vadd.f32 %v3988, %v4762
  %v4827 = vadd.f32 %v3989, %v4763
  %v4828 = vadd.f32 %v3990, %v4764
  %v4829 = vadd.f32 %v3991, %v4765
  %v4830 = vadd.f32 %v3992, %v4766
  %v4831 = vadd.f32 %v3993, %v4767
  %v4832 = vadd.f32 %v3994, %v4768
  %v4833 = vadd.f32 %v3995, %v4769
  %v4834 = vadd.f32 %v3996, %v4770
  %v4835 = vadd.f32 %v3997, %v4771
  %v4836 = vadd.f32 %v3998, %v4772
  %v4837 = vadd.f32 %v3999, %v4773
  %v4838 = vadd.f32 %v4000, %v4774
  %v4839 = vadd.f32 %v4001, %v4775
  %v4840 = vadd.f32 %v4002, %v4776
  %v4841 = vadd.f32 %v4003, %v4777
  %v4842 = vadd.f32 %v4004, %v4778
  %v4843 = vadd.f32 %v4005, %v4779
  %v4844 = vadd.f32 %v4006, %v4780
  %v4845 = vadd.f32 %v4007, %v4781
  %v4846 = vadd.f32 %v4008, %v4782
  %v4847 = vadd.f32 %v4009, %v4783
  %v4848 = vadd.f32 %v4010, %v4784
  %v4849 = vadd.f32 %v4011, %v4785
  %v4850 = vadd.f32 %v4012, %v4786
  %v4851 = vadd.f32 %v4013, %v4787
  %v4852 = vadd.f32 %v4014, %v4788
  %v4853 = vadd.f32 %v4015, %v4789
  %v4854 = vadd.f32 %v4016, %v4790
  %v4855 = vadd.f32 %v4017, %v4791
  %v4856 = vadd.f32 %v4018, %v4792
  %v4857 = vadd.f32 %v4019, %v4793
  %v4858 = vadd.f32 %v4020, %v4794
  %v4859 = vadd.f32 %v4021, %v4795
  %v4860 = vadd.f32 %v4022, %v4796
  %v4861 = vadd.f32 %v4023, %v4797
  %v4862 = vadd.f32 %v4024, %v4798
  %v4863 = vadd.f32 %v4025, %v4799
  %v4864 = vadd.f32 %v4026, %v4800
  %v4865 = vadd.f32 %v4027, %v4801
  %v4866 = vadd.f32 %v4028, %v4802
  %v4867 = vadd.f32 %v4029, %v4803
  %v4868 = vadd.f32 %v4030, %v4804
  %v4869 = vadd.f32 %v4031, %v4805
  %v4870 = vadd.f32 %v4032, %v4806
  %v4871 = vadd.f32 %v4033, %v4807
  %v4872 = vadd.f32 %v4034, %v4808
  %v4873 = vadd.f32 %v4035, %v4809
  %v4874 = vadd.f32 %v4036, %v4810
  %v4875 = vadd.f32 %v4037, %v4811
  %v4876 = vadd.f32 %v4038, %v4812
  %v4877 = vadd.f32 %v4039, %v4813
  %v4878 = vadd.f32 %v4040, %v4814
  %v4879 = vadd.f32 %v4041, %v4815
  %v4880 = vadd.f32 %v4042, %v4816
  %s4881 = scalar_lea.vmem %s2, 10
  %v4882 = vld [vmem:[%s4881] sm:$0x3]
  %4883 = vrot.lane.b32.xlu0 %v659, 108
  %v4884 = vpop.permute.xlu0 %4883
  %4885 = vrot.lane.b32.xlu0 %v660, 108
  %v4886 = vpop.permute.xlu0 %4885
  %4887 = vrot.lane.b32.xlu0 %v661, 108
  %v4888 = vpop.permute.xlu0 %4887
  %4889 = vrot.lane.b32.xlu0 %v662, 108
  %v4890 = vpop.permute.xlu0 %4889
  %4891 = vrot.lane.b32.xlu0 %v663, 108
  %v4892 = vpop.permute.xlu0 %4891
  %4893 = vrot.lane.b32.xlu0 %v664, 108
  %v4894 = vpop.permute.xlu0 %4893
  %4895 = vrot.lane.b32.xlu0 %v665, 108
  %v4896 = vpop.permute.xlu0 %4895
  %4897 = vrot.lane.b32.xlu0 %v666, 108
  %v4898 = vpop.permute.xlu0 %4897
  %4899 = vrot.lane.b32.xlu0 %v667, 108
  %v4900 = vpop.permute.xlu0 %4899
  %4901 = vrot.lane.b32.xlu0 %v668, 108
  %v4902 = vpop.permute.xlu0 %4901
  %4903 = vrot.lane.b32.xlu0 %v669, 108
  %v4904 = vpop.permute.xlu0 %4903
  %4905 = vrot.lane.b32.xlu0 %v670, 108
  %v4906 = vpop.permute.xlu0 %4905
  %4907 = vrot.lane.b32.xlu0 %v671, 108
  %v4908 = vpop.permute.xlu0 %4907
  %4909 = vrot.lane.b32.xlu0 %v672, 108
  %v4910 = vpop.permute.xlu0 %4909
  %4911 = vrot.lane.b32.xlu0 %v673, 108
  %v4912 = vpop.permute.xlu0 %4911
  %4913 = vrot.lane.b32.xlu0 %v674, 108
  %v4914 = vpop.permute.xlu0 %4913
  %4915 = vrot.lane.b32.xlu0 %v675, 108
  %v4916 = vpop.permute.xlu0 %4915
  %4917 = vrot.lane.b32.xlu0 %v676, 108
  %v4918 = vpop.permute.xlu0 %4917
  %4919 = vrot.lane.b32.xlu0 %v677, 108
  %v4920 = vpop.permute.xlu0 %4919
  %4921 = vrot.lane.b32.xlu0 %v678, 108
  %v4922 = vpop.permute.xlu0 %4921
  %4923 = vrot.lane.b32.xlu0 %v679, 108
  %v4924 = vpop.permute.xlu0 %4923
  %4925 = vrot.lane.b32.xlu0 %v680, 108
  %v4926 = vpop.permute.xlu0 %4925
  %4927 = vrot.lane.b32.xlu0 %v681, 108
  %v4928 = vpop.permute.xlu0 %4927
  %4929 = vrot.lane.b32.xlu0 %v682, 108
  %v4930 = vpop.permute.xlu0 %4929
  %4931 = vrot.lane.b32.xlu0 %v683, 108
  %v4932 = vpop.permute.xlu0 %4931
  %4933 = vrot.lane.b32.xlu0 %v684, 108
  %v4934 = vpop.permute.xlu0 %4933
  %4935 = vrot.lane.b32.xlu0 %v685, 108
  %v4936 = vpop.permute.xlu0 %4935
  %4937 = vrot.lane.b32.xlu0 %v686, 108
  %v4938 = vpop.permute.xlu0 %4937
  %4939 = vrot.lane.b32.xlu0 %v687, 108
  %v4940 = vpop.permute.xlu0 %4939
  %4941 = vrot.lane.b32.xlu0 %v688, 108
  %v4942 = vpop.permute.xlu0 %4941
  %4943 = vrot.lane.b32.xlu0 %v689, 108
  %v4944 = vpop.permute.xlu0 %4943
  %4945 = vrot.lane.b32.xlu0 %v690, 108
  %v4946 = vpop.permute.xlu0 %4945
  %v4948 = vsel %vm691, %v4884, 0
  %v4951 = vsel %vm691, %v4886, 0
  %v4954 = vsel %vm691, %v4888, 0
  %v4957 = vsel %vm691, %v4890, 0
  %v4960 = vsel %vm691, %v4892, 0
  %v4963 = vsel %vm691, %v4894, 0
  %v4966 = vsel %vm691, %v4896, 0
  %v4969 = vsel %vm691, %v4898, 0
  %v4972 = vsel %vm691, %v4900, 0
  %v4975 = vsel %vm691, %v4902, 0
  %v4978 = vsel %vm691, %v4904, 0
  %v4981 = vsel %vm691, %v4906, 0
  %v4984 = vsel %vm691, %v4908, 0
  %v4987 = vsel %vm691, %v4910, 0
  %v4990 = vsel %vm691, %v4912, 0
  %v4993 = vsel %vm691, %v4914, 0
  %v4996 = vsel %vm691, %v4916, 0
  %v4999 = vsel %vm691, %v4918, 0
  %v5002 = vsel %vm691, %v4920, 0
  %v5005 = vsel %vm691, %v4922, 0
  %v5008 = vsel %vm691, %v4924, 0
  %v5011 = vsel %vm691, %v4926, 0
  %v5014 = vsel %vm691, %v4928, 0
  %v5017 = vsel %vm691, %v4930, 0
  %v5020 = vsel %vm691, %v4932, 0
  %v5023 = vsel %vm691, %v4934, 0
  %v5026 = vsel %vm691, %v4936, 0
  %v5029 = vsel %vm691, %v4938, 0
  %v5032 = vsel %vm691, %v4940, 0
  %v5035 = vsel %vm691, %v4942, 0
  %v5038 = vsel %vm691, %v4944, 0
  %v5041 = vsel %vm691, %v4946, 0
  %v5044 = vsel %vm788, %v4882, 0
  %5046 = vmatprep.subr.bf16.mxu0 0
  %5047 = vmatpush1.bf16.msra.mxu0 0
  %5048 = vmatprep.subr.bf16.mxu0 0
  %5049 = vmatpush1.bf16.msra.mxu0 0
  %5050 = vmatprep.subr.bf16.mxu0 0
  %5051 = vmatpush1.bf16.msra.mxu0 0
  %5052 = vmatprep.subr.bf16.mxu0 0
  %5053 = vmatpush1.bf16.msra.mxu0 0
  %5054 = vmatprep.subr.bf16.mxu0 0
  %5055 = vmatpush1.bf16.msra.mxu0 0
  %5056 = vmatprep.subr.bf16.mxu0 0
  %5057 = vmatpush1.bf16.msra.mxu0 0
  %5058 = vmatprep.subr.bf16.mxu0 0
  %5059 = vmatpush1.bf16.msra.mxu0 0
  %5060 = vmatprep.subr.bf16.mxu0 0
  %5061 = vmatpush1.bf16.msra.mxu0 %v5044
  %5062 = vmatprep.subr.bf16.mxu0 0
  %5063 = vmatpush2.bf16.msra.mxu0 0
  %5064 = vmatprep.subr.bf16.mxu0 0
  %5065 = vmatpush2.bf16.msra.mxu0 0
  %5066 = vmatprep.subr.bf16.mxu0 0
  %5067 = vmatpush2.bf16.msra.mxu0 0
  %5068 = vmatprep.subr.bf16.mxu0 0
  %5069 = vmatpush2.bf16.msra.mxu0 0
  %5070 = vmatprep.subr.bf16.mxu0 0
  %5071 = vmatpush2.bf16.msra.mxu0 0
  %5072 = vmatprep.subr.bf16.mxu0 0
  %5073 = vmatpush2.bf16.msra.mxu0 0
  %5074 = vmatprep.subr.bf16.mxu0 0
  %5075 = vmatpush2.bf16.msra.mxu0 0
  %5076 = vmatprep.subr.bf16.mxu0 0
  %5077 = vmatpush2.bf16.msra.mxu0 0
  %5078 = vmatprep.mubr.bf16.mxu0 0
  %5079 = vmatmul.mubr.bf16.gmra.mxu0 %v4948
  %v5080 = vpop.f32.mrf.mxu0
  %v5081 = vadd.f32 0.0, %v5080
  %v5082 = vpop.f32.mrf.mxu0
  %v5083 = vpop.f32.mrf.mxu0
  %v5084 = vadd.f32 0.0, %v5083
  %v5085 = vpop.f32.mrf.mxu0
  %5086 = vmatprep.mubr.bf16.mxu0 0
  %5087 = vmatmul.mubr.bf16.gmra.mxu0 %v4951
  %v5088 = vpop.f32.mrf.mxu0
  %v5089 = vadd.f32 0.0, %v5088
  %v5090 = vpop.f32.mrf.mxu0
  %v5091 = vpop.f32.mrf.mxu0
  %v5092 = vadd.f32 0.0, %v5091
  %v5093 = vpop.f32.mrf.mxu0
  %5094 = vmatprep.mubr.bf16.mxu0 0
  %5095 = vmatmul.mubr.bf16.gmra.mxu0 %v4954
  %v5096 = vpop.f32.mrf.mxu0
  %v5097 = vadd.f32 0.0, %v5096
  %v5098 = vpop.f32.mrf.mxu0
  %v5099 = vpop.f32.mrf.mxu0
  %v5100 = vadd.f32 0.0, %v5099
  %v5101 = vpop.f32.mrf.mxu0
  %5102 = vmatprep.mubr.bf16.mxu0 0
  %5103 = vmatmul.mubr.bf16.gmra.mxu0 %v4957
  %v5104 = vpop.f32.mrf.mxu0
  %v5105 = vadd.f32 0.0, %v5104
  %v5106 = vpop.f32.mrf.mxu0
  %v5107 = vpop.f32.mrf.mxu0
  %v5108 = vadd.f32 0.0, %v5107
  %v5109 = vpop.f32.mrf.mxu0
  %5110 = vmatprep.mubr.bf16.mxu0 0
  %5111 = vmatmul.mubr.bf16.gmra.mxu0 %v4960
  %v5112 = vpop.f32.mrf.mxu0
  %v5113 = vadd.f32 0.0, %v5112
  %v5114 = vpop.f32.mrf.mxu0
  %v5115 = vpop.f32.mrf.mxu0
  %v5116 = vadd.f32 0.0, %v5115
  %v5117 = vpop.f32.mrf.mxu0
  %5118 = vmatprep.mubr.bf16.mxu0 0
  %5119 = vmatmul.mubr.bf16.gmra.mxu0 %v4963
  %v5120 = vpop.f32.mrf.mxu0
  %v5121 = vadd.f32 0.0, %v5120
  %v5122 = vpop.f32.mrf.mxu0
  %v5123 = vpop.f32.mrf.mxu0
  %v5124 = vadd.f32 0.0, %v5123
  %v5125 = vpop.f32.mrf.mxu0
  %5126 = vmatprep.mubr.bf16.mxu0 0
  %5127 = vmatmul.mubr.bf16.gmra.mxu0 %v4966
  %v5128 = vpop.f32.mrf.mxu0
  %v5129 = vadd.f32 0.0, %v5128
  %v5130 = vpop.f32.mrf.mxu0
  %v5131 = vpop.f32.mrf.mxu0
  %v5132 = vadd.f32 0.0, %v5131
  %v5133 = vpop.f32.mrf.mxu0
  %5134 = vmatprep.mubr.bf16.mxu0 0
  %5135 = vmatmul.mubr.bf16.gmra.mxu0 %v4969
  %v5136 = vpop.f32.mrf.mxu0
  %v5137 = vadd.f32 0.0, %v5136
  %v5138 = vpop.f32.mrf.mxu0
  %v5139 = vpop.f32.mrf.mxu0
  %v5140 = vadd.f32 0.0, %v5139
  %v5141 = vpop.f32.mrf.mxu0
  %5142 = vmatprep.mubr.bf16.mxu0 0
  %5143 = vmatmul.mubr.bf16.gmra.mxu0 %v4972
  %v5144 = vpop.f32.mrf.mxu0
  %v5145 = vadd.f32 0.0, %v5144
  %v5146 = vpop.f32.mrf.mxu0
  %v5147 = vpop.f32.mrf.mxu0
  %v5148 = vadd.f32 0.0, %v5147
  %v5149 = vpop.f32.mrf.mxu0
  %5150 = vmatprep.mubr.bf16.mxu0 0
  %5151 = vmatmul.mubr.bf16.gmra.mxu0 %v4975
  %v5152 = vpop.f32.mrf.mxu0
  %v5153 = vadd.f32 0.0, %v5152
  %v5154 = vpop.f32.mrf.mxu0
  %v5155 = vpop.f32.mrf.mxu0
  %v5156 = vadd.f32 0.0, %v5155
  %v5157 = vpop.f32.mrf.mxu0
  %5158 = vmatprep.mubr.bf16.mxu0 0
  %5159 = vmatmul.mubr.bf16.gmra.mxu0 %v4978
  %v5160 = vpop.f32.mrf.mxu0
  %v5161 = vadd.f32 0.0, %v5160
  %v5162 = vpop.f32.mrf.mxu0
  %v5163 = vpop.f32.mrf.mxu0
  %v5164 = vadd.f32 0.0, %v5163
  %v5165 = vpop.f32.mrf.mxu0
  %5166 = vmatprep.mubr.bf16.mxu0 0
  %5167 = vmatmul.mubr.bf16.gmra.mxu0 %v4981
  %v5168 = vpop.f32.mrf.mxu0
  %v5169 = vadd.f32 0.0, %v5168
  %v5170 = vpop.f32.mrf.mxu0
  %v5171 = vpop.f32.mrf.mxu0
  %v5172 = vadd.f32 0.0, %v5171
  %v5173 = vpop.f32.mrf.mxu0
  %5174 = vmatprep.mubr.bf16.mxu0 0
  %5175 = vmatmul.mubr.bf16.gmra.mxu0 %v4984
  %v5176 = vpop.f32.mrf.mxu0
  %v5177 = vadd.f32 0.0, %v5176
  %v5178 = vpop.f32.mrf.mxu0
  %v5179 = vpop.f32.mrf.mxu0
  %v5180 = vadd.f32 0.0, %v5179
  %v5181 = vpop.f32.mrf.mxu0
  %5182 = vmatprep.mubr.bf16.mxu0 0
  %5183 = vmatmul.mubr.bf16.gmra.mxu0 %v4987
  %v5184 = vpop.f32.mrf.mxu0
  %v5185 = vadd.f32 0.0, %v5184
  %v5186 = vpop.f32.mrf.mxu0
  %v5187 = vpop.f32.mrf.mxu0
  %v5188 = vadd.f32 0.0, %v5187
  %v5189 = vpop.f32.mrf.mxu0
  %5190 = vmatprep.mubr.bf16.mxu0 0
  %5191 = vmatmul.mubr.bf16.gmra.mxu0 %v4990
  %v5192 = vpop.f32.mrf.mxu0
  %v5193 = vadd.f32 0.0, %v5192
  %v5194 = vpop.f32.mrf.mxu0
  %v5195 = vpop.f32.mrf.mxu0
  %v5196 = vadd.f32 0.0, %v5195
  %v5197 = vpop.f32.mrf.mxu0
  %5198 = vmatprep.mubr.bf16.mxu0 0
  %5199 = vmatmul.mubr.bf16.gmra.mxu0 %v4993
  %v5200 = vpop.f32.mrf.mxu0
  %v5201 = vadd.f32 0.0, %v5200
  %v5202 = vpop.f32.mrf.mxu0
  %v5203 = vpop.f32.mrf.mxu0
  %v5204 = vadd.f32 0.0, %v5203
  %v5205 = vpop.f32.mrf.mxu0
  %5206 = vmatprep.mubr.bf16.mxu0 0
  %5207 = vmatmul.mubr.bf16.gmra.mxu0 %v4996
  %v5208 = vpop.f32.mrf.mxu0
  %v5209 = vadd.f32 0.0, %v5208
  %v5210 = vpop.f32.mrf.mxu0
  %v5211 = vpop.f32.mrf.mxu0
  %v5212 = vadd.f32 0.0, %v5211
  %v5213 = vpop.f32.mrf.mxu0
  %5214 = vmatprep.mubr.bf16.mxu0 0
  %5215 = vmatmul.mubr.bf16.gmra.mxu0 %v4999
  %v5216 = vpop.f32.mrf.mxu0
  %v5217 = vadd.f32 0.0, %v5216
  %v5218 = vpop.f32.mrf.mxu0
  %v5219 = vpop.f32.mrf.mxu0
  %v5220 = vadd.f32 0.0, %v5219
  %v5221 = vpop.f32.mrf.mxu0
  %5222 = vmatprep.mubr.bf16.mxu0 0
  %5223 = vmatmul.mubr.bf16.gmra.mxu0 %v5002
  %v5224 = vpop.f32.mrf.mxu0
  %v5225 = vadd.f32 0.0, %v5224
  %v5226 = vpop.f32.mrf.mxu0
  %v5227 = vpop.f32.mrf.mxu0
  %v5228 = vadd.f32 0.0, %v5227
  %v5229 = vpop.f32.mrf.mxu0
  %5230 = vmatprep.mubr.bf16.mxu0 0
  %5231 = vmatmul.mubr.bf16.gmra.mxu0 %v5005
  %v5232 = vpop.f32.mrf.mxu0
  %v5233 = vadd.f32 0.0, %v5232
  %v5234 = vpop.f32.mrf.mxu0
  %v5235 = vpop.f32.mrf.mxu0
  %v5236 = vadd.f32 0.0, %v5235
  %v5237 = vpop.f32.mrf.mxu0
  %5238 = vmatprep.mubr.bf16.mxu0 0
  %5239 = vmatmul.mubr.bf16.gmra.mxu0 %v5008
  %v5240 = vpop.f32.mrf.mxu0
  %v5241 = vadd.f32 0.0, %v5240
  %v5242 = vpop.f32.mrf.mxu0
  %v5243 = vpop.f32.mrf.mxu0
  %v5244 = vadd.f32 0.0, %v5243
  %v5245 = vpop.f32.mrf.mxu0
  %5246 = vmatprep.mubr.bf16.mxu0 0
  %5247 = vmatmul.mubr.bf16.gmra.mxu0 %v5011
  %v5248 = vpop.f32.mrf.mxu0
  %v5249 = vadd.f32 0.0, %v5248
  %v5250 = vpop.f32.mrf.mxu0
  %v5251 = vpop.f32.mrf.mxu0
  %v5252 = vadd.f32 0.0, %v5251
  %v5253 = vpop.f32.mrf.mxu0
  %5254 = vmatprep.mubr.bf16.mxu0 0
  %5255 = vmatmul.mubr.bf16.gmra.mxu0 %v5014
  %v5256 = vpop.f32.mrf.mxu0
  %v5257 = vadd.f32 0.0, %v5256
  %v5258 = vpop.f32.mrf.mxu0
  %v5259 = vpop.f32.mrf.mxu0
  %v5260 = vadd.f32 0.0, %v5259
  %v5261 = vpop.f32.mrf.mxu0
  %5262 = vmatprep.mubr.bf16.mxu0 0
  %5263 = vmatmul.mubr.bf16.gmra.mxu0 %v5017
  %v5264 = vpop.f32.mrf.mxu0
  %v5265 = vadd.f32 0.0, %v5264
  %v5266 = vpop.f32.mrf.mxu0
  %v5267 = vpop.f32.mrf.mxu0
  %v5268 = vadd.f32 0.0, %v5267
  %v5269 = vpop.f32.mrf.mxu0
  %5270 = vmatprep.mubr.bf16.mxu0 0
  %5271 = vmatmul.mubr.bf16.gmra.mxu0 %v5020
  %v5272 = vpop.f32.mrf.mxu0
  %v5273 = vadd.f32 0.0, %v5272
  %v5274 = vpop.f32.mrf.mxu0
  %v5275 = vpop.f32.mrf.mxu0
  %v5276 = vadd.f32 0.0, %v5275
  %v5277 = vpop.f32.mrf.mxu0
  %5278 = vmatprep.mubr.bf16.mxu0 0
  %5279 = vmatmul.mubr.bf16.gmra.mxu0 %v5023
  %v5280 = vpop.f32.mrf.mxu0
  %v5281 = vadd.f32 0.0, %v5280
  %v5282 = vpop.f32.mrf.mxu0
  %v5283 = vpop.f32.mrf.mxu0
  %v5284 = vadd.f32 0.0, %v5283
  %v5285 = vpop.f32.mrf.mxu0
  %5286 = vmatprep.mubr.bf16.mxu0 0
  %5287 = vmatmul.mubr.bf16.gmra.mxu0 %v5026
  %v5288 = vpop.f32.mrf.mxu0
  %v5289 = vadd.f32 0.0, %v5288
  %v5290 = vpop.f32.mrf.mxu0
  %v5291 = vpop.f32.mrf.mxu0
  %v5292 = vadd.f32 0.0, %v5291
  %v5293 = vpop.f32.mrf.mxu0
  %5294 = vmatprep.mubr.bf16.mxu0 0
  %5295 = vmatmul.mubr.bf16.gmra.mxu0 %v5029
  %v5296 = vpop.f32.mrf.mxu0
  %v5297 = vadd.f32 0.0, %v5296
  %v5298 = vpop.f32.mrf.mxu0
  %v5299 = vpop.f32.mrf.mxu0
  %v5300 = vadd.f32 0.0, %v5299
  %v5301 = vpop.f32.mrf.mxu0
  %5302 = vmatprep.mubr.bf16.mxu0 0
  %5303 = vmatmul.mubr.bf16.gmra.mxu0 %v5032
  %v5304 = vpop.f32.mrf.mxu0
  %v5305 = vadd.f32 0.0, %v5304
  %v5306 = vpop.f32.mrf.mxu0
  %v5307 = vpop.f32.mrf.mxu0
  %v5308 = vadd.f32 0.0, %v5307
  %v5309 = vpop.f32.mrf.mxu0
  %5310 = vmatprep.mubr.bf16.mxu0 0
  %5311 = vmatmul.mubr.bf16.gmra.mxu0 %v5035
  %v5312 = vpop.f32.mrf.mxu0
  %v5313 = vadd.f32 0.0, %v5312
  %v5314 = vpop.f32.mrf.mxu0
  %v5315 = vpop.f32.mrf.mxu0
  %v5316 = vadd.f32 0.0, %v5315
  %v5317 = vpop.f32.mrf.mxu0
  %5318 = vmatprep.mubr.bf16.mxu0 0
  %5319 = vmatmul.mubr.bf16.gmra.mxu0 %v5038
  %v5320 = vpop.f32.mrf.mxu0
  %v5321 = vadd.f32 0.0, %v5320
  %v5322 = vpop.f32.mrf.mxu0
  %v5323 = vpop.f32.mrf.mxu0
  %v5324 = vadd.f32 0.0, %v5323
  %v5325 = vpop.f32.mrf.mxu0
  %5326 = vmatprep.mubr.bf16.mxu0 0
  %5327 = vmatmul.mubr.bf16.gmra.mxu0 %v5041
  %v5328 = vpop.f32.mrf.mxu0
  %v5329 = vadd.f32 0.0, %v5328
  %v5330 = vpop.f32.mrf.mxu0
  %v5331 = vpop.f32.mrf.mxu0
  %v5332 = vadd.f32 0.0, %v5331
  %v5333 = vpop.f32.mrf.mxu0
  %5334 = vdwg.mxu0
  %5335 = vset.pattern.permute.xlu0 5
  %5336 = vperm.xlu0 %5335, %v339
  %v5337 = vpop.permute.xlu0 %5336
  %5339 = vset.pattern.permute.xlu0 5
  %5340 = vperm.xlu0 %5339, %v341
  %v5341 = vpop.permute.xlu0 %5340
  %5343 = vset.pattern.permute.xlu0 5
  %5344 = vperm.xlu0 %5343, %v343
  %v5345 = vpop.permute.xlu0 %5344
  %5347 = vset.pattern.permute.xlu0 5
  %5348 = vperm.xlu0 %5347, %v345
  %v5349 = vpop.permute.xlu0 %5348
  %5351 = vset.pattern.permute.xlu0 5
  %5352 = vperm.xlu0 %5351, %v347
  %v5353 = vpop.permute.xlu0 %5352
  %5355 = vset.pattern.permute.xlu0 5
  %5356 = vperm.xlu0 %5355, %v349
  %v5357 = vpop.permute.xlu0 %5356
  %5359 = vset.pattern.permute.xlu0 5
  %5360 = vperm.xlu0 %5359, %v351
  %v5361 = vpop.permute.xlu0 %5360
  %5363 = vset.pattern.permute.xlu0 5
  %5364 = vperm.xlu0 %5363, %v353
  %v5365 = vpop.permute.xlu0 %5364
  %5367 = vset.pattern.permute.xlu0 5
  %5368 = vperm.xlu0 %5367, %v355
  %v5369 = vpop.permute.xlu0 %5368
  %5371 = vset.pattern.permute.xlu0 5
  %5372 = vperm.xlu0 %5371, %v357
  %v5373 = vpop.permute.xlu0 %5372
  %5375 = vset.pattern.permute.xlu0 5
  %5376 = vperm.xlu0 %5375, %v359
  %v5377 = vpop.permute.xlu0 %5376
  %5379 = vset.pattern.permute.xlu0 5
  %5380 = vperm.xlu0 %5379, %v361
  %v5381 = vpop.permute.xlu0 %5380
  %5383 = vset.pattern.permute.xlu0 5
  %5384 = vperm.xlu0 %5383, %v363
  %v5385 = vpop.permute.xlu0 %5384
  %5387 = vset.pattern.permute.xlu0 5
  %5388 = vperm.xlu0 %5387, %v365
  %v5389 = vpop.permute.xlu0 %5388
  %5391 = vset.pattern.permute.xlu0 5
  %5392 = vperm.xlu0 %5391, %v367
  %v5393 = vpop.permute.xlu0 %5392
  %5395 = vset.pattern.permute.xlu0 5
  %5396 = vperm.xlu0 %5395, %v369
  %v5397 = vpop.permute.xlu0 %5396
  %5399 = vset.pattern.permute.xlu0 5
  %5400 = vperm.xlu0 %5399, %v371
  %v5401 = vpop.permute.xlu0 %5400
  %5403 = vset.pattern.permute.xlu0 5
  %5404 = vperm.xlu0 %5403, %v373
  %v5405 = vpop.permute.xlu0 %5404
  %5407 = vset.pattern.permute.xlu0 5
  %5408 = vperm.xlu0 %5407, %v375
  %v5409 = vpop.permute.xlu0 %5408
  %5411 = vset.pattern.permute.xlu0 5
  %5412 = vperm.xlu0 %5411, %v377
  %v5413 = vpop.permute.xlu0 %5412
  %5415 = vset.pattern.permute.xlu0 5
  %5416 = vperm.xlu0 %5415, %v379
  %v5417 = vpop.permute.xlu0 %5416
  %5419 = vset.pattern.permute.xlu0 5
  %5420 = vperm.xlu0 %5419, %v381
  %v5421 = vpop.permute.xlu0 %5420
  %5423 = vset.pattern.permute.xlu0 5
  %5424 = vperm.xlu0 %5423, %v383
  %v5425 = vpop.permute.xlu0 %5424
  %5427 = vset.pattern.permute.xlu0 5
  %5428 = vperm.xlu0 %5427, %v385
  %v5429 = vpop.permute.xlu0 %5428
  %5431 = vset.pattern.permute.xlu0 5
  %5432 = vperm.xlu0 %5431, %v387
  %v5433 = vpop.permute.xlu0 %5432
  %5435 = vset.pattern.permute.xlu0 5
  %5436 = vperm.xlu0 %5435, %v389
  %v5437 = vpop.permute.xlu0 %5436
  %5439 = vset.pattern.permute.xlu0 5
  %5440 = vperm.xlu0 %5439, %v391
  %v5441 = vpop.permute.xlu0 %5440
  %5443 = vset.pattern.permute.xlu0 5
  %5444 = vperm.xlu0 %5443, %v393
  %v5445 = vpop.permute.xlu0 %5444
  %5447 = vset.pattern.permute.xlu0 5
  %5448 = vperm.xlu0 %5447, %v395
  %v5449 = vpop.permute.xlu0 %5448
  %5451 = vset.pattern.permute.xlu0 5
  %5452 = vperm.xlu0 %5451, %v397
  %v5453 = vpop.permute.xlu0 %5452
  %5455 = vset.pattern.permute.xlu0 5
  %5456 = vperm.xlu0 %5455, %v399
  %v5457 = vpop.permute.xlu0 %5456
  %5459 = vset.pattern.permute.xlu0 5
  %5460 = vperm.xlu0 %5459, %v401
  %v5461 = vpop.permute.xlu0 %5460
  %5463 = vset.pattern.permute.xlu0 5
  %5464 = vperm.xlu0 %5463, %v403
  %v5465 = vpop.permute.xlu0 %5464
  %5467 = vset.pattern.permute.xlu0 5
  %5468 = vperm.xlu0 %5467, %v405
  %v5469 = vpop.permute.xlu0 %5468
  %5471 = vset.pattern.permute.xlu0 5
  %5472 = vperm.xlu0 %5471, %v407
  %v5473 = vpop.permute.xlu0 %5472
  %5475 = vset.pattern.permute.xlu0 5
  %5476 = vperm.xlu0 %5475, %v409
  %v5477 = vpop.permute.xlu0 %5476
  %5479 = vset.pattern.permute.xlu0 5
  %5480 = vperm.xlu0 %5479, %v411
  %v5481 = vpop.permute.xlu0 %5480
  %5483 = vset.pattern.permute.xlu0 5
  %5484 = vperm.xlu0 %5483, %v413
  %v5485 = vpop.permute.xlu0 %5484
  %5487 = vset.pattern.permute.xlu0 5
  %5488 = vperm.xlu0 %5487, %v415
  %v5489 = vpop.permute.xlu0 %5488
  %5491 = vset.pattern.permute.xlu0 5
  %5492 = vperm.xlu0 %5491, %v417
  %v5493 = vpop.permute.xlu0 %5492
  %5495 = vset.pattern.permute.xlu0 5
  %5496 = vperm.xlu0 %5495, %v419
  %v5497 = vpop.permute.xlu0 %5496
  %5499 = vset.pattern.permute.xlu0 5
  %5500 = vperm.xlu0 %5499, %v421
  %v5501 = vpop.permute.xlu0 %5500
  %5503 = vset.pattern.permute.xlu0 5
  %5504 = vperm.xlu0 %5503, %v423
  %v5505 = vpop.permute.xlu0 %5504
  %5507 = vset.pattern.permute.xlu0 5
  %5508 = vperm.xlu0 %5507, %v425
  %v5509 = vpop.permute.xlu0 %5508
  %5511 = vset.pattern.permute.xlu0 5
  %5512 = vperm.xlu0 %5511, %v427
  %v5513 = vpop.permute.xlu0 %5512
  %5515 = vset.pattern.permute.xlu0 5
  %5516 = vperm.xlu0 %5515, %v429
  %v5517 = vpop.permute.xlu0 %5516
  %5519 = vset.pattern.permute.xlu0 5
  %5520 = vperm.xlu0 %5519, %v431
  %v5521 = vpop.permute.xlu0 %5520
  %5523 = vset.pattern.permute.xlu0 5
  %5524 = vperm.xlu0 %5523, %v433
  %v5525 = vpop.permute.xlu0 %5524
  %5527 = vset.pattern.permute.xlu0 5
  %5528 = vperm.xlu0 %5527, %v435
  %v5529 = vpop.permute.xlu0 %5528
  %5531 = vset.pattern.permute.xlu0 5
  %5532 = vperm.xlu0 %5531, %v437
  %v5533 = vpop.permute.xlu0 %5532
  %5535 = vset.pattern.permute.xlu0 5
  %5536 = vperm.xlu0 %5535, %v439
  %v5537 = vpop.permute.xlu0 %5536
  %5539 = vset.pattern.permute.xlu0 5
  %5540 = vperm.xlu0 %5539, %v441
  %v5541 = vpop.permute.xlu0 %5540
  %5543 = vset.pattern.permute.xlu0 5
  %5544 = vperm.xlu0 %5543, %v443
  %v5545 = vpop.permute.xlu0 %5544
  %5547 = vset.pattern.permute.xlu0 5
  %5548 = vperm.xlu0 %5547, %v445
  %v5549 = vpop.permute.xlu0 %5548
  %5551 = vset.pattern.permute.xlu0 5
  %5552 = vperm.xlu0 %5551, %v447
  %v5553 = vpop.permute.xlu0 %5552
  %5555 = vset.pattern.permute.xlu0 5
  %5556 = vperm.xlu0 %5555, %v449
  %v5557 = vpop.permute.xlu0 %5556
  %5559 = vset.pattern.permute.xlu0 5
  %5560 = vperm.xlu0 %5559, %v451
  %v5561 = vpop.permute.xlu0 %5560
  %5563 = vset.pattern.permute.xlu0 5
  %5564 = vperm.xlu0 %5563, %v453
  %v5565 = vpop.permute.xlu0 %5564
  %5567 = vset.pattern.permute.xlu0 5
  %5568 = vperm.xlu0 %5567, %v455
  %v5569 = vpop.permute.xlu0 %5568
  %5571 = vset.pattern.permute.xlu0 5
  %5572 = vperm.xlu0 %5571, %v457
  %v5573 = vpop.permute.xlu0 %5572
  %5575 = vset.pattern.permute.xlu0 5
  %5576 = vperm.xlu0 %5575, %v459
  %v5577 = vpop.permute.xlu0 %5576
  %5579 = vset.pattern.permute.xlu0 5
  %5580 = vperm.xlu0 %5579, %v461
  %v5581 = vpop.permute.xlu0 %5580
  %5583 = vset.pattern.permute.xlu0 5
  %5584 = vperm.xlu0 %5583, %v463
  %v5585 = vpop.permute.xlu0 %5584
  %5587 = vset.pattern.permute.xlu0 5
  %5588 = vperm.xlu0 %5587, %v465
  %v5589 = vpop.permute.xlu0 %5588
  %v5591 = vmul.f32 %v5337, %v5081
  %v5592 = vmul.f32 %v5341, %v5084
  %v5593 = vmul.f32 %v5345, %v5089
  %v5594 = vmul.f32 %v5349, %v5092
  %v5595 = vmul.f32 %v5353, %v5097
  %v5596 = vmul.f32 %v5357, %v5100
  %v5597 = vmul.f32 %v5361, %v5105
  %v5598 = vmul.f32 %v5365, %v5108
  %v5599 = vmul.f32 %v5369, %v5113
  %v5600 = vmul.f32 %v5373, %v5116
  %v5601 = vmul.f32 %v5377, %v5121
  %v5602 = vmul.f32 %v5381, %v5124
  %v5603 = vmul.f32 %v5385, %v5129
  %v5604 = vmul.f32 %v5389, %v5132
  %v5605 = vmul.f32 %v5393, %v5137
  %v5606 = vmul.f32 %v5397, %v5140
  %v5607 = vmul.f32 %v5401, %v5145
  %v5608 = vmul.f32 %v5405, %v5148
  %v5609 = vmul.f32 %v5409, %v5153
  %v5610 = vmul.f32 %v5413, %v5156
  %v5611 = vmul.f32 %v5417, %v5161
  %v5612 = vmul.f32 %v5421, %v5164
  %v5613 = vmul.f32 %v5425, %v5169
  %v5614 = vmul.f32 %v5429, %v5172
  %v5615 = vmul.f32 %v5433, %v5177
  %v5616 = vmul.f32 %v5437, %v5180
  %v5617 = vmul.f32 %v5441, %v5185
  %v5618 = vmul.f32 %v5445, %v5188
  %v5619 = vmul.f32 %v5449, %v5193
  %v5620 = vmul.f32 %v5453, %v5196
  %v5621 = vmul.f32 %v5457, %v5201
  %v5622 = vmul.f32 %v5461, %v5204
  %v5623 = vmul.f32 %v5465, %v5209
  %v5624 = vmul.f32 %v5469, %v5212
  %v5625 = vmul.f32 %v5473, %v5217
  %v5626 = vmul.f32 %v5477, %v5220
  %v5627 = vmul.f32 %v5481, %v5225
  %v5628 = vmul.f32 %v5485, %v5228
  %v5629 = vmul.f32 %v5489, %v5233
  %v5630 = vmul.f32 %v5493, %v5236
  %v5631 = vmul.f32 %v5497, %v5241
  %v5632 = vmul.f32 %v5501, %v5244
  %v5633 = vmul.f32 %v5505, %v5249
  %v5634 = vmul.f32 %v5509, %v5252
  %v5635 = vmul.f32 %v5513, %v5257
  %v5636 = vmul.f32 %v5517, %v5260
  %v5637 = vmul.f32 %v5521, %v5265
  %v5638 = vmul.f32 %v5525, %v5268
  %v5639 = vmul.f32 %v5529, %v5273
  %v5640 = vmul.f32 %v5533, %v5276
  %v5641 = vmul.f32 %v5537, %v5281
  %v5642 = vmul.f32 %v5541, %v5284
  %v5643 = vmul.f32 %v5545, %v5289
  %v5644 = vmul.f32 %v5549, %v5292
  %v5645 = vmul.f32 %v5553, %v5297
  %v5646 = vmul.f32 %v5557, %v5300
  %v5647 = vmul.f32 %v5561, %v5305
  %v5648 = vmul.f32 %v5565, %v5308
  %v5649 = vmul.f32 %v5569, %v5313
  %v5650 = vmul.f32 %v5573, %v5316
  %v5651 = vmul.f32 %v5577, %v5321
  %v5652 = vmul.f32 %v5581, %v5324
  %v5653 = vmul.f32 %v5585, %v5329
  %v5654 = vmul.f32 %v5589, %v5332
  %v5655 = vadd.f32 %v4817, %v5591
  %v5656 = vadd.f32 %v4818, %v5592
  %v5657 = vadd.f32 %v4819, %v5593
  %v5658 = vadd.f32 %v4820, %v5594
  %v5659 = vadd.f32 %v4821, %v5595
  %v5660 = vadd.f32 %v4822, %v5596
  %v5661 = vadd.f32 %v4823, %v5597
  %v5662 = vadd.f32 %v4824, %v5598
  %v5663 = vadd.f32 %v4825, %v5599
  %v5664 = vadd.f32 %v4826, %v5600
  %v5665 = vadd.f32 %v4827, %v5601
  %v5666 = vadd.f32 %v4828, %v5602
  %v5667 = vadd.f32 %v4829, %v5603
  %v5668 = vadd.f32 %v4830, %v5604
  %v5669 = vadd.f32 %v4831, %v5605
  %v5670 = vadd.f32 %v4832, %v5606
  %v5671 = vadd.f32 %v4833, %v5607
  %v5672 = vadd.f32 %v4834, %v5608
  %v5673 = vadd.f32 %v4835, %v5609
  %v5674 = vadd.f32 %v4836, %v5610
  %v5675 = vadd.f32 %v4837, %v5611
  %v5676 = vadd.f32 %v4838, %v5612
  %v5677 = vadd.f32 %v4839, %v5613
  %v5678 = vadd.f32 %v4840, %v5614
  %v5679 = vadd.f32 %v4841, %v5615
  %v5680 = vadd.f32 %v4842, %v5616
  %v5681 = vadd.f32 %v4843, %v5617
  %v5682 = vadd.f32 %v4844, %v5618
  %v5683 = vadd.f32 %v4845, %v5619
  %v5684 = vadd.f32 %v4846, %v5620
  %v5685 = vadd.f32 %v4847, %v5621
  %v5686 = vadd.f32 %v4848, %v5622
  %v5687 = vadd.f32 %v4849, %v5623
  %v5688 = vadd.f32 %v4850, %v5624
  %v5689 = vadd.f32 %v4851, %v5625
  %v5690 = vadd.f32 %v4852, %v5626
  %v5691 = vadd.f32 %v4853, %v5627
  %v5692 = vadd.f32 %v4854, %v5628
  %v5693 = vadd.f32 %v4855, %v5629
  %v5694 = vadd.f32 %v4856, %v5630
  %v5695 = vadd.f32 %v4857, %v5631
  %v5696 = vadd.f32 %v4858, %v5632
  %v5697 = vadd.f32 %v4859, %v5633
  %v5698 = vadd.f32 %v4860, %v5634
  %v5699 = vadd.f32 %v4861, %v5635
  %v5700 = vadd.f32 %v4862, %v5636
  %v5701 = vadd.f32 %v4863, %v5637
  %v5702 = vadd.f32 %v4864, %v5638
  %v5703 = vadd.f32 %v4865, %v5639
  %v5704 = vadd.f32 %v4866, %v5640
  %v5705 = vadd.f32 %v4867, %v5641
  %v5706 = vadd.f32 %v4868, %v5642
  %v5707 = vadd.f32 %v4869, %v5643
  %v5708 = vadd.f32 %v4870, %v5644
  %v5709 = vadd.f32 %v4871, %v5645
  %v5710 = vadd.f32 %v4872, %v5646
  %v5711 = vadd.f32 %v4873, %v5647
  %v5712 = vadd.f32 %v4874, %v5648
  %v5713 = vadd.f32 %v4875, %v5649
  %v5714 = vadd.f32 %v4876, %v5650
  %v5715 = vadd.f32 %v4877, %v5651
  %v5716 = vadd.f32 %v4878, %v5652
  %v5717 = vadd.f32 %v4879, %v5653
  %v5718 = vadd.f32 %v4880, %v5654
  %s5719 = scalar_lea.vmem %s2, 12
  %v5720 = vld [vmem:[%s5719] sm:$0x3]
  %5721 = vrot.lane.b32.xlu0 %v659, 104
  %v5722 = vpop.permute.xlu0 %5721
  %5723 = vrot.lane.b32.xlu0 %v660, 104
  %v5724 = vpop.permute.xlu0 %5723
  %5725 = vrot.lane.b32.xlu0 %v661, 104
  %v5726 = vpop.permute.xlu0 %5725
  %5727 = vrot.lane.b32.xlu0 %v662, 104
  %v5728 = vpop.permute.xlu0 %5727
  %5729 = vrot.lane.b32.xlu0 %v663, 104
  %v5730 = vpop.permute.xlu0 %5729
  %5731 = vrot.lane.b32.xlu0 %v664, 104
  %v5732 = vpop.permute.xlu0 %5731
  %5733 = vrot.lane.b32.xlu0 %v665, 104
  %v5734 = vpop.permute.xlu0 %5733
  %5735 = vrot.lane.b32.xlu0 %v666, 104
  %v5736 = vpop.permute.xlu0 %5735
  %5737 = vrot.lane.b32.xlu0 %v667, 104
  %v5738 = vpop.permute.xlu0 %5737
  %5739 = vrot.lane.b32.xlu0 %v668, 104
  %v5740 = vpop.permute.xlu0 %5739
  %5741 = vrot.lane.b32.xlu0 %v669, 104
  %v5742 = vpop.permute.xlu0 %5741
  %5743 = vrot.lane.b32.xlu0 %v670, 104
  %v5744 = vpop.permute.xlu0 %5743
  %5745 = vrot.lane.b32.xlu0 %v671, 104
  %v5746 = vpop.permute.xlu0 %5745
  %5747 = vrot.lane.b32.xlu0 %v672, 104
  %v5748 = vpop.permute.xlu0 %5747
  %5749 = vrot.lane.b32.xlu0 %v673, 104
  %v5750 = vpop.permute.xlu0 %5749
  %5751 = vrot.lane.b32.xlu0 %v674, 104
  %v5752 = vpop.permute.xlu0 %5751
  %5753 = vrot.lane.b32.xlu0 %v675, 104
  %v5754 = vpop.permute.xlu0 %5753
  %5755 = vrot.lane.b32.xlu0 %v676, 104
  %v5756 = vpop.permute.xlu0 %5755
  %5757 = vrot.lane.b32.xlu0 %v677, 104
  %v5758 = vpop.permute.xlu0 %5757
  %5759 = vrot.lane.b32.xlu0 %v678, 104
  %v5760 = vpop.permute.xlu0 %5759
  %5761 = vrot.lane.b32.xlu0 %v679, 104
  %v5762 = vpop.permute.xlu0 %5761
  %5763 = vrot.lane.b32.xlu0 %v680, 104
  %v5764 = vpop.permute.xlu0 %5763
  %5765 = vrot.lane.b32.xlu0 %v681, 104
  %v5766 = vpop.permute.xlu0 %5765
  %5767 = vrot.lane.b32.xlu0 %v682, 104
  %v5768 = vpop.permute.xlu0 %5767
  %5769 = vrot.lane.b32.xlu0 %v683, 104
  %v5770 = vpop.permute.xlu0 %5769
  %5771 = vrot.lane.b32.xlu0 %v684, 104
  %v5772 = vpop.permute.xlu0 %5771
  %5773 = vrot.lane.b32.xlu0 %v685, 104
  %v5774 = vpop.permute.xlu0 %5773
  %5775 = vrot.lane.b32.xlu0 %v686, 104
  %v5776 = vpop.permute.xlu0 %5775
  %5777 = vrot.lane.b32.xlu0 %v687, 104
  %v5778 = vpop.permute.xlu0 %5777
  %5779 = vrot.lane.b32.xlu0 %v688, 104
  %v5780 = vpop.permute.xlu0 %5779
  %5781 = vrot.lane.b32.xlu0 %v689, 104
  %v5782 = vpop.permute.xlu0 %5781
  %5783 = vrot.lane.b32.xlu0 %v690, 104
  %v5784 = vpop.permute.xlu0 %5783
  %v5786 = vsel %vm691, %v5722, 0
  %v5789 = vsel %vm691, %v5724, 0
  %v5792 = vsel %vm691, %v5726, 0
  %v5795 = vsel %vm691, %v5728, 0
  %v5798 = vsel %vm691, %v5730, 0
  %v5801 = vsel %vm691, %v5732, 0
  %v5804 = vsel %vm691, %v5734, 0
  %v5807 = vsel %vm691, %v5736, 0
  %v5810 = vsel %vm691, %v5738, 0
  %v5813 = vsel %vm691, %v5740, 0
  %v5816 = vsel %vm691, %v5742, 0
  %v5819 = vsel %vm691, %v5744, 0
  %v5822 = vsel %vm691, %v5746, 0
  %v5825 = vsel %vm691, %v5748, 0
  %v5828 = vsel %vm691, %v5750, 0
  %v5831 = vsel %vm691, %v5752, 0
  %v5834 = vsel %vm691, %v5754, 0
  %v5837 = vsel %vm691, %v5756, 0
  %v5840 = vsel %vm691, %v5758, 0
  %v5843 = vsel %vm691, %v5760, 0
  %v5846 = vsel %vm691, %v5762, 0
  %v5849 = vsel %vm691, %v5764, 0
  %v5852 = vsel %vm691, %v5766, 0
  %v5855 = vsel %vm691, %v5768, 0
  %v5858 = vsel %vm691, %v5770, 0
  %v5861 = vsel %vm691, %v5772, 0
  %v5864 = vsel %vm691, %v5774, 0
  %v5867 = vsel %vm691, %v5776, 0
  %v5870 = vsel %vm691, %v5778, 0
  %v5873 = vsel %vm691, %v5780, 0
  %v5876 = vsel %vm691, %v5782, 0
  %v5879 = vsel %vm691, %v5784, 0
  %v5882 = vsel %vm788, %v5720, 0
  %5884 = vmatprep.subr.bf16.mxu0 0
  %5885 = vmatpush1.bf16.msra.mxu0 0
  %5886 = vmatprep.subr.bf16.mxu0 0
  %5887 = vmatpush1.bf16.msra.mxu0 0
  %5888 = vmatprep.subr.bf16.mxu0 0
  %5889 = vmatpush1.bf16.msra.mxu0 0
  %5890 = vmatprep.subr.bf16.mxu0 0
  %5891 = vmatpush1.bf16.msra.mxu0 0
  %5892 = vmatprep.subr.bf16.mxu0 0
  %5893 = vmatpush1.bf16.msra.mxu0 0
  %5894 = vmatprep.subr.bf16.mxu0 0
  %5895 = vmatpush1.bf16.msra.mxu0 0
  %5896 = vmatprep.subr.bf16.mxu0 0
  %5897 = vmatpush1.bf16.msra.mxu0 0
  %5898 = vmatprep.subr.bf16.mxu0 0
  %5899 = vmatpush1.bf16.msra.mxu0 %v5882
  %5900 = vmatprep.subr.bf16.mxu0 0
  %5901 = vmatpush2.bf16.msra.mxu0 0
  %5902 = vmatprep.subr.bf16.mxu0 0
  %5903 = vmatpush2.bf16.msra.mxu0 0
  %5904 = vmatprep.subr.bf16.mxu0 0
  %5905 = vmatpush2.bf16.msra.mxu0 0
  %5906 = vmatprep.subr.bf16.mxu0 0
  %5907 = vmatpush2.bf16.msra.mxu0 0
  %5908 = vmatprep.subr.bf16.mxu0 0
  %5909 = vmatpush2.bf16.msra.mxu0 0
  %5910 = vmatprep.subr.bf16.mxu0 0
  %5911 = vmatpush2.bf16.msra.mxu0 0
  %5912 = vmatprep.subr.bf16.mxu0 0
  %5913 = vmatpush2.bf16.msra.mxu0 0
  %5914 = vmatprep.subr.bf16.mxu0 0
  %5915 = vmatpush2.bf16.msra.mxu0 0
  %5916 = vmatprep.mubr.bf16.mxu0 0
  %5917 = vmatmul.mubr.bf16.gmra.mxu0 %v5786
  %v5918 = vpop.f32.mrf.mxu0
  %v5919 = vadd.f32 0.0, %v5918
  %v5920 = vpop.f32.mrf.mxu0
  %v5921 = vpop.f32.mrf.mxu0
  %v5922 = vadd.f32 0.0, %v5921
  %v5923 = vpop.f32.mrf.mxu0
  %5924 = vmatprep.mubr.bf16.mxu0 0
  %5925 = vmatmul.mubr.bf16.gmra.mxu0 %v5789
  %v5926 = vpop.f32.mrf.mxu0
  %v5927 = vadd.f32 0.0, %v5926
  %v5928 = vpop.f32.mrf.mxu0
  %v5929 = vpop.f32.mrf.mxu0
  %v5930 = vadd.f32 0.0, %v5929
  %v5931 = vpop.f32.mrf.mxu0
  %5932 = vmatprep.mubr.bf16.mxu0 0
  %5933 = vmatmul.mubr.bf16.gmra.mxu0 %v5792
  %v5934 = vpop.f32.mrf.mxu0
  %v5935 = vadd.f32 0.0, %v5934
  %v5936 = vpop.f32.mrf.mxu0
  %v5937 = vpop.f32.mrf.mxu0
  %v5938 = vadd.f32 0.0, %v5937
  %v5939 = vpop.f32.mrf.mxu0
  %5940 = vmatprep.mubr.bf16.mxu0 0
  %5941 = vmatmul.mubr.bf16.gmra.mxu0 %v5795
  %v5942 = vpop.f32.mrf.mxu0
  %v5943 = vadd.f32 0.0, %v5942
  %v5944 = vpop.f32.mrf.mxu0
  %v5945 = vpop.f32.mrf.mxu0
  %v5946 = vadd.f32 0.0, %v5945
  %v5947 = vpop.f32.mrf.mxu0
  %5948 = vmatprep.mubr.bf16.mxu0 0
  %5949 = vmatmul.mubr.bf16.gmra.mxu0 %v5798
  %v5950 = vpop.f32.mrf.mxu0
  %v5951 = vadd.f32 0.0, %v5950
  %v5952 = vpop.f32.mrf.mxu0
  %v5953 = vpop.f32.mrf.mxu0
  %v5954 = vadd.f32 0.0, %v5953
  %v5955 = vpop.f32.mrf.mxu0
  %5956 = vmatprep.mubr.bf16.mxu0 0
  %5957 = vmatmul.mubr.bf16.gmra.mxu0 %v5801
  %v5958 = vpop.f32.mrf.mxu0
  %v5959 = vadd.f32 0.0, %v5958
  %v5960 = vpop.f32.mrf.mxu0
  %v5961 = vpop.f32.mrf.mxu0
  %v5962 = vadd.f32 0.0, %v5961
  %v5963 = vpop.f32.mrf.mxu0
  %5964 = vmatprep.mubr.bf16.mxu0 0
  %5965 = vmatmul.mubr.bf16.gmra.mxu0 %v5804
  %v5966 = vpop.f32.mrf.mxu0
  %v5967 = vadd.f32 0.0, %v5966
  %v5968 = vpop.f32.mrf.mxu0
  %v5969 = vpop.f32.mrf.mxu0
  %v5970 = vadd.f32 0.0, %v5969
  %v5971 = vpop.f32.mrf.mxu0
  %5972 = vmatprep.mubr.bf16.mxu0 0
  %5973 = vmatmul.mubr.bf16.gmra.mxu0 %v5807
  %v5974 = vpop.f32.mrf.mxu0
  %v5975 = vadd.f32 0.0, %v5974
  %v5976 = vpop.f32.mrf.mxu0
  %v5977 = vpop.f32.mrf.mxu0
  %v5978 = vadd.f32 0.0, %v5977
  %v5979 = vpop.f32.mrf.mxu0
  %5980 = vmatprep.mubr.bf16.mxu0 0
  %5981 = vmatmul.mubr.bf16.gmra.mxu0 %v5810
  %v5982 = vpop.f32.mrf.mxu0
  %v5983 = vadd.f32 0.0, %v5982
  %v5984 = vpop.f32.mrf.mxu0
  %v5985 = vpop.f32.mrf.mxu0
  %v5986 = vadd.f32 0.0, %v5985
  %v5987 = vpop.f32.mrf.mxu0
  %5988 = vmatprep.mubr.bf16.mxu0 0
  %5989 = vmatmul.mubr.bf16.gmra.mxu0 %v5813
  %v5990 = vpop.f32.mrf.mxu0
  %v5991 = vadd.f32 0.0, %v5990
  %v5992 = vpop.f32.mrf.mxu0
  %v5993 = vpop.f32.mrf.mxu0
  %v5994 = vadd.f32 0.0, %v5993
  %v5995 = vpop.f32.mrf.mxu0
  %5996 = vmatprep.mubr.bf16.mxu0 0
  %5997 = vmatmul.mubr.bf16.gmra.mxu0 %v5816
  %v5998 = vpop.f32.mrf.mxu0
  %v5999 = vadd.f32 0.0, %v5998
  %v6000 = vpop.f32.mrf.mxu0
  %v6001 = vpop.f32.mrf.mxu0
  %v6002 = vadd.f32 0.0, %v6001
  %v6003 = vpop.f32.mrf.mxu0
  %6004 = vmatprep.mubr.bf16.mxu0 0
  %6005 = vmatmul.mubr.bf16.gmra.mxu0 %v5819
  %v6006 = vpop.f32.mrf.mxu0
  %v6007 = vadd.f32 0.0, %v6006
  %v6008 = vpop.f32.mrf.mxu0
  %v6009 = vpop.f32.mrf.mxu0
  %v6010 = vadd.f32 0.0, %v6009
  %v6011 = vpop.f32.mrf.mxu0
  %6012 = vmatprep.mubr.bf16.mxu0 0
  %6013 = vmatmul.mubr.bf16.gmra.mxu0 %v5822
  %v6014 = vpop.f32.mrf.mxu0
  %v6015 = vadd.f32 0.0, %v6014
  %v6016 = vpop.f32.mrf.mxu0
  %v6017 = vpop.f32.mrf.mxu0
  %v6018 = vadd.f32 0.0, %v6017
  %v6019 = vpop.f32.mrf.mxu0
  %6020 = vmatprep.mubr.bf16.mxu0 0
  %6021 = vmatmul.mubr.bf16.gmra.mxu0 %v5825
  %v6022 = vpop.f32.mrf.mxu0
  %v6023 = vadd.f32 0.0, %v6022
  %v6024 = vpop.f32.mrf.mxu0
  %v6025 = vpop.f32.mrf.mxu0
  %v6026 = vadd.f32 0.0, %v6025
  %v6027 = vpop.f32.mrf.mxu0
  %6028 = vmatprep.mubr.bf16.mxu0 0
  %6029 = vmatmul.mubr.bf16.gmra.mxu0 %v5828
  %v6030 = vpop.f32.mrf.mxu0
  %v6031 = vadd.f32 0.0, %v6030
  %v6032 = vpop.f32.mrf.mxu0
  %v6033 = vpop.f32.mrf.mxu0
  %v6034 = vadd.f32 0.0, %v6033
  %v6035 = vpop.f32.mrf.mxu0
  %6036 = vmatprep.mubr.bf16.mxu0 0
  %6037 = vmatmul.mubr.bf16.gmra.mxu0 %v5831
  %v6038 = vpop.f32.mrf.mxu0
  %v6039 = vadd.f32 0.0, %v6038
  %v6040 = vpop.f32.mrf.mxu0
  %v6041 = vpop.f32.mrf.mxu0
  %v6042 = vadd.f32 0.0, %v6041
  %v6043 = vpop.f32.mrf.mxu0
  %6044 = vmatprep.mubr.bf16.mxu0 0
  %6045 = vmatmul.mubr.bf16.gmra.mxu0 %v5834
  %v6046 = vpop.f32.mrf.mxu0
  %v6047 = vadd.f32 0.0, %v6046
  %v6048 = vpop.f32.mrf.mxu0
  %v6049 = vpop.f32.mrf.mxu0
  %v6050 = vadd.f32 0.0, %v6049
  %v6051 = vpop.f32.mrf.mxu0
  %6052 = vmatprep.mubr.bf16.mxu0 0
  %6053 = vmatmul.mubr.bf16.gmra.mxu0 %v5837
  %v6054 = vpop.f32.mrf.mxu0
  %v6055 = vadd.f32 0.0, %v6054
  %v6056 = vpop.f32.mrf.mxu0
  %v6057 = vpop.f32.mrf.mxu0
  %v6058 = vadd.f32 0.0, %v6057
  %v6059 = vpop.f32.mrf.mxu0
  %6060 = vmatprep.mubr.bf16.mxu0 0
  %6061 = vmatmul.mubr.bf16.gmra.mxu0 %v5840
  %v6062 = vpop.f32.mrf.mxu0
  %v6063 = vadd.f32 0.0, %v6062
  %v6064 = vpop.f32.mrf.mxu0
  %v6065 = vpop.f32.mrf.mxu0
  %v6066 = vadd.f32 0.0, %v6065
  %v6067 = vpop.f32.mrf.mxu0
  %6068 = vmatprep.mubr.bf16.mxu0 0
  %6069 = vmatmul.mubr.bf16.gmra.mxu0 %v5843
  %v6070 = vpop.f32.mrf.mxu0
  %v6071 = vadd.f32 0.0, %v6070
  %v6072 = vpop.f32.mrf.mxu0
  %v6073 = vpop.f32.mrf.mxu0
  %v6074 = vadd.f32 0.0, %v6073
  %v6075 = vpop.f32.mrf.mxu0
  %6076 = vmatprep.mubr.bf16.mxu0 0
  %6077 = vmatmul.mubr.bf16.gmra.mxu0 %v5846
  %v6078 = vpop.f32.mrf.mxu0
  %v6079 = vadd.f32 0.0, %v6078
  %v6080 = vpop.f32.mrf.mxu0
  %v6081 = vpop.f32.mrf.mxu0
  %v6082 = vadd.f32 0.0, %v6081
  %v6083 = vpop.f32.mrf.mxu0
  %6084 = vmatprep.mubr.bf16.mxu0 0
  %6085 = vmatmul.mubr.bf16.gmra.mxu0 %v5849
  %v6086 = vpop.f32.mrf.mxu0
  %v6087 = vadd.f32 0.0, %v6086
  %v6088 = vpop.f32.mrf.mxu0
  %v6089 = vpop.f32.mrf.mxu0
  %v6090 = vadd.f32 0.0, %v6089
  %v6091 = vpop.f32.mrf.mxu0
  %6092 = vmatprep.mubr.bf16.mxu0 0
  %6093 = vmatmul.mubr.bf16.gmra.mxu0 %v5852
  %v6094 = vpop.f32.mrf.mxu0
  %v6095 = vadd.f32 0.0, %v6094
  %v6096 = vpop.f32.mrf.mxu0
  %v6097 = vpop.f32.mrf.mxu0
  %v6098 = vadd.f32 0.0, %v6097
  %v6099 = vpop.f32.mrf.mxu0
  %6100 = vmatprep.mubr.bf16.mxu0 0
  %6101 = vmatmul.mubr.bf16.gmra.mxu0 %v5855
  %v6102 = vpop.f32.mrf.mxu0
  %v6103 = vadd.f32 0.0, %v6102
  %v6104 = vpop.f32.mrf.mxu0
  %v6105 = vpop.f32.mrf.mxu0
  %v6106 = vadd.f32 0.0, %v6105
  %v6107 = vpop.f32.mrf.mxu0
  %6108 = vmatprep.mubr.bf16.mxu0 0
  %6109 = vmatmul.mubr.bf16.gmra.mxu0 %v5858
  %v6110 = vpop.f32.mrf.mxu0
  %v6111 = vadd.f32 0.0, %v6110
  %v6112 = vpop.f32.mrf.mxu0
  %v6113 = vpop.f32.mrf.mxu0
  %v6114 = vadd.f32 0.0, %v6113
  %v6115 = vpop.f32.mrf.mxu0
  %6116 = vmatprep.mubr.bf16.mxu0 0
  %6117 = vmatmul.mubr.bf16.gmra.mxu0 %v5861
  %v6118 = vpop.f32.mrf.mxu0
  %v6119 = vadd.f32 0.0, %v6118
  %v6120 = vpop.f32.mrf.mxu0
  %v6121 = vpop.f32.mrf.mxu0
  %v6122 = vadd.f32 0.0, %v6121
  %v6123 = vpop.f32.mrf.mxu0
  %6124 = vmatprep.mubr.bf16.mxu0 0
  %6125 = vmatmul.mubr.bf16.gmra.mxu0 %v5864
  %v6126 = vpop.f32.mrf.mxu0
  %v6127 = vadd.f32 0.0, %v6126
  %v6128 = vpop.f32.mrf.mxu0
  %v6129 = vpop.f32.mrf.mxu0
  %v6130 = vadd.f32 0.0, %v6129
  %v6131 = vpop.f32.mrf.mxu0
  %6132 = vmatprep.mubr.bf16.mxu0 0
  %6133 = vmatmul.mubr.bf16.gmra.mxu0 %v5867
  %v6134 = vpop.f32.mrf.mxu0
  %v6135 = vadd.f32 0.0, %v6134
  %v6136 = vpop.f32.mrf.mxu0
  %v6137 = vpop.f32.mrf.mxu0
  %v6138 = vadd.f32 0.0, %v6137
  %v6139 = vpop.f32.mrf.mxu0
  %6140 = vmatprep.mubr.bf16.mxu0 0
  %6141 = vmatmul.mubr.bf16.gmra.mxu0 %v5870
  %v6142 = vpop.f32.mrf.mxu0
  %v6143 = vadd.f32 0.0, %v6142
  %v6144 = vpop.f32.mrf.mxu0
  %v6145 = vpop.f32.mrf.mxu0
  %v6146 = vadd.f32 0.0, %v6145
  %v6147 = vpop.f32.mrf.mxu0
  %6148 = vmatprep.mubr.bf16.mxu0 0
  %6149 = vmatmul.mubr.bf16.gmra.mxu0 %v5873
  %v6150 = vpop.f32.mrf.mxu0
  %v6151 = vadd.f32 0.0, %v6150
  %v6152 = vpop.f32.mrf.mxu0
  %v6153 = vpop.f32.mrf.mxu0
  %v6154 = vadd.f32 0.0, %v6153
  %v6155 = vpop.f32.mrf.mxu0
  %6156 = vmatprep.mubr.bf16.mxu0 0
  %6157 = vmatmul.mubr.bf16.gmra.mxu0 %v5876
  %v6158 = vpop.f32.mrf.mxu0
  %v6159 = vadd.f32 0.0, %v6158
  %v6160 = vpop.f32.mrf.mxu0
  %v6161 = vpop.f32.mrf.mxu0
  %v6162 = vadd.f32 0.0, %v6161
  %v6163 = vpop.f32.mrf.mxu0
  %6164 = vmatprep.mubr.bf16.mxu0 0
  %6165 = vmatmul.mubr.bf16.gmra.mxu0 %v5879
  %v6166 = vpop.f32.mrf.mxu0
  %v6167 = vadd.f32 0.0, %v6166
  %v6168 = vpop.f32.mrf.mxu0
  %v6169 = vpop.f32.mrf.mxu0
  %v6170 = vadd.f32 0.0, %v6169
  %v6171 = vpop.f32.mrf.mxu0
  %6172 = vdwg.mxu0
  %6173 = vset.pattern.permute.xlu0 6
  %6174 = vperm.xlu0 %6173, %v339
  %v6175 = vpop.permute.xlu0 %6174
  %6177 = vset.pattern.permute.xlu0 6
  %6178 = vperm.xlu0 %6177, %v341
  %v6179 = vpop.permute.xlu0 %6178
  %6181 = vset.pattern.permute.xlu0 6
  %6182 = vperm.xlu0 %6181, %v343
  %v6183 = vpop.permute.xlu0 %6182
  %6185 = vset.pattern.permute.xlu0 6
  %6186 = vperm.xlu0 %6185, %v345
  %v6187 = vpop.permute.xlu0 %6186
  %6189 = vset.pattern.permute.xlu0 6
  %6190 = vperm.xlu0 %6189, %v347
  %v6191 = vpop.permute.xlu0 %6190
  %6193 = vset.pattern.permute.xlu0 6
  %6194 = vperm.xlu0 %6193, %v349
  %v6195 = vpop.permute.xlu0 %6194
  %6197 = vset.pattern.permute.xlu0 6
  %6198 = vperm.xlu0 %6197, %v351
  %v6199 = vpop.permute.xlu0 %6198
  %6201 = vset.pattern.permute.xlu0 6
  %6202 = vperm.xlu0 %6201, %v353
  %v6203 = vpop.permute.xlu0 %6202
  %6205 = vset.pattern.permute.xlu0 6
  %6206 = vperm.xlu0 %6205, %v355
  %v6207 = vpop.permute.xlu0 %6206
  %6209 = vset.pattern.permute.xlu0 6
  %6210 = vperm.xlu0 %6209, %v357
  %v6211 = vpop.permute.xlu0 %6210
  %6213 = vset.pattern.permute.xlu0 6
  %6214 = vperm.xlu0 %6213, %v359
  %v6215 = vpop.permute.xlu0 %6214
  %6217 = vset.pattern.permute.xlu0 6
  %6218 = vperm.xlu0 %6217, %v361
  %v6219 = vpop.permute.xlu0 %6218
  %6221 = vset.pattern.permute.xlu0 6
  %6222 = vperm.xlu0 %6221, %v363
  %v6223 = vpop.permute.xlu0 %6222
  %6225 = vset.pattern.permute.xlu0 6
  %6226 = vperm.xlu0 %6225, %v365
  %v6227 = vpop.permute.xlu0 %6226
  %6229 = vset.pattern.permute.xlu0 6
  %6230 = vperm.xlu0 %6229, %v367
  %v6231 = vpop.permute.xlu0 %6230
  %6233 = vset.pattern.permute.xlu0 6
  %6234 = vperm.xlu0 %6233, %v369
  %v6235 = vpop.permute.xlu0 %6234
  %6237 = vset.pattern.permute.xlu0 6
  %6238 = vperm.xlu0 %6237, %v371
  %v6239 = vpop.permute.xlu0 %6238
  %6241 = vset.pattern.permute.xlu0 6
  %6242 = vperm.xlu0 %6241, %v373
  %v6243 = vpop.permute.xlu0 %6242
  %6245 = vset.pattern.permute.xlu0 6
  %6246 = vperm.xlu0 %6245, %v375
  %v6247 = vpop.permute.xlu0 %6246
  %6249 = vset.pattern.permute.xlu0 6
  %6250 = vperm.xlu0 %6249, %v377
  %v6251 = vpop.permute.xlu0 %6250
  %6253 = vset.pattern.permute.xlu0 6
  %6254 = vperm.xlu0 %6253, %v379
  %v6255 = vpop.permute.xlu0 %6254
  %6257 = vset.pattern.permute.xlu0 6
  %6258 = vperm.xlu0 %6257, %v381
  %v6259 = vpop.permute.xlu0 %6258
  %6261 = vset.pattern.permute.xlu0 6
  %6262 = vperm.xlu0 %6261, %v383
  %v6263 = vpop.permute.xlu0 %6262
  %6265 = vset.pattern.permute.xlu0 6
  %6266 = vperm.xlu0 %6265, %v385
  %v6267 = vpop.permute.xlu0 %6266
  %6269 = vset.pattern.permute.xlu0 6
  %6270 = vperm.xlu0 %6269, %v387
  %v6271 = vpop.permute.xlu0 %6270
  %6273 = vset.pattern.permute.xlu0 6
  %6274 = vperm.xlu0 %6273, %v389
  %v6275 = vpop.permute.xlu0 %6274
  %6277 = vset.pattern.permute.xlu0 6
  %6278 = vperm.xlu0 %6277, %v391
  %v6279 = vpop.permute.xlu0 %6278
  %6281 = vset.pattern.permute.xlu0 6
  %6282 = vperm.xlu0 %6281, %v393
  %v6283 = vpop.permute.xlu0 %6282
  %6285 = vset.pattern.permute.xlu0 6
  %6286 = vperm.xlu0 %6285, %v395
  %v6287 = vpop.permute.xlu0 %6286
  %6289 = vset.pattern.permute.xlu0 6
  %6290 = vperm.xlu0 %6289, %v397
  %v6291 = vpop.permute.xlu0 %6290
  %6293 = vset.pattern.permute.xlu0 6
  %6294 = vperm.xlu0 %6293, %v399
  %v6295 = vpop.permute.xlu0 %6294
  %6297 = vset.pattern.permute.xlu0 6
  %6298 = vperm.xlu0 %6297, %v401
  %v6299 = vpop.permute.xlu0 %6298
  %6301 = vset.pattern.permute.xlu0 6
  %6302 = vperm.xlu0 %6301, %v403
  %v6303 = vpop.permute.xlu0 %6302
  %6305 = vset.pattern.permute.xlu0 6
  %6306 = vperm.xlu0 %6305, %v405
  %v6307 = vpop.permute.xlu0 %6306
  %6309 = vset.pattern.permute.xlu0 6
  %6310 = vperm.xlu0 %6309, %v407
  %v6311 = vpop.permute.xlu0 %6310
  %6313 = vset.pattern.permute.xlu0 6
  %6314 = vperm.xlu0 %6313, %v409
  %v6315 = vpop.permute.xlu0 %6314
  %6317 = vset.pattern.permute.xlu0 6
  %6318 = vperm.xlu0 %6317, %v411
  %v6319 = vpop.permute.xlu0 %6318
  %6321 = vset.pattern.permute.xlu0 6
  %6322 = vperm.xlu0 %6321, %v413
  %v6323 = vpop.permute.xlu0 %6322
  %6325 = vset.pattern.permute.xlu0 6
  %6326 = vperm.xlu0 %6325, %v415
  %v6327 = vpop.permute.xlu0 %6326
  %6329 = vset.pattern.permute.xlu0 6
  %6330 = vperm.xlu0 %6329, %v417
  %v6331 = vpop.permute.xlu0 %6330
  %6333 = vset.pattern.permute.xlu0 6
  %6334 = vperm.xlu0 %6333, %v419
  %v6335 = vpop.permute.xlu0 %6334
  %6337 = vset.pattern.permute.xlu0 6
  %6338 = vperm.xlu0 %6337, %v421
  %v6339 = vpop.permute.xlu0 %6338
  %6341 = vset.pattern.permute.xlu0 6
  %6342 = vperm.xlu0 %6341, %v423
  %v6343 = vpop.permute.xlu0 %6342
  %6345 = vset.pattern.permute.xlu0 6
  %6346 = vperm.xlu0 %6345, %v425
  %v6347 = vpop.permute.xlu0 %6346
  %6349 = vset.pattern.permute.xlu0 6
  %6350 = vperm.xlu0 %6349, %v427
  %v6351 = vpop.permute.xlu0 %6350
  %6353 = vset.pattern.permute.xlu0 6
  %6354 = vperm.xlu0 %6353, %v429
  %v6355 = vpop.permute.xlu0 %6354
  %6357 = vset.pattern.permute.xlu0 6
  %6358 = vperm.xlu0 %6357, %v431
  %v6359 = vpop.permute.xlu0 %6358
  %6361 = vset.pattern.permute.xlu0 6
  %6362 = vperm.xlu0 %6361, %v433
  %v6363 = vpop.permute.xlu0 %6362
  %6365 = vset.pattern.permute.xlu0 6
  %6366 = vperm.xlu0 %6365, %v435
  %v6367 = vpop.permute.xlu0 %6366
  %6369 = vset.pattern.permute.xlu0 6
  %6370 = vperm.xlu0 %6369, %v437
  %v6371 = vpop.permute.xlu0 %6370
  %6373 = vset.pattern.permute.xlu0 6
  %6374 = vperm.xlu0 %6373, %v439
  %v6375 = vpop.permute.xlu0 %6374
  %6377 = vset.pattern.permute.xlu0 6
  %6378 = vperm.xlu0 %6377, %v441
  %v6379 = vpop.permute.xlu0 %6378
  %6381 = vset.pattern.permute.xlu0 6
  %6382 = vperm.xlu0 %6381, %v443
  %v6383 = vpop.permute.xlu0 %6382
  %6385 = vset.pattern.permute.xlu0 6
  %6386 = vperm.xlu0 %6385, %v445
  %v6387 = vpop.permute.xlu0 %6386
  %6389 = vset.pattern.permute.xlu0 6
  %6390 = vperm.xlu0 %6389, %v447
  %v6391 = vpop.permute.xlu0 %6390
  %6393 = vset.pattern.permute.xlu0 6
  %6394 = vperm.xlu0 %6393, %v449
  %v6395 = vpop.permute.xlu0 %6394
  %6397 = vset.pattern.permute.xlu0 6
  %6398 = vperm.xlu0 %6397, %v451
  %v6399 = vpop.permute.xlu0 %6398
  %6401 = vset.pattern.permute.xlu0 6
  %6402 = vperm.xlu0 %6401, %v453
  %v6403 = vpop.permute.xlu0 %6402
  %6405 = vset.pattern.permute.xlu0 6
  %6406 = vperm.xlu0 %6405, %v455
  %v6407 = vpop.permute.xlu0 %6406
  %6409 = vset.pattern.permute.xlu0 6
  %6410 = vperm.xlu0 %6409, %v457
  %v6411 = vpop.permute.xlu0 %6410
  %6413 = vset.pattern.permute.xlu0 6
  %6414 = vperm.xlu0 %6413, %v459
  %v6415 = vpop.permute.xlu0 %6414
  %6417 = vset.pattern.permute.xlu0 6
  %6418 = vperm.xlu0 %6417, %v461
  %v6419 = vpop.permute.xlu0 %6418
  %6421 = vset.pattern.permute.xlu0 6
  %6422 = vperm.xlu0 %6421, %v463
  %v6423 = vpop.permute.xlu0 %6422
  %6425 = vset.pattern.permute.xlu0 6
  %6426 = vperm.xlu0 %6425, %v465
  %v6427 = vpop.permute.xlu0 %6426
  %v6429 = vmul.f32 %v6175, %v5919
  %v6430 = vmul.f32 %v6179, %v5922
  %v6431 = vmul.f32 %v6183, %v5927
  %v6432 = vmul.f32 %v6187, %v5930
  %v6433 = vmul.f32 %v6191, %v5935
  %v6434 = vmul.f32 %v6195, %v5938
  %v6435 = vmul.f32 %v6199, %v5943
  %v6436 = vmul.f32 %v6203, %v5946
  %v6437 = vmul.f32 %v6207, %v5951
  %v6438 = vmul.f32 %v6211, %v5954
  %v6439 = vmul.f32 %v6215, %v5959
  %v6440 = vmul.f32 %v6219, %v5962
  %v6441 = vmul.f32 %v6223, %v5967
  %v6442 = vmul.f32 %v6227, %v5970
  %v6443 = vmul.f32 %v6231, %v5975
  %v6444 = vmul.f32 %v6235, %v5978
  %v6445 = vmul.f32 %v6239, %v5983
  %v6446 = vmul.f32 %v6243, %v5986
  %v6447 = vmul.f32 %v6247, %v5991
  %v6448 = vmul.f32 %v6251, %v5994
  %v6449 = vmul.f32 %v6255, %v5999
  %v6450 = vmul.f32 %v6259, %v6002
  %v6451 = vmul.f32 %v6263, %v6007
  %v6452 = vmul.f32 %v6267, %v6010
  %v6453 = vmul.f32 %v6271, %v6015
  %v6454 = vmul.f32 %v6275, %v6018
  %v6455 = vmul.f32 %v6279, %v6023
  %v6456 = vmul.f32 %v6283, %v6026
  %v6457 = vmul.f32 %v6287, %v6031
  %v6458 = vmul.f32 %v6291, %v6034
  %v6459 = vmul.f32 %v6295, %v6039
  %v6460 = vmul.f32 %v6299, %v6042
  %v6461 = vmul.f32 %v6303, %v6047
  %v6462 = vmul.f32 %v6307, %v6050
  %v6463 = vmul.f32 %v6311, %v6055
  %v6464 = vmul.f32 %v6315, %v6058
  %v6465 = vmul.f32 %v6319, %v6063
  %v6466 = vmul.f32 %v6323, %v6066
  %v6467 = vmul.f32 %v6327, %v6071
  %v6468 = vmul.f32 %v6331, %v6074
  %v6469 = vmul.f32 %v6335, %v6079
  %v6470 = vmul.f32 %v6339, %v6082
  %v6471 = vmul.f32 %v6343, %v6087
  %v6472 = vmul.f32 %v6347, %v6090
  %v6473 = vmul.f32 %v6351, %v6095
  %v6474 = vmul.f32 %v6355, %v6098
  %v6475 = vmul.f32 %v6359, %v6103
  %v6476 = vmul.f32 %v6363, %v6106
  %v6477 = vmul.f32 %v6367, %v6111
  %v6478 = vmul.f32 %v6371, %v6114
  %v6479 = vmul.f32 %v6375, %v6119
  %v6480 = vmul.f32 %v6379, %v6122
  %v6481 = vmul.f32 %v6383, %v6127
  %v6482 = vmul.f32 %v6387, %v6130
  %v6483 = vmul.f32 %v6391, %v6135
  %v6484 = vmul.f32 %v6395, %v6138
  %v6485 = vmul.f32 %v6399, %v6143
  %v6486 = vmul.f32 %v6403, %v6146
  %v6487 = vmul.f32 %v6407, %v6151
  %v6488 = vmul.f32 %v6411, %v6154
  %v6489 = vmul.f32 %v6415, %v6159
  %v6490 = vmul.f32 %v6419, %v6162
  %v6491 = vmul.f32 %v6423, %v6167
  %v6492 = vmul.f32 %v6427, %v6170
  %v6493 = vadd.f32 %v5655, %v6429
  %v6494 = vadd.f32 %v5656, %v6430
  %v6495 = vadd.f32 %v5657, %v6431
  %v6496 = vadd.f32 %v5658, %v6432
  %v6497 = vadd.f32 %v5659, %v6433
  %v6498 = vadd.f32 %v5660, %v6434
  %v6499 = vadd.f32 %v5661, %v6435
  %v6500 = vadd.f32 %v5662, %v6436
  %v6501 = vadd.f32 %v5663, %v6437
  %v6502 = vadd.f32 %v5664, %v6438
  %v6503 = vadd.f32 %v5665, %v6439
  %v6504 = vadd.f32 %v5666, %v6440
  %v6505 = vadd.f32 %v5667, %v6441
  %v6506 = vadd.f32 %v5668, %v6442
  %v6507 = vadd.f32 %v5669, %v6443
  %v6508 = vadd.f32 %v5670, %v6444
  %v6509 = vadd.f32 %v5671, %v6445
  %v6510 = vadd.f32 %v5672, %v6446
  %v6511 = vadd.f32 %v5673, %v6447
  %v6512 = vadd.f32 %v5674, %v6448
  %v6513 = vadd.f32 %v5675, %v6449
  %v6514 = vadd.f32 %v5676, %v6450
  %v6515 = vadd.f32 %v5677, %v6451
  %v6516 = vadd.f32 %v5678, %v6452
  %v6517 = vadd.f32 %v5679, %v6453
  %v6518 = vadd.f32 %v5680, %v6454
  %v6519 = vadd.f32 %v5681, %v6455
  %v6520 = vadd.f32 %v5682, %v6456
  %v6521 = vadd.f32 %v5683, %v6457
  %v6522 = vadd.f32 %v5684, %v6458
  %v6523 = vadd.f32 %v5685, %v6459
  %v6524 = vadd.f32 %v5686, %v6460
  %v6525 = vadd.f32 %v5687, %v6461
  %v6526 = vadd.f32 %v5688, %v6462
  %v6527 = vadd.f32 %v5689, %v6463
  %v6528 = vadd.f32 %v5690, %v6464
  %v6529 = vadd.f32 %v5691, %v6465
  %v6530 = vadd.f32 %v5692, %v6466
  %v6531 = vadd.f32 %v5693, %v6467
  %v6532 = vadd.f32 %v5694, %v6468
  %v6533 = vadd.f32 %v5695, %v6469
  %v6534 = vadd.f32 %v5696, %v6470
  %v6535 = vadd.f32 %v5697, %v6471
  %v6536 = vadd.f32 %v5698, %v6472
  %v6537 = vadd.f32 %v5699, %v6473
  %v6538 = vadd.f32 %v5700, %v6474
  %v6539 = vadd.f32 %v5701, %v6475
  %v6540 = vadd.f32 %v5702, %v6476
  %v6541 = vadd.f32 %v5703, %v6477
  %v6542 = vadd.f32 %v5704, %v6478
  %v6543 = vadd.f32 %v5705, %v6479
  %v6544 = vadd.f32 %v5706, %v6480
  %v6545 = vadd.f32 %v5707, %v6481
  %v6546 = vadd.f32 %v5708, %v6482
  %v6547 = vadd.f32 %v5709, %v6483
  %v6548 = vadd.f32 %v5710, %v6484
  %v6549 = vadd.f32 %v5711, %v6485
  %v6550 = vadd.f32 %v5712, %v6486
  %v6551 = vadd.f32 %v5713, %v6487
  %v6552 = vadd.f32 %v5714, %v6488
  %v6553 = vadd.f32 %v5715, %v6489
  %v6554 = vadd.f32 %v5716, %v6490
  %v6555 = vadd.f32 %v5717, %v6491
  %v6556 = vadd.f32 %v5718, %v6492
  %s6557 = scalar_lea.vmem %s2, 14
  %v6558 = vld [vmem:[%s6557] sm:$0x3]
  %6559 = vrot.lane.b32.xlu0 %v659, 100
  %v6560 = vpop.permute.xlu0 %6559
  %6561 = vrot.lane.b32.xlu0 %v660, 100
  %v6562 = vpop.permute.xlu0 %6561
  %6563 = vrot.lane.b32.xlu0 %v661, 100
  %v6564 = vpop.permute.xlu0 %6563
  %6565 = vrot.lane.b32.xlu0 %v662, 100
  %v6566 = vpop.permute.xlu0 %6565
  %6567 = vrot.lane.b32.xlu0 %v663, 100
  %v6568 = vpop.permute.xlu0 %6567
  %6569 = vrot.lane.b32.xlu0 %v664, 100
  %v6570 = vpop.permute.xlu0 %6569
  %6571 = vrot.lane.b32.xlu0 %v665, 100
  %v6572 = vpop.permute.xlu0 %6571
  %6573 = vrot.lane.b32.xlu0 %v666, 100
  %v6574 = vpop.permute.xlu0 %6573
  %6575 = vrot.lane.b32.xlu0 %v667, 100
  %v6576 = vpop.permute.xlu0 %6575
  %6577 = vrot.lane.b32.xlu0 %v668, 100
  %v6578 = vpop.permute.xlu0 %6577
  %6579 = vrot.lane.b32.xlu0 %v669, 100
  %v6580 = vpop.permute.xlu0 %6579
  %6581 = vrot.lane.b32.xlu0 %v670, 100
  %v6582 = vpop.permute.xlu0 %6581
  %6583 = vrot.lane.b32.xlu0 %v671, 100
  %v6584 = vpop.permute.xlu0 %6583
  %6585 = vrot.lane.b32.xlu0 %v672, 100
  %v6586 = vpop.permute.xlu0 %6585
  %6587 = vrot.lane.b32.xlu0 %v673, 100
  %v6588 = vpop.permute.xlu0 %6587
  %6589 = vrot.lane.b32.xlu0 %v674, 100
  %v6590 = vpop.permute.xlu0 %6589
  %6591 = vrot.lane.b32.xlu0 %v675, 100
  %v6592 = vpop.permute.xlu0 %6591
  %6593 = vrot.lane.b32.xlu0 %v676, 100
  %v6594 = vpop.permute.xlu0 %6593
  %6595 = vrot.lane.b32.xlu0 %v677, 100
  %v6596 = vpop.permute.xlu0 %6595
  %6597 = vrot.lane.b32.xlu0 %v678, 100
  %v6598 = vpop.permute.xlu0 %6597
  %6599 = vrot.lane.b32.xlu0 %v679, 100
  %v6600 = vpop.permute.xlu0 %6599
  %6601 = vrot.lane.b32.xlu0 %v680, 100
  %v6602 = vpop.permute.xlu0 %6601
  %6603 = vrot.lane.b32.xlu0 %v681, 100
  %v6604 = vpop.permute.xlu0 %6603
  %6605 = vrot.lane.b32.xlu0 %v682, 100
  %v6606 = vpop.permute.xlu0 %6605
  %6607 = vrot.lane.b32.xlu0 %v683, 100
  %v6608 = vpop.permute.xlu0 %6607
  %6609 = vrot.lane.b32.xlu0 %v684, 100
  %v6610 = vpop.permute.xlu0 %6609
  %6611 = vrot.lane.b32.xlu0 %v685, 100
  %v6612 = vpop.permute.xlu0 %6611
  %6613 = vrot.lane.b32.xlu0 %v686, 100
  %v6614 = vpop.permute.xlu0 %6613
  %6615 = vrot.lane.b32.xlu0 %v687, 100
  %v6616 = vpop.permute.xlu0 %6615
  %6617 = vrot.lane.b32.xlu0 %v688, 100
  %v6618 = vpop.permute.xlu0 %6617
  %6619 = vrot.lane.b32.xlu0 %v689, 100
  %v6620 = vpop.permute.xlu0 %6619
  %6621 = vrot.lane.b32.xlu0 %v690, 100
  %v6622 = vpop.permute.xlu0 %6621
  %v6624 = vsel %vm691, %v6560, 0
  %v6627 = vsel %vm691, %v6562, 0
  %v6630 = vsel %vm691, %v6564, 0
  %v6633 = vsel %vm691, %v6566, 0
  %v6636 = vsel %vm691, %v6568, 0
  %v6639 = vsel %vm691, %v6570, 0
  %v6642 = vsel %vm691, %v6572, 0
  %v6645 = vsel %vm691, %v6574, 0
  %v6648 = vsel %vm691, %v6576, 0
  %v6651 = vsel %vm691, %v6578, 0
  %v6654 = vsel %vm691, %v6580, 0
  %v6657 = vsel %vm691, %v6582, 0
  %v6660 = vsel %vm691, %v6584, 0
  %v6663 = vsel %vm691, %v6586, 0
  %v6666 = vsel %vm691, %v6588, 0
  %v6669 = vsel %vm691, %v6590, 0
  %v6672 = vsel %vm691, %v6592, 0
  %v6675 = vsel %vm691, %v6594, 0
  %v6678 = vsel %vm691, %v6596, 0
  %v6681 = vsel %vm691, %v6598, 0
  %v6684 = vsel %vm691, %v6600, 0
  %v6687 = vsel %vm691, %v6602, 0
  %v6690 = vsel %vm691, %v6604, 0
  %v6693 = vsel %vm691, %v6606, 0
  %v6696 = vsel %vm691, %v6608, 0
  %v6699 = vsel %vm691, %v6610, 0
  %v6702 = vsel %vm691, %v6612, 0
  %v6705 = vsel %vm691, %v6614, 0
  %v6708 = vsel %vm691, %v6616, 0
  %v6711 = vsel %vm691, %v6618, 0
  %v6714 = vsel %vm691, %v6620, 0
  %v6717 = vsel %vm691, %v6622, 0
  %v6720 = vsel %vm788, %v6558, 0
  %6722 = vmatprep.subr.bf16.mxu0 0
  %6723 = vmatpush1.bf16.msra.mxu0 0
  %6724 = vmatprep.subr.bf16.mxu0 0
  %6725 = vmatpush1.bf16.msra.mxu0 0
  %6726 = vmatprep.subr.bf16.mxu0 0
  %6727 = vmatpush1.bf16.msra.mxu0 0
  %6728 = vmatprep.subr.bf16.mxu0 0
  %6729 = vmatpush1.bf16.msra.mxu0 0
  %6730 = vmatprep.subr.bf16.mxu0 0
  %6731 = vmatpush1.bf16.msra.mxu0 0
  %6732 = vmatprep.subr.bf16.mxu0 0
  %6733 = vmatpush1.bf16.msra.mxu0 0
  %6734 = vmatprep.subr.bf16.mxu0 0
  %6735 = vmatpush1.bf16.msra.mxu0 0
  %6736 = vmatprep.subr.bf16.mxu0 0
  %6737 = vmatpush1.bf16.msra.mxu0 %v6720
  %6738 = vmatprep.subr.bf16.mxu0 0
  %6739 = vmatpush2.bf16.msra.mxu0 0
  %6740 = vmatprep.subr.bf16.mxu0 0
  %6741 = vmatpush2.bf16.msra.mxu0 0
  %6742 = vmatprep.subr.bf16.mxu0 0
  %6743 = vmatpush2.bf16.msra.mxu0 0
  %6744 = vmatprep.subr.bf16.mxu0 0
  %6745 = vmatpush2.bf16.msra.mxu0 0
  %6746 = vmatprep.subr.bf16.mxu0 0
  %6747 = vmatpush2.bf16.msra.mxu0 0
  %6748 = vmatprep.subr.bf16.mxu0 0
  %6749 = vmatpush2.bf16.msra.mxu0 0
  %6750 = vmatprep.subr.bf16.mxu0 0
  %6751 = vmatpush2.bf16.msra.mxu0 0
  %6752 = vmatprep.subr.bf16.mxu0 0
  %6753 = vmatpush2.bf16.msra.mxu0 0
  %6754 = vmatprep.mubr.bf16.mxu0 0
  %6755 = vmatmul.mubr.bf16.gmra.mxu0 %v6624
  %v6756 = vpop.f32.mrf.mxu0
  %v6757 = vadd.f32 0.0, %v6756
  %v6758 = vpop.f32.mrf.mxu0
  %v6759 = vpop.f32.mrf.mxu0
  %v6760 = vadd.f32 0.0, %v6759
  %v6761 = vpop.f32.mrf.mxu0
  %6762 = vmatprep.mubr.bf16.mxu0 0
  %6763 = vmatmul.mubr.bf16.gmra.mxu0 %v6627
  %v6764 = vpop.f32.mrf.mxu0
  %v6765 = vadd.f32 0.0, %v6764
  %v6766 = vpop.f32.mrf.mxu0
  %v6767 = vpop.f32.mrf.mxu0
  %v6768 = vadd.f32 0.0, %v6767
  %v6769 = vpop.f32.mrf.mxu0
  %6770 = vmatprep.mubr.bf16.mxu0 0
  %6771 = vmatmul.mubr.bf16.gmra.mxu0 %v6630
  %v6772 = vpop.f32.mrf.mxu0
  %v6773 = vadd.f32 0.0, %v6772
  %v6774 = vpop.f32.mrf.mxu0
  %v6775 = vpop.f32.mrf.mxu0
  %v6776 = vadd.f32 0.0, %v6775
  %v6777 = vpop.f32.mrf.mxu0
  %6778 = vmatprep.mubr.bf16.mxu0 0
  %6779 = vmatmul.mubr.bf16.gmra.mxu0 %v6633
  %v6780 = vpop.f32.mrf.mxu0
  %v6781 = vadd.f32 0.0, %v6780
  %v6782 = vpop.f32.mrf.mxu0
  %v6783 = vpop.f32.mrf.mxu0
  %v6784 = vadd.f32 0.0, %v6783
  %v6785 = vpop.f32.mrf.mxu0
  %6786 = vmatprep.mubr.bf16.mxu0 0
  %6787 = vmatmul.mubr.bf16.gmra.mxu0 %v6636
  %v6788 = vpop.f32.mrf.mxu0
  %v6789 = vadd.f32 0.0, %v6788
  %v6790 = vpop.f32.mrf.mxu0
  %v6791 = vpop.f32.mrf.mxu0
  %v6792 = vadd.f32 0.0, %v6791
  %v6793 = vpop.f32.mrf.mxu0
  %6794 = vmatprep.mubr.bf16.mxu0 0
  %6795 = vmatmul.mubr.bf16.gmra.mxu0 %v6639
  %v6796 = vpop.f32.mrf.mxu0
  %v6797 = vadd.f32 0.0, %v6796
  %v6798 = vpop.f32.mrf.mxu0
  %v6799 = vpop.f32.mrf.mxu0
  %v6800 = vadd.f32 0.0, %v6799
  %v6801 = vpop.f32.mrf.mxu0
  %6802 = vmatprep.mubr.bf16.mxu0 0
  %6803 = vmatmul.mubr.bf16.gmra.mxu0 %v6642
  %v6804 = vpop.f32.mrf.mxu0
  %v6805 = vadd.f32 0.0, %v6804
  %v6806 = vpop.f32.mrf.mxu0
  %v6807 = vpop.f32.mrf.mxu0
  %v6808 = vadd.f32 0.0, %v6807
  %v6809 = vpop.f32.mrf.mxu0
  %6810 = vmatprep.mubr.bf16.mxu0 0
  %6811 = vmatmul.mubr.bf16.gmra.mxu0 %v6645
  %v6812 = vpop.f32.mrf.mxu0
  %v6813 = vadd.f32 0.0, %v6812
  %v6814 = vpop.f32.mrf.mxu0
  %v6815 = vpop.f32.mrf.mxu0
  %v6816 = vadd.f32 0.0, %v6815
  %v6817 = vpop.f32.mrf.mxu0
  %6818 = vmatprep.mubr.bf16.mxu0 0
  %6819 = vmatmul.mubr.bf16.gmra.mxu0 %v6648
  %v6820 = vpop.f32.mrf.mxu0
  %v6821 = vadd.f32 0.0, %v6820
  %v6822 = vpop.f32.mrf.mxu0
  %v6823 = vpop.f32.mrf.mxu0
  %v6824 = vadd.f32 0.0, %v6823
  %v6825 = vpop.f32.mrf.mxu0
  %6826 = vmatprep.mubr.bf16.mxu0 0
  %6827 = vmatmul.mubr.bf16.gmra.mxu0 %v6651
  %v6828 = vpop.f32.mrf.mxu0
  %v6829 = vadd.f32 0.0, %v6828
  %v6830 = vpop.f32.mrf.mxu0
  %v6831 = vpop.f32.mrf.mxu0
  %v6832 = vadd.f32 0.0, %v6831
  %v6833 = vpop.f32.mrf.mxu0
  %6834 = vmatprep.mubr.bf16.mxu0 0
  %6835 = vmatmul.mubr.bf16.gmra.mxu0 %v6654
  %v6836 = vpop.f32.mrf.mxu0
  %v6837 = vadd.f32 0.0, %v6836
  %v6838 = vpop.f32.mrf.mxu0
  %v6839 = vpop.f32.mrf.mxu0
  %v6840 = vadd.f32 0.0, %v6839
  %v6841 = vpop.f32.mrf.mxu0
  %6842 = vmatprep.mubr.bf16.mxu0 0
  %6843 = vmatmul.mubr.bf16.gmra.mxu0 %v6657
  %v6844 = vpop.f32.mrf.mxu0
  %v6845 = vadd.f32 0.0, %v6844
  %v6846 = vpop.f32.mrf.mxu0
  %v6847 = vpop.f32.mrf.mxu0
  %v6848 = vadd.f32 0.0, %v6847
  %v6849 = vpop.f32.mrf.mxu0
  %6850 = vmatprep.mubr.bf16.mxu0 0
  %6851 = vmatmul.mubr.bf16.gmra.mxu0 %v6660
  %v6852 = vpop.f32.mrf.mxu0
  %v6853 = vadd.f32 0.0, %v6852
  %v6854 = vpop.f32.mrf.mxu0
  %v6855 = vpop.f32.mrf.mxu0
  %v6856 = vadd.f32 0.0, %v6855
  %v6857 = vpop.f32.mrf.mxu0
  %6858 = vmatprep.mubr.bf16.mxu0 0
  %6859 = vmatmul.mubr.bf16.gmra.mxu0 %v6663
  %v6860 = vpop.f32.mrf.mxu0
  %v6861 = vadd.f32 0.0, %v6860
  %v6862 = vpop.f32.mrf.mxu0
  %v6863 = vpop.f32.mrf.mxu0
  %v6864 = vadd.f32 0.0, %v6863
  %v6865 = vpop.f32.mrf.mxu0
  %6866 = vmatprep.mubr.bf16.mxu0 0
  %6867 = vmatmul.mubr.bf16.gmra.mxu0 %v6666
  %v6868 = vpop.f32.mrf.mxu0
  %v6869 = vadd.f32 0.0, %v6868
  %v6870 = vpop.f32.mrf.mxu0
  %v6871 = vpop.f32.mrf.mxu0
  %v6872 = vadd.f32 0.0, %v6871
  %v6873 = vpop.f32.mrf.mxu0
  %6874 = vmatprep.mubr.bf16.mxu0 0
  %6875 = vmatmul.mubr.bf16.gmra.mxu0 %v6669
  %v6876 = vpop.f32.mrf.mxu0
  %v6877 = vadd.f32 0.0, %v6876
  %v6878 = vpop.f32.mrf.mxu0
  %v6879 = vpop.f32.mrf.mxu0
  %v6880 = vadd.f32 0.0, %v6879
  %v6881 = vpop.f32.mrf.mxu0
  %6882 = vmatprep.mubr.bf16.mxu0 0
  %6883 = vmatmul.mubr.bf16.gmra.mxu0 %v6672
  %v6884 = vpop.f32.mrf.mxu0
  %v6885 = vadd.f32 0.0, %v6884
  %v6886 = vpop.f32.mrf.mxu0
  %v6887 = vpop.f32.mrf.mxu0
  %v6888 = vadd.f32 0.0, %v6887
  %v6889 = vpop.f32.mrf.mxu0
  %6890 = vmatprep.mubr.bf16.mxu0 0
  %6891 = vmatmul.mubr.bf16.gmra.mxu0 %v6675
  %v6892 = vpop.f32.mrf.mxu0
  %v6893 = vadd.f32 0.0, %v6892
  %v6894 = vpop.f32.mrf.mxu0
  %v6895 = vpop.f32.mrf.mxu0
  %v6896 = vadd.f32 0.0, %v6895
  %v6897 = vpop.f32.mrf.mxu0
  %6898 = vmatprep.mubr.bf16.mxu0 0
  %6899 = vmatmul.mubr.bf16.gmra.mxu0 %v6678
  %v6900 = vpop.f32.mrf.mxu0
  %v6901 = vadd.f32 0.0, %v6900
  %v6902 = vpop.f32.mrf.mxu0
  %v6903 = vpop.f32.mrf.mxu0
  %v6904 = vadd.f32 0.0, %v6903
  %v6905 = vpop.f32.mrf.mxu0
  %6906 = vmatprep.mubr.bf16.mxu0 0
  %6907 = vmatmul.mubr.bf16.gmra.mxu0 %v6681
  %v6908 = vpop.f32.mrf.mxu0
  %v6909 = vadd.f32 0.0, %v6908
  %v6910 = vpop.f32.mrf.mxu0
  %v6911 = vpop.f32.mrf.mxu0
  %v6912 = vadd.f32 0.0, %v6911
  %v6913 = vpop.f32.mrf.mxu0
  %6914 = vmatprep.mubr.bf16.mxu0 0
  %6915 = vmatmul.mubr.bf16.gmra.mxu0 %v6684
  %v6916 = vpop.f32.mrf.mxu0
  %v6917 = vadd.f32 0.0, %v6916
  %v6918 = vpop.f32.mrf.mxu0
  %v6919 = vpop.f32.mrf.mxu0
  %v6920 = vadd.f32 0.0, %v6919
  %v6921 = vpop.f32.mrf.mxu0
  %6922 = vmatprep.mubr.bf16.mxu0 0
  %6923 = vmatmul.mubr.bf16.gmra.mxu0 %v6687
  %v6924 = vpop.f32.mrf.mxu0
  %v6925 = vadd.f32 0.0, %v6924
  %v6926 = vpop.f32.mrf.mxu0
  %v6927 = vpop.f32.mrf.mxu0
  %v6928 = vadd.f32 0.0, %v6927
  %v6929 = vpop.f32.mrf.mxu0
  %6930 = vmatprep.mubr.bf16.mxu0 0
  %6931 = vmatmul.mubr.bf16.gmra.mxu0 %v6690
  %v6932 = vpop.f32.mrf.mxu0
  %v6933 = vadd.f32 0.0, %v6932
  %v6934 = vpop.f32.mrf.mxu0
  %v6935 = vpop.f32.mrf.mxu0
  %v6936 = vadd.f32 0.0, %v6935
  %v6937 = vpop.f32.mrf.mxu0
  %6938 = vmatprep.mubr.bf16.mxu0 0
  %6939 = vmatmul.mubr.bf16.gmra.mxu0 %v6693
  %v6940 = vpop.f32.mrf.mxu0
  %v6941 = vadd.f32 0.0, %v6940
  %v6942 = vpop.f32.mrf.mxu0
  %v6943 = vpop.f32.mrf.mxu0
  %v6944 = vadd.f32 0.0, %v6943
  %v6945 = vpop.f32.mrf.mxu0
  %6946 = vmatprep.mubr.bf16.mxu0 0
  %6947 = vmatmul.mubr.bf16.gmra.mxu0 %v6696
  %v6948 = vpop.f32.mrf.mxu0
  %v6949 = vadd.f32 0.0, %v6948
  %v6950 = vpop.f32.mrf.mxu0
  %v6951 = vpop.f32.mrf.mxu0
  %v6952 = vadd.f32 0.0, %v6951
  %v6953 = vpop.f32.mrf.mxu0
  %6954 = vmatprep.mubr.bf16.mxu0 0
  %6955 = vmatmul.mubr.bf16.gmra.mxu0 %v6699
  %v6956 = vpop.f32.mrf.mxu0
  %v6957 = vadd.f32 0.0, %v6956
  %v6958 = vpop.f32.mrf.mxu0
  %v6959 = vpop.f32.mrf.mxu0
  %v6960 = vadd.f32 0.0, %v6959
  %v6961 = vpop.f32.mrf.mxu0
  %6962 = vmatprep.mubr.bf16.mxu0 0
  %6963 = vmatmul.mubr.bf16.gmra.mxu0 %v6702
  %v6964 = vpop.f32.mrf.mxu0
  %v6965 = vadd.f32 0.0, %v6964
  %v6966 = vpop.f32.mrf.mxu0
  %v6967 = vpop.f32.mrf.mxu0
  %v6968 = vadd.f32 0.0, %v6967
  %v6969 = vpop.f32.mrf.mxu0
  %6970 = vmatprep.mubr.bf16.mxu0 0
  %6971 = vmatmul.mubr.bf16.gmra.mxu0 %v6705
  %v6972 = vpop.f32.mrf.mxu0
  %v6973 = vadd.f32 0.0, %v6972
  %v6974 = vpop.f32.mrf.mxu0
  %v6975 = vpop.f32.mrf.mxu0
  %v6976 = vadd.f32 0.0, %v6975
  %v6977 = vpop.f32.mrf.mxu0
  %6978 = vmatprep.mubr.bf16.mxu0 0
  %6979 = vmatmul.mubr.bf16.gmra.mxu0 %v6708
  %v6980 = vpop.f32.mrf.mxu0
  %v6981 = vadd.f32 0.0, %v6980
  %v6982 = vpop.f32.mrf.mxu0
  %v6983 = vpop.f32.mrf.mxu0
  %v6984 = vadd.f32 0.0, %v6983
  %v6985 = vpop.f32.mrf.mxu0
  %6986 = vmatprep.mubr.bf16.mxu0 0
  %6987 = vmatmul.mubr.bf16.gmra.mxu0 %v6711
  %v6988 = vpop.f32.mrf.mxu0
  %v6989 = vadd.f32 0.0, %v6988
  %v6990 = vpop.f32.mrf.mxu0
  %v6991 = vpop.f32.mrf.mxu0
  %v6992 = vadd.f32 0.0, %v6991
  %v6993 = vpop.f32.mrf.mxu0
  %6994 = vmatprep.mubr.bf16.mxu0 0
  %6995 = vmatmul.mubr.bf16.gmra.mxu0 %v6714
  %v6996 = vpop.f32.mrf.mxu0
  %v6997 = vadd.f32 0.0, %v6996
  %v6998 = vpop.f32.mrf.mxu0
  %v6999 = vpop.f32.mrf.mxu0
  %v7000 = vadd.f32 0.0, %v6999
  %v7001 = vpop.f32.mrf.mxu0
  %7002 = vmatprep.mubr.bf16.mxu0 0
  %7003 = vmatmul.mubr.bf16.gmra.mxu0 %v6717
  %v7004 = vpop.f32.mrf.mxu0
  %v7005 = vadd.f32 0.0, %v7004
  %v7006 = vpop.f32.mrf.mxu0
  %v7007 = vpop.f32.mrf.mxu0
  %v7008 = vadd.f32 0.0, %v7007
  %v7009 = vpop.f32.mrf.mxu0
  %7010 = vdwg.mxu0
  %7011 = vset.pattern.permute.xlu0 7
  %7012 = vperm.xlu0 %7011, %v339
  %v7013 = vpop.permute.xlu0 %7012
  %7015 = vset.pattern.permute.xlu0 7
  %7016 = vperm.xlu0 %7015, %v341
  %v7017 = vpop.permute.xlu0 %7016
  %7019 = vset.pattern.permute.xlu0 7
  %7020 = vperm.xlu0 %7019, %v343
  %v7021 = vpop.permute.xlu0 %7020
  %7023 = vset.pattern.permute.xlu0 7
  %7024 = vperm.xlu0 %7023, %v345
  %v7025 = vpop.permute.xlu0 %7024
  %7027 = vset.pattern.permute.xlu0 7
  %7028 = vperm.xlu0 %7027, %v347
  %v7029 = vpop.permute.xlu0 %7028
  %7031 = vset.pattern.permute.xlu0 7
  %7032 = vperm.xlu0 %7031, %v349
  %v7033 = vpop.permute.xlu0 %7032
  %7035 = vset.pattern.permute.xlu0 7
  %7036 = vperm.xlu0 %7035, %v351
  %v7037 = vpop.permute.xlu0 %7036
  %7039 = vset.pattern.permute.xlu0 7
  %7040 = vperm.xlu0 %7039, %v353
  %v7041 = vpop.permute.xlu0 %7040
  %7043 = vset.pattern.permute.xlu0 7
  %7044 = vperm.xlu0 %7043, %v355
  %v7045 = vpop.permute.xlu0 %7044
  %7047 = vset.pattern.permute.xlu0 7
  %7048 = vperm.xlu0 %7047, %v357
  %v7049 = vpop.permute.xlu0 %7048
  %7051 = vset.pattern.permute.xlu0 7
  %7052 = vperm.xlu0 %7051, %v359
  %v7053 = vpop.permute.xlu0 %7052
  %7055 = vset.pattern.permute.xlu0 7
  %7056 = vperm.xlu0 %7055, %v361
  %v7057 = vpop.permute.xlu0 %7056
  %7059 = vset.pattern.permute.xlu0 7
  %7060 = vperm.xlu0 %7059, %v363
  %v7061 = vpop.permute.xlu0 %7060
  %7063 = vset.pattern.permute.xlu0 7
  %7064 = vperm.xlu0 %7063, %v365
  %v7065 = vpop.permute.xlu0 %7064
  %7067 = vset.pattern.permute.xlu0 7
  %7068 = vperm.xlu0 %7067, %v367
  %v7069 = vpop.permute.xlu0 %7068
  %7071 = vset.pattern.permute.xlu0 7
  %7072 = vperm.xlu0 %7071, %v369
  %v7073 = vpop.permute.xlu0 %7072
  %7075 = vset.pattern.permute.xlu0 7
  %7076 = vperm.xlu0 %7075, %v371
  %v7077 = vpop.permute.xlu0 %7076
  %7079 = vset.pattern.permute.xlu0 7
  %7080 = vperm.xlu0 %7079, %v373
  %v7081 = vpop.permute.xlu0 %7080
  %7083 = vset.pattern.permute.xlu0 7
  %7084 = vperm.xlu0 %7083, %v375
  %v7085 = vpop.permute.xlu0 %7084
  %7087 = vset.pattern.permute.xlu0 7
  %7088 = vperm.xlu0 %7087, %v377
  %v7089 = vpop.permute.xlu0 %7088
  %7091 = vset.pattern.permute.xlu0 7
  %7092 = vperm.xlu0 %7091, %v379
  %v7093 = vpop.permute.xlu0 %7092
  %7095 = vset.pattern.permute.xlu0 7
  %7096 = vperm.xlu0 %7095, %v381
  %v7097 = vpop.permute.xlu0 %7096
  %7099 = vset.pattern.permute.xlu0 7
  %7100 = vperm.xlu0 %7099, %v383
  %v7101 = vpop.permute.xlu0 %7100
  %7103 = vset.pattern.permute.xlu0 7
  %7104 = vperm.xlu0 %7103, %v385
  %v7105 = vpop.permute.xlu0 %7104
  %7107 = vset.pattern.permute.xlu0 7
  %7108 = vperm.xlu0 %7107, %v387
  %v7109 = vpop.permute.xlu0 %7108
  %7111 = vset.pattern.permute.xlu0 7
  %7112 = vperm.xlu0 %7111, %v389
  %v7113 = vpop.permute.xlu0 %7112
  %7115 = vset.pattern.permute.xlu0 7
  %7116 = vperm.xlu0 %7115, %v391
  %v7117 = vpop.permute.xlu0 %7116
  %7119 = vset.pattern.permute.xlu0 7
  %7120 = vperm.xlu0 %7119, %v393
  %v7121 = vpop.permute.xlu0 %7120
  %7123 = vset.pattern.permute.xlu0 7
  %7124 = vperm.xlu0 %7123, %v395
  %v7125 = vpop.permute.xlu0 %7124
  %7127 = vset.pattern.permute.xlu0 7
  %7128 = vperm.xlu0 %7127, %v397
  %v7129 = vpop.permute.xlu0 %7128
  %7131 = vset.pattern.permute.xlu0 7
  %7132 = vperm.xlu0 %7131, %v399
  %v7133 = vpop.permute.xlu0 %7132
  %7135 = vset.pattern.permute.xlu0 7
  %7136 = vperm.xlu0 %7135, %v401
  %v7137 = vpop.permute.xlu0 %7136
  %7139 = vset.pattern.permute.xlu0 7
  %7140 = vperm.xlu0 %7139, %v403
  %v7141 = vpop.permute.xlu0 %7140
  %7143 = vset.pattern.permute.xlu0 7
  %7144 = vperm.xlu0 %7143, %v405
  %v7145 = vpop.permute.xlu0 %7144
  %7147 = vset.pattern.permute.xlu0 7
  %7148 = vperm.xlu0 %7147, %v407
  %v7149 = vpop.permute.xlu0 %7148
  %7151 = vset.pattern.permute.xlu0 7
  %7152 = vperm.xlu0 %7151, %v409
  %v7153 = vpop.permute.xlu0 %7152
  %7155 = vset.pattern.permute.xlu0 7
  %7156 = vperm.xlu0 %7155, %v411
  %v7157 = vpop.permute.xlu0 %7156
  %7159 = vset.pattern.permute.xlu0 7
  %7160 = vperm.xlu0 %7159, %v413
  %v7161 = vpop.permute.xlu0 %7160
  %7163 = vset.pattern.permute.xlu0 7
  %7164 = vperm.xlu0 %7163, %v415
  %v7165 = vpop.permute.xlu0 %7164
  %7167 = vset.pattern.permute.xlu0 7
  %7168 = vperm.xlu0 %7167, %v417
  %v7169 = vpop.permute.xlu0 %7168
  %7171 = vset.pattern.permute.xlu0 7
  %7172 = vperm.xlu0 %7171, %v419
  %v7173 = vpop.permute.xlu0 %7172
  %7175 = vset.pattern.permute.xlu0 7
  %7176 = vperm.xlu0 %7175, %v421
  %v7177 = vpop.permute.xlu0 %7176
  %7179 = vset.pattern.permute.xlu0 7
  %7180 = vperm.xlu0 %7179, %v423
  %v7181 = vpop.permute.xlu0 %7180
  %7183 = vset.pattern.permute.xlu0 7
  %7184 = vperm.xlu0 %7183, %v425
  %v7185 = vpop.permute.xlu0 %7184
  %7187 = vset.pattern.permute.xlu0 7
  %7188 = vperm.xlu0 %7187, %v427
  %v7189 = vpop.permute.xlu0 %7188
  %7191 = vset.pattern.permute.xlu0 7
  %7192 = vperm.xlu0 %7191, %v429
  %v7193 = vpop.permute.xlu0 %7192
  %7195 = vset.pattern.permute.xlu0 7
  %7196 = vperm.xlu0 %7195, %v431
  %v7197 = vpop.permute.xlu0 %7196
  %7199 = vset.pattern.permute.xlu0 7
  %7200 = vperm.xlu0 %7199, %v433
  %v7201 = vpop.permute.xlu0 %7200
  %7203 = vset.pattern.permute.xlu0 7
  %7204 = vperm.xlu0 %7203, %v435
  %v7205 = vpop.permute.xlu0 %7204
  %7207 = vset.pattern.permute.xlu0 7
  %7208 = vperm.xlu0 %7207, %v437
  %v7209 = vpop.permute.xlu0 %7208
  %7211 = vset.pattern.permute.xlu0 7
  %7212 = vperm.xlu0 %7211, %v439
  %v7213 = vpop.permute.xlu0 %7212
  %7215 = vset.pattern.permute.xlu0 7
  %7216 = vperm.xlu0 %7215, %v441
  %v7217 = vpop.permute.xlu0 %7216
  %7219 = vset.pattern.permute.xlu0 7
  %7220 = vperm.xlu0 %7219, %v443
  %v7221 = vpop.permute.xlu0 %7220
  %7223 = vset.pattern.permute.xlu0 7
  %7224 = vperm.xlu0 %7223, %v445
  %v7225 = vpop.permute.xlu0 %7224
  %7227 = vset.pattern.permute.xlu0 7
  %7228 = vperm.xlu0 %7227, %v447
  %v7229 = vpop.permute.xlu0 %7228
  %7231 = vset.pattern.permute.xlu0 7
  %7232 = vperm.xlu0 %7231, %v449
  %v7233 = vpop.permute.xlu0 %7232
  %7235 = vset.pattern.permute.xlu0 7
  %7236 = vperm.xlu0 %7235, %v451
  %v7237 = vpop.permute.xlu0 %7236
  %7239 = vset.pattern.permute.xlu0 7
  %7240 = vperm.xlu0 %7239, %v453
  %v7241 = vpop.permute.xlu0 %7240
  %7243 = vset.pattern.permute.xlu0 7
  %7244 = vperm.xlu0 %7243, %v455
  %v7245 = vpop.permute.xlu0 %7244
  %7247 = vset.pattern.permute.xlu0 7
  %7248 = vperm.xlu0 %7247, %v457
  %v7249 = vpop.permute.xlu0 %7248
  %7251 = vset.pattern.permute.xlu0 7
  %7252 = vperm.xlu0 %7251, %v459
  %v7253 = vpop.permute.xlu0 %7252
  %7255 = vset.pattern.permute.xlu0 7
  %7256 = vperm.xlu0 %7255, %v461
  %v7257 = vpop.permute.xlu0 %7256
  %7259 = vset.pattern.permute.xlu0 7
  %7260 = vperm.xlu0 %7259, %v463
  %v7261 = vpop.permute.xlu0 %7260
  %7263 = vset.pattern.permute.xlu0 7
  %7264 = vperm.xlu0 %7263, %v465
  %v7265 = vpop.permute.xlu0 %7264
  %v7267 = vmul.f32 %v7013, %v6757
  %v7268 = vmul.f32 %v7017, %v6760
  %v7269 = vmul.f32 %v7021, %v6765
  %v7270 = vmul.f32 %v7025, %v6768
  %v7271 = vmul.f32 %v7029, %v6773
  %v7272 = vmul.f32 %v7033, %v6776
  %v7273 = vmul.f32 %v7037, %v6781
  %v7274 = vmul.f32 %v7041, %v6784
  %v7275 = vmul.f32 %v7045, %v6789
  %v7276 = vmul.f32 %v7049, %v6792
  %v7277 = vmul.f32 %v7053, %v6797
  %v7278 = vmul.f32 %v7057, %v6800
  %v7279 = vmul.f32 %v7061, %v6805
  %v7280 = vmul.f32 %v7065, %v6808
  %v7281 = vmul.f32 %v7069, %v6813
  %v7282 = vmul.f32 %v7073, %v6816
  %v7283 = vmul.f32 %v7077, %v6821
  %v7284 = vmul.f32 %v7081, %v6824
  %v7285 = vmul.f32 %v7085, %v6829
  %v7286 = vmul.f32 %v7089, %v6832
  %v7287 = vmul.f32 %v7093, %v6837
  %v7288 = vmul.f32 %v7097, %v6840
  %v7289 = vmul.f32 %v7101, %v6845
  %v7290 = vmul.f32 %v7105, %v6848
  %v7291 = vmul.f32 %v7109, %v6853
  %v7292 = vmul.f32 %v7113, %v6856
  %v7293 = vmul.f32 %v7117, %v6861
  %v7294 = vmul.f32 %v7121, %v6864
  %v7295 = vmul.f32 %v7125, %v6869
  %v7296 = vmul.f32 %v7129, %v6872
  %v7297 = vmul.f32 %v7133, %v6877
  %v7298 = vmul.f32 %v7137, %v6880
  %v7299 = vmul.f32 %v7141, %v6885
  %v7300 = vmul.f32 %v7145, %v6888
  %v7301 = vmul.f32 %v7149, %v6893
  %v7302 = vmul.f32 %v7153, %v6896
  %v7303 = vmul.f32 %v7157, %v6901
  %v7304 = vmul.f32 %v7161, %v6904
  %v7305 = vmul.f32 %v7165, %v6909
  %v7306 = vmul.f32 %v7169, %v6912
  %v7307 = vmul.f32 %v7173, %v6917
  %v7308 = vmul.f32 %v7177, %v6920
  %v7309 = vmul.f32 %v7181, %v6925
  %v7310 = vmul.f32 %v7185, %v6928
  %v7311 = vmul.f32 %v7189, %v6933
  %v7312 = vmul.f32 %v7193, %v6936
  %v7313 = vmul.f32 %v7197, %v6941
  %v7314 = vmul.f32 %v7201, %v6944
  %v7315 = vmul.f32 %v7205, %v6949
  %v7316 = vmul.f32 %v7209, %v6952
  %v7317 = vmul.f32 %v7213, %v6957
  %v7318 = vmul.f32 %v7217, %v6960
  %v7319 = vmul.f32 %v7221, %v6965
  %v7320 = vmul.f32 %v7225, %v6968
  %v7321 = vmul.f32 %v7229, %v6973
  %v7322 = vmul.f32 %v7233, %v6976
  %v7323 = vmul.f32 %v7237, %v6981
  %v7324 = vmul.f32 %v7241, %v6984
  %v7325 = vmul.f32 %v7245, %v6989
  %v7326 = vmul.f32 %v7249, %v6992
  %v7327 = vmul.f32 %v7253, %v6997
  %v7328 = vmul.f32 %v7257, %v7000
  %v7329 = vmul.f32 %v7261, %v7005
  %v7330 = vmul.f32 %v7265, %v7008
  %v7331 = vadd.f32 %v6493, %v7267
  %v7332 = vadd.f32 %v6494, %v7268
  %v7333 = vadd.f32 %v6495, %v7269
  %v7334 = vadd.f32 %v6496, %v7270
  %v7335 = vadd.f32 %v6497, %v7271
  %v7336 = vadd.f32 %v6498, %v7272
  %v7337 = vadd.f32 %v6499, %v7273
  %v7338 = vadd.f32 %v6500, %v7274
  %v7339 = vadd.f32 %v6501, %v7275
  %v7340 = vadd.f32 %v6502, %v7276
  %v7341 = vadd.f32 %v6503, %v7277
  %v7342 = vadd.f32 %v6504, %v7278
  %v7343 = vadd.f32 %v6505, %v7279
  %v7344 = vadd.f32 %v6506, %v7280
  %v7345 = vadd.f32 %v6507, %v7281
  %v7346 = vadd.f32 %v6508, %v7282
  %v7347 = vadd.f32 %v6509, %v7283
  %v7348 = vadd.f32 %v6510, %v7284
  %v7349 = vadd.f32 %v6511, %v7285
  %v7350 = vadd.f32 %v6512, %v7286
  %v7351 = vadd.f32 %v6513, %v7287
  %v7352 = vadd.f32 %v6514, %v7288
  %v7353 = vadd.f32 %v6515, %v7289
  %v7354 = vadd.f32 %v6516, %v7290
  %v7355 = vadd.f32 %v6517, %v7291
  %v7356 = vadd.f32 %v6518, %v7292
  %v7357 = vadd.f32 %v6519, %v7293
  %v7358 = vadd.f32 %v6520, %v7294
  %v7359 = vadd.f32 %v6521, %v7295
  %v7360 = vadd.f32 %v6522, %v7296
  %v7361 = vadd.f32 %v6523, %v7297
  %v7362 = vadd.f32 %v6524, %v7298
  %v7363 = vadd.f32 %v6525, %v7299
  %v7364 = vadd.f32 %v6526, %v7300
  %v7365 = vadd.f32 %v6527, %v7301
  %v7366 = vadd.f32 %v6528, %v7302
  %v7367 = vadd.f32 %v6529, %v7303
  %v7368 = vadd.f32 %v6530, %v7304
  %v7369 = vadd.f32 %v6531, %v7305
  %v7370 = vadd.f32 %v6532, %v7306
  %v7371 = vadd.f32 %v6533, %v7307
  %v7372 = vadd.f32 %v6534, %v7308
  %v7373 = vadd.f32 %v6535, %v7309
  %v7374 = vadd.f32 %v6536, %v7310
  %v7375 = vadd.f32 %v6537, %v7311
  %v7376 = vadd.f32 %v6538, %v7312
  %v7377 = vadd.f32 %v6539, %v7313
  %v7378 = vadd.f32 %v6540, %v7314
  %v7379 = vadd.f32 %v6541, %v7315
  %v7380 = vadd.f32 %v6542, %v7316
  %v7381 = vadd.f32 %v6543, %v7317
  %v7382 = vadd.f32 %v6544, %v7318
  %v7383 = vadd.f32 %v6545, %v7319
  %v7384 = vadd.f32 %v6546, %v7320
  %v7385 = vadd.f32 %v6547, %v7321
  %v7386 = vadd.f32 %v6548, %v7322
  %v7387 = vadd.f32 %v6549, %v7323
  %v7388 = vadd.f32 %v6550, %v7324
  %v7389 = vadd.f32 %v6551, %v7325
  %v7390 = vadd.f32 %v6552, %v7326
  %v7391 = vadd.f32 %v6553, %v7327
  %v7392 = vadd.f32 %v6554, %v7328
  %v7393 = vadd.f32 %v6555, %v7329
  %v7394 = vadd.f32 %v6556, %v7330
  %s7395 = scalar_lea.vmem %s2, 16
  %v7396 = vld [vmem:[%s7395] sm:$0x3]
  %7397 = vrot.lane.b32.xlu0 %v659, 96
  %v7398 = vpop.permute.xlu0 %7397
  %7399 = vrot.lane.b32.xlu0 %v660, 96
  %v7400 = vpop.permute.xlu0 %7399
  %7401 = vrot.lane.b32.xlu0 %v661, 96
  %v7402 = vpop.permute.xlu0 %7401
  %7403 = vrot.lane.b32.xlu0 %v662, 96
  %v7404 = vpop.permute.xlu0 %7403
  %7405 = vrot.lane.b32.xlu0 %v663, 96
  %v7406 = vpop.permute.xlu0 %7405
  %7407 = vrot.lane.b32.xlu0 %v664, 96
  %v7408 = vpop.permute.xlu0 %7407
  %7409 = vrot.lane.b32.xlu0 %v665, 96
  %v7410 = vpop.permute.xlu0 %7409
  %7411 = vrot.lane.b32.xlu0 %v666, 96
  %v7412 = vpop.permute.xlu0 %7411
  %7413 = vrot.lane.b32.xlu0 %v667, 96
  %v7414 = vpop.permute.xlu0 %7413
  %7415 = vrot.lane.b32.xlu0 %v668, 96
  %v7416 = vpop.permute.xlu0 %7415
  %7417 = vrot.lane.b32.xlu0 %v669, 96
  %v7418 = vpop.permute.xlu0 %7417
  %7419 = vrot.lane.b32.xlu0 %v670, 96
  %v7420 = vpop.permute.xlu0 %7419
  %7421 = vrot.lane.b32.xlu0 %v671, 96
  %v7422 = vpop.permute.xlu0 %7421
  %7423 = vrot.lane.b32.xlu0 %v672, 96
  %v7424 = vpop.permute.xlu0 %7423
  %7425 = vrot.lane.b32.xlu0 %v673, 96
  %v7426 = vpop.permute.xlu0 %7425
  %7427 = vrot.lane.b32.xlu0 %v674, 96
  %v7428 = vpop.permute.xlu0 %7427
  %7429 = vrot.lane.b32.xlu0 %v675, 96
  %v7430 = vpop.permute.xlu0 %7429
  %7431 = vrot.lane.b32.xlu0 %v676, 96
  %v7432 = vpop.permute.xlu0 %7431
  %7433 = vrot.lane.b32.xlu0 %v677, 96
  %v7434 = vpop.permute.xlu0 %7433
  %7435 = vrot.lane.b32.xlu0 %v678, 96
  %v7436 = vpop.permute.xlu0 %7435
  %7437 = vrot.lane.b32.xlu0 %v679, 96
  %v7438 = vpop.permute.xlu0 %7437
  %7439 = vrot.lane.b32.xlu0 %v680, 96
  %v7440 = vpop.permute.xlu0 %7439
  %7441 = vrot.lane.b32.xlu0 %v681, 96
  %v7442 = vpop.permute.xlu0 %7441
  %7443 = vrot.lane.b32.xlu0 %v682, 96
  %v7444 = vpop.permute.xlu0 %7443
  %7445 = vrot.lane.b32.xlu0 %v683, 96
  %v7446 = vpop.permute.xlu0 %7445
  %7447 = vrot.lane.b32.xlu0 %v684, 96
  %v7448 = vpop.permute.xlu0 %7447
  %7449 = vrot.lane.b32.xlu0 %v685, 96
  %v7450 = vpop.permute.xlu0 %7449
  %7451 = vrot.lane.b32.xlu0 %v686, 96
  %v7452 = vpop.permute.xlu0 %7451
  %7453 = vrot.lane.b32.xlu0 %v687, 96
  %v7454 = vpop.permute.xlu0 %7453
  %7455 = vrot.lane.b32.xlu0 %v688, 96
  %v7456 = vpop.permute.xlu0 %7455
  %7457 = vrot.lane.b32.xlu0 %v689, 96
  %v7458 = vpop.permute.xlu0 %7457
  %7459 = vrot.lane.b32.xlu0 %v690, 96
  %v7460 = vpop.permute.xlu0 %7459
  %v7462 = vsel %vm691, %v7398, 0
  %v7465 = vsel %vm691, %v7400, 0
  %v7468 = vsel %vm691, %v7402, 0
  %v7471 = vsel %vm691, %v7404, 0
  %v7474 = vsel %vm691, %v7406, 0
  %v7477 = vsel %vm691, %v7408, 0
  %v7480 = vsel %vm691, %v7410, 0
  %v7483 = vsel %vm691, %v7412, 0
  %v7486 = vsel %vm691, %v7414, 0
  %v7489 = vsel %vm691, %v7416, 0
  %v7492 = vsel %vm691, %v7418, 0
  %v7495 = vsel %vm691, %v7420, 0
  %v7498 = vsel %vm691, %v7422, 0
  %v7501 = vsel %vm691, %v7424, 0
  %v7504 = vsel %vm691, %v7426, 0
  %v7507 = vsel %vm691, %v7428, 0
  %v7510 = vsel %vm691, %v7430, 0
  %v7513 = vsel %vm691, %v7432, 0
  %v7516 = vsel %vm691, %v7434, 0
  %v7519 = vsel %vm691, %v7436, 0
  %v7522 = vsel %vm691, %v7438, 0
  %v7525 = vsel %vm691, %v7440, 0
  %v7528 = vsel %vm691, %v7442, 0
  %v7531 = vsel %vm691, %v7444, 0
  %v7534 = vsel %vm691, %v7446, 0
  %v7537 = vsel %vm691, %v7448, 0
  %v7540 = vsel %vm691, %v7450, 0
  %v7543 = vsel %vm691, %v7452, 0
  %v7546 = vsel %vm691, %v7454, 0
  %v7549 = vsel %vm691, %v7456, 0
  %v7552 = vsel %vm691, %v7458, 0
  %v7555 = vsel %vm691, %v7460, 0
  %v7558 = vsel %vm788, %v7396, 0
  %7560 = vmatprep.subr.bf16.mxu0 0
  %7561 = vmatpush1.bf16.msra.mxu0 0
  %7562 = vmatprep.subr.bf16.mxu0 0
  %7563 = vmatpush1.bf16.msra.mxu0 0
  %7564 = vmatprep.subr.bf16.mxu0 0
  %7565 = vmatpush1.bf16.msra.mxu0 0
  %7566 = vmatprep.subr.bf16.mxu0 0
  %7567 = vmatpush1.bf16.msra.mxu0 0
  %7568 = vmatprep.subr.bf16.mxu0 0
  %7569 = vmatpush1.bf16.msra.mxu0 0
  %7570 = vmatprep.subr.bf16.mxu0 0
  %7571 = vmatpush1.bf16.msra.mxu0 0
  %7572 = vmatprep.subr.bf16.mxu0 0
  %7573 = vmatpush1.bf16.msra.mxu0 0
  %7574 = vmatprep.subr.bf16.mxu0 0
  %7575 = vmatpush1.bf16.msra.mxu0 %v7558
  %7576 = vmatprep.subr.bf16.mxu0 0
  %7577 = vmatpush2.bf16.msra.mxu0 0
  %7578 = vmatprep.subr.bf16.mxu0 0
  %7579 = vmatpush2.bf16.msra.mxu0 0
  %7580 = vmatprep.subr.bf16.mxu0 0
  %7581 = vmatpush2.bf16.msra.mxu0 0
  %7582 = vmatprep.subr.bf16.mxu0 0
  %7583 = vmatpush2.bf16.msra.mxu0 0
  %7584 = vmatprep.subr.bf16.mxu0 0
  %7585 = vmatpush2.bf16.msra.mxu0 0
  %7586 = vmatprep.subr.bf16.mxu0 0
  %7587 = vmatpush2.bf16.msra.mxu0 0
  %7588 = vmatprep.subr.bf16.mxu0 0
  %7589 = vmatpush2.bf16.msra.mxu0 0
  %7590 = vmatprep.subr.bf16.mxu0 0
  %7591 = vmatpush2.bf16.msra.mxu0 0
  %7592 = vmatprep.mubr.bf16.mxu0 0
  %7593 = vmatmul.mubr.bf16.gmra.mxu0 %v7462
  %v7594 = vpop.f32.mrf.mxu0
  %v7595 = vadd.f32 0.0, %v7594
  %v7596 = vpop.f32.mrf.mxu0
  %v7597 = vpop.f32.mrf.mxu0
  %v7598 = vadd.f32 0.0, %v7597
  %v7599 = vpop.f32.mrf.mxu0
  %7600 = vmatprep.mubr.bf16.mxu0 0
  %7601 = vmatmul.mubr.bf16.gmra.mxu0 %v7465
  %v7602 = vpop.f32.mrf.mxu0
  %v7603 = vadd.f32 0.0, %v7602
  %v7604 = vpop.f32.mrf.mxu0
  %v7605 = vpop.f32.mrf.mxu0
  %v7606 = vadd.f32 0.0, %v7605
  %v7607 = vpop.f32.mrf.mxu0
  %7608 = vmatprep.mubr.bf16.mxu0 0
  %7609 = vmatmul.mubr.bf16.gmra.mxu0 %v7468
  %v7610 = vpop.f32.mrf.mxu0
  %v7611 = vadd.f32 0.0, %v7610
  %v7612 = vpop.f32.mrf.mxu0
  %v7613 = vpop.f32.mrf.mxu0
  %v7614 = vadd.f32 0.0, %v7613
  %v7615 = vpop.f32.mrf.mxu0
  %7616 = vmatprep.mubr.bf16.mxu0 0
  %7617 = vmatmul.mubr.bf16.gmra.mxu0 %v7471
  %v7618 = vpop.f32.mrf.mxu0
  %v7619 = vadd.f32 0.0, %v7618
  %v7620 = vpop.f32.mrf.mxu0
  %v7621 = vpop.f32.mrf.mxu0
  %v7622 = vadd.f32 0.0, %v7621
  %v7623 = vpop.f32.mrf.mxu0
  %7624 = vmatprep.mubr.bf16.mxu0 0
  %7625 = vmatmul.mubr.bf16.gmra.mxu0 %v7474
  %v7626 = vpop.f32.mrf.mxu0
  %v7627 = vadd.f32 0.0, %v7626
  %v7628 = vpop.f32.mrf.mxu0
  %v7629 = vpop.f32.mrf.mxu0
  %v7630 = vadd.f32 0.0, %v7629
  %v7631 = vpop.f32.mrf.mxu0
  %7632 = vmatprep.mubr.bf16.mxu0 0
  %7633 = vmatmul.mubr.bf16.gmra.mxu0 %v7477
  %v7634 = vpop.f32.mrf.mxu0
  %v7635 = vadd.f32 0.0, %v7634
  %v7636 = vpop.f32.mrf.mxu0
  %v7637 = vpop.f32.mrf.mxu0
  %v7638 = vadd.f32 0.0, %v7637
  %v7639 = vpop.f32.mrf.mxu0
  %7640 = vmatprep.mubr.bf16.mxu0 0
  %7641 = vmatmul.mubr.bf16.gmra.mxu0 %v7480
  %v7642 = vpop.f32.mrf.mxu0
  %v7643 = vadd.f32 0.0, %v7642
  %v7644 = vpop.f32.mrf.mxu0
  %v7645 = vpop.f32.mrf.mxu0
  %v7646 = vadd.f32 0.0, %v7645
  %v7647 = vpop.f32.mrf.mxu0
  %7648 = vmatprep.mubr.bf16.mxu0 0
  %7649 = vmatmul.mubr.bf16.gmra.mxu0 %v7483
  %v7650 = vpop.f32.mrf.mxu0
  %v7651 = vadd.f32 0.0, %v7650
  %v7652 = vpop.f32.mrf.mxu0
  %v7653 = vpop.f32.mrf.mxu0
  %v7654 = vadd.f32 0.0, %v7653
  %v7655 = vpop.f32.mrf.mxu0
  %7656 = vmatprep.mubr.bf16.mxu0 0
  %7657 = vmatmul.mubr.bf16.gmra.mxu0 %v7486
  %v7658 = vpop.f32.mrf.mxu0
  %v7659 = vadd.f32 0.0, %v7658
  %v7660 = vpop.f32.mrf.mxu0
  %v7661 = vpop.f32.mrf.mxu0
  %v7662 = vadd.f32 0.0, %v7661
  %v7663 = vpop.f32.mrf.mxu0
  %7664 = vmatprep.mubr.bf16.mxu0 0
  %7665 = vmatmul.mubr.bf16.gmra.mxu0 %v7489
  %v7666 = vpop.f32.mrf.mxu0
  %v7667 = vadd.f32 0.0, %v7666
  %v7668 = vpop.f32.mrf.mxu0
  %v7669 = vpop.f32.mrf.mxu0
  %v7670 = vadd.f32 0.0, %v7669
  %v7671 = vpop.f32.mrf.mxu0
  %7672 = vmatprep.mubr.bf16.mxu0 0
  %7673 = vmatmul.mubr.bf16.gmra.mxu0 %v7492
  %v7674 = vpop.f32.mrf.mxu0
  %v7675 = vadd.f32 0.0, %v7674
  %v7676 = vpop.f32.mrf.mxu0
  %v7677 = vpop.f32.mrf.mxu0
  %v7678 = vadd.f32 0.0, %v7677
  %v7679 = vpop.f32.mrf.mxu0
  %7680 = vmatprep.mubr.bf16.mxu0 0
  %7681 = vmatmul.mubr.bf16.gmra.mxu0 %v7495
  %v7682 = vpop.f32.mrf.mxu0
  %v7683 = vadd.f32 0.0, %v7682
  %v7684 = vpop.f32.mrf.mxu0
  %v7685 = vpop.f32.mrf.mxu0
  %v7686 = vadd.f32 0.0, %v7685
  %v7687 = vpop.f32.mrf.mxu0
  %7688 = vmatprep.mubr.bf16.mxu0 0
  %7689 = vmatmul.mubr.bf16.gmra.mxu0 %v7498
  %v7690 = vpop.f32.mrf.mxu0
  %v7691 = vadd.f32 0.0, %v7690
  %v7692 = vpop.f32.mrf.mxu0
  %v7693 = vpop.f32.mrf.mxu0
  %v7694 = vadd.f32 0.0, %v7693
  %v7695 = vpop.f32.mrf.mxu0
  %7696 = vmatprep.mubr.bf16.mxu0 0
  %7697 = vmatmul.mubr.bf16.gmra.mxu0 %v7501
  %v7698 = vpop.f32.mrf.mxu0
  %v7699 = vadd.f32 0.0, %v7698
  %v7700 = vpop.f32.mrf.mxu0
  %v7701 = vpop.f32.mrf.mxu0
  %v7702 = vadd.f32 0.0, %v7701
  %v7703 = vpop.f32.mrf.mxu0
  %7704 = vmatprep.mubr.bf16.mxu0 0
  %7705 = vmatmul.mubr.bf16.gmra.mxu0 %v7504
  %v7706 = vpop.f32.mrf.mxu0
  %v7707 = vadd.f32 0.0, %v7706
  %v7708 = vpop.f32.mrf.mxu0
  %v7709 = vpop.f32.mrf.mxu0
  %v7710 = vadd.f32 0.0, %v7709
  %v7711 = vpop.f32.mrf.mxu0
  %7712 = vmatprep.mubr.bf16.mxu0 0
  %7713 = vmatmul.mubr.bf16.gmra.mxu0 %v7507
  %v7714 = vpop.f32.mrf.mxu0
  %v7715 = vadd.f32 0.0, %v7714
  %v7716 = vpop.f32.mrf.mxu0
  %v7717 = vpop.f32.mrf.mxu0
  %v7718 = vadd.f32 0.0, %v7717
  %v7719 = vpop.f32.mrf.mxu0
  %7720 = vmatprep.mubr.bf16.mxu0 0
  %7721 = vmatmul.mubr.bf16.gmra.mxu0 %v7510
  %v7722 = vpop.f32.mrf.mxu0
  %v7723 = vadd.f32 0.0, %v7722
  %v7724 = vpop.f32.mrf.mxu0
  %v7725 = vpop.f32.mrf.mxu0
  %v7726 = vadd.f32 0.0, %v7725
  %v7727 = vpop.f32.mrf.mxu0
  %7728 = vmatprep.mubr.bf16.mxu0 0
  %7729 = vmatmul.mubr.bf16.gmra.mxu0 %v7513
  %v7730 = vpop.f32.mrf.mxu0
  %v7731 = vadd.f32 0.0, %v7730
  %v7732 = vpop.f32.mrf.mxu0
  %v7733 = vpop.f32.mrf.mxu0
  %v7734 = vadd.f32 0.0, %v7733
  %v7735 = vpop.f32.mrf.mxu0
  %7736 = vmatprep.mubr.bf16.mxu0 0
  %7737 = vmatmul.mubr.bf16.gmra.mxu0 %v7516
  %v7738 = vpop.f32.mrf.mxu0
  %v7739 = vadd.f32 0.0, %v7738
  %v7740 = vpop.f32.mrf.mxu0
  %v7741 = vpop.f32.mrf.mxu0
  %v7742 = vadd.f32 0.0, %v7741
  %v7743 = vpop.f32.mrf.mxu0
  %7744 = vmatprep.mubr.bf16.mxu0 0
  %7745 = vmatmul.mubr.bf16.gmra.mxu0 %v7519
  %v7746 = vpop.f32.mrf.mxu0
  %v7747 = vadd.f32 0.0, %v7746
  %v7748 = vpop.f32.mrf.mxu0
  %v7749 = vpop.f32.mrf.mxu0
  %v7750 = vadd.f32 0.0, %v7749
  %v7751 = vpop.f32.mrf.mxu0
  %7752 = vmatprep.mubr.bf16.mxu0 0
  %7753 = vmatmul.mubr.bf16.gmra.mxu0 %v7522
  %v7754 = vpop.f32.mrf.mxu0
  %v7755 = vadd.f32 0.0, %v7754
  %v7756 = vpop.f32.mrf.mxu0
  %v7757 = vpop.f32.mrf.mxu0
  %v7758 = vadd.f32 0.0, %v7757
  %v7759 = vpop.f32.mrf.mxu0
  %7760 = vmatprep.mubr.bf16.mxu0 0
  %7761 = vmatmul.mubr.bf16.gmra.mxu0 %v7525
  %v7762 = vpop.f32.mrf.mxu0
  %v7763 = vadd.f32 0.0, %v7762
  %v7764 = vpop.f32.mrf.mxu0
  %v7765 = vpop.f32.mrf.mxu0
  %v7766 = vadd.f32 0.0, %v7765
  %v7767 = vpop.f32.mrf.mxu0
  %7768 = vmatprep.mubr.bf16.mxu0 0
  %7769 = vmatmul.mubr.bf16.gmra.mxu0 %v7528
  %v7770 = vpop.f32.mrf.mxu0
  %v7771 = vadd.f32 0.0, %v7770
  %v7772 = vpop.f32.mrf.mxu0
  %v7773 = vpop.f32.mrf.mxu0
  %v7774 = vadd.f32 0.0, %v7773
  %v7775 = vpop.f32.mrf.mxu0
  %7776 = vmatprep.mubr.bf16.mxu0 0
  %7777 = vmatmul.mubr.bf16.gmra.mxu0 %v7531
  %v7778 = vpop.f32.mrf.mxu0
  %v7779 = vadd.f32 0.0, %v7778
  %v7780 = vpop.f32.mrf.mxu0
  %v7781 = vpop.f32.mrf.mxu0
  %v7782 = vadd.f32 0.0, %v7781
  %v7783 = vpop.f32.mrf.mxu0
  %7784 = vmatprep.mubr.bf16.mxu0 0
  %7785 = vmatmul.mubr.bf16.gmra.mxu0 %v7534
  %v7786 = vpop.f32.mrf.mxu0
  %v7787 = vadd.f32 0.0, %v7786
  %v7788 = vpop.f32.mrf.mxu0
  %v7789 = vpop.f32.mrf.mxu0
  %v7790 = vadd.f32 0.0, %v7789
  %v7791 = vpop.f32.mrf.mxu0
  %7792 = vmatprep.mubr.bf16.mxu0 0
  %7793 = vmatmul.mubr.bf16.gmra.mxu0 %v7537
  %v7794 = vpop.f32.mrf.mxu0
  %v7795 = vadd.f32 0.0, %v7794
  %v7796 = vpop.f32.mrf.mxu0
  %v7797 = vpop.f32.mrf.mxu0
  %v7798 = vadd.f32 0.0, %v7797
  %v7799 = vpop.f32.mrf.mxu0
  %7800 = vmatprep.mubr.bf16.mxu0 0
  %7801 = vmatmul.mubr.bf16.gmra.mxu0 %v7540
  %v7802 = vpop.f32.mrf.mxu0
  %v7803 = vadd.f32 0.0, %v7802
  %v7804 = vpop.f32.mrf.mxu0
  %v7805 = vpop.f32.mrf.mxu0
  %v7806 = vadd.f32 0.0, %v7805
  %v7807 = vpop.f32.mrf.mxu0
  %7808 = vmatprep.mubr.bf16.mxu0 0
  %7809 = vmatmul.mubr.bf16.gmra.mxu0 %v7543
  %v7810 = vpop.f32.mrf.mxu0
  %v7811 = vadd.f32 0.0, %v7810
  %v7812 = vpop.f32.mrf.mxu0
  %v7813 = vpop.f32.mrf.mxu0
  %v7814 = vadd.f32 0.0, %v7813
  %v7815 = vpop.f32.mrf.mxu0
  %7816 = vmatprep.mubr.bf16.mxu0 0
  %7817 = vmatmul.mubr.bf16.gmra.mxu0 %v7546
  %v7818 = vpop.f32.mrf.mxu0
  %v7819 = vadd.f32 0.0, %v7818
  %v7820 = vpop.f32.mrf.mxu0
  %v7821 = vpop.f32.mrf.mxu0
  %v7822 = vadd.f32 0.0, %v7821
  %v7823 = vpop.f32.mrf.mxu0
  %7824 = vmatprep.mubr.bf16.mxu0 0
  %7825 = vmatmul.mubr.bf16.gmra.mxu0 %v7549
  %v7826 = vpop.f32.mrf.mxu0
  %v7827 = vadd.f32 0.0, %v7826
  %v7828 = vpop.f32.mrf.mxu0
  %v7829 = vpop.f32.mrf.mxu0
  %v7830 = vadd.f32 0.0, %v7829
  %v7831 = vpop.f32.mrf.mxu0
  %7832 = vmatprep.mubr.bf16.mxu0 0
  %7833 = vmatmul.mubr.bf16.gmra.mxu0 %v7552
  %v7834 = vpop.f32.mrf.mxu0
  %v7835 = vadd.f32 0.0, %v7834
  %v7836 = vpop.f32.mrf.mxu0
  %v7837 = vpop.f32.mrf.mxu0
  %v7838 = vadd.f32 0.0, %v7837
  %v7839 = vpop.f32.mrf.mxu0
  %7840 = vmatprep.mubr.bf16.mxu0 0
  %7841 = vmatmul.mubr.bf16.gmra.mxu0 %v7555
  %v7842 = vpop.f32.mrf.mxu0
  %v7843 = vadd.f32 0.0, %v7842
  %v7844 = vpop.f32.mrf.mxu0
  %v7845 = vpop.f32.mrf.mxu0
  %v7846 = vadd.f32 0.0, %v7845
  %v7847 = vpop.f32.mrf.mxu0
  %7848 = vdwg.mxu0
  %7849 = vset.pattern.permute.xlu0 8
  %7850 = vperm.xlu0 %7849, %v339
  %v7851 = vpop.permute.xlu0 %7850
  %7853 = vset.pattern.permute.xlu0 8
  %7854 = vperm.xlu0 %7853, %v341
  %v7855 = vpop.permute.xlu0 %7854
  %7857 = vset.pattern.permute.xlu0 8
  %7858 = vperm.xlu0 %7857, %v343
  %v7859 = vpop.permute.xlu0 %7858
  %7861 = vset.pattern.permute.xlu0 8
  %7862 = vperm.xlu0 %7861, %v345
  %v7863 = vpop.permute.xlu0 %7862
  %7865 = vset.pattern.permute.xlu0 8
  %7866 = vperm.xlu0 %7865, %v347
  %v7867 = vpop.permute.xlu0 %7866
  %7869 = vset.pattern.permute.xlu0 8
  %7870 = vperm.xlu0 %7869, %v349
  %v7871 = vpop.permute.xlu0 %7870
  %7873 = vset.pattern.permute.xlu0 8
  %7874 = vperm.xlu0 %7873, %v351
  %v7875 = vpop.permute.xlu0 %7874
  %7877 = vset.pattern.permute.xlu0 8
  %7878 = vperm.xlu0 %7877, %v353
  %v7879 = vpop.permute.xlu0 %7878
  %7881 = vset.pattern.permute.xlu0 8
  %7882 = vperm.xlu0 %7881, %v355
  %v7883 = vpop.permute.xlu0 %7882
  %7885 = vset.pattern.permute.xlu0 8
  %7886 = vperm.xlu0 %7885, %v357
  %v7887 = vpop.permute.xlu0 %7886
  %7889 = vset.pattern.permute.xlu0 8
  %7890 = vperm.xlu0 %7889, %v359
  %v7891 = vpop.permute.xlu0 %7890
  %7893 = vset.pattern.permute.xlu0 8
  %7894 = vperm.xlu0 %7893, %v361
  %v7895 = vpop.permute.xlu0 %7894
  %7897 = vset.pattern.permute.xlu0 8
  %7898 = vperm.xlu0 %7897, %v363
  %v7899 = vpop.permute.xlu0 %7898
  %7901 = vset.pattern.permute.xlu0 8
  %7902 = vperm.xlu0 %7901, %v365
  %v7903 = vpop.permute.xlu0 %7902
  %7905 = vset.pattern.permute.xlu0 8
  %7906 = vperm.xlu0 %7905, %v367
  %v7907 = vpop.permute.xlu0 %7906
  %7909 = vset.pattern.permute.xlu0 8
  %7910 = vperm.xlu0 %7909, %v369
  %v7911 = vpop.permute.xlu0 %7910
  %7913 = vset.pattern.permute.xlu0 8
  %7914 = vperm.xlu0 %7913, %v371
  %v7915 = vpop.permute.xlu0 %7914
  %7917 = vset.pattern.permute.xlu0 8
  %7918 = vperm.xlu0 %7917, %v373
  %v7919 = vpop.permute.xlu0 %7918
  %7921 = vset.pattern.permute.xlu0 8
  %7922 = vperm.xlu0 %7921, %v375
  %v7923 = vpop.permute.xlu0 %7922
  %7925 = vset.pattern.permute.xlu0 8
  %7926 = vperm.xlu0 %7925, %v377
  %v7927 = vpop.permute.xlu0 %7926
  %7929 = vset.pattern.permute.xlu0 8
  %7930 = vperm.xlu0 %7929, %v379
  %v7931 = vpop.permute.xlu0 %7930
  %7933 = vset.pattern.permute.xlu0 8
  %7934 = vperm.xlu0 %7933, %v381
  %v7935 = vpop.permute.xlu0 %7934
  %7937 = vset.pattern.permute.xlu0 8
  %7938 = vperm.xlu0 %7937, %v383
  %v7939 = vpop.permute.xlu0 %7938
  %7941 = vset.pattern.permute.xlu0 8
  %7942 = vperm.xlu0 %7941, %v385
  %v7943 = vpop.permute.xlu0 %7942
  %7945 = vset.pattern.permute.xlu0 8
  %7946 = vperm.xlu0 %7945, %v387
  %v7947 = vpop.permute.xlu0 %7946
  %7949 = vset.pattern.permute.xlu0 8
  %7950 = vperm.xlu0 %7949, %v389
  %v7951 = vpop.permute.xlu0 %7950
  %7953 = vset.pattern.permute.xlu0 8
  %7954 = vperm.xlu0 %7953, %v391
  %v7955 = vpop.permute.xlu0 %7954
  %7957 = vset.pattern.permute.xlu0 8
  %7958 = vperm.xlu0 %7957, %v393
  %v7959 = vpop.permute.xlu0 %7958
  %7961 = vset.pattern.permute.xlu0 8
  %7962 = vperm.xlu0 %7961, %v395
  %v7963 = vpop.permute.xlu0 %7962
  %7965 = vset.pattern.permute.xlu0 8
  %7966 = vperm.xlu0 %7965, %v397
  %v7967 = vpop.permute.xlu0 %7966
  %7969 = vset.pattern.permute.xlu0 8
  %7970 = vperm.xlu0 %7969, %v399
  %v7971 = vpop.permute.xlu0 %7970
  %7973 = vset.pattern.permute.xlu0 8
  %7974 = vperm.xlu0 %7973, %v401
  %v7975 = vpop.permute.xlu0 %7974
  %7977 = vset.pattern.permute.xlu0 8
  %7978 = vperm.xlu0 %7977, %v403
  %v7979 = vpop.permute.xlu0 %7978
  %7981 = vset.pattern.permute.xlu0 8
  %7982 = vperm.xlu0 %7981, %v405
  %v7983 = vpop.permute.xlu0 %7982
  %7985 = vset.pattern.permute.xlu0 8
  %7986 = vperm.xlu0 %7985, %v407
  %v7987 = vpop.permute.xlu0 %7986
  %7989 = vset.pattern.permute.xlu0 8
  %7990 = vperm.xlu0 %7989, %v409
  %v7991 = vpop.permute.xlu0 %7990
  %7993 = vset.pattern.permute.xlu0 8
  %7994 = vperm.xlu0 %7993, %v411
  %v7995 = vpop.permute.xlu0 %7994
  %7997 = vset.pattern.permute.xlu0 8
  %7998 = vperm.xlu0 %7997, %v413
  %v7999 = vpop.permute.xlu0 %7998
  %8001 = vset.pattern.permute.xlu0 8
  %8002 = vperm.xlu0 %8001, %v415
  %v8003 = vpop.permute.xlu0 %8002
  %8005 = vset.pattern.permute.xlu0 8
  %8006 = vperm.xlu0 %8005, %v417
  %v8007 = vpop.permute.xlu0 %8006
  %8009 = vset.pattern.permute.xlu0 8
  %8010 = vperm.xlu0 %8009, %v419
  %v8011 = vpop.permute.xlu0 %8010
  %8013 = vset.pattern.permute.xlu0 8
  %8014 = vperm.xlu0 %8013, %v421
  %v8015 = vpop.permute.xlu0 %8014
  %8017 = vset.pattern.permute.xlu0 8
  %8018 = vperm.xlu0 %8017, %v423
  %v8019 = vpop.permute.xlu0 %8018
  %8021 = vset.pattern.permute.xlu0 8
  %8022 = vperm.xlu0 %8021, %v425
  %v8023 = vpop.permute.xlu0 %8022
  %8025 = vset.pattern.permute.xlu0 8
  %8026 = vperm.xlu0 %8025, %v427
  %v8027 = vpop.permute.xlu0 %8026
  %8029 = vset.pattern.permute.xlu0 8
  %8030 = vperm.xlu0 %8029, %v429
  %v8031 = vpop.permute.xlu0 %8030
  %8033 = vset.pattern.permute.xlu0 8
  %8034 = vperm.xlu0 %8033, %v431
  %v8035 = vpop.permute.xlu0 %8034
  %8037 = vset.pattern.permute.xlu0 8
  %8038 = vperm.xlu0 %8037, %v433
  %v8039 = vpop.permute.xlu0 %8038
  %8041 = vset.pattern.permute.xlu0 8
  %8042 = vperm.xlu0 %8041, %v435
  %v8043 = vpop.permute.xlu0 %8042
  %8045 = vset.pattern.permute.xlu0 8
  %8046 = vperm.xlu0 %8045, %v437
  %v8047 = vpop.permute.xlu0 %8046
  %8049 = vset.pattern.permute.xlu0 8
  %8050 = vperm.xlu0 %8049, %v439
  %v8051 = vpop.permute.xlu0 %8050
  %8053 = vset.pattern.permute.xlu0 8
  %8054 = vperm.xlu0 %8053, %v441
  %v8055 = vpop.permute.xlu0 %8054
  %8057 = vset.pattern.permute.xlu0 8
  %8058 = vperm.xlu0 %8057, %v443
  %v8059 = vpop.permute.xlu0 %8058
  %8061 = vset.pattern.permute.xlu0 8
  %8062 = vperm.xlu0 %8061, %v445
  %v8063 = vpop.permute.xlu0 %8062
  %8065 = vset.pattern.permute.xlu0 8
  %8066 = vperm.xlu0 %8065, %v447
  %v8067 = vpop.permute.xlu0 %8066
  %8069 = vset.pattern.permute.xlu0 8
  %8070 = vperm.xlu0 %8069, %v449
  %v8071 = vpop.permute.xlu0 %8070
  %8073 = vset.pattern.permute.xlu0 8
  %8074 = vperm.xlu0 %8073, %v451
  %v8075 = vpop.permute.xlu0 %8074
  %8077 = vset.pattern.permute.xlu0 8
  %8078 = vperm.xlu0 %8077, %v453
  %v8079 = vpop.permute.xlu0 %8078
  %8081 = vset.pattern.permute.xlu0 8
  %8082 = vperm.xlu0 %8081, %v455
  %v8083 = vpop.permute.xlu0 %8082
  %8085 = vset.pattern.permute.xlu0 8
  %8086 = vperm.xlu0 %8085, %v457
  %v8087 = vpop.permute.xlu0 %8086
  %8089 = vset.pattern.permute.xlu0 8
  %8090 = vperm.xlu0 %8089, %v459
  %v8091 = vpop.permute.xlu0 %8090
  %8093 = vset.pattern.permute.xlu0 8
  %8094 = vperm.xlu0 %8093, %v461
  %v8095 = vpop.permute.xlu0 %8094
  %8097 = vset.pattern.permute.xlu0 8
  %8098 = vperm.xlu0 %8097, %v463
  %v8099 = vpop.permute.xlu0 %8098
  %8101 = vset.pattern.permute.xlu0 8
  %8102 = vperm.xlu0 %8101, %v465
  %v8103 = vpop.permute.xlu0 %8102
  %v8105 = vmul.f32 %v7851, %v7595
  %v8106 = vmul.f32 %v7855, %v7598
  %v8107 = vmul.f32 %v7859, %v7603
  %v8108 = vmul.f32 %v7863, %v7606
  %v8109 = vmul.f32 %v7867, %v7611
  %v8110 = vmul.f32 %v7871, %v7614
  %v8111 = vmul.f32 %v7875, %v7619
  %v8112 = vmul.f32 %v7879, %v7622
  %v8113 = vmul.f32 %v7883, %v7627
  %v8114 = vmul.f32 %v7887, %v7630
  %v8115 = vmul.f32 %v7891, %v7635
  %v8116 = vmul.f32 %v7895, %v7638
  %v8117 = vmul.f32 %v7899, %v7643
  %v8118 = vmul.f32 %v7903, %v7646
  %v8119 = vmul.f32 %v7907, %v7651
  %v8120 = vmul.f32 %v7911, %v7654
  %v8121 = vmul.f32 %v7915, %v7659
  %v8122 = vmul.f32 %v7919, %v7662
  %v8123 = vmul.f32 %v7923, %v7667
  %v8124 = vmul.f32 %v7927, %v7670
  %v8125 = vmul.f32 %v7931, %v7675
  %v8126 = vmul.f32 %v7935, %v7678
  %v8127 = vmul.f32 %v7939, %v7683
  %v8128 = vmul.f32 %v7943, %v7686
  %v8129 = vmul.f32 %v7947, %v7691
  %v8130 = vmul.f32 %v7951, %v7694
  %v8131 = vmul.f32 %v7955, %v7699
  %v8132 = vmul.f32 %v7959, %v7702
  %v8133 = vmul.f32 %v7963, %v7707
  %v8134 = vmul.f32 %v7967, %v7710
  %v8135 = vmul.f32 %v7971, %v7715
  %v8136 = vmul.f32 %v7975, %v7718
  %v8137 = vmul.f32 %v7979, %v7723
  %v8138 = vmul.f32 %v7983, %v7726
  %v8139 = vmul.f32 %v7987, %v7731
  %v8140 = vmul.f32 %v7991, %v7734
  %v8141 = vmul.f32 %v7995, %v7739
  %v8142 = vmul.f32 %v7999, %v7742
  %v8143 = vmul.f32 %v8003, %v7747
  %v8144 = vmul.f32 %v8007, %v7750
  %v8145 = vmul.f32 %v8011, %v7755
  %v8146 = vmul.f32 %v8015, %v7758
  %v8147 = vmul.f32 %v8019, %v7763
  %v8148 = vmul.f32 %v8023, %v7766
  %v8149 = vmul.f32 %v8027, %v7771
  %v8150 = vmul.f32 %v8031, %v7774
  %v8151 = vmul.f32 %v8035, %v7779
  %v8152 = vmul.f32 %v8039, %v7782
  %v8153 = vmul.f32 %v8043, %v7787
  %v8154 = vmul.f32 %v8047, %v7790
  %v8155 = vmul.f32 %v8051, %v7795
  %v8156 = vmul.f32 %v8055, %v7798
  %v8157 = vmul.f32 %v8059, %v7803
  %v8158 = vmul.f32 %v8063, %v7806
  %v8159 = vmul.f32 %v8067, %v7811
  %v8160 = vmul.f32 %v8071, %v7814
  %v8161 = vmul.f32 %v8075, %v7819
  %v8162 = vmul.f32 %v8079, %v7822
  %v8163 = vmul.f32 %v8083, %v7827
  %v8164 = vmul.f32 %v8087, %v7830
  %v8165 = vmul.f32 %v8091, %v7835
  %v8166 = vmul.f32 %v8095, %v7838
  %v8167 = vmul.f32 %v8099, %v7843
  %v8168 = vmul.f32 %v8103, %v7846
  %v8169 = vadd.f32 %v7331, %v8105
  %v8170 = vadd.f32 %v7332, %v8106
  %v8171 = vadd.f32 %v7333, %v8107
  %v8172 = vadd.f32 %v7334, %v8108
  %v8173 = vadd.f32 %v7335, %v8109
  %v8174 = vadd.f32 %v7336, %v8110
  %v8175 = vadd.f32 %v7337, %v8111
  %v8176 = vadd.f32 %v7338, %v8112
  %v8177 = vadd.f32 %v7339, %v8113
  %v8178 = vadd.f32 %v7340, %v8114
  %v8179 = vadd.f32 %v7341, %v8115
  %v8180 = vadd.f32 %v7342, %v8116
  %v8181 = vadd.f32 %v7343, %v8117
  %v8182 = vadd.f32 %v7344, %v8118
  %v8183 = vadd.f32 %v7345, %v8119
  %v8184 = vadd.f32 %v7346, %v8120
  %v8185 = vadd.f32 %v7347, %v8121
  %v8186 = vadd.f32 %v7348, %v8122
  %v8187 = vadd.f32 %v7349, %v8123
  %v8188 = vadd.f32 %v7350, %v8124
  %v8189 = vadd.f32 %v7351, %v8125
  %v8190 = vadd.f32 %v7352, %v8126
  %v8191 = vadd.f32 %v7353, %v8127
  %v8192 = vadd.f32 %v7354, %v8128
  %v8193 = vadd.f32 %v7355, %v8129
  %v8194 = vadd.f32 %v7356, %v8130
  %v8195 = vadd.f32 %v7357, %v8131
  %v8196 = vadd.f32 %v7358, %v8132
  %v8197 = vadd.f32 %v7359, %v8133
  %v8198 = vadd.f32 %v7360, %v8134
  %v8199 = vadd.f32 %v7361, %v8135
  %v8200 = vadd.f32 %v7362, %v8136
  %v8201 = vadd.f32 %v7363, %v8137
  %v8202 = vadd.f32 %v7364, %v8138
  %v8203 = vadd.f32 %v7365, %v8139
  %v8204 = vadd.f32 %v7366, %v8140
  %v8205 = vadd.f32 %v7367, %v8141
  %v8206 = vadd.f32 %v7368, %v8142
  %v8207 = vadd.f32 %v7369, %v8143
  %v8208 = vadd.f32 %v7370, %v8144
  %v8209 = vadd.f32 %v7371, %v8145
  %v8210 = vadd.f32 %v7372, %v8146
  %v8211 = vadd.f32 %v7373, %v8147
  %v8212 = vadd.f32 %v7374, %v8148
  %v8213 = vadd.f32 %v7375, %v8149
  %v8214 = vadd.f32 %v7376, %v8150
  %v8215 = vadd.f32 %v7377, %v8151
  %v8216 = vadd.f32 %v7378, %v8152
  %v8217 = vadd.f32 %v7379, %v8153
  %v8218 = vadd.f32 %v7380, %v8154
  %v8219 = vadd.f32 %v7381, %v8155
  %v8220 = vadd.f32 %v7382, %v8156
  %v8221 = vadd.f32 %v7383, %v8157
  %v8222 = vadd.f32 %v7384, %v8158
  %v8223 = vadd.f32 %v7385, %v8159
  %v8224 = vadd.f32 %v7386, %v8160
  %v8225 = vadd.f32 %v7387, %v8161
  %v8226 = vadd.f32 %v7388, %v8162
  %v8227 = vadd.f32 %v7389, %v8163
  %v8228 = vadd.f32 %v7390, %v8164
  %v8229 = vadd.f32 %v7391, %v8165
  %v8230 = vadd.f32 %v7392, %v8166
  %v8231 = vadd.f32 %v7393, %v8167
  %v8232 = vadd.f32 %v7394, %v8168
  %v8233 = vld [vmem:[%s3] sm:$0x1]
  %v8235 = vlaneseq
  %v8236 = vshrl.u32 %v8235, 7
  %v8237 = vsub.s32 0, %v8236
  %v8238 = vrot.slane %v8233, %v8237
  %v8240 = vadd.f32 %v8169, %v8238
  %v8241 = vadd.f32 %v8170, %v8238
  %v8242 = vadd.f32 %v8171, %v8238
  %v8243 = vadd.f32 %v8172, %v8238
  %v8244 = vadd.f32 %v8173, %v8238
  %v8245 = vadd.f32 %v8174, %v8238
  %v8246 = vadd.f32 %v8175, %v8238
  %v8247 = vadd.f32 %v8176, %v8238
  %v8248 = vadd.f32 %v8177, %v8238
  %v8249 = vadd.f32 %v8178, %v8238
  %v8250 = vadd.f32 %v8179, %v8238
  %v8251 = vadd.f32 %v8180, %v8238
  %v8252 = vadd.f32 %v8181, %v8238
  %v8253 = vadd.f32 %v8182, %v8238
  %v8254 = vadd.f32 %v8183, %v8238
  %v8255 = vadd.f32 %v8184, %v8238
  %v8256 = vadd.f32 %v8185, %v8238
  %v8257 = vadd.f32 %v8186, %v8238
  %v8258 = vadd.f32 %v8187, %v8238
  %v8259 = vadd.f32 %v8188, %v8238
  %v8260 = vadd.f32 %v8189, %v8238
  %v8261 = vadd.f32 %v8190, %v8238
  %v8262 = vadd.f32 %v8191, %v8238
  %v8263 = vadd.f32 %v8192, %v8238
  %v8264 = vadd.f32 %v8193, %v8238
  %v8265 = vadd.f32 %v8194, %v8238
  %v8266 = vadd.f32 %v8195, %v8238
  %v8267 = vadd.f32 %v8196, %v8238
  %v8268 = vadd.f32 %v8197, %v8238
  %v8269 = vadd.f32 %v8198, %v8238
  %v8270 = vadd.f32 %v8199, %v8238
  %v8271 = vadd.f32 %v8200, %v8238
  %v8272 = vadd.f32 %v8201, %v8238
  %v8273 = vadd.f32 %v8202, %v8238
  %v8274 = vadd.f32 %v8203, %v8238
  %v8275 = vadd.f32 %v8204, %v8238
  %v8276 = vadd.f32 %v8205, %v8238
  %v8277 = vadd.f32 %v8206, %v8238
  %v8278 = vadd.f32 %v8207, %v8238
  %v8279 = vadd.f32 %v8208, %v8238
  %v8280 = vadd.f32 %v8209, %v8238
  %v8281 = vadd.f32 %v8210, %v8238
  %v8282 = vadd.f32 %v8211, %v8238
  %v8283 = vadd.f32 %v8212, %v8238
  %v8284 = vadd.f32 %v8213, %v8238
  %v8285 = vadd.f32 %v8214, %v8238
  %v8286 = vadd.f32 %v8215, %v8238
  %v8287 = vadd.f32 %v8216, %v8238
  %v8288 = vadd.f32 %v8217, %v8238
  %v8289 = vadd.f32 %v8218, %v8238
  %v8290 = vadd.f32 %v8219, %v8238
  %v8291 = vadd.f32 %v8220, %v8238
  %v8292 = vadd.f32 %v8221, %v8238
  %v8293 = vadd.f32 %v8222, %v8238
  %v8294 = vadd.f32 %v8223, %v8238
  %v8295 = vadd.f32 %v8224, %v8238
  %v8296 = vadd.f32 %v8225, %v8238
  %v8297 = vadd.f32 %v8226, %v8238
  %v8298 = vadd.f32 %v8227, %v8238
  %v8299 = vadd.f32 %v8228, %v8238
  %v8300 = vadd.f32 %v8229, %v8238
  %v8301 = vadd.f32 %v8230, %v8238
  %v8302 = vadd.f32 %v8231, %v8238
  %v8303 = vadd.f32 %v8232, %v8238
  %8304 = vst [vmem:[%s4] sm:$0xff] %v8240
  %8305 = vst [vmem:[%s4 + $0x8] sm:$0xff] %v8241
  %8306 = vst [vmem:[%s4 + $0x10] sm:$0xff] %v8242
  %8307 = vst [vmem:[%s4 + $0x18] sm:$0xff] %v8243
  %8308 = vst [vmem:[%s4 + $0x20] sm:$0xff] %v8244
  %8309 = vst [vmem:[%s4 + $0x28] sm:$0xff] %v8245
  %8310 = vst [vmem:[%s4 + $0x30] sm:$0xff] %v8246
  %8311 = vst [vmem:[%s4 + $0x38] sm:$0xff] %v8247
  %8312 = vst [vmem:[%s4 + $0x40] sm:$0xff] %v8248
  %8313 = vst [vmem:[%s4 + $0x48] sm:$0xff] %v8249
  %8314 = vst [vmem:[%s4 + $0x50] sm:$0xff] %v8250
  %8315 = vst [vmem:[%s4 + $0x58] sm:$0xff] %v8251
  %8316 = vst [vmem:[%s4 + $0x60] sm:$0xff] %v8252
  %8317 = vst [vmem:[%s4 + $0x68] sm:$0xff] %v8253
  %8318 = vst [vmem:[%s4 + $0x70] sm:$0xff] %v8254
  %8319 = vst [vmem:[%s4 + $0x78] sm:$0xff] %v8255
  %8320 = vst [vmem:[%s4 + $0x80] sm:$0xff] %v8256
  %8321 = vst [vmem:[%s4 + $0x88] sm:$0xff] %v8257
  %8322 = vst [vmem:[%s4 + $0x90] sm:$0xff] %v8258
  %8323 = vst [vmem:[%s4 + $0x98] sm:$0xff] %v8259
  %8324 = vst [vmem:[%s4 + $0xa0] sm:$0xff] %v8260
  %8325 = vst [vmem:[%s4 + $0xa8] sm:$0xff] %v8261
  %8326 = vst [vmem:[%s4 + $0xb0] sm:$0xff] %v8262
  %8327 = vst [vmem:[%s4 + $0xb8] sm:$0xff] %v8263
  %8328 = vst [vmem:[%s4 + $0xc0] sm:$0xff] %v8264
  %8329 = vst [vmem:[%s4 + $0xc8] sm:$0xff] %v8265
  %8330 = vst [vmem:[%s4 + $0xd0] sm:$0xff] %v8266
  %8331 = vst [vmem:[%s4 + $0xd8] sm:$0xff] %v8267
  %8332 = vst [vmem:[%s4 + $0xe0] sm:$0xff] %v8268
  %8333 = vst [vmem:[%s4 + $0xe8] sm:$0xff] %v8269
  %8334 = vst [vmem:[%s4 + $0xf0] sm:$0xff] %v8270
  %8335 = vst [vmem:[%s4 + $0xf8] sm:$0xff] %v8271
  %8336 = vst [vmem:[%s4 + $0x100] sm:$0xff] %v8272
  %8337 = vst [vmem:[%s4 + $0x108] sm:$0xff] %v8273
  %8338 = vst [vmem:[%s4 + $0x110] sm:$0xff] %v8274
  %8339 = vst [vmem:[%s4 + $0x118] sm:$0xff] %v8275
  %8340 = vst [vmem:[%s4 + $0x120] sm:$0xff] %v8276
  %8341 = vst [vmem:[%s4 + $0x128] sm:$0xff] %v8277
  %8342 = vst [vmem:[%s4 + $0x130] sm:$0xff] %v8278
  %8343 = vst [vmem:[%s4 + $0x138] sm:$0xff] %v8279
  %8344 = vst [vmem:[%s4 + $0x140] sm:$0xff] %v8280
  %8345 = vst [vmem:[%s4 + $0x148] sm:$0xff] %v8281
  %8346 = vst [vmem:[%s4 + $0x150] sm:$0xff] %v8282
  %8347 = vst [vmem:[%s4 + $0x158] sm:$0xff] %v8283
  %8348 = vst [vmem:[%s4 + $0x160] sm:$0xff] %v8284
  %8349 = vst [vmem:[%s4 + $0x168] sm:$0xff] %v8285
  %8350 = vst [vmem:[%s4 + $0x170] sm:$0xff] %v8286
  %8351 = vst [vmem:[%s4 + $0x178] sm:$0xff] %v8287
  %8352 = vst [vmem:[%s4 + $0x180] sm:$0xff] %v8288
  %8353 = vst [vmem:[%s4 + $0x188] sm:$0xff] %v8289
  %8354 = vst [vmem:[%s4 + $0x190] sm:$0xff] %v8290
  %8355 = vst [vmem:[%s4 + $0x198] sm:$0xff] %v8291
  %8356 = vst [vmem:[%s4 + $0x1a0] sm:$0xff] %v8292
  %8357 = vst [vmem:[%s4 + $0x1a8] sm:$0xff] %v8293
  %8358 = vst [vmem:[%s4 + $0x1b0] sm:$0xff] %v8294
  %8359 = vst [vmem:[%s4 + $0x1b8] sm:$0xff] %v8295
  %8360 = vst [vmem:[%s4 + $0x1c0] sm:$0xff] %v8296
  %8361 = vst [vmem:[%s4 + $0x1c8] sm:$0xff] %v8297
  %8362 = vst [vmem:[%s4 + $0x1d0] sm:$0xff] %v8298
  %8363 = vst [vmem:[%s4 + $0x1d8] sm:$0xff] %v8299
  %8364 = vst [vmem:[%s4 + $0x1e0] sm:$0xff] %v8300
  %8365 = vst [vmem:[%s4 + $0x1e8] sm:$0xff] %v8301
  %8366 = vst [vmem:[%s4 + $0x1f0] sm:$0xff] %v8302
  %8367 = vst [vmem:[%s4 + $0x1f8] sm:$0xff] %v8303
  // Predicated region
  $region18: #{dcnv2_forward.1} parent=0 // pred_check
    _
  $region19: #{dcnv2_forward.1} parent=0 // pred_check_branch
    %8369 = sbr.rel (0) target = $region21
  $region20: #{dcnv2_forward.1} parent=0 // pred_region
    _
  $region21: #{dcnv2_forward.1} parent=0 // pred_fallthru
    _
  // Predicated region
  $region22: #{dcnv2_forward.1} parent=0 // pred_check
    _
  $region23: #{dcnv2_forward.1} parent=0 // pred_check_branch
    %8371 = sbr.rel (0) target = $region25
  $region24: #{dcnv2_forward.1} parent=0 // pred_region
    _
  $region25: #{dcnv2_forward.1} parent=0 // pred_fallthru
    _

</llo_original>
